<compile_context>
chip_gen: v6e
topology: v6e:2x2x1
jax: 0.10.0
libtpu: 0.0.40
codegen_flags: <defaults>
</compile_context>

<pallas_src>
import functools

import jax
import jax.numpy as jnp
from jax import lax
from jax.experimental import pallas as pl
from jax.experimental.pallas import tpu as pltpu


# ----------------------------- Pallas kernels ------------------------------

def _conv_pool_kernel(x_ref, w_ref, b_ref, o_ref, *, hh, ww):
    """3x3 conv (row taps fused) + bias + ReLU + fused 2x2 maxpool.

    x_ref: (1, (hh+2)*ww, 3*cin) bf16  -- width-im2col'd rows, columns permuted
           even-cols-first so the 2x2 pool reduces over tile-aligned slices.
    w_ref: (3, 3*cin, cout) bf16       -- one (K, Cout) matrix per row tap.
    b_ref: (1, cout) f32
    o_ref: (1, (hh//2)*(ww//2), cout) bf16
    """
    m = hh * ww
    acc = jnp.dot(x_ref[0, pl.ds(0 * ww, m), :], w_ref[0],
                  preferred_element_type=jnp.float32)
    acc = acc + jnp.dot(x_ref[0, pl.ds(1 * ww, m), :], w_ref[1],
                        preferred_element_type=jnp.float32)
    acc = acc + jnp.dot(x_ref[0, pl.ds(2 * ww, m), :], w_ref[2],
                        preferred_element_type=jnp.float32)
    y = jnp.maximum(acc + b_ref[...], 0.0)                 # (hh*ww, cout) f32
    cout = y.shape[-1]
    # maxpool 2x2 -- all slices / reshapes are (8,128)-tile aligned.
    y = y.reshape(hh // 2, 2 * ww, cout)
    y = jnp.maximum(y[:, :ww, :], y[:, ww:, :])            # pool over row pairs
    half = ww // 2
    y = jnp.maximum(y[:, :half, :], y[:, half:, :])        # pool over column pairs
    o_ref[0] = y.reshape((hh // 2) * half, cout).astype(o_ref.dtype)


def _conv_kernel(x_ref, w_ref, b_ref, o_ref, *, hh, ww):
    """3x3 conv (row taps fused in-kernel) + bias + ReLU for one (branch, n) step.

    x_ref: (1, 1, (hh+2)*ww, 3*cin) bf16, w_ref: (1, 3, 3*cin, cout) bf16,
    b_ref: (1, 1, cout) f32, o_ref: (1, 1, hh*ww, cout) bf16.
    """
    m = hh * ww
    acc = jnp.dot(x_ref[0, 0, pl.ds(0 * ww, m), :], w_ref[0, 0],
                  preferred_element_type=jnp.float32)
    acc = acc + jnp.dot(x_ref[0, 0, pl.ds(1 * ww, m), :], w_ref[0, 1],
                        preferred_element_type=jnp.float32)
    acc = acc + jnp.dot(x_ref[0, 0, pl.ds(2 * ww, m), :], w_ref[0, 2],
                        preferred_element_type=jnp.float32)
    o_ref[0, 0] = jnp.maximum(acc + b_ref[0], 0.0).astype(o_ref.dtype)


def _bilinear_head_kernel(x1_ref, x2_ref, w_ref, b_ref, o_ref, acc_ref,
                          *, inv_hw, c1, c2):
    """Bilinear pooling + sqrt + L2-normalize + fc, Gram accumulated over HW."""
    k = pl.program_id(1)

    @pl.when(k == 0)
    def _init():
        acc_ref[...] = jnp.zeros_like(acc_ref)

    # Gram accumulation: X1^T @ X2 over this HW chunk. Features arrive as
    # (HW, C) (no HBM relayout); only a small in-kernel f32 transpose is needed.
    a_t = jnp.transpose(x1_ref[0].astype(jnp.float32))     # (c1, thw)
    b = x2_ref[0].astype(jnp.float32)                      # (thw, c2)
    acc_ref[...] += jnp.dot(a_t, b, preferred_element_type=jnp.float32)

    @pl.when(k == pl.num_programs(1) - 1)
    def _finalize():
        g = acc_ref[...]                                   # (c1, c2) f32, >= 0
        # Both branches end in ReLU -> every Gram entry >= 0, so
        # ||sqrt(g/HW + eps)||^2 == sum(g)/HW + eps*c1*c2 (scalar algebra,
        # no (c1,c2) temporary just for the norm).
        sq = inv_hw * jnp.sum(jnp.sum(g, axis=1, keepdims=True),
                              axis=0, keepdims=True) + 1e-8 * float(c1 * c2)
        f = jnp.sqrt(g * inv_hw + 1e-8)                    # torch.sqrt(X + 1e-8)
        t = jnp.sum(jnp.sum(f * w_ref[...], axis=1, keepdims=True),
                    axis=0, keepdims=True)                 # (1,1)
        score = t * lax.rsqrt(sq) + b_ref[...]             # (1,1)
        o_ref[...] = jnp.broadcast_to(score, o_ref.shape)  # lane-dense out block


# ------------------------------ Pallas wrappers ------------------------------

def _conv_weights_to_taps(w_oihw):
    """PyTorch (Cout,Cin,3,3) -> (3, 3*Cin, Cout): one matrix per row tap (kh);
    channel order (kw, cin) matches the width-im2col input layout."""
    cout = w_oihw.shape[0]
    wt = jnp.transpose(w_oihw, (2, 3, 1, 0))               # (kh, kw, cin, cout)
    return wt.reshape(3, -1, cout).astype(jnp.bfloat16)


def _width_im2col(xpad, w_out):
    """(N, h+2, w+2, C) -> (N, h+2, w_out, 3C): column taps gathered onto lanes."""
    return jnp.concatenate([xpad[:, :, dw:dw + w_out, :] for dw in range(3)],
                           axis=-1)


def conv3x3_relu_maxpool(x_nhwc, w_oihw, b):
    """Conv2d(k=3,s=1,p=1) + ReLU + MaxPool2d(2), fused in one Pallas kernel."""
    n, hh, ww, cin = x_nhwc.shape
    cout = w_oihw.shape[0]
    xp = jnp.pad(x_nhwc, ((0, 0), (1, 1), (1, 1), (0, 0)))
    cols = _width_im2col(xp, ww)                           # (N, hh+2, ww, 3*cin)
    # even-columns-first permutation -> in-kernel column-pair pool is aligned
    perm = jnp.concatenate([jnp.arange(0, ww, 2), jnp.arange(1, ww, 2)])
    cols = cols[:, :, perm, :]
    a = cols.reshape(n, (hh + 2) * ww, 3 * cin)
    wt = _conv_weights_to_taps(w_oihw)
    bb = b.reshape(1, cout).astype(jnp.float32)
    mp = (hh // 2) * (ww // 2)
    kernel = functools.partial(_conv_pool_kernel, hh=hh, ww=ww)
    return pl.pallas_call(
        kernel,
        out_shape=jax.ShapeDtypeStruct((n, mp, cout), jnp.bfloat16),
        grid=(n,),
        in_specs=[
            pl.BlockSpec((1, (hh + 2) * ww, 3 * cin), lambda i: (i, 0, 0)),
            pl.BlockSpec((3, 3 * cin, cout), lambda i: (0, 0, 0)),
            pl.BlockSpec((1, cout), lambda i: (0, 0)),
        ],
        out_specs=pl.BlockSpec((1, mp, cout), lambda i: (i, 0, 0)),
        compiler_params=pltpu.CompilerParams(
            dimension_semantics=("parallel",),
            vmem_limit_bytes=32 * 1024 * 1024),
    )(a, wt, bb)


def conv3x3_relu_pair(y_nhwc, w_pair, b_pair):
    """Both branches' second 3x3 conv+ReLU in ONE pallas_call, grid=(branch, N).

    Output layout (branch, N, HW, C) feeds the bilinear head with no transpose.
    """
    n, hh, ww, ctot = y_nhwc.shape
    c = ctot // 2                                          # per-branch channels
    cout = w_pair[0].shape[0]
    yp = jnp.pad(y_nhwc, ((0, 0), (1, 1), (1, 1), (0, 0)))

    def prep(z):                                           # (N, hh+2, ww+2, c)
        return _width_im2col(z, ww).reshape(n, (hh + 2) * ww, 3 * c)

    xin = jnp.stack([prep(yp[..., :c]), prep(yp[..., c:])], axis=0)
    wts = jnp.stack([_conv_weights_to_taps(w_pair[0]),
                     _conv_weights_to_taps(w_pair[1])], axis=0)
    bbs = jnp.stack([b_pair[0].reshape(1, cout),
                     b_pair[1].reshape(1, cout)], axis=0).astype(jnp.float32)
    kernel = functools.partial(_conv_kernel, hh=hh, ww=ww)
    return pl.pallas_call(
        kernel,
        out_shape=jax.ShapeDtypeStruct((2, n, hh * ww, cout), jnp.bfloat16),
        grid=(2, n),
        in_specs=[
            pl.BlockSpec((1, 1, (hh + 2) * ww, 3 * c), lambda br, i: (br, i, 0, 0)),
            pl.BlockSpec((1, 3, 3 * c, cout), lambda br, i: (br, 0, 0, 0)),
            pl.BlockSpec((1, 1, cout), lambda br, i: (br, 0, 0)),
        ],
        out_specs=pl.BlockSpec((1, 1, hh * ww, cout), lambda br, i: (br, i, 0, 0)),
        compiler_params=pltpu.CompilerParams(
            dimension_semantics=("parallel", "parallel"),
            vmem_limit_bytes=32 * 1024 * 1024),
    )(xin, wts, bbs)


def bilinear_head(x1, x2, fc_w_c1c2, fc_b_11):
    """x1:(N,HW,C1), x2:(N,HW,C2) bf16; fc_w:(C1,C2), fc_b:(1,1) f32 -> (N,1)."""
    n, hw, c1 = x1.shape
    c2 = x2.shape[-1]
    thw = 128 if hw % 128 == 0 else hw                     # HW reduction chunk
    kernel = functools.partial(_bilinear_head_kernel, inv_hw=1.0 / hw, c1=c1, c2=c2)
    out = pl.pallas_call(
        kernel,
        out_shape=jax.ShapeDtypeStruct((n, 8, 128), jnp.float32),
        grid=(n, hw // thw),
        in_specs=[
            pl.BlockSpec((1, thw, c1), lambda i, k: (i, k, 0)),
            pl.BlockSpec((1, thw, c2), lambda i, k: (i, k, 0)),
            pl.BlockSpec((c1, c2), lambda i, k: (0, 0)),
            pl.BlockSpec((1, 1), lambda i, k: (0, 0)),
        ],
        out_specs=pl.BlockSpec((1, 8, 128), lambda i, k: (i, 0, 0)),
        scratch_shapes=[pltpu.VMEM((c1, c2), jnp.float32)],   # Gram accumulator
        compiler_params=pltpu.CompilerParams(
            dimension_semantics=("parallel", "arbitrary"),
            vmem_limit_bytes=32 * 1024 * 1024),
    )(x1, x2, fc_w_c1c2, fc_b_11)
    return out[:, 0, 0:1]


# ------------------------------ Model forward -------------------------------

@jax.jit
def dbcnn_forward(params, image_nchw):
    """MetricModel.forward(image): NCHW float in [0,1] -> (N,1) quality scores."""
    x = jnp.transpose(image_nchw, (0, 2, 3, 1)).astype(jnp.bfloat16)   # NHWC
    n = x.shape[0]
    c1 = params['w1a'].shape[0]
    c2 = params['w2a'].shape[0]

    # Both branches' first convs share the input -> one lane-dense (Cout=256)
    # conv kernel with the 2x2 maxpool fused into its epilogue.
    w_first = jnp.concatenate([params['w1a'], params['w2a']], axis=0)
    b_first = jnp.concatenate([params['b1a'], params['b2a']], axis=0)
    y = conv3x3_relu_maxpool(x, w_first, b_first)          # (N, (H/2)*(W/2), C1+C2)

    h = image_nchw.shape[2] // 2
    w = image_nchw.shape[3] // 2
    y = y.reshape(n, h, w, c1 + c2)

    # Both second-layer convs in one pallas_call -> (2, N, h*w, 128); this
    # layout feeds the bilinear head directly (no NHWC->NCHW relayout).
    feats = conv3x3_relu_pair(y, (params['w1b'], params['w2b']),
                              (params['b1b'], params['b2b']))

    fc_w = params['fc_w'].reshape(c1, c2).astype(jnp.float32)
    fc_b = params['fc_b'].reshape(1, 1).astype(jnp.float32)
    return bilinear_head(feats[0], feats[1], fc_w, fc_b)


# ---------------------------- Pure-JAX reference ----------------------------

def _im2col3x3(x_nhwc):
    n, h, w, c = x_nhwc.shape
    xp = jnp.pad(x_nhwc, ((0, 0), (1, 1), (1, 1), (0, 0)))
    cols = [xp[:, dh:dh + h, dw:dw + w, :] for dh in range(3) for dw in range(3)]
    return jnp.concatenate(cols, axis=-1).reshape(n * h * w, 9 * c)


def _weight_oihw_to_mat(w_oihw):
    cout = w_oihw.shape[0]
    return jnp.transpose(w_oihw, (2, 3, 1, 0)).reshape(-1, cout)


def maxpool2x2(x_nhwc):
    n, h, w, c = x_nhwc.shape
    return jnp.max(x_nhwc.reshape(n, h // 2, 2, w // 2, 2, c), axis=(2, 4))


def _conv_ref(x_nhwc, w_oihw, b):
    n, h, w, _ = x_nhwc.shape
    cout = w_oihw.shape[0]
    a = _im2col3x3(x_nhwc)
    wm = _weight_oihw_to_mat(w_oihw)
    out = jnp.maximum(
        jnp.dot(a, wm, precision=jax.lax.Precision.HIGHEST) + b.reshape(1, cout), 0.0)
    return out.reshape(n, h, w, cout)


def dbcnn_reference(params, image_nchw):
    x = jnp.transpose(image_nchw, (0, 2, 3, 1)).astype(jnp.float32)
    f1 = _conv_ref(x, params['w1a'], params['b1a'])
    f1 = maxpool2x2(f1)
    f1 = _conv_ref(f1, params['w1b'], params['b1b'])
    f2 = _conv_ref(x, params['w2a'], params['b2a'])
    f2 = maxpool2x2(f2)
    f2 = _conv_ref(f2, params['w2b'], params['b2b'])
    n, h, w, c1 = f1.shape
    c2 = f2.shape[-1]
    x1 = jnp.transpose(f1, (0, 3, 1, 2)).reshape(n, c1, h * w)
    x2 = jnp.transpose(f2, (0, 3, 1, 2)).reshape(n, c2, h * w)
    g = jnp.einsum('nck,ndk->ncd', x1, x2,
                   precision=jax.lax.Precision.HIGHEST) / float(h * w)
    f = jnp.sqrt(g + 1e-8).reshape(n, c1 * c2)
    nrm = jnp.sqrt(jnp.sum(f * f, axis=1, keepdims=True))
    fn = f / jnp.maximum(nrm, 1e-12)
    return fn @ params['fc_w'].T + params['fc_b'].reshape(1, 1)


# --------------------------------- Params -----------------------------------

def init_params(key):
    ks = jax.random.split(key, 10)

    def w(k, shape, scale):
        return (scale * jax.random.normal(k, shape)).astype(jnp.float32)

    c1, c2 = 128, 128   # lane-dense; real DBCNN uses C1=512 (VGG16), C2=128 (SCNN)
    return {
        'w1a': w(ks[0], (c1, 3, 3, 3), (2.0 / 27) ** 0.5),
        'b1a': w(ks[1], (c1,), 0.01),
        'w1b': w(ks[2], (c1, c1, 3, 3), (2.0 / (9 * c1)) ** 0.5),
        'b1b': w(ks[3], (c1,), 0.01),
        'w2a': w(ks[4], (c2, 3, 3, 3), (2.0 / 27) ** 0.5),
        'b2a': w(ks[5], (c2,), 0.01),
        'w2b': w(ks[6], (c2, c2, 3, 3), (2.0 / (9 * c2)) ** 0.5),
        'b2b': w(ks[7], (c2,), 0.01),
        'fc_w': w(ks[8], (1, c1 * c2), 0.05),
        'fc_b': w(ks[9], (1,), 0.01),
    }


if __name__ == "__main__":
    key = jax.random.PRNGKey(0)
    pkey, ikey = jax.random.split(key)
    params = init_params(pkey)

    # image: NCHW, float32 in [0,1], like the PyTorch metric input
    image = jax.random.uniform(ikey, (2, 3, 32, 32), dtype=jnp.float32)

    scores = jax.block_until_ready(dbcnn_forward(params, image))
    ref = jax.block_until_ready(dbcnn_reference(params, image))

    assert scores.shape == (2, 1), scores.shape
    assert bool(jnp.all(jnp.isfinite(scores)))
    assert bool(jnp.allclose(scores, ref, rtol=5e-2, atol=1e-2)), (scores, ref)
    print("KERNEL_OK")
</pallas_src>

<mosaic_0001>
module attributes {stable_mosaic.version = 11 : i64} {
  func.func @_conv_pool_kernel(%arg0: i32, %arg1: memref<1x1088x9xbf16, #tpu.memory_space<vmem>>, %arg2: memref<3x9x256xbf16, #tpu.memory_space<vmem>>, %arg3: memref<1x256xf32, #tpu.memory_space<vmem>>, %arg4: memref<1x256x256xbf16, #tpu.memory_space<vmem>>) attributes {dimension_semantics = [#tpu.dimension_semantics<parallel>], iteration_bounds = array<i64: 2>, scalar_prefetch = 0 : i64, scratch_operands = 0 : i64, tpu.core_type = #tpu.core_type<tc>, window_params = [{transform_indices = @transform_0, window_bounds = array<i64: 1, 1088, 9>}, {pipeline_mode = #tpu.pipeline_mode<synchronous>, transform_indices = @transform_1, window_bounds = array<i64: 3, 9, 256>}, {pipeline_mode = #tpu.pipeline_mode<synchronous>, transform_indices = @transform_2, window_bounds = array<i64: 1, 256>}, {transform_indices = @transform_3, window_bounds = array<i64: 1, 256, 256>}]} {
    %c0 = arith.constant 0 : index
    %c0_0 = arith.constant 0 : index
    %c0_1 = arith.constant 0 : index
    %0 = vector.load %arg1[%c0, %c0_0, %c0_1] : memref<1x1088x9xbf16, #tpu.memory_space<vmem>>, vector<1x1024x9xbf16>
    %1 = vector.shape_cast %0 : vector<1x1024x9xbf16> to vector<1024x9xbf16>
    %c0_2 = arith.constant 0 : index
    %c0_3 = arith.constant 0 : index
    %c0_4 = arith.constant 0 : index
    %2 = vector.load %arg2[%c0_2, %c0_3, %c0_4] : memref<3x9x256xbf16, #tpu.memory_space<vmem>>, vector<1x9x256xbf16>
    %3 = vector.shape_cast %2 : vector<1x9x256xbf16> to vector<9x256xbf16>
    %cst = arith.constant dense<0.000000e+00> : vector<1024x256xf32>
    %4 = tpu.matmul %1, %3, %cst {dimension_numbers = #tpu.dot_dimension_numbers<[1], [0], [0], [1], [0, 0, 1, 1], [], []>} : vector<1024x9xbf16>, vector<9x256xbf16>, vector<1024x256xf32> -> vector<1024x256xf32>
    %c0_5 = arith.constant 0 : index
    %c32 = arith.constant 32 : index
    %c0_6 = arith.constant 0 : index
    %5 = vector.load %arg1[%c0_5, %c32, %c0_6] : memref<1x1088x9xbf16, #tpu.memory_space<vmem>>, vector<1x1024x9xbf16>
    %6 = vector.shape_cast %5 : vector<1x1024x9xbf16> to vector<1024x9xbf16>
    %c1 = arith.constant 1 : index
    %c0_7 = arith.constant 0 : index
    %c0_8 = arith.constant 0 : index
    %7 = vector.load %arg2[%c1, %c0_7, %c0_8] : memref<3x9x256xbf16, #tpu.memory_space<vmem>>, vector<1x9x256xbf16>
    %8 = vector.shape_cast %7 : vector<1x9x256xbf16> to vector<9x256xbf16>
    %cst_9 = arith.constant dense<0.000000e+00> : vector<1024x256xf32>
    %9 = tpu.matmul %6, %8, %cst_9 {dimension_numbers = #tpu.dot_dimension_numbers<[1], [0], [0], [1], [0, 0, 1, 1], [], []>} : vector<1024x9xbf16>, vector<9x256xbf16>, vector<1024x256xf32> -> vector<1024x256xf32>
    %10 = arith.addf %4, %9 : vector<1024x256xf32>
    %c0_10 = arith.constant 0 : index
    %c64 = arith.constant 64 : index
    %c0_11 = arith.constant 0 : index
    %11 = vector.load %arg1[%c0_10, %c64, %c0_11] : memref<1x1088x9xbf16, #tpu.memory_space<vmem>>, vector<1x1024x9xbf16>
    %12 = vector.shape_cast %11 : vector<1x1024x9xbf16> to vector<1024x9xbf16>
    %c2 = arith.constant 2 : index
    %c0_12 = arith.constant 0 : index
    %c0_13 = arith.constant 0 : index
    %13 = vector.load %arg2[%c2, %c0_12, %c0_13] : memref<3x9x256xbf16, #tpu.memory_space<vmem>>, vector<1x9x256xbf16>
    %14 = vector.shape_cast %13 : vector<1x9x256xbf16> to vector<9x256xbf16>
    %cst_14 = arith.constant dense<0.000000e+00> : vector<1024x256xf32>
    %15 = tpu.matmul %12, %14, %cst_14 {dimension_numbers = #tpu.dot_dimension_numbers<[1], [0], [0], [1], [0, 0, 1, 1], [], []>} : vector<1024x9xbf16>, vector<9x256xbf16>, vector<1024x256xf32> -> vector<1024x256xf32>
    %16 = arith.addf %10, %15 : vector<1024x256xf32>
    %c0_15 = arith.constant 0 : index
    %c0_16 = arith.constant 0 : index
    %17 = vector.load %arg3[%c0_15, %c0_16] : memref<1x256xf32, #tpu.memory_space<vmem>>, vector<1x256xf32>
    %18 = vector.broadcast %17 : vector<1x256xf32> to vector<1024x256xf32>
    %19 = arith.addf %16, %18 : vector<1024x256xf32>
    %cst_17 = arith.constant 0.000000e+00 : f32
    %20 = vector.broadcast %cst_17 : f32 to vector<1024x256xf32>
    %21 = arith.maximumf %19, %20 : vector<1024x256xf32>
    %22 = vector.shape_cast %21 : vector<1024x256xf32> to vector<16x64x256xf32>
    %23 = vector.extract_strided_slice %22 {offsets = [0, 0, 0], sizes = [16, 32, 256], strides = [1, 1, 1]} : vector<16x64x256xf32> to vector<16x32x256xf32>
    %24 = vector.extract_strided_slice %22 {offsets = [0, 32, 0], sizes = [16, 32, 256], strides = [1, 1, 1]} : vector<16x64x256xf32> to vector<16x32x256xf32>
    %25 = arith.maximumf %23, %24 : vector<16x32x256xf32>
    %26 = vector.extract_strided_slice %25 {offsets = [0, 0, 0], sizes = [16, 16, 256], strides = [1, 1, 1]} : vector<16x32x256xf32> to vector<16x16x256xf32>
    %27 = vector.extract_strided_slice %25 {offsets = [0, 16, 0], sizes = [16, 16, 256], strides = [1, 1, 1]} : vector<16x32x256xf32> to vector<16x16x256xf32>
    %28 = arith.maximumf %26, %27 : vector<16x16x256xf32>
    %29 = vector.shape_cast %28 : vector<16x16x256xf32> to vector<256x256xf32>
    %30 = arith.truncf %29 : vector<256x256xf32> to vector<256x256xbf16>
    %c0_18 = arith.constant 0 : index
    %c0_19 = arith.constant 0 : index
    %c0_20 = arith.constant 0 : index
    %31 = vector.load %arg4[%c0_18, %c0_19, %c0_20] : memref<1x256x256xbf16, #tpu.memory_space<vmem>>, vector<1x256x256xbf16>
    %32 = vector.shape_cast %31 : vector<1x256x256xbf16> to vector<256x256xbf16>
    %33 = vector.shape_cast %30 : vector<256x256xbf16> to vector<1x256x256xbf16>
    tpu.vector_store %arg4[%c0_18, %c0_19, %c0_20], %33 {strides = array<i32>} : memref<1x256x256xbf16, #tpu.memory_space<vmem>>, vector<1x256x256xbf16>,
    return
  }
  func.func @transform_0(%arg0: i32) -> (i32, i32, i32) {
    %c0_i32 = arith.constant 0 : i32
    %c0_i32_0 = arith.constant 0 : i32
    %c0_i32_1 = arith.constant 0 : i32
    return %arg0, %c0_i32, %c0_i32_0 : i32, i32, i32
  }
  func.func @transform_1(%arg0: i32) -> (i32, i32, i32) {
    %c0_i32 = arith.constant 0 : i32
    %c0_i32_0 = arith.constant 0 : i32
    %c0_i32_1 = arith.constant 0 : i32
    %c0_i32_2 = arith.constant 0 : i32
    return %c0_i32, %c0_i32_0, %c0_i32_1 : i32, i32, i32
  }
  func.func @transform_2(%arg0: i32) -> (i32, i32) {
    %c0_i32 = arith.constant 0 : i32
    %c0_i32_0 = arith.constant 0 : i32
    %c0_i32_1 = arith.constant 0 : i32
    return %c0_i32, %c0_i32_0 : i32, i32
  }
  func.func @transform_3(%arg0: i32) -> (i32, i32, i32) {
    %c0_i32 = arith.constant 0 : i32
    %c0_i32_0 = arith.constant 0 : i32
    %c0_i32_1 = arith.constant 0 : i32
    return %arg0, %c0_i32, %c0_i32_0 : i32, i32, i32
  }
}

module attributes {stable_mosaic.version = 11 : i64} {
  func.func @_conv_kernel(%arg0: i32, %arg1: i32, %arg2: memref<1x1x288x384xbf16, #tpu.memory_space<vmem>>, %arg3: memref<1x3x384x128xbf16, #tpu.memory_space<vmem>>, %arg4: memref<1x1x128xf32, #tpu.memory_space<vmem>>, %arg5: memref<1x1x256x128xbf16, #tpu.memory_space<vmem>>) attributes {dimension_semantics = [#tpu.dimension_semantics<parallel>, #tpu.dimension_semantics<parallel>], iteration_bounds = array<i64: 2, 2>, scalar_prefetch = 0 : i64, scratch_operands = 0 : i64, tpu.core_type = #tpu.core_type<tc>, window_params = [{transform_indices = @transform_0, window_bounds = array<i64: 1, 1, 288, 384>}, {transform_indices = @transform_1, window_bounds = array<i64: 1, 3, 384, 128>}, {transform_indices = @transform_2, window_bounds = array<i64: 1, 1, 128>}, {transform_indices = @transform_3, window_bounds = array<i64: 1, 1, 256, 128>}]} {
    %c0 = arith.constant 0 : index
    %c0_0 = arith.constant 0 : index
    %c0_1 = arith.constant 0 : index
    %c0_2 = arith.constant 0 : index
    %0 = vector.load %arg2[%c0, %c0_0, %c0_1, %c0_2] : memref<1x1x288x384xbf16, #tpu.memory_space<vmem>>, vector<1x1x256x384xbf16>
    %1 = vector.shape_cast %0 : vector<1x1x256x384xbf16> to vector<256x384xbf16>
    %c0_3 = arith.constant 0 : index
    %c0_4 = arith.constant 0 : index
    %c0_5 = arith.constant 0 : index
    %c0_6 = arith.constant 0 : index
    %2 = vector.load %arg3[%c0_3, %c0_4, %c0_5, %c0_6] : memref<1x3x384x128xbf16, #tpu.memory_space<vmem>>, vector<1x1x384x128xbf16>
    %3 = vector.shape_cast %2 : vector<1x1x384x128xbf16> to vector<384x128xbf16>
    %cst = arith.constant dense<0.000000e+00> : vector<256x128xf32>
    %4 = tpu.matmul %1, %3, %cst {dimension_numbers = #tpu.dot_dimension_numbers<[1], [0], [0], [1], [0, 0, 1, 1], [], []>} : vector<256x384xbf16>, vector<384x128xbf16>, vector<256x128xf32> -> vector<256x128xf32>
    %c0_7 = arith.constant 0 : index
    %c0_8 = arith.constant 0 : index
    %c16 = arith.constant 16 : index
    %c0_9 = arith.constant 0 : index
    %5 = vector.load %arg2[%c0_7, %c0_8, %c16, %c0_9] : memref<1x1x288x384xbf16, #tpu.memory_space<vmem>>, vector<1x1x256x384xbf16>
    %6 = vector.shape_cast %5 : vector<1x1x256x384xbf16> to vector<256x384xbf16>
    %c0_10 = arith.constant 0 : index
    %c1 = arith.constant 1 : index
    %c0_11 = arith.constant 0 : index
    %c0_12 = arith.constant 0 : index
    %7 = vector.load %arg3[%c0_10, %c1, %c0_11, %c0_12] : memref<1x3x384x128xbf16, #tpu.memory_space<vmem>>, vector<1x1x384x128xbf16>
    %8 = vector.shape_cast %7 : vector<1x1x384x128xbf16> to vector<384x128xbf16>
    %cst_13 = arith.constant dense<0.000000e+00> : vector<256x128xf32>
    %9 = tpu.matmul %6, %8, %cst_13 {dimension_numbers = #tpu.dot_dimension_numbers<[1], [0], [0], [1], [0, 0, 1, 1], [], []>} : vector<256x384xbf16>, vector<384x128xbf16>, vector<256x128xf32> -> vector<256x128xf32>
    %10 = arith.addf %4, %9 : vector<256x128xf32>
    %c0_14 = arith.constant 0 : index
    %c0_15 = arith.constant 0 : index
    %c32 = arith.constant 32 : index
    %c0_16 = arith.constant 0 : index
    %11 = vector.load %arg2[%c0_14, %c0_15, %c32, %c0_16] : memref<1x1x288x384xbf16, #tpu.memory_space<vmem>>, vector<1x1x256x384xbf16>
    %12 = vector.shape_cast %11 : vector<1x1x256x384xbf16> to vector<256x384xbf16>
    %c0_17 = arith.constant 0 : index
    %c2 = arith.constant 2 : index
    %c0_18 = arith.constant 0 : index
    %c0_19 = arith.constant 0 : index
    %13 = vector.load %arg3[%c0_17, %c2, %c0_18, %c0_19] : memref<1x3x384x128xbf16, #tpu.memory_space<vmem>>, vector<1x1x384x128xbf16>
    %14 = vector.shape_cast %13 : vector<1x1x384x128xbf16> to vector<384x128xbf16>
    %cst_20 = arith.constant dense<0.000000e+00> : vector<256x128xf32>
    %15 = tpu.matmul %12, %14, %cst_20 {dimension_numbers = #tpu.dot_dimension_numbers<[1], [0], [0], [1], [0, 0, 1, 1], [], []>} : vector<256x384xbf16>, vector<384x128xbf16>, vector<256x128xf32> -> vector<256x128xf32>
    %16 = arith.addf %10, %15 : vector<256x128xf32>
    %c0_21 = arith.constant 0 : index
    %c0_22 = arith.constant 0 : index
    %c0_23 = arith.constant 0 : index
    %17 = vector.load %arg4[%c0_21, %c0_22, %c0_23] : memref<1x1x128xf32, #tpu.memory_space<vmem>>, vector<1x1x128xf32>
    %18 = vector.shape_cast %17 : vector<1x1x128xf32> to vector<1x128xf32>
    %19 = vector.broadcast %18 : vector<1x128xf32> to vector<256x128xf32>
    %20 = arith.addf %16, %19 : vector<256x128xf32>
    %cst_24 = arith.constant 0.000000e+00 : f32
    %21 = vector.broadcast %cst_24 : f32 to vector<256x128xf32>
    %22 = arith.maximumf %20, %21 : vector<256x128xf32>
    %23 = arith.truncf %22 : vector<256x128xf32> to vector<256x128xbf16>
    %c0_25 = arith.constant 0 : index
    %c0_26 = arith.constant 0 : index
    %c0_27 = arith.constant 0 : index
    %c0_28 = arith.constant 0 : index
    %24 = vector.load %arg5[%c0_25, %c0_26, %c0_27, %c0_28] : memref<1x1x256x128xbf16, #tpu.memory_space<vmem>>, vector<1x1x256x128xbf16>
    %25 = vector.shape_cast %24 : vector<1x1x256x128xbf16> to vector<256x128xbf16>
    %26 = vector.shape_cast %23 : vector<256x128xbf16> to vector<1x1x256x128xbf16>
    tpu.vector_store %arg5[%c0_25, %c0_26, %c0_27, %c0_28], %26 {strides = array<i32>} : memref<1x1x256x128xbf16, #tpu.memory_space<vmem>>, vector<1x1x256x128xbf16>,
    return
  }
  func.func @transform_0(%arg0: i32, %arg1: i32) -> (i32, i32, i32, i32) {
    %c0_i32 = arith.constant 0 : i32
    %c0_i32_0 = arith.constant 0 : i32
    %c0_i32_1 = arith.constant 0 : i32
    return %arg0, %arg1, %c0_i32, %c0_i32_0 : i32, i32, i32, i32
  }
  func.func @transform_1(%arg0: i32, %arg1: i32) -> (i32, i32, i32, i32) {
    %c0_i32 = arith.constant 0 : i32
    %c0_i32_0 = arith.constant 0 : i32
    %c0_i32_1 = arith.constant 0 : i32
    %c0_i32_2 = arith.constant 0 : i32
    return %arg0, %c0_i32, %c0_i32_0, %c0_i32_1 : i32, i32, i32, i32
  }
  func.func @transform_2(%arg0: i32, %arg1: i32) -> (i32, i32, i32) {
    %c0_i32 = arith.constant 0 : i32
    %c0_i32_0 = arith.constant 0 : i32
    %c0_i32_1 = arith.constant 0 : i32
    return %arg0, %c0_i32, %c0_i32_0 : i32, i32, i32
  }
  func.func @transform_3(%arg0: i32, %arg1: i32) -> (i32, i32, i32, i32) {
    %c0_i32 = arith.constant 0 : i32
    %c0_i32_0 = arith.constant 0 : i32
    %c0_i32_1 = arith.constant 0 : i32
    return %arg0, %arg1, %c0_i32, %c0_i32_0 : i32, i32, i32, i32
  }
}

module attributes {stable_mosaic.version = 11 : i64} {
  func.func @_bilinear_head_kernel(%arg0: i32, %arg1: i32, %arg2: memref<1x128x128xbf16, #tpu.memory_space<vmem>>, %arg3: memref<1x128x128xbf16, #tpu.memory_space<vmem>>, %arg4: memref<128x128xf32, #tpu.memory_space<vmem>>, %arg5: memref<1x1xf32, #tpu.memory_space<vmem>>, %arg6: memref<1x8x128xf32, #tpu.memory_space<vmem>>, %arg7: memref<128x128xf32, #tpu.memory_space<vmem>>) attributes {dimension_semantics = [#tpu.dimension_semantics<parallel>, #tpu.dimension_semantics<arbitrary>], iteration_bounds = array<i64: 2, 2>, scalar_prefetch = 0 : i64, scratch_operands = 1 : i64, tpu.core_type = #tpu.core_type<tc>, window_params = [{transform_indices = @transform_0, window_bounds = array<i64: 1, 128, 128>}, {transform_indices = @transform_1, window_bounds = array<i64: 1, 128, 128>}, {pipeline_mode = #tpu.pipeline_mode<synchronous>, transform_indices = @transform_2, window_bounds = array<i64: 128, 128>}, {pipeline_mode = #tpu.pipeline_mode<synchronous>, transform_indices = @transform_3, window_bounds = array<i64: 1, 1>}, {transform_indices = @transform_4, window_bounds = array<i64: 1, 8, 128>}]} {
    %c0_i32 = arith.constant 0 : i32
    %0 = arith.cmpi eq, %arg1, %c0_i32 : i32
    %1 = arith.extui %0 : i1 to i32
    %c0_i32_0 = arith.constant 0 : i32
    %2 = arith.cmpi ne, %1, %c0_i32_0 : i32
    scf.if %2 {
      %cst_11 = arith.constant 0.000000e+00 : f32
      %17 = vector.broadcast %cst_11 : f32 to vector<128x128xf32>
      %c0_12 = arith.constant 0 : index
      %c0_13 = arith.constant 0 : index
      %18 = vector.load %arg7[%c0_12, %c0_13] : memref<128x128xf32, #tpu.memory_space<vmem>>, vector<128x128xf32>
      tpu.vector_store %arg7[%c0_12, %c0_13], %17 {strides = array<i32>} : memref<128x128xf32, #tpu.memory_space<vmem>>, vector<128x128xf32>,
    } else {
    }
    %c0 = arith.constant 0 : index
    %c0_1 = arith.constant 0 : index
    %c0_2 = arith.constant 0 : index
    %3 = vector.load %arg2[%c0, %c0_1, %c0_2] : memref<1x128x128xbf16, #tpu.memory_space<vmem>>, vector<1x128x128xbf16>
    %4 = vector.shape_cast %3 : vector<1x128x128xbf16> to vector<128x128xbf16>
    %5 = arith.extf %4 : vector<128x128xbf16> to vector<128x128xf32>
    %6 = tpu.transpose %5, [1, 0] : vector<128x128xf32> -> vector<128x128xf32>
    %c0_3 = arith.constant 0 : index
    %c0_4 = arith.constant 0 : index
    %c0_5 = arith.constant 0 : index
    %7 = vector.load %arg3[%c0_3, %c0_4, %c0_5] : memref<1x128x128xbf16, #tpu.memory_space<vmem>>, vector<1x128x128xbf16>
    %8 = vector.shape_cast %7 : vector<1x128x128xbf16> to vector<128x128xbf16>
    %9 = arith.extf %8 : vector<128x128xbf16> to vector<128x128xf32>
    %c0_6 = arith.constant 0 : index
    %c0_7 = arith.constant 0 : index
    %10 = vector.load %arg7[%c0_6, %c0_7] : memref<128x128xf32, #tpu.memory_space<vmem>>, vector<128x128xf32>
    %cst = arith.constant dense<0.000000e+00> : vector<128x128xf32>
    %11 = tpu.matmul %6, %9, %cst {dimension_numbers = #tpu.dot_dimension_numbers<[1], [0], [0], [1], [0, 0, 1, 1], [], []>} : vector<128x128xf32>, vector<128x128xf32>, vector<128x128xf32> -> vector<128x128xf32>
    %12 = arith.addf %10, %11 : vector<128x128xf32>
    %c0_8 = arith.constant 0 : index
    %c0_9 = arith.constant 0 : index
    %13 = vector.load %arg7[%c0_8, %c0_9] : memref<128x128xf32, #tpu.memory_space<vmem>>, vector<128x128xf32>
    tpu.vector_store %arg7[%c0_8, %c0_9], %12 {strides = array<i32>} : memref<128x128xf32, #tpu.memory_space<vmem>>, vector<128x128xf32>,
    %c1_i32 = arith.constant 1 : i32
    %14 = arith.cmpi eq, %arg1, %c1_i32 : i32
    %15 = arith.extui %14 : i1 to i32
    %c0_i32_10 = arith.constant 0 : i32
    %16 = arith.cmpi ne, %15, %c0_i32_10 : i32
    scf.if %16 {
      %c0_11 = arith.constant 0 : index
      %c0_12 = arith.constant 0 : index
      %17 = vector.load %arg7[%c0_11, %c0_12] : memref<128x128xf32, #tpu.memory_space<vmem>>, vector<128x128xf32>
      %cst_13 = arith.constant dense<0.000000e+00> : vector<128xf32>
      %18 = vector.multi_reduction <add>, %17, %cst_13 [1] : vector<128x128xf32> to vector<128xf32>
      %19 = vector.shape_cast %18 : vector<128xf32> to vector<128x1xf32>
      %cst_14 = arith.constant dense<0.000000e+00> : vector<1xf32>
      %20 = vector.multi_reduction <add>, %19, %cst_14 [0] : vector<128x1xf32> to vector<1xf32>
      %21 = vector.shape_cast %20 : vector<1xf32> to vector<1x1xf32>
      %cst_15 = arith.constant 3.906250e-03 : f32
      %22 = vector.broadcast %cst_15 : f32 to vector<1x1xf32>
      %23 = arith.mulf %22, %21 : vector<1x1xf32>
      %cst_16 = arith.constant 1.638400e-04 : f32
      %24 = vector.broadcast %cst_16 : f32 to vector<1x1xf32>
      %25 = arith.addf %23, %24 : vector<1x1xf32>
      %cst_17 = arith.constant 3.906250e-03 : f32
      %26 = vector.broadcast %cst_17 : f32 to vector<128x128xf32>
      %27 = arith.mulf %17, %26 : vector<128x128xf32>
      %cst_18 = arith.constant 9.99999993E-9 : f32
      %28 = vector.broadcast %cst_18 : f32 to vector<128x128xf32>
      %29 = arith.addf %27, %28 : vector<128x128xf32>
      %30 = math.sqrt %29 : vector<128x128xf32>
      %c0_19 = arith.constant 0 : index
      %c0_20 = arith.constant 0 : index
      %31 = vector.load %arg4[%c0_19, %c0_20] : memref<128x128xf32, #tpu.memory_space<vmem>>, vector<128x128xf32>
      %32 = arith.mulf %30, %31 : vector<128x128xf32>
      %cst_21 = arith.constant dense<0.000000e+00> : vector<128xf32>
      %33 = vector.multi_reduction <add>, %32, %cst_21 [1] : vector<128x128xf32> to vector<128xf32>
      %34 = vector.shape_cast %33 : vector<128xf32> to vector<128x1xf32>
      %cst_22 = arith.constant dense<0.000000e+00> : vector<1xf32>
      %35 = vector.multi_reduction <add>, %34, %cst_22 [0] : vector<128x1xf32> to vector<1xf32>
      %36 = vector.shape_cast %35 : vector<1xf32> to vector<1x1xf32>
      %37 = math.rsqrt %25 : vector<1x1xf32>
      %38 = arith.mulf %36, %37 : vector<1x1xf32>
      %c0_23 = arith.constant 0 : index
      %c0_24 = arith.constant 0 : index
      %39 = vector.load %arg5[%c0_23, %c0_24] : memref<1x1xf32, #tpu.memory_space<vmem>>, vector<1x1xf32>
      %40 = arith.addf %38, %39 : vector<1x1xf32>
      %41 = vector.shape_cast %40 : vector<1x1xf32> to vector<1x1x1xf32>
      %42 = vector.broadcast %41 : vector<1x1x1xf32> to vector<1x8x128xf32>
      %c0_25 = arith.constant 0 : index
      %c0_26 = arith.constant 0 : index
      %c0_27 = arith.constant 0 : index
      %43 = vector.load %arg6[%c0_25, %c0_26, %c0_27] : memref<1x8x128xf32, #tpu.memory_space<vmem>>, vector<1x8x128xf32>
      tpu.vector_store %arg6[%c0_25, %c0_26, %c0_27], %42 {strides = array<i32>} : memref<1x8x128xf32, #tpu.memory_space<vmem>>, vector<1x8x128xf32>,
    } else {
    }
    return
  }
  func.func @transform_0(%arg0: i32, %arg1: i32) -> (i32, i32, i32) {
    %c0_i32 = arith.constant 0 : i32
    %c0_i32_0 = arith.constant 0 : i32
    return %arg0, %arg1, %c0_i32 : i32, i32, i32
  }
  func.func @transform_1(%arg0: i32, %arg1: i32) -> (i32, i32, i32) {
    %c0_i32 = arith.constant 0 : i32
    %c0_i32_0 = arith.constant 0 : i32
    return %arg0, %arg1, %c0_i32 : i32, i32, i32
  }
  func.func @transform_2(%arg0: i32, %arg1: i32) -> (i32, i32) {
    %c0_i32 = arith.constant 0 : i32
    %c0_i32_0 = arith.constant 0 : i32
    %c0_i32_1 = arith.constant 0 : i32
    return %c0_i32, %c0_i32_0 : i32, i32
  }
  func.func @transform_3(%arg0: i32, %arg1: i32) -> (i32, i32) {
    %c0_i32 = arith.constant 0 : i32
    %c0_i32_0 = arith.constant 0 : i32
    %c0_i32_1 = arith.constant 0 : i32
    return %c0_i32, %c0_i32_0 : i32, i32
  }
  func.func @transform_4(%arg0: i32, %arg1: i32) -> (i32, i32, i32) {
    %c0_i32 = arith.constant 0 : i32
    %c0_i32_0 = arith.constant 0 : i32
    %c0_i32_1 = arith.constant 0 : i32
    return %arg0, %c0_i32, %c0_i32_0 : i32, i32, i32
  }
}

</mosaic_0001>

<llo_original>
// kernel: dbcnn_forward.3
$region0: #{dbcnn_forward.3}
  #allocation0 [shape = 'u32[]', space=smem, size = 0x4, offset = 0x4, fixed_abs, tag = 'smem constant byte address 0x4 - core index']
  #allocation1 [shape = 'u32[144,128]{1,0:T(1,128)}', space=vmem, size = 0x12000, scoped, tag = 'internal scratch']
  %s0 = inlined_call_operand.vmem [shape: bf16[2,1088,9], index: 0, kind: input, shape index: {}]
  %s1 = inlined_call_operand.vmem [shape: bf16[3,9,256], index: 1, kind: input, shape index: {}]
  %s2 = inlined_call_operand.vmem [shape: f32[1,256], index: 2, kind: input, shape index: {}]
  %s3 = inlined_call_operand.vmem [shape: bf16[2,256,256], index: 3, kind: output, shape index: {}]
  %s4 = sld [smem:[#allocation0]]
  $region45: #{dbcnn_forward.3} parent=0
    _
  %s6 = ssub.s32 1, %s4
  %s7 = scalar_select 0, %s6, %s4
  loop: start=0, step=1, limit=4
  $region2: #{dbcnn_forward.3} parent=0 // loop_pre_header
    _
  $region3: #{dbcnn_forward.3} parent=0 // loop_header
    %s9 = sphi 0, %s13
    %p10 = scmp.ge.s32.totalorder %s9, 4
    %s19 = sphi 0, %s21
    %s22 = sphi 0, %s19
    %s23 = sphi 0, %s22
    %s39 = sphi 0, %s23
    %s43 = sphi 0, %s43
    %s45 = sphi 0, %s43
    %s46 = sphi 0, %s45
    %s60 = sphi 0, %s46
    %s64 = sphi 0, %s64
    %s66 = sphi 0, %s64
    %s67 = sphi 0, %s66
    %s81 = sphi 0, %s67
    %s87 = sphi 0, %s89
    %s90 = sphi 0, %s87
    %s91 = sphi 0, %s90
    %s107 = sphi 0, %s91
  $region4: #{dbcnn_forward.3} parent=0 // loop_header_branch
    %12 = sbr.rel (%p10) target = $region8
  $region5: #{dbcnn_forward.3} parent=0 // loop_body
    %s14 = ssub.s32 %s9, 1
    %s15 = ssub.s32 %s9, 2
    %s16 = sadd.s32 %s9, 1
    %s17 = ssub.s32 %s9, %s16
    %p18 = scmp.eq.s32.totalorder %s17, 0
    %s20 = sadd.s32 %s19, 1
    %s21 = scalar_select %p18, %s19, %s20
    %p24 = pneg %p18
    %p25 = scmp.eq.s32.totalorder %s9, 1
    %p26 = por %p24, %p25
    %p27 = scmp.ne.s32.totalorder %s19, %s22
    %p28 = scmp.eq.s32.totalorder %s9, 0
    %p29 = por %p27, %p28
    %p30 = scmp.ne.s32.totalorder %s19, %s22
    %p31 = scmp.eq.s32.totalorder %s14, 1
    %p32 = por %p30, %p31
    %p33 = scmp.ne.s32.totalorder %s22, %s23
    %p34 = scmp.eq.s32.totalorder %s14, 0
    %p35 = por %p33, %p34
    %p36 = scmp.ne.s32.totalorder %s22, %s23
    %p37 = scmp.eq.s32.totalorder %s15, 1
    %p38 = por %p36, %p37
    %p40 = scmp.ne.s32.totalorder %s23, %s39
    %p41 = scmp.eq.s32.totalorder %s15, 0
    %p42 = por %p40, %p41
    %s44 = sadd.s32 %s43, 1
    %p47 = scmp.eq.s32.totalorder %s9, 1
    %p48 = scmp.ne.s32.totalorder %s43, %s45
    %p49 = scmp.eq.s32.totalorder %s9, 0
    %p50 = por %p48, %p49
    %p51 = scmp.ne.s32.totalorder %s43, %s45
    %p52 = scmp.eq.s32.totalorder %s14, 1
    %p53 = por %p51, %p52
    %p54 = scmp.ne.s32.totalorder %s45, %s46
    %p55 = scmp.eq.s32.totalorder %s14, 0
    %p56 = por %p54, %p55
    %p57 = scmp.ne.s32.totalorder %s45, %s46
    %p58 = scmp.eq.s32.totalorder %s15, 1
    %p59 = por %p57, %p58
    %p61 = scmp.ne.s32.totalorder %s46, %s60
    %p62 = scmp.eq.s32.totalorder %s15, 0
    %p63 = por %p61, %p62
    %s65 = sadd.s32 %s64, 1
    %p68 = scmp.eq.s32.totalorder %s9, 1
    %p69 = scmp.ne.s32.totalorder %s64, %s66
    %p70 = scmp.eq.s32.totalorder %s9, 0
    %p71 = por %p69, %p70
    %p72 = scmp.ne.s32.totalorder %s64, %s66
    %p73 = scmp.eq.s32.totalorder %s14, 1
    %p74 = por %p72, %p73
    %p75 = scmp.ne.s32.totalorder %s66, %s67
    %p76 = scmp.eq.s32.totalorder %s14, 0
    %p77 = por %p75, %p76
    %p78 = scmp.ne.s32.totalorder %s66, %s67
    %p79 = scmp.eq.s32.totalorder %s15, 1
    %p80 = por %p78, %p79
    %p82 = scmp.ne.s32.totalorder %s67, %s81
    %p83 = scmp.eq.s32.totalorder %s15, 0
    %p84 = por %p82, %p83
    %s85 = ssub.s32 %s9, %s16
    %p86 = scmp.eq.s32.totalorder %s85, 0
    %s88 = sadd.s32 %s87, 1
    %s89 = scalar_select %p86, %s87, %s88
    %p92 = pneg %p86
    %p93 = scmp.eq.s32.totalorder %s9, 1
    %p94 = por %p92, %p93
    %p95 = scmp.ne.s32.totalorder %s87, %s90
    %p96 = scmp.eq.s32.totalorder %s9, 0
    %p97 = por %p95, %p96
    %p98 = scmp.ne.s32.totalorder %s87, %s90
    %p99 = scmp.eq.s32.totalorder %s14, 1
    %p100 = por %p98, %p99
    %p101 = scmp.ne.s32.totalorder %s90, %s91
    %p102 = scmp.eq.s32.totalorder %s14, 0
    %p103 = por %p101, %p102
    %p104 = scmp.ne.s32.totalorder %s90, %s91
    %p105 = scmp.eq.s32.totalorder %s15, 1
    %p106 = por %p104, %p105
    %p108 = scmp.ne.s32.totalorder %s91, %s107
    %p109 = scmp.eq.s32.totalorder %s15, 0
    %p110 = por %p108, %p109
    %p111 = scmp.le.s32.totalorder 1, %s9
    %p112 = scmp.lt.s32.totalorder %s9, 3
    %p113 = pnand %p111, %p112
    %p114 = pneg %p113
    // Predicated region
    $region9: #{dbcnn_forward.3} parent=5 // pred_check
      _
    $region10: #{dbcnn_forward.3} parent=5 // pred_check_branch
      %116 = sbr.rel (%p113) target = $region12
    $region11: #{dbcnn_forward.3} parent=5 // pred_region
      %s117 = ssub.s32 %s9, 1
      // Predicated region
      $region13: #{dbcnn_forward.3} parent=11 // pred_check
        %p118 = pneg %p56
      $region14: #{dbcnn_forward.3} parent=11 // pred_check_branch
        %120 = sbr.rel (%p118) target = $region16
      $region15: #{dbcnn_forward.3} parent=11 // pred_region
        _
      $region16: #{dbcnn_forward.3} parent=11 // pred_fallthru
        _
      // Predicated region
      $region17: #{dbcnn_forward.3} parent=11 // pred_check
        %p121 = pneg %p77
      $region18: #{dbcnn_forward.3} parent=11 // pred_check_branch
        %123 = sbr.rel (%p121) target = $region20
      $region19: #{dbcnn_forward.3} parent=11 // pred_region
        _
      $region20: #{dbcnn_forward.3} parent=11 // pred_fallthru
        _
    $region12: #{dbcnn_forward.3} parent=5 // pred_fallthru
      _
    %p124 = scmp.lt.s32.totalorder %s9, 2
    // Predicated region
    $region21: #{dbcnn_forward.3} parent=5 // pred_check
      %p125 = pneg %p124
    $region22: #{dbcnn_forward.3} parent=5 // pred_check_branch
      %127 = sbr.rel (%p125) target = $region24
    $region23: #{dbcnn_forward.3} parent=5 // pred_region
      // Predicated region
      $region25: #{dbcnn_forward.3} parent=23 // pred_check
        %p128 = pneg %p29
      $region26: #{dbcnn_forward.3} parent=23 // pred_check_branch
        %130 = sbr.rel (%p128) target = $region28
      $region27: #{dbcnn_forward.3} parent=23 // pred_region
        %p131 = scmp.lt.s32.totalorder %s9, 1
        %s132 = scalar_select %p131, %s9, 1
        %s133 = smul.addr %s132, 136
        %s134 = smul.addr %s133, 4
        %s135 = scalar_lea.vmem %s0, %s134
      $region28: #{dbcnn_forward.3} parent=23 // pred_fallthru
        _
    $region24: #{dbcnn_forward.3} parent=5 // pred_fallthru
      _
    %p136 = scmp.le.s32.totalorder 1, %s9
    %p137 = scmp.lt.s32.totalorder %s9, 3
    %p138 = pnand %p136, %p137
    %p139 = pneg %p138
    // Predicated region
    $region29: #{dbcnn_forward.3} parent=5 // pred_check
      _
    $region30: #{dbcnn_forward.3} parent=5 // pred_check_branch
      %141 = sbr.rel (%p138) target = $region32
    $region31: #{dbcnn_forward.3} parent=5 // pred_region
      %s142 = ssub.s32 %s9, 1
      %p143 = scmp.lt.s32.totalorder %s14, 1
      %s144 = scalar_select %p143, %s14, 1
      %s145 = smul.addr %s144, 136
      %s146 = smul.addr %s145, 4
      %s147 = scalar_lea.vmem %s0, %s146
      %p148 = pneg %p35
      %p149 = pneg %p32
      %p150 = pneg %p56
      %p151 = pneg %p53
      %p152 = pneg %p77
      %p153 = pneg %p74
      %p154 = pneg %p103
      %p155 = pneg %p100
      %p156 = scmp.lt.s32.totalorder %s14, 1
      %s157 = scalar_select %p156, %s14, 1
      %s158 = smul.addr %s157, 64
      %s159 = smul.addr %s158, 4
      %s160 = scalar_lea.vmem %s3, %s159
      %p161 = scmp.lt.s32.totalorder %s14, 1
      %s162 = scalar_select %p161, %s14, 1
      %s163 = smul.addr %s162, 136
      %s164 = smul.addr %s163, 4
      %s165 = scalar_lea.vmem %s0, %s164
      %p166 = scmp.lt.s32.totalorder %s14, 1
      %s167 = scalar_select %p166, %s14, 1
      %s168 = smul.addr %s167, 64
      %s169 = smul.addr %s168, 4
      %s170 = scalar_lea.vmem %s3, %s169
      %v172 = vld [vmem:[%s165] sm:$0xf]
      %v173 = vld [vmem:[%s165 + $0x4] sm:$0xf]
      %v174 = vld [vmem:[%s165 + $0x8] sm:$0xf]
      %v175 = vld [vmem:[%s165 + $0xc] sm:$0xf]
      %v176 = vld [vmem:[%s165 + $0x10] sm:$0xf]
      %v177 = vld [vmem:[%s165 + $0x14] sm:$0xf]
      %v178 = vld [vmem:[%s165 + $0x18] sm:$0xf]
      %v179 = vld [vmem:[%s165 + $0x1c] sm:$0xf]
      %v180 = vld [vmem:[%s165 + $0x20] sm:$0xf]
      %v181 = vld [vmem:[%s165 + $0x24] sm:$0xf]
      %v182 = vld [vmem:[%s165 + $0x28] sm:$0xf]
      %v183 = vld [vmem:[%s165 + $0x2c] sm:$0xf]
      %v184 = vld [vmem:[%s165 + $0x30] sm:$0xf]
      %v185 = vld [vmem:[%s165 + $0x34] sm:$0xf]
      %v186 = vld [vmem:[%s165 + $0x38] sm:$0xf]
      %v187 = vld [vmem:[%s165 + $0x3c] sm:$0xf]
      %v188 = vld [vmem:[%s165 + $0x40] sm:$0xf]
      %v189 = vld [vmem:[%s165 + $0x44] sm:$0xf]
      %v190 = vld [vmem:[%s165 + $0x48] sm:$0xf]
      %v191 = vld [vmem:[%s165 + $0x4c] sm:$0xf]
      %v192 = vld [vmem:[%s165 + $0x50] sm:$0xf]
      %v193 = vld [vmem:[%s165 + $0x54] sm:$0xf]
      %v194 = vld [vmem:[%s165 + $0x58] sm:$0xf]
      %v195 = vld [vmem:[%s165 + $0x5c] sm:$0xf]
      %v196 = vld [vmem:[%s165 + $0x60] sm:$0xf]
      %v197 = vld [vmem:[%s165 + $0x64] sm:$0xf]
      %v198 = vld [vmem:[%s165 + $0x68] sm:$0xf]
      %v199 = vld [vmem:[%s165 + $0x6c] sm:$0xf]
      %v200 = vld [vmem:[%s165 + $0x70] sm:$0xf]
      %v201 = vld [vmem:[%s165 + $0x74] sm:$0xf]
      %v202 = vld [vmem:[%s165 + $0x78] sm:$0xf]
      %v203 = vld [vmem:[%s165 + $0x7c] sm:$0xf]
      %v204 = vld [vmem:[%s165 + $0x80] sm:$0xf]
      %v205 = vld [vmem:[%s165 + $0x84] sm:$0xf]
      %v206 = vld [vmem:[%s165 + $0x88] sm:$0xf]
      %v207 = vld [vmem:[%s165 + $0x8c] sm:$0xf]
      %v208 = vld [vmem:[%s165 + $0x90] sm:$0xf]
      %v209 = vld [vmem:[%s165 + $0x94] sm:$0xf]
      %v210 = vld [vmem:[%s165 + $0x98] sm:$0xf]
      %v211 = vld [vmem:[%s165 + $0x9c] sm:$0xf]
      %v212 = vld [vmem:[%s165 + $0xa0] sm:$0xf]
      %v213 = vld [vmem:[%s165 + $0xa4] sm:$0xf]
      %v214 = vld [vmem:[%s165 + $0xa8] sm:$0xf]
      %v215 = vld [vmem:[%s165 + $0xac] sm:$0xf]
      %v216 = vld [vmem:[%s165 + $0xb0] sm:$0xf]
      %v217 = vld [vmem:[%s165 + $0xb4] sm:$0xf]
      %v218 = vld [vmem:[%s165 + $0xb8] sm:$0xf]
      %v219 = vld [vmem:[%s165 + $0xbc] sm:$0xf]
      %v220 = vld [vmem:[%s165 + $0xc0] sm:$0xf]
      %v221 = vld [vmem:[%s165 + $0xc4] sm:$0xf]
      %v222 = vld [vmem:[%s165 + $0xc8] sm:$0xf]
      %v223 = vld [vmem:[%s165 + $0xcc] sm:$0xf]
      %v224 = vld [vmem:[%s165 + $0xd0] sm:$0xf]
      %v225 = vld [vmem:[%s165 + $0xd4] sm:$0xf]
      %v226 = vld [vmem:[%s165 + $0xd8] sm:$0xf]
      %v227 = vld [vmem:[%s165 + $0xdc] sm:$0xf]
      %v228 = vld [vmem:[%s165 + $0xe0] sm:$0xf]
      %v229 = vld [vmem:[%s165 + $0xe4] sm:$0xf]
      %v230 = vld [vmem:[%s165 + $0xe8] sm:$0xf]
      %v231 = vld [vmem:[%s165 + $0xec] sm:$0xf]
      %v232 = vld [vmem:[%s165 + $0xf0] sm:$0xf]
      %v233 = vld [vmem:[%s165 + $0xf4] sm:$0xf]
      %v234 = vld [vmem:[%s165 + $0xf8] sm:$0xf]
      %v235 = vld [vmem:[%s165 + $0xfc] sm:$0xf]
      %v236 = vld [vmem:[%s165 + $0x100] sm:$0xf]
      %v237 = vld [vmem:[%s165 + $0x104] sm:$0xf]
      %v238 = vld [vmem:[%s165 + $0x108] sm:$0xf]
      %v239 = vld [vmem:[%s165 + $0x10c] sm:$0xf]
      %v240 = vld [vmem:[%s165 + $0x110] sm:$0xf]
      %v241 = vld [vmem:[%s165 + $0x114] sm:$0xf]
      %v242 = vld [vmem:[%s165 + $0x118] sm:$0xf]
      %v243 = vld [vmem:[%s165 + $0x11c] sm:$0xf]
      %v244 = vld [vmem:[%s165 + $0x120] sm:$0xf]
      %v245 = vld [vmem:[%s165 + $0x124] sm:$0xf]
      %v246 = vld [vmem:[%s165 + $0x128] sm:$0xf]
      %v247 = vld [vmem:[%s165 + $0x12c] sm:$0xf]
      %v248 = vld [vmem:[%s165 + $0x130] sm:$0xf]
      %v249 = vld [vmem:[%s165 + $0x134] sm:$0xf]
      %v250 = vld [vmem:[%s165 + $0x138] sm:$0xf]
      %v251 = vld [vmem:[%s165 + $0x13c] sm:$0xf]
      %v252 = vld [vmem:[%s165 + $0x140] sm:$0xf]
      %v253 = vld [vmem:[%s165 + $0x144] sm:$0xf]
      %v254 = vld [vmem:[%s165 + $0x148] sm:$0xf]
      %v255 = vld [vmem:[%s165 + $0x14c] sm:$0xf]
      %v256 = vld [vmem:[%s165 + $0x150] sm:$0xf]
      %v257 = vld [vmem:[%s165 + $0x154] sm:$0xf]
      %v258 = vld [vmem:[%s165 + $0x158] sm:$0xf]
      %v259 = vld [vmem:[%s165 + $0x15c] sm:$0xf]
      %v260 = vld [vmem:[%s165 + $0x160] sm:$0xf]
      %v261 = vld [vmem:[%s165 + $0x164] sm:$0xf]
      %v262 = vld [vmem:[%s165 + $0x168] sm:$0xf]
      %v263 = vld [vmem:[%s165 + $0x16c] sm:$0xf]
      %v264 = vld [vmem:[%s165 + $0x170] sm:$0xf]
      %v265 = vld [vmem:[%s165 + $0x174] sm:$0xf]
      %v266 = vld [vmem:[%s165 + $0x178] sm:$0xf]
      %v267 = vld [vmem:[%s165 + $0x17c] sm:$0xf]
      %v268 = vld [vmem:[%s165 + $0x180] sm:$0xf]
      %v269 = vld [vmem:[%s165 + $0x184] sm:$0xf]
      %v270 = vld [vmem:[%s165 + $0x188] sm:$0xf]
      %v271 = vld [vmem:[%s165 + $0x18c] sm:$0xf]
      %v272 = vld [vmem:[%s165 + $0x190] sm:$0xf]
      %v273 = vld [vmem:[%s165 + $0x194] sm:$0xf]
      %v274 = vld [vmem:[%s165 + $0x198] sm:$0xf]
      %v275 = vld [vmem:[%s165 + $0x19c] sm:$0xf]
      %v276 = vld [vmem:[%s165 + $0x1a0] sm:$0xf]
      %v277 = vld [vmem:[%s165 + $0x1a4] sm:$0xf]
      %v278 = vld [vmem:[%s165 + $0x1a8] sm:$0xf]
      %v279 = vld [vmem:[%s165 + $0x1ac] sm:$0xf]
      %v280 = vld [vmem:[%s165 + $0x1b0] sm:$0xf]
      %v281 = vld [vmem:[%s165 + $0x1b4] sm:$0xf]
      %v282 = vld [vmem:[%s165 + $0x1b8] sm:$0xf]
      %v283 = vld [vmem:[%s165 + $0x1bc] sm:$0xf]
      %v284 = vld [vmem:[%s165 + $0x1c0] sm:$0xf]
      %v285 = vld [vmem:[%s165 + $0x1c4] sm:$0xf]
      %v286 = vld [vmem:[%s165 + $0x1c8] sm:$0xf]
      %v287 = vld [vmem:[%s165 + $0x1cc] sm:$0xf]
      %v288 = vld [vmem:[%s165 + $0x1d0] sm:$0xf]
      %v289 = vld [vmem:[%s165 + $0x1d4] sm:$0xf]
      %v290 = vld [vmem:[%s165 + $0x1d8] sm:$0xf]
      %v291 = vld [vmem:[%s165 + $0x1dc] sm:$0xf]
      %v292 = vld [vmem:[%s165 + $0x1e0] sm:$0xf]
      %v293 = vld [vmem:[%s165 + $0x1e4] sm:$0xf]
      %v294 = vld [vmem:[%s165 + $0x1e8] sm:$0xf]
      %v295 = vld [vmem:[%s165 + $0x1ec] sm:$0xf]
      %v296 = vld [vmem:[%s165 + $0x1f0] sm:$0xf]
      %v297 = vld [vmem:[%s165 + $0x1f4] sm:$0xf]
      %v298 = vld [vmem:[%s165 + $0x1f8] sm:$0xf]
      %v299 = vld [vmem:[%s165 + $0x1fc] sm:$0xf]
      %v300 = vld [vmem:[%s1] sm:$0xff]
      %v301 = vld [vmem:[%s1 + $0x8] sm:$0x11]
      %v302 = vld [vmem:[%s165 + $0x200] sm:$0xf]
      %v303 = vld [vmem:[%s165 + $0x204] sm:$0xf]
      %v304 = vld [vmem:[%s165 + $0x208] sm:$0xf]
      %v305 = vld [vmem:[%s165 + $0x20c] sm:$0xf]
      %s306 = scalar_lea.vmem %s1, 16
      %v307 = vld [vmem:[%s306] sm:$0xff]
      %v308 = vld [vmem:[%s306 + $0x8] sm:$0x11]
      %v437 = vunpack.c.l.b16 %v176
      %v438 = vunpack.c.l.b16 %v177
      %v439 = vunpack.c.l.b16 %v178
      %v440 = vunpack.c.l.b16 %v179
      %v441 = vunpack.c.l.b16 %v180
      %v442 = vunpack.c.l.b16 %v181
      %v443 = vunpack.c.l.b16 %v182
      %v444 = vunpack.c.l.b16 %v183
      %v445 = vunpack.c.l.b16 %v184
      %v446 = vunpack.c.l.b16 %v185
      %v447 = vunpack.c.l.b16 %v186
      %v448 = vunpack.c.l.b16 %v187
      %v449 = vunpack.c.l.b16 %v188
      %v450 = vunpack.c.l.b16 %v189
      %v451 = vunpack.c.l.b16 %v190
      %v452 = vunpack.c.l.b16 %v191
      %v453 = vunpack.c.l.b16 %v192
      %v454 = vunpack.c.l.b16 %v193
      %v455 = vunpack.c.l.b16 %v194
      %v456 = vunpack.c.l.b16 %v195
      %v457 = vunpack.c.l.b16 %v196
      %v458 = vunpack.c.l.b16 %v197
      %v459 = vunpack.c.l.b16 %v198
      %v460 = vunpack.c.l.b16 %v199
      %v461 = vunpack.c.l.b16 %v200
      %v462 = vunpack.c.l.b16 %v201
      %v463 = vunpack.c.l.b16 %v202
      %v464 = vunpack.c.l.b16 %v203
      %v465 = vunpack.c.l.b16 %v204
      %v466 = vunpack.c.l.b16 %v205
      %v467 = vunpack.c.l.b16 %v206
      %v468 = vunpack.c.l.b16 %v207
      %v469 = vunpack.c.l.b16 %v208
      %v470 = vunpack.c.l.b16 %v209
      %v471 = vunpack.c.l.b16 %v210
      %v472 = vunpack.c.l.b16 %v211
      %v473 = vunpack.c.l.b16 %v212
      %v474 = vunpack.c.l.b16 %v213
      %v475 = vunpack.c.l.b16 %v214
      %v476 = vunpack.c.l.b16 %v215
      %v477 = vunpack.c.l.b16 %v216
      %v478 = vunpack.c.l.b16 %v217
      %v479 = vunpack.c.l.b16 %v218
      %v480 = vunpack.c.l.b16 %v219
      %v481 = vunpack.c.l.b16 %v220
      %v482 = vunpack.c.l.b16 %v221
      %v483 = vunpack.c.l.b16 %v222
      %v484 = vunpack.c.l.b16 %v223
      %v485 = vunpack.c.l.b16 %v224
      %v486 = vunpack.c.l.b16 %v225
      %v487 = vunpack.c.l.b16 %v226
      %v488 = vunpack.c.l.b16 %v227
      %v489 = vunpack.c.l.b16 %v228
      %v490 = vunpack.c.l.b16 %v229
      %v491 = vunpack.c.l.b16 %v230
      %v492 = vunpack.c.l.b16 %v231
      %v493 = vunpack.c.l.b16 %v232
      %v494 = vunpack.c.l.b16 %v233
      %v495 = vunpack.c.l.b16 %v234
      %v496 = vunpack.c.l.b16 %v235
      %v497 = vunpack.c.l.b16 %v236
      %v498 = vunpack.c.l.b16 %v237
      %v499 = vunpack.c.l.b16 %v238
      %v500 = vunpack.c.l.b16 %v239
      %v501 = vunpack.c.l.b16 %v240
      %v502 = vunpack.c.l.b16 %v241
      %v503 = vunpack.c.l.b16 %v242
      %v504 = vunpack.c.l.b16 %v243
      %v505 = vunpack.c.l.b16 %v244
      %v506 = vunpack.c.l.b16 %v245
      %v507 = vunpack.c.l.b16 %v246
      %v508 = vunpack.c.l.b16 %v247
      %v509 = vunpack.c.l.b16 %v248
      %v510 = vunpack.c.l.b16 %v249
      %v511 = vunpack.c.l.b16 %v250
      %v512 = vunpack.c.l.b16 %v251
      %v513 = vunpack.c.l.b16 %v252
      %v514 = vunpack.c.l.b16 %v253
      %v515 = vunpack.c.l.b16 %v254
      %v516 = vunpack.c.l.b16 %v255
      %v517 = vunpack.c.l.b16 %v256
      %v518 = vunpack.c.l.b16 %v257
      %v519 = vunpack.c.l.b16 %v258
      %v520 = vunpack.c.l.b16 %v259
      %v521 = vunpack.c.l.b16 %v260
      %v522 = vunpack.c.l.b16 %v261
      %v523 = vunpack.c.l.b16 %v262
      %v524 = vunpack.c.l.b16 %v263
      %v525 = vunpack.c.l.b16 %v264
      %v526 = vunpack.c.l.b16 %v265
      %v527 = vunpack.c.l.b16 %v266
      %v528 = vunpack.c.l.b16 %v267
      %v529 = vunpack.c.l.b16 %v268
      %v530 = vunpack.c.l.b16 %v269
      %v531 = vunpack.c.l.b16 %v270
      %v532 = vunpack.c.l.b16 %v271
      %v533 = vunpack.c.l.b16 %v272
      %v534 = vunpack.c.l.b16 %v273
      %v535 = vunpack.c.l.b16 %v274
      %v536 = vunpack.c.l.b16 %v275
      %v537 = vunpack.c.l.b16 %v276
      %v538 = vunpack.c.l.b16 %v277
      %v539 = vunpack.c.l.b16 %v278
      %v540 = vunpack.c.l.b16 %v279
      %v541 = vunpack.c.l.b16 %v280
      %v542 = vunpack.c.l.b16 %v281
      %v543 = vunpack.c.l.b16 %v282
      %v544 = vunpack.c.l.b16 %v283
      %v545 = vunpack.c.l.b16 %v284
      %v546 = vunpack.c.l.b16 %v285
      %v547 = vunpack.c.l.b16 %v286
      %v548 = vunpack.c.l.b16 %v287
      %v549 = vunpack.c.l.b16 %v288
      %v550 = vunpack.c.l.b16 %v289
      %v551 = vunpack.c.l.b16 %v290
      %v552 = vunpack.c.l.b16 %v291
      %v553 = vunpack.c.l.b16 %v292
      %v554 = vunpack.c.l.b16 %v293
      %v555 = vunpack.c.l.b16 %v294
      %v556 = vunpack.c.l.b16 %v295
      %v557 = vunpack.c.l.b16 %v296
      %v558 = vunpack.c.l.b16 %v297
      %v559 = vunpack.c.l.b16 %v298
      %v560 = vunpack.c.l.b16 %v299
      %v561 = vunpack.c.l.b16 %v302
      %v562 = vunpack.c.l.b16 %v303
      %v563 = vunpack.c.l.b16 %v304
      %v564 = vunpack.c.l.b16 %v305
      %v565 = vpack.c.b16 %v438, %v437
      %v566 = vpack.c.b16 %v440, %v439
      %v567 = vpack.c.b16 %v442, %v441
      %v568 = vpack.c.b16 %v444, %v443
      %v569 = vpack.c.b16 %v446, %v445
      %v570 = vpack.c.b16 %v448, %v447
      %v571 = vpack.c.b16 %v450, %v449
      %v572 = vpack.c.b16 %v452, %v451
      %v573 = vpack.c.b16 %v454, %v453
      %v574 = vpack.c.b16 %v456, %v455
      %v575 = vpack.c.b16 %v458, %v457
      %v576 = vpack.c.b16 %v460, %v459
      %v577 = vpack.c.b16 %v462, %v461
      %v578 = vpack.c.b16 %v464, %v463
      %v579 = vpack.c.b16 %v466, %v465
      %v580 = vpack.c.b16 %v468, %v467
      %v581 = vpack.c.b16 %v470, %v469
      %v582 = vpack.c.b16 %v472, %v471
      %v583 = vpack.c.b16 %v474, %v473
      %v584 = vpack.c.b16 %v476, %v475
      %v585 = vpack.c.b16 %v478, %v477
      %v586 = vpack.c.b16 %v480, %v479
      %v587 = vpack.c.b16 %v482, %v481
      %v588 = vpack.c.b16 %v484, %v483
      %v589 = vpack.c.b16 %v486, %v485
      %v590 = vpack.c.b16 %v488, %v487
      %v591 = vpack.c.b16 %v490, %v489
      %v592 = vpack.c.b16 %v492, %v491
      %v593 = vpack.c.b16 %v494, %v493
      %v594 = vpack.c.b16 %v496, %v495
      %v595 = vpack.c.b16 %v498, %v497
      %v596 = vpack.c.b16 %v500, %v499
      %v597 = vpack.c.b16 %v502, %v501
      %v598 = vpack.c.b16 %v504, %v503
      %v599 = vpack.c.b16 %v506, %v505
      %v600 = vpack.c.b16 %v508, %v507
      %v601 = vpack.c.b16 %v510, %v509
      %v602 = vpack.c.b16 %v512, %v511
      %v603 = vpack.c.b16 %v514, %v513
      %v604 = vpack.c.b16 %v516, %v515
      %v605 = vpack.c.b16 %v518, %v517
      %v606 = vpack.c.b16 %v520, %v519
      %v607 = vpack.c.b16 %v522, %v521
      %v608 = vpack.c.b16 %v524, %v523
      %v609 = vpack.c.b16 %v526, %v525
      %v610 = vpack.c.b16 %v528, %v527
      %v611 = vpack.c.b16 %v530, %v529
      %v612 = vpack.c.b16 %v532, %v531
      %v613 = vpack.c.b16 %v534, %v533
      %v614 = vpack.c.b16 %v536, %v535
      %v615 = vpack.c.b16 %v538, %v537
      %v616 = vpack.c.b16 %v540, %v539
      %v617 = vpack.c.b16 %v542, %v541
      %v618 = vpack.c.b16 %v544, %v543
      %v619 = vpack.c.b16 %v546, %v545
      %v620 = vpack.c.b16 %v548, %v547
      %v621 = vpack.c.b16 %v550, %v549
      %v622 = vpack.c.b16 %v552, %v551
      %v623 = vpack.c.b16 %v554, %v553
      %v624 = vpack.c.b16 %v556, %v555
      %v625 = vpack.c.b16 %v558, %v557
      %v626 = vpack.c.b16 %v560, %v559
      %v627 = vpack.c.b16 %v562, %v561
      %v628 = vpack.c.b16 %v564, %v563
      %v631 = vunpack.c.l.b16 %v307
      %v632 = vunpack.c.h.b16 %v307
      %v633 = vunpack.c.l.b16 %v308
      %v634 = vunpack.c.h.b16 %v308
      %v635 = vpack.c.b16 %v633, %v631
      %v636 = vpack.c.b16 %v634, %v632
      %vm637 = vcmask 72704
      %v639 = vsel %vm637, %v565, 0
      %v642 = vsel %vm637, %v566, 0
      %v645 = vsel %vm637, %v567, 0
      %v648 = vsel %vm637, %v568, 0
      %v651 = vsel %vm637, %v569, 0
      %v654 = vsel %vm637, %v570, 0
      %v657 = vsel %vm637, %v571, 0
      %v660 = vsel %vm637, %v572, 0
      %v663 = vsel %vm637, %v573, 0
      %v666 = vsel %vm637, %v574, 0
      %v669 = vsel %vm637, %v575, 0
      %v672 = vsel %vm637, %v576, 0
      %v675 = vsel %vm637, %v577, 0
      %v678 = vsel %vm637, %v578, 0
      %v681 = vsel %vm637, %v579, 0
      %v684 = vsel %vm637, %v580, 0
      %v687 = vsel %vm637, %v581, 0
      %v690 = vsel %vm637, %v582, 0
      %v693 = vsel %vm637, %v583, 0
      %v696 = vsel %vm637, %v584, 0
      %v699 = vsel %vm637, %v585, 0
      %v702 = vsel %vm637, %v586, 0
      %v705 = vsel %vm637, %v587, 0
      %v708 = vsel %vm637, %v588, 0
      %v711 = vsel %vm637, %v589, 0
      %v714 = vsel %vm637, %v590, 0
      %v717 = vsel %vm637, %v591, 0
      %v720 = vsel %vm637, %v592, 0
      %v723 = vsel %vm637, %v593, 0
      %v726 = vsel %vm637, %v594, 0
      %v729 = vsel %vm637, %v595, 0
      %v732 = vsel %vm637, %v596, 0
      %v735 = vsel %vm637, %v597, 0
      %v738 = vsel %vm637, %v598, 0
      %v741 = vsel %vm637, %v599, 0
      %v744 = vsel %vm637, %v600, 0
      %v747 = vsel %vm637, %v601, 0
      %v750 = vsel %vm637, %v602, 0
      %v753 = vsel %vm637, %v603, 0
      %v756 = vsel %vm637, %v604, 0
      %v759 = vsel %vm637, %v605, 0
      %v762 = vsel %vm637, %v606, 0
      %v765 = vsel %vm637, %v607, 0
      %v768 = vsel %vm637, %v608, 0
      %v771 = vsel %vm637, %v609, 0
      %v774 = vsel %vm637, %v610, 0
      %v777 = vsel %vm637, %v611, 0
      %v780 = vsel %vm637, %v612, 0
      %v783 = vsel %vm637, %v613, 0
      %v786 = vsel %vm637, %v614, 0
      %v789 = vsel %vm637, %v615, 0
      %v792 = vsel %vm637, %v616, 0
      %v795 = vsel %vm637, %v617, 0
      %v798 = vsel %vm637, %v618, 0
      %v801 = vsel %vm637, %v619, 0
      %v804 = vsel %vm637, %v620, 0
      %v807 = vsel %vm637, %v621, 0
      %v810 = vsel %vm637, %v622, 0
      %v813 = vsel %vm637, %v623, 0
      %v816 = vsel %vm637, %v624, 0
      %v819 = vsel %vm637, %v625, 0
      %v822 = vsel %vm637, %v626, 0
      %v825 = vsel %vm637, %v627, 0
      %v828 = vsel %vm637, %v628, 0
      %vm830 = vcmask 1043456
      %vm831 = vcmask 1044480
      %v832 = vsel %vm830, 4294967295, 65535
      %v833 = vsel %vm831, %v832, 0
      %v835 = vand.u32 %v635, %v833
      %v838 = vand.u32 %v636, %v833
      %840 = vmatprep.subr.bf16.mxu0 0
      %841 = vmatpush1.bf16.msra.mxu0 0
      %842 = vmatprep.subr.bf16.mxu0 0
      %843 = vmatpush1.bf16.msra.mxu0 0
      %844 = vmatprep.subr.bf16.mxu0 0
      %845 = vmatpush1.bf16.msra.mxu0 0
      %846 = vmatprep.subr.bf16.mxu0 0
      %847 = vmatpush1.bf16.msra.mxu0 0
      %848 = vmatprep.subr.bf16.mxu0 0
      %849 = vmatpush1.bf16.msra.mxu0 0
      %850 = vmatprep.subr.bf16.mxu0 0
      %851 = vmatpush1.bf16.msra.mxu0 0
      %852 = vmatprep.subr.bf16.mxu0 0
      %853 = vmatpush1.bf16.msra.mxu0 0
      %854 = vmatprep.subr.bf16.mxu0 %v838
      %855 = vmatpush1.bf16.msra.mxu0 %v835
      %856 = vmatprep.subr.bf16.mxu0 0
      %857 = vmatpush2.bf16.msra.mxu0 0
      %858 = vmatprep.subr.bf16.mxu0 0
      %859 = vmatpush2.bf16.msra.mxu0 0
      %860 = vmatprep.subr.bf16.mxu0 0
      %861 = vmatpush2.bf16.msra.mxu0 0
      %862 = vmatprep.subr.bf16.mxu0 0
      %863 = vmatpush2.bf16.msra.mxu0 0
      %864 = vmatprep.subr.bf16.mxu0 0
      %865 = vmatpush2.bf16.msra.mxu0 0
      %866 = vmatprep.subr.bf16.mxu0 0
      %867 = vmatpush2.bf16.msra.mxu0 0
      %868 = vmatprep.subr.bf16.mxu0 0
      %869 = vmatpush2.bf16.msra.mxu0 0
      %870 = vmatprep.subr.bf16.mxu0 0
      %871 = vmatpush2.bf16.msra.mxu0 0
      %872 = vmatprep.mubr.bf16.mxu0 0
      %873 = vmatmul.mubr.bf16.gmra.mxu0 %v639
      %v874 = vpop.f32.mrf.mxu0
      %v875 = vadd.f32 0.0, %v874
      %v876 = vpop.f32.mrf.mxu0
      %v877 = vadd.f32 0.0, %v876
      %v878 = vpop.f32.mrf.mxu0
      %v879 = vadd.f32 0.0, %v878
      %v880 = vpop.f32.mrf.mxu0
      %v881 = vadd.f32 0.0, %v880
      %882 = vmatprep.mubr.bf16.mxu0 0
      %883 = vmatmul.mubr.bf16.gmra.mxu0 %v642
      %v884 = vpop.f32.mrf.mxu0
      %v885 = vadd.f32 0.0, %v884
      %v886 = vpop.f32.mrf.mxu0
      %v887 = vadd.f32 0.0, %v886
      %v888 = vpop.f32.mrf.mxu0
      %v889 = vadd.f32 0.0, %v888
      %v890 = vpop.f32.mrf.mxu0
      %v891 = vadd.f32 0.0, %v890
      %892 = vmatprep.mubr.bf16.mxu0 0
      %893 = vmatmul.mubr.bf16.gmra.mxu0 %v645
      %v894 = vpop.f32.mrf.mxu0
      %v895 = vadd.f32 0.0, %v894
      %v896 = vpop.f32.mrf.mxu0
      %v897 = vadd.f32 0.0, %v896
      %v898 = vpop.f32.mrf.mxu0
      %v899 = vadd.f32 0.0, %v898
      %v900 = vpop.f32.mrf.mxu0
      %v901 = vadd.f32 0.0, %v900
      %902 = vmatprep.mubr.bf16.mxu0 0
      %903 = vmatmul.mubr.bf16.gmra.mxu0 %v648
      %v904 = vpop.f32.mrf.mxu0
      %v905 = vadd.f32 0.0, %v904
      %v906 = vpop.f32.mrf.mxu0
      %v907 = vadd.f32 0.0, %v906
      %v908 = vpop.f32.mrf.mxu0
      %v909 = vadd.f32 0.0, %v908
      %v910 = vpop.f32.mrf.mxu0
      %v911 = vadd.f32 0.0, %v910
      %912 = vmatprep.mubr.bf16.mxu0 0
      %913 = vmatmul.mubr.bf16.gmra.mxu0 %v651
      %v914 = vpop.f32.mrf.mxu0
      %v915 = vadd.f32 0.0, %v914
      %v916 = vpop.f32.mrf.mxu0
      %v917 = vadd.f32 0.0, %v916
      %v918 = vpop.f32.mrf.mxu0
      %v919 = vadd.f32 0.0, %v918
      %v920 = vpop.f32.mrf.mxu0
      %v921 = vadd.f32 0.0, %v920
      %922 = vmatprep.mubr.bf16.mxu0 0
      %923 = vmatmul.mubr.bf16.gmra.mxu0 %v654
      %v924 = vpop.f32.mrf.mxu0
      %v925 = vadd.f32 0.0, %v924
      %v926 = vpop.f32.mrf.mxu0
      %v927 = vadd.f32 0.0, %v926
      %v928 = vpop.f32.mrf.mxu0
      %v929 = vadd.f32 0.0, %v928
      %v930 = vpop.f32.mrf.mxu0
      %v931 = vadd.f32 0.0, %v930
      %932 = vmatprep.mubr.bf16.mxu0 0
      %933 = vmatmul.mubr.bf16.gmra.mxu0 %v657
      %v934 = vpop.f32.mrf.mxu0
      %v935 = vadd.f32 0.0, %v934
      %v936 = vpop.f32.mrf.mxu0
      %v937 = vadd.f32 0.0, %v936
      %v938 = vpop.f32.mrf.mxu0
      %v939 = vadd.f32 0.0, %v938
      %v940 = vpop.f32.mrf.mxu0
      %v941 = vadd.f32 0.0, %v940
      %942 = vmatprep.mubr.bf16.mxu0 0
      %943 = vmatmul.mubr.bf16.gmra.mxu0 %v660
      %v944 = vpop.f32.mrf.mxu0
      %v945 = vadd.f32 0.0, %v944
      %v946 = vpop.f32.mrf.mxu0
      %v947 = vadd.f32 0.0, %v946
      %v948 = vpop.f32.mrf.mxu0
      %v949 = vadd.f32 0.0, %v948
      %v950 = vpop.f32.mrf.mxu0
      %v951 = vadd.f32 0.0, %v950
      %952 = vmatprep.mubr.bf16.mxu0 0
      %953 = vmatmul.mubr.bf16.gmra.mxu0 %v663
      %v954 = vpop.f32.mrf.mxu0
      %v955 = vadd.f32 0.0, %v954
      %v956 = vpop.f32.mrf.mxu0
      %v957 = vadd.f32 0.0, %v956
      %v958 = vpop.f32.mrf.mxu0
      %v959 = vadd.f32 0.0, %v958
      %v960 = vpop.f32.mrf.mxu0
      %v961 = vadd.f32 0.0, %v960
      %962 = vmatprep.mubr.bf16.mxu0 0
      %963 = vmatmul.mubr.bf16.gmra.mxu0 %v666
      %v964 = vpop.f32.mrf.mxu0
      %v965 = vadd.f32 0.0, %v964
      %v966 = vpop.f32.mrf.mxu0
      %v967 = vadd.f32 0.0, %v966
      %v968 = vpop.f32.mrf.mxu0
      %v969 = vadd.f32 0.0, %v968
      %v970 = vpop.f32.mrf.mxu0
      %v971 = vadd.f32 0.0, %v970
      %972 = vmatprep.mubr.bf16.mxu0 0
      %973 = vmatmul.mubr.bf16.gmra.mxu0 %v669
      %v974 = vpop.f32.mrf.mxu0
      %v975 = vadd.f32 0.0, %v974
      %v976 = vpop.f32.mrf.mxu0
      %v977 = vadd.f32 0.0, %v976
      %v978 = vpop.f32.mrf.mxu0
      %v979 = vadd.f32 0.0, %v978
      %v980 = vpop.f32.mrf.mxu0
      %v981 = vadd.f32 0.0, %v980
      %982 = vmatprep.mubr.bf16.mxu0 0
      %983 = vmatmul.mubr.bf16.gmra.mxu0 %v672
      %v984 = vpop.f32.mrf.mxu0
      %v985 = vadd.f32 0.0, %v984
      %v986 = vpop.f32.mrf.mxu0
      %v987 = vadd.f32 0.0, %v986
      %v988 = vpop.f32.mrf.mxu0
      %v989 = vadd.f32 0.0, %v988
      %v990 = vpop.f32.mrf.mxu0
      %v991 = vadd.f32 0.0, %v990
      %992 = vmatprep.mubr.bf16.mxu0 0
      %993 = vmatmul.mubr.bf16.gmra.mxu0 %v675
      %v994 = vpop.f32.mrf.mxu0
      %v995 = vadd.f32 0.0, %v994
      %v996 = vpop.f32.mrf.mxu0
      %v997 = vadd.f32 0.0, %v996
      %v998 = vpop.f32.mrf.mxu0
      %v999 = vadd.f32 0.0, %v998
      %v1000 = vpop.f32.mrf.mxu0
      %v1001 = vadd.f32 0.0, %v1000
      %1002 = vmatprep.mubr.bf16.mxu0 0
      %1003 = vmatmul.mubr.bf16.gmra.mxu0 %v678
      %v1004 = vpop.f32.mrf.mxu0
      %v1005 = vadd.f32 0.0, %v1004
      %v1006 = vpop.f32.mrf.mxu0
      %v1007 = vadd.f32 0.0, %v1006
      %v1008 = vpop.f32.mrf.mxu0
      %v1009 = vadd.f32 0.0, %v1008
      %v1010 = vpop.f32.mrf.mxu0
      %v1011 = vadd.f32 0.0, %v1010
      %1012 = vmatprep.mubr.bf16.mxu0 0
      %1013 = vmatmul.mubr.bf16.gmra.mxu0 %v681
      %v1014 = vpop.f32.mrf.mxu0
      %v1015 = vadd.f32 0.0, %v1014
      %v1016 = vpop.f32.mrf.mxu0
      %v1017 = vadd.f32 0.0, %v1016
      %v1018 = vpop.f32.mrf.mxu0
      %v1019 = vadd.f32 0.0, %v1018
      %v1020 = vpop.f32.mrf.mxu0
      %v1021 = vadd.f32 0.0, %v1020
      %1022 = vmatprep.mubr.bf16.mxu0 0
      %1023 = vmatmul.mubr.bf16.gmra.mxu0 %v684
      %v1024 = vpop.f32.mrf.mxu0
      %v1025 = vadd.f32 0.0, %v1024
      %v1026 = vpop.f32.mrf.mxu0
      %v1027 = vadd.f32 0.0, %v1026
      %v1028 = vpop.f32.mrf.mxu0
      %v1029 = vadd.f32 0.0, %v1028
      %v1030 = vpop.f32.mrf.mxu0
      %v1031 = vadd.f32 0.0, %v1030
      %1032 = vmatprep.mubr.bf16.mxu0 0
      %1033 = vmatmul.mubr.bf16.gmra.mxu0 %v687
      %v1034 = vpop.f32.mrf.mxu0
      %v1035 = vadd.f32 0.0, %v1034
      %v1036 = vpop.f32.mrf.mxu0
      %v1037 = vadd.f32 0.0, %v1036
      %v1038 = vpop.f32.mrf.mxu0
      %v1039 = vadd.f32 0.0, %v1038
      %v1040 = vpop.f32.mrf.mxu0
      %v1041 = vadd.f32 0.0, %v1040
      %1042 = vmatprep.mubr.bf16.mxu0 0
      %1043 = vmatmul.mubr.bf16.gmra.mxu0 %v690
      %v1044 = vpop.f32.mrf.mxu0
      %v1045 = vadd.f32 0.0, %v1044
      %v1046 = vpop.f32.mrf.mxu0
      %v1047 = vadd.f32 0.0, %v1046
      %v1048 = vpop.f32.mrf.mxu0
      %v1049 = vadd.f32 0.0, %v1048
      %v1050 = vpop.f32.mrf.mxu0
      %v1051 = vadd.f32 0.0, %v1050
      %1052 = vmatprep.mubr.bf16.mxu0 0
      %1053 = vmatmul.mubr.bf16.gmra.mxu0 %v693
      %v1054 = vpop.f32.mrf.mxu0
      %v1055 = vadd.f32 0.0, %v1054
      %v1056 = vpop.f32.mrf.mxu0
      %v1057 = vadd.f32 0.0, %v1056
      %v1058 = vpop.f32.mrf.mxu0
      %v1059 = vadd.f32 0.0, %v1058
      %v1060 = vpop.f32.mrf.mxu0
      %v1061 = vadd.f32 0.0, %v1060
      %1062 = vmatprep.mubr.bf16.mxu0 0
      %1063 = vmatmul.mubr.bf16.gmra.mxu0 %v696
      %v1064 = vpop.f32.mrf.mxu0
      %v1065 = vadd.f32 0.0, %v1064
      %v1066 = vpop.f32.mrf.mxu0
      %v1067 = vadd.f32 0.0, %v1066
      %v1068 = vpop.f32.mrf.mxu0
      %v1069 = vadd.f32 0.0, %v1068
      %v1070 = vpop.f32.mrf.mxu0
      %v1071 = vadd.f32 0.0, %v1070
      %1072 = vmatprep.mubr.bf16.mxu0 0
      %1073 = vmatmul.mubr.bf16.gmra.mxu0 %v699
      %v1074 = vpop.f32.mrf.mxu0
      %v1075 = vadd.f32 0.0, %v1074
      %v1076 = vpop.f32.mrf.mxu0
      %v1077 = vadd.f32 0.0, %v1076
      %v1078 = vpop.f32.mrf.mxu0
      %v1079 = vadd.f32 0.0, %v1078
      %v1080 = vpop.f32.mrf.mxu0
      %v1081 = vadd.f32 0.0, %v1080
      %1082 = vmatprep.mubr.bf16.mxu0 0
      %1083 = vmatmul.mubr.bf16.gmra.mxu0 %v702
      %v1084 = vpop.f32.mrf.mxu0
      %v1085 = vadd.f32 0.0, %v1084
      %v1086 = vpop.f32.mrf.mxu0
      %v1087 = vadd.f32 0.0, %v1086
      %v1088 = vpop.f32.mrf.mxu0
      %v1089 = vadd.f32 0.0, %v1088
      %v1090 = vpop.f32.mrf.mxu0
      %v1091 = vadd.f32 0.0, %v1090
      %1092 = vmatprep.mubr.bf16.mxu0 0
      %1093 = vmatmul.mubr.bf16.gmra.mxu0 %v705
      %v1094 = vpop.f32.mrf.mxu0
      %v1095 = vadd.f32 0.0, %v1094
      %v1096 = vpop.f32.mrf.mxu0
      %v1097 = vadd.f32 0.0, %v1096
      %v1098 = vpop.f32.mrf.mxu0
      %v1099 = vadd.f32 0.0, %v1098
      %v1100 = vpop.f32.mrf.mxu0
      %v1101 = vadd.f32 0.0, %v1100
      %1102 = vmatprep.mubr.bf16.mxu0 0
      %1103 = vmatmul.mubr.bf16.gmra.mxu0 %v708
      %v1104 = vpop.f32.mrf.mxu0
      %v1105 = vadd.f32 0.0, %v1104
      %v1106 = vpop.f32.mrf.mxu0
      %v1107 = vadd.f32 0.0, %v1106
      %v1108 = vpop.f32.mrf.mxu0
      %v1109 = vadd.f32 0.0, %v1108
      %v1110 = vpop.f32.mrf.mxu0
      %v1111 = vadd.f32 0.0, %v1110
      %1112 = vmatprep.mubr.bf16.mxu0 0
      %1113 = vmatmul.mubr.bf16.gmra.mxu0 %v711
      %v1114 = vpop.f32.mrf.mxu0
      %v1115 = vadd.f32 0.0, %v1114
      %v1116 = vpop.f32.mrf.mxu0
      %v1117 = vadd.f32 0.0, %v1116
      %v1118 = vpop.f32.mrf.mxu0
      %v1119 = vadd.f32 0.0, %v1118
      %v1120 = vpop.f32.mrf.mxu0
      %v1121 = vadd.f32 0.0, %v1120
      %1122 = vmatprep.mubr.bf16.mxu0 0
      %1123 = vmatmul.mubr.bf16.gmra.mxu0 %v714
      %v1124 = vpop.f32.mrf.mxu0
      %v1125 = vadd.f32 0.0, %v1124
      %v1126 = vpop.f32.mrf.mxu0
      %v1127 = vadd.f32 0.0, %v1126
      %v1128 = vpop.f32.mrf.mxu0
      %v1129 = vadd.f32 0.0, %v1128
      %v1130 = vpop.f32.mrf.mxu0
      %v1131 = vadd.f32 0.0, %v1130
      %1132 = vmatprep.mubr.bf16.mxu0 0
      %1133 = vmatmul.mubr.bf16.gmra.mxu0 %v717
      %v1134 = vpop.f32.mrf.mxu0
      %v1135 = vadd.f32 0.0, %v1134
      %v1136 = vpop.f32.mrf.mxu0
      %v1137 = vadd.f32 0.0, %v1136
      %v1138 = vpop.f32.mrf.mxu0
      %v1139 = vadd.f32 0.0, %v1138
      %v1140 = vpop.f32.mrf.mxu0
      %v1141 = vadd.f32 0.0, %v1140
      %1142 = vmatprep.mubr.bf16.mxu0 0
      %1143 = vmatmul.mubr.bf16.gmra.mxu0 %v720
      %v1144 = vpop.f32.mrf.mxu0
      %v1145 = vadd.f32 0.0, %v1144
      %v1146 = vpop.f32.mrf.mxu0
      %v1147 = vadd.f32 0.0, %v1146
      %v1148 = vpop.f32.mrf.mxu0
      %v1149 = vadd.f32 0.0, %v1148
      %v1150 = vpop.f32.mrf.mxu0
      %v1151 = vadd.f32 0.0, %v1150
      %1152 = vmatprep.mubr.bf16.mxu0 0
      %1153 = vmatmul.mubr.bf16.gmra.mxu0 %v723
      %v1154 = vpop.f32.mrf.mxu0
      %v1155 = vadd.f32 0.0, %v1154
      %v1156 = vpop.f32.mrf.mxu0
      %v1157 = vadd.f32 0.0, %v1156
      %v1158 = vpop.f32.mrf.mxu0
      %v1159 = vadd.f32 0.0, %v1158
      %v1160 = vpop.f32.mrf.mxu0
      %v1161 = vadd.f32 0.0, %v1160
      %1162 = vmatprep.mubr.bf16.mxu0 0
      %1163 = vmatmul.mubr.bf16.gmra.mxu0 %v726
      %v1164 = vpop.f32.mrf.mxu0
      %v1165 = vadd.f32 0.0, %v1164
      %v1166 = vpop.f32.mrf.mxu0
      %v1167 = vadd.f32 0.0, %v1166
      %v1168 = vpop.f32.mrf.mxu0
      %v1169 = vadd.f32 0.0, %v1168
      %v1170 = vpop.f32.mrf.mxu0
      %v1171 = vadd.f32 0.0, %v1170
      %1172 = vmatprep.mubr.bf16.mxu0 0
      %1173 = vmatmul.mubr.bf16.gmra.mxu0 %v729
      %v1174 = vpop.f32.mrf.mxu0
      %v1175 = vadd.f32 0.0, %v1174
      %v1176 = vpop.f32.mrf.mxu0
      %v1177 = vadd.f32 0.0, %v1176
      %v1178 = vpop.f32.mrf.mxu0
      %v1179 = vadd.f32 0.0, %v1178
      %v1180 = vpop.f32.mrf.mxu0
      %v1181 = vadd.f32 0.0, %v1180
      %1182 = vmatprep.mubr.bf16.mxu0 0
      %1183 = vmatmul.mubr.bf16.gmra.mxu0 %v732
      %v1184 = vpop.f32.mrf.mxu0
      %v1185 = vadd.f32 0.0, %v1184
      %v1186 = vpop.f32.mrf.mxu0
      %v1187 = vadd.f32 0.0, %v1186
      %v1188 = vpop.f32.mrf.mxu0
      %v1189 = vadd.f32 0.0, %v1188
      %v1190 = vpop.f32.mrf.mxu0
      %v1191 = vadd.f32 0.0, %v1190
      %1192 = vmatprep.mubr.bf16.mxu0 0
      %1193 = vmatmul.mubr.bf16.gmra.mxu0 %v735
      %v1194 = vpop.f32.mrf.mxu0
      %v1195 = vadd.f32 0.0, %v1194
      %v1196 = vpop.f32.mrf.mxu0
      %v1197 = vadd.f32 0.0, %v1196
      %v1198 = vpop.f32.mrf.mxu0
      %v1199 = vadd.f32 0.0, %v1198
      %v1200 = vpop.f32.mrf.mxu0
      %v1201 = vadd.f32 0.0, %v1200
      %1202 = vmatprep.mubr.bf16.mxu0 0
      %1203 = vmatmul.mubr.bf16.gmra.mxu0 %v738
      %v1204 = vpop.f32.mrf.mxu0
      %v1205 = vadd.f32 0.0, %v1204
      %v1206 = vpop.f32.mrf.mxu0
      %v1207 = vadd.f32 0.0, %v1206
      %v1208 = vpop.f32.mrf.mxu0
      %v1209 = vadd.f32 0.0, %v1208
      %v1210 = vpop.f32.mrf.mxu0
      %v1211 = vadd.f32 0.0, %v1210
      %1212 = vmatprep.mubr.bf16.mxu0 0
      %1213 = vmatmul.mubr.bf16.gmra.mxu0 %v741
      %v1214 = vpop.f32.mrf.mxu0
      %v1215 = vadd.f32 0.0, %v1214
      %v1216 = vpop.f32.mrf.mxu0
      %v1217 = vadd.f32 0.0, %v1216
      %v1218 = vpop.f32.mrf.mxu0
      %v1219 = vadd.f32 0.0, %v1218
      %v1220 = vpop.f32.mrf.mxu0
      %v1221 = vadd.f32 0.0, %v1220
      %1222 = vmatprep.mubr.bf16.mxu0 0
      %1223 = vmatmul.mubr.bf16.gmra.mxu0 %v744
      %v1224 = vpop.f32.mrf.mxu0
      %v1225 = vadd.f32 0.0, %v1224
      %v1226 = vpop.f32.mrf.mxu0
      %v1227 = vadd.f32 0.0, %v1226
      %v1228 = vpop.f32.mrf.mxu0
      %v1229 = vadd.f32 0.0, %v1228
      %v1230 = vpop.f32.mrf.mxu0
      %v1231 = vadd.f32 0.0, %v1230
      %1232 = vmatprep.mubr.bf16.mxu0 0
      %1233 = vmatmul.mubr.bf16.gmra.mxu0 %v747
      %v1234 = vpop.f32.mrf.mxu0
      %v1235 = vadd.f32 0.0, %v1234
      %v1236 = vpop.f32.mrf.mxu0
      %v1237 = vadd.f32 0.0, %v1236
      %v1238 = vpop.f32.mrf.mxu0
      %v1239 = vadd.f32 0.0, %v1238
      %v1240 = vpop.f32.mrf.mxu0
      %v1241 = vadd.f32 0.0, %v1240
      %1242 = vmatprep.mubr.bf16.mxu0 0
      %1243 = vmatmul.mubr.bf16.gmra.mxu0 %v750
      %v1244 = vpop.f32.mrf.mxu0
      %v1245 = vadd.f32 0.0, %v1244
      %v1246 = vpop.f32.mrf.mxu0
      %v1247 = vadd.f32 0.0, %v1246
      %v1248 = vpop.f32.mrf.mxu0
      %v1249 = vadd.f32 0.0, %v1248
      %v1250 = vpop.f32.mrf.mxu0
      %v1251 = vadd.f32 0.0, %v1250
      %1252 = vmatprep.mubr.bf16.mxu0 0
      %1253 = vmatmul.mubr.bf16.gmra.mxu0 %v753
      %v1254 = vpop.f32.mrf.mxu0
      %v1255 = vadd.f32 0.0, %v1254
      %v1256 = vpop.f32.mrf.mxu0
      %v1257 = vadd.f32 0.0, %v1256
      %v1258 = vpop.f32.mrf.mxu0
      %v1259 = vadd.f32 0.0, %v1258
      %v1260 = vpop.f32.mrf.mxu0
      %v1261 = vadd.f32 0.0, %v1260
      %1262 = vmatprep.mubr.bf16.mxu0 0
      %1263 = vmatmul.mubr.bf16.gmra.mxu0 %v756
      %v1264 = vpop.f32.mrf.mxu0
      %v1265 = vadd.f32 0.0, %v1264
      %v1266 = vpop.f32.mrf.mxu0
      %v1267 = vadd.f32 0.0, %v1266
      %v1268 = vpop.f32.mrf.mxu0
      %v1269 = vadd.f32 0.0, %v1268
      %v1270 = vpop.f32.mrf.mxu0
      %v1271 = vadd.f32 0.0, %v1270
      %1272 = vmatprep.mubr.bf16.mxu0 0
      %1273 = vmatmul.mubr.bf16.gmra.mxu0 %v759
      %v1274 = vpop.f32.mrf.mxu0
      %v1275 = vadd.f32 0.0, %v1274
      %v1276 = vpop.f32.mrf.mxu0
      %v1277 = vadd.f32 0.0, %v1276
      %v1278 = vpop.f32.mrf.mxu0
      %v1279 = vadd.f32 0.0, %v1278
      %v1280 = vpop.f32.mrf.mxu0
      %v1281 = vadd.f32 0.0, %v1280
      %1282 = vmatprep.mubr.bf16.mxu0 0
      %1283 = vmatmul.mubr.bf16.gmra.mxu0 %v762
      %v1284 = vpop.f32.mrf.mxu0
      %v1285 = vadd.f32 0.0, %v1284
      %v1286 = vpop.f32.mrf.mxu0
      %v1287 = vadd.f32 0.0, %v1286
      %v1288 = vpop.f32.mrf.mxu0
      %v1289 = vadd.f32 0.0, %v1288
      %v1290 = vpop.f32.mrf.mxu0
      %v1291 = vadd.f32 0.0, %v1290
      %1292 = vmatprep.mubr.bf16.mxu0 0
      %1293 = vmatmul.mubr.bf16.gmra.mxu0 %v765
      %v1294 = vpop.f32.mrf.mxu0
      %v1295 = vadd.f32 0.0, %v1294
      %v1296 = vpop.f32.mrf.mxu0
      %v1297 = vadd.f32 0.0, %v1296
      %v1298 = vpop.f32.mrf.mxu0
      %v1299 = vadd.f32 0.0, %v1298
      %v1300 = vpop.f32.mrf.mxu0
      %v1301 = vadd.f32 0.0, %v1300
      %1302 = vmatprep.mubr.bf16.mxu0 0
      %1303 = vmatmul.mubr.bf16.gmra.mxu0 %v768
      %v1304 = vpop.f32.mrf.mxu0
      %v1305 = vadd.f32 0.0, %v1304
      %v1306 = vpop.f32.mrf.mxu0
      %v1307 = vadd.f32 0.0, %v1306
      %v1308 = vpop.f32.mrf.mxu0
      %v1309 = vadd.f32 0.0, %v1308
      %v1310 = vpop.f32.mrf.mxu0
      %v1311 = vadd.f32 0.0, %v1310
      %1312 = vmatprep.mubr.bf16.mxu0 0
      %1313 = vmatmul.mubr.bf16.gmra.mxu0 %v771
      %v1314 = vpop.f32.mrf.mxu0
      %v1315 = vadd.f32 0.0, %v1314
      %v1316 = vpop.f32.mrf.mxu0
      %v1317 = vadd.f32 0.0, %v1316
      %v1318 = vpop.f32.mrf.mxu0
      %v1319 = vadd.f32 0.0, %v1318
      %v1320 = vpop.f32.mrf.mxu0
      %v1321 = vadd.f32 0.0, %v1320
      %1322 = vmatprep.mubr.bf16.mxu0 0
      %1323 = vmatmul.mubr.bf16.gmra.mxu0 %v774
      %v1324 = vpop.f32.mrf.mxu0
      %v1325 = vadd.f32 0.0, %v1324
      %v1326 = vpop.f32.mrf.mxu0
      %v1327 = vadd.f32 0.0, %v1326
      %v1328 = vpop.f32.mrf.mxu0
      %v1329 = vadd.f32 0.0, %v1328
      %v1330 = vpop.f32.mrf.mxu0
      %v1331 = vadd.f32 0.0, %v1330
      %1332 = vmatprep.mubr.bf16.mxu0 0
      %1333 = vmatmul.mubr.bf16.gmra.mxu0 %v777
      %v1334 = vpop.f32.mrf.mxu0
      %v1335 = vadd.f32 0.0, %v1334
      %v1336 = vpop.f32.mrf.mxu0
      %v1337 = vadd.f32 0.0, %v1336
      %v1338 = vpop.f32.mrf.mxu0
      %v1339 = vadd.f32 0.0, %v1338
      %v1340 = vpop.f32.mrf.mxu0
      %v1341 = vadd.f32 0.0, %v1340
      %1342 = vmatprep.mubr.bf16.mxu0 0
      %1343 = vmatmul.mubr.bf16.gmra.mxu0 %v780
      %v1344 = vpop.f32.mrf.mxu0
      %v1345 = vadd.f32 0.0, %v1344
      %v1346 = vpop.f32.mrf.mxu0
      %v1347 = vadd.f32 0.0, %v1346
      %v1348 = vpop.f32.mrf.mxu0
      %v1349 = vadd.f32 0.0, %v1348
      %v1350 = vpop.f32.mrf.mxu0
      %v1351 = vadd.f32 0.0, %v1350
      %1352 = vmatprep.mubr.bf16.mxu0 0
      %1353 = vmatmul.mubr.bf16.gmra.mxu0 %v783
      %v1354 = vpop.f32.mrf.mxu0
      %v1355 = vadd.f32 0.0, %v1354
      %v1356 = vpop.f32.mrf.mxu0
      %v1357 = vadd.f32 0.0, %v1356
      %v1358 = vpop.f32.mrf.mxu0
      %v1359 = vadd.f32 0.0, %v1358
      %v1360 = vpop.f32.mrf.mxu0
      %v1361 = vadd.f32 0.0, %v1360
      %1362 = vmatprep.mubr.bf16.mxu0 0
      %1363 = vmatmul.mubr.bf16.gmra.mxu0 %v786
      %v1364 = vpop.f32.mrf.mxu0
      %v1365 = vadd.f32 0.0, %v1364
      %v1366 = vpop.f32.mrf.mxu0
      %v1367 = vadd.f32 0.0, %v1366
      %v1368 = vpop.f32.mrf.mxu0
      %v1369 = vadd.f32 0.0, %v1368
      %v1370 = vpop.f32.mrf.mxu0
      %v1371 = vadd.f32 0.0, %v1370
      %1372 = vmatprep.mubr.bf16.mxu0 0
      %1373 = vmatmul.mubr.bf16.gmra.mxu0 %v789
      %v1374 = vpop.f32.mrf.mxu0
      %v1375 = vadd.f32 0.0, %v1374
      %v1376 = vpop.f32.mrf.mxu0
      %v1377 = vadd.f32 0.0, %v1376
      %v1378 = vpop.f32.mrf.mxu0
      %v1379 = vadd.f32 0.0, %v1378
      %v1380 = vpop.f32.mrf.mxu0
      %v1381 = vadd.f32 0.0, %v1380
      %1382 = vmatprep.mubr.bf16.mxu0 0
      %1383 = vmatmul.mubr.bf16.gmra.mxu0 %v792
      %v1384 = vpop.f32.mrf.mxu0
      %v1385 = vadd.f32 0.0, %v1384
      %v1386 = vpop.f32.mrf.mxu0
      %v1387 = vadd.f32 0.0, %v1386
      %v1388 = vpop.f32.mrf.mxu0
      %v1389 = vadd.f32 0.0, %v1388
      %v1390 = vpop.f32.mrf.mxu0
      %v1391 = vadd.f32 0.0, %v1390
      %1392 = vmatprep.mubr.bf16.mxu0 0
      %1393 = vmatmul.mubr.bf16.gmra.mxu0 %v795
      %v1394 = vpop.f32.mrf.mxu0
      %v1395 = vadd.f32 0.0, %v1394
      %v1396 = vpop.f32.mrf.mxu0
      %v1397 = vadd.f32 0.0, %v1396
      %v1398 = vpop.f32.mrf.mxu0
      %v1399 = vadd.f32 0.0, %v1398
      %v1400 = vpop.f32.mrf.mxu0
      %v1401 = vadd.f32 0.0, %v1400
      %1402 = vmatprep.mubr.bf16.mxu0 0
      %1403 = vmatmul.mubr.bf16.gmra.mxu0 %v798
      %v1404 = vpop.f32.mrf.mxu0
      %v1405 = vadd.f32 0.0, %v1404
      %v1406 = vpop.f32.mrf.mxu0
      %v1407 = vadd.f32 0.0, %v1406
      %v1408 = vpop.f32.mrf.mxu0
      %v1409 = vadd.f32 0.0, %v1408
      %v1410 = vpop.f32.mrf.mxu0
      %v1411 = vadd.f32 0.0, %v1410
      %1412 = vmatprep.mubr.bf16.mxu0 0
      %1413 = vmatmul.mubr.bf16.gmra.mxu0 %v801
      %v1414 = vpop.f32.mrf.mxu0
      %v1415 = vadd.f32 0.0, %v1414
      %v1416 = vpop.f32.mrf.mxu0
      %v1417 = vadd.f32 0.0, %v1416
      %v1418 = vpop.f32.mrf.mxu0
      %v1419 = vadd.f32 0.0, %v1418
      %v1420 = vpop.f32.mrf.mxu0
      %v1421 = vadd.f32 0.0, %v1420
      %1422 = vmatprep.mubr.bf16.mxu0 0
      %1423 = vmatmul.mubr.bf16.gmra.mxu0 %v804
      %v1424 = vpop.f32.mrf.mxu0
      %v1425 = vadd.f32 0.0, %v1424
      %v1426 = vpop.f32.mrf.mxu0
      %v1427 = vadd.f32 0.0, %v1426
      %v1428 = vpop.f32.mrf.mxu0
      %v1429 = vadd.f32 0.0, %v1428
      %v1430 = vpop.f32.mrf.mxu0
      %v1431 = vadd.f32 0.0, %v1430
      %1432 = vmatprep.mubr.bf16.mxu0 0
      %1433 = vmatmul.mubr.bf16.gmra.mxu0 %v807
      %v1434 = vpop.f32.mrf.mxu0
      %v1435 = vadd.f32 0.0, %v1434
      %v1436 = vpop.f32.mrf.mxu0
      %v1437 = vadd.f32 0.0, %v1436
      %v1438 = vpop.f32.mrf.mxu0
      %v1439 = vadd.f32 0.0, %v1438
      %v1440 = vpop.f32.mrf.mxu0
      %v1441 = vadd.f32 0.0, %v1440
      %1442 = vmatprep.mubr.bf16.mxu0 0
      %1443 = vmatmul.mubr.bf16.gmra.mxu0 %v810
      %v1444 = vpop.f32.mrf.mxu0
      %v1445 = vadd.f32 0.0, %v1444
      %v1446 = vpop.f32.mrf.mxu0
      %v1447 = vadd.f32 0.0, %v1446
      %v1448 = vpop.f32.mrf.mxu0
      %v1449 = vadd.f32 0.0, %v1448
      %v1450 = vpop.f32.mrf.mxu0
      %v1451 = vadd.f32 0.0, %v1450
      %1452 = vmatprep.mubr.bf16.mxu0 0
      %1453 = vmatmul.mubr.bf16.gmra.mxu0 %v813
      %v1454 = vpop.f32.mrf.mxu0
      %v1455 = vadd.f32 0.0, %v1454
      %v1456 = vpop.f32.mrf.mxu0
      %v1457 = vadd.f32 0.0, %v1456
      %v1458 = vpop.f32.mrf.mxu0
      %v1459 = vadd.f32 0.0, %v1458
      %v1460 = vpop.f32.mrf.mxu0
      %v1461 = vadd.f32 0.0, %v1460
      %1462 = vmatprep.mubr.bf16.mxu0 0
      %1463 = vmatmul.mubr.bf16.gmra.mxu0 %v816
      %v1464 = vpop.f32.mrf.mxu0
      %v1465 = vadd.f32 0.0, %v1464
      %v1466 = vpop.f32.mrf.mxu0
      %v1467 = vadd.f32 0.0, %v1466
      %v1468 = vpop.f32.mrf.mxu0
      %v1469 = vadd.f32 0.0, %v1468
      %v1470 = vpop.f32.mrf.mxu0
      %v1471 = vadd.f32 0.0, %v1470
      %1472 = vmatprep.mubr.bf16.mxu0 0
      %1473 = vmatmul.mubr.bf16.gmra.mxu0 %v819
      %v1474 = vpop.f32.mrf.mxu0
      %v1475 = vadd.f32 0.0, %v1474
      %v1476 = vpop.f32.mrf.mxu0
      %v1477 = vadd.f32 0.0, %v1476
      %v1478 = vpop.f32.mrf.mxu0
      %v1479 = vadd.f32 0.0, %v1478
      %v1480 = vpop.f32.mrf.mxu0
      %v1481 = vadd.f32 0.0, %v1480
      %1482 = vmatprep.mubr.bf16.mxu0 0
      %1483 = vmatmul.mubr.bf16.gmra.mxu0 %v822
      %v1484 = vpop.f32.mrf.mxu0
      %v1485 = vadd.f32 0.0, %v1484
      %v1486 = vpop.f32.mrf.mxu0
      %v1487 = vadd.f32 0.0, %v1486
      %v1488 = vpop.f32.mrf.mxu0
      %v1489 = vadd.f32 0.0, %v1488
      %v1490 = vpop.f32.mrf.mxu0
      %v1491 = vadd.f32 0.0, %v1490
      %1492 = vmatprep.mubr.bf16.mxu0 0
      %1493 = vmatmul.mubr.bf16.gmra.mxu0 %v825
      %v1494 = vpop.f32.mrf.mxu0
      %v1495 = vadd.f32 0.0, %v1494
      %v1496 = vpop.f32.mrf.mxu0
      %v1497 = vadd.f32 0.0, %v1496
      %v1498 = vpop.f32.mrf.mxu0
      %v1499 = vadd.f32 0.0, %v1498
      %v1500 = vpop.f32.mrf.mxu0
      %v1501 = vadd.f32 0.0, %v1500
      %1502 = vmatprep.mubr.bf16.mxu0 0
      %1503 = vmatmul.mubr.bf16.gmra.mxu0 %v828
      %v1504 = vpop.f32.mrf.mxu0
      %v1505 = vadd.f32 0.0, %v1504
      %v1506 = vpop.f32.mrf.mxu0
      %v1507 = vadd.f32 0.0, %v1506
      %v1508 = vpop.f32.mrf.mxu0
      %v1509 = vadd.f32 0.0, %v1508
      %v1510 = vpop.f32.mrf.mxu0
      %v1511 = vadd.f32 0.0, %v1510
      %1512 = vdwg.mxu0
      %v1517 = vunpack.c.l.b16 %v172
      %v1518 = vunpack.c.l.b16 %v173
      %v1519 = vunpack.c.l.b16 %v174
      %v1520 = vunpack.c.l.b16 %v175
      %v1521 = vpack.c.b16 %v1518, %v1517
      %v1522 = vpack.c.b16 %v1520, %v1519
      %v1525 = vunpack.c.l.b16 %v300
      %v1526 = vunpack.c.h.b16 %v300
      %v1527 = vunpack.c.l.b16 %v301
      %v1528 = vunpack.c.h.b16 %v301
      %v1529 = vpack.c.b16 %v1527, %v1525
      %v1530 = vpack.c.b16 %v1528, %v1526
      %v1532 = vsel %vm637, %v1521, 0
      %v1535 = vsel %vm637, %v1522, 0
      %v1538 = vand.u32 %v1529, %v833
      %v1541 = vand.u32 %v1530, %v833
      %1543 = vmatprep.subr.bf16.mxu0 0
      %1544 = vmatpush1.bf16.msra.mxu0 0
      %1545 = vmatprep.subr.bf16.mxu0 0
      %1546 = vmatpush1.bf16.msra.mxu0 0
      %1547 = vmatprep.subr.bf16.mxu0 0
      %1548 = vmatpush1.bf16.msra.mxu0 0
      %1549 = vmatprep.subr.bf16.mxu0 0
      %1550 = vmatpush1.bf16.msra.mxu0 0
      %1551 = vmatprep.subr.bf16.mxu0 0
      %1552 = vmatpush1.bf16.msra.mxu0 0
      %1553 = vmatprep.subr.bf16.mxu0 0
      %1554 = vmatpush1.bf16.msra.mxu0 0
      %1555 = vmatprep.subr.bf16.mxu0 0
      %1556 = vmatpush1.bf16.msra.mxu0 0
      %1557 = vmatprep.subr.bf16.mxu0 %v1541
      %1558 = vmatpush1.bf16.msra.mxu0 %v1538
      %1559 = vmatprep.subr.bf16.mxu0 0
      %1560 = vmatpush2.bf16.msra.mxu0 0
      %1561 = vmatprep.subr.bf16.mxu0 0
      %1562 = vmatpush2.bf16.msra.mxu0 0
      %1563 = vmatprep.subr.bf16.mxu0 0
      %1564 = vmatpush2.bf16.msra.mxu0 0
      %1565 = vmatprep.subr.bf16.mxu0 0
      %1566 = vmatpush2.bf16.msra.mxu0 0
      %1567 = vmatprep.subr.bf16.mxu0 0
      %1568 = vmatpush2.bf16.msra.mxu0 0
      %1569 = vmatprep.subr.bf16.mxu0 0
      %1570 = vmatpush2.bf16.msra.mxu0 0
      %1571 = vmatprep.subr.bf16.mxu0 0
      %1572 = vmatpush2.bf16.msra.mxu0 0
      %1573 = vmatprep.subr.bf16.mxu0 0
      %1574 = vmatpush2.bf16.msra.mxu0 0
      %1575 = vmatprep.mubr.bf16.mxu0 0
      %1576 = vmatmul.mubr.bf16.gmra.mxu0 %v1532
      %v1577 = vpop.f32.mrf.mxu0
      %v1578 = vadd.f32 %v875, %v1577
      %v1579 = vpop.f32.mrf.mxu0
      %v1580 = vadd.f32 %v877, %v1579
      %v1581 = vpop.f32.mrf.mxu0
      %v1582 = vadd.f32 %v879, %v1581
      %v1583 = vpop.f32.mrf.mxu0
      %v1584 = vadd.f32 %v881, %v1583
      %1585 = vmatprep.mubr.bf16.mxu0 0
      %1586 = vmatmul.mubr.bf16.gmra.mxu0 %v1535
      %v1587 = vpop.f32.mrf.mxu0
      %v1588 = vadd.f32 %v885, %v1587
      %v1589 = vpop.f32.mrf.mxu0
      %v1590 = vadd.f32 %v887, %v1589
      %v1591 = vpop.f32.mrf.mxu0
      %v1592 = vadd.f32 %v889, %v1591
      %v1593 = vpop.f32.mrf.mxu0
      %v1594 = vadd.f32 %v891, %v1593
      %1595 = vmatprep.mubr.bf16.mxu0 0
      %1596 = vmatmul.mubr.bf16.gmra.mxu0 %v639
      %v1597 = vpop.f32.mrf.mxu0
      %v1598 = vadd.f32 %v895, %v1597
      %v1599 = vpop.f32.mrf.mxu0
      %v1600 = vadd.f32 %v897, %v1599
      %v1601 = vpop.f32.mrf.mxu0
      %v1602 = vadd.f32 %v899, %v1601
      %v1603 = vpop.f32.mrf.mxu0
      %v1604 = vadd.f32 %v901, %v1603
      %1605 = vmatprep.mubr.bf16.mxu0 0
      %1606 = vmatmul.mubr.bf16.gmra.mxu0 %v642
      %v1607 = vpop.f32.mrf.mxu0
      %v1608 = vadd.f32 %v905, %v1607
      %v1609 = vpop.f32.mrf.mxu0
      %v1610 = vadd.f32 %v907, %v1609
      %v1611 = vpop.f32.mrf.mxu0
      %v1612 = vadd.f32 %v909, %v1611
      %v1613 = vpop.f32.mrf.mxu0
      %v1614 = vadd.f32 %v911, %v1613
      %1615 = vmatprep.mubr.bf16.mxu0 0
      %1616 = vmatmul.mubr.bf16.gmra.mxu0 %v645
      %v1617 = vpop.f32.mrf.mxu0
      %v1618 = vadd.f32 %v915, %v1617
      %v1619 = vpop.f32.mrf.mxu0
      %v1620 = vadd.f32 %v917, %v1619
      %v1621 = vpop.f32.mrf.mxu0
      %v1622 = vadd.f32 %v919, %v1621
      %v1623 = vpop.f32.mrf.mxu0
      %v1624 = vadd.f32 %v921, %v1623
      %1625 = vmatprep.mubr.bf16.mxu0 0
      %1626 = vmatmul.mubr.bf16.gmra.mxu0 %v648
      %v1627 = vpop.f32.mrf.mxu0
      %v1628 = vadd.f32 %v925, %v1627
      %v1629 = vpop.f32.mrf.mxu0
      %v1630 = vadd.f32 %v927, %v1629
      %v1631 = vpop.f32.mrf.mxu0
      %v1632 = vadd.f32 %v929, %v1631
      %v1633 = vpop.f32.mrf.mxu0
      %v1634 = vadd.f32 %v931, %v1633
      %1635 = vmatprep.mubr.bf16.mxu0 0
      %1636 = vmatmul.mubr.bf16.gmra.mxu0 %v651
      %v1637 = vpop.f32.mrf.mxu0
      %v1638 = vadd.f32 %v935, %v1637
      %v1639 = vpop.f32.mrf.mxu0
      %v1640 = vadd.f32 %v937, %v1639
      %v1641 = vpop.f32.mrf.mxu0
      %v1642 = vadd.f32 %v939, %v1641
      %v1643 = vpop.f32.mrf.mxu0
      %v1644 = vadd.f32 %v941, %v1643
      %1645 = vmatprep.mubr.bf16.mxu0 0
      %1646 = vmatmul.mubr.bf16.gmra.mxu0 %v654
      %v1647 = vpop.f32.mrf.mxu0
      %v1648 = vadd.f32 %v945, %v1647
      %v1649 = vpop.f32.mrf.mxu0
      %v1650 = vadd.f32 %v947, %v1649
      %v1651 = vpop.f32.mrf.mxu0
      %v1652 = vadd.f32 %v949, %v1651
      %v1653 = vpop.f32.mrf.mxu0
      %v1654 = vadd.f32 %v951, %v1653
      %1655 = vmatprep.mubr.bf16.mxu0 0
      %1656 = vmatmul.mubr.bf16.gmra.mxu0 %v657
      %v1657 = vpop.f32.mrf.mxu0
      %v1658 = vadd.f32 %v955, %v1657
      %v1659 = vpop.f32.mrf.mxu0
      %v1660 = vadd.f32 %v957, %v1659
      %v1661 = vpop.f32.mrf.mxu0
      %v1662 = vadd.f32 %v959, %v1661
      %v1663 = vpop.f32.mrf.mxu0
      %v1664 = vadd.f32 %v961, %v1663
      %1665 = vmatprep.mubr.bf16.mxu0 0
      %1666 = vmatmul.mubr.bf16.gmra.mxu0 %v660
      %v1667 = vpop.f32.mrf.mxu0
      %v1668 = vadd.f32 %v965, %v1667
      %v1669 = vpop.f32.mrf.mxu0
      %v1670 = vadd.f32 %v967, %v1669
      %v1671 = vpop.f32.mrf.mxu0
      %v1672 = vadd.f32 %v969, %v1671
      %v1673 = vpop.f32.mrf.mxu0
      %v1674 = vadd.f32 %v971, %v1673
      %1675 = vmatprep.mubr.bf16.mxu0 0
      %1676 = vmatmul.mubr.bf16.gmra.mxu0 %v663
      %v1677 = vpop.f32.mrf.mxu0
      %v1678 = vadd.f32 %v975, %v1677
      %v1679 = vpop.f32.mrf.mxu0
      %v1680 = vadd.f32 %v977, %v1679
      %v1681 = vpop.f32.mrf.mxu0
      %v1682 = vadd.f32 %v979, %v1681
      %v1683 = vpop.f32.mrf.mxu0
      %v1684 = vadd.f32 %v981, %v1683
      %1685 = vmatprep.mubr.bf16.mxu0 0
      %1686 = vmatmul.mubr.bf16.gmra.mxu0 %v666
      %v1687 = vpop.f32.mrf.mxu0
      %v1688 = vadd.f32 %v985, %v1687
      %v1689 = vpop.f32.mrf.mxu0
      %v1690 = vadd.f32 %v987, %v1689
      %v1691 = vpop.f32.mrf.mxu0
      %v1692 = vadd.f32 %v989, %v1691
      %v1693 = vpop.f32.mrf.mxu0
      %v1694 = vadd.f32 %v991, %v1693
      %1695 = vmatprep.mubr.bf16.mxu0 0
      %1696 = vmatmul.mubr.bf16.gmra.mxu0 %v669
      %v1697 = vpop.f32.mrf.mxu0
      %v1698 = vadd.f32 %v995, %v1697
      %v1699 = vpop.f32.mrf.mxu0
      %v1700 = vadd.f32 %v997, %v1699
      %v1701 = vpop.f32.mrf.mxu0
      %v1702 = vadd.f32 %v999, %v1701
      %v1703 = vpop.f32.mrf.mxu0
      %v1704 = vadd.f32 %v1001, %v1703
      %1705 = vmatprep.mubr.bf16.mxu0 0
      %1706 = vmatmul.mubr.bf16.gmra.mxu0 %v672
      %v1707 = vpop.f32.mrf.mxu0
      %v1708 = vadd.f32 %v1005, %v1707
      %v1709 = vpop.f32.mrf.mxu0
      %v1710 = vadd.f32 %v1007, %v1709
      %v1711 = vpop.f32.mrf.mxu0
      %v1712 = vadd.f32 %v1009, %v1711
      %v1713 = vpop.f32.mrf.mxu0
      %v1714 = vadd.f32 %v1011, %v1713
      %1715 = vmatprep.mubr.bf16.mxu0 0
      %1716 = vmatmul.mubr.bf16.gmra.mxu0 %v675
      %v1717 = vpop.f32.mrf.mxu0
      %v1718 = vadd.f32 %v1015, %v1717
      %v1719 = vpop.f32.mrf.mxu0
      %v1720 = vadd.f32 %v1017, %v1719
      %v1721 = vpop.f32.mrf.mxu0
      %v1722 = vadd.f32 %v1019, %v1721
      %v1723 = vpop.f32.mrf.mxu0
      %v1724 = vadd.f32 %v1021, %v1723
      %1725 = vmatprep.mubr.bf16.mxu0 0
      %1726 = vmatmul.mubr.bf16.gmra.mxu0 %v678
      %v1727 = vpop.f32.mrf.mxu0
      %v1728 = vadd.f32 %v1025, %v1727
      %v1729 = vpop.f32.mrf.mxu0
      %v1730 = vadd.f32 %v1027, %v1729
      %v1731 = vpop.f32.mrf.mxu0
      %v1732 = vadd.f32 %v1029, %v1731
      %v1733 = vpop.f32.mrf.mxu0
      %v1734 = vadd.f32 %v1031, %v1733
      %1735 = vmatprep.mubr.bf16.mxu0 0
      %1736 = vmatmul.mubr.bf16.gmra.mxu0 %v681
      %v1737 = vpop.f32.mrf.mxu0
      %v1738 = vadd.f32 %v1035, %v1737
      %v1739 = vpop.f32.mrf.mxu0
      %v1740 = vadd.f32 %v1037, %v1739
      %v1741 = vpop.f32.mrf.mxu0
      %v1742 = vadd.f32 %v1039, %v1741
      %v1743 = vpop.f32.mrf.mxu0
      %v1744 = vadd.f32 %v1041, %v1743
      %1745 = vmatprep.mubr.bf16.mxu0 0
      %1746 = vmatmul.mubr.bf16.gmra.mxu0 %v684
      %v1747 = vpop.f32.mrf.mxu0
      %v1748 = vadd.f32 %v1045, %v1747
      %v1749 = vpop.f32.mrf.mxu0
      %v1750 = vadd.f32 %v1047, %v1749
      %v1751 = vpop.f32.mrf.mxu0
      %v1752 = vadd.f32 %v1049, %v1751
      %v1753 = vpop.f32.mrf.mxu0
      %v1754 = vadd.f32 %v1051, %v1753
      %1755 = vmatprep.mubr.bf16.mxu0 0
      %1756 = vmatmul.mubr.bf16.gmra.mxu0 %v687
      %v1757 = vpop.f32.mrf.mxu0
      %v1758 = vadd.f32 %v1055, %v1757
      %v1759 = vpop.f32.mrf.mxu0
      %v1760 = vadd.f32 %v1057, %v1759
      %v1761 = vpop.f32.mrf.mxu0
      %v1762 = vadd.f32 %v1059, %v1761
      %v1763 = vpop.f32.mrf.mxu0
      %v1764 = vadd.f32 %v1061, %v1763
      %1765 = vmatprep.mubr.bf16.mxu0 0
      %1766 = vmatmul.mubr.bf16.gmra.mxu0 %v690
      %v1767 = vpop.f32.mrf.mxu0
      %v1768 = vadd.f32 %v1065, %v1767
      %v1769 = vpop.f32.mrf.mxu0
      %v1770 = vadd.f32 %v1067, %v1769
      %v1771 = vpop.f32.mrf.mxu0
      %v1772 = vadd.f32 %v1069, %v1771
      %v1773 = vpop.f32.mrf.mxu0
      %v1774 = vadd.f32 %v1071, %v1773
      %1775 = vmatprep.mubr.bf16.mxu0 0
      %1776 = vmatmul.mubr.bf16.gmra.mxu0 %v693
      %v1777 = vpop.f32.mrf.mxu0
      %v1778 = vadd.f32 %v1075, %v1777
      %v1779 = vpop.f32.mrf.mxu0
      %v1780 = vadd.f32 %v1077, %v1779
      %v1781 = vpop.f32.mrf.mxu0
      %v1782 = vadd.f32 %v1079, %v1781
      %v1783 = vpop.f32.mrf.mxu0
      %v1784 = vadd.f32 %v1081, %v1783
      %1785 = vmatprep.mubr.bf16.mxu0 0
      %1786 = vmatmul.mubr.bf16.gmra.mxu0 %v696
      %v1787 = vpop.f32.mrf.mxu0
      %v1788 = vadd.f32 %v1085, %v1787
      %v1789 = vpop.f32.mrf.mxu0
      %v1790 = vadd.f32 %v1087, %v1789
      %v1791 = vpop.f32.mrf.mxu0
      %v1792 = vadd.f32 %v1089, %v1791
      %v1793 = vpop.f32.mrf.mxu0
      %v1794 = vadd.f32 %v1091, %v1793
      %1795 = vmatprep.mubr.bf16.mxu0 0
      %1796 = vmatmul.mubr.bf16.gmra.mxu0 %v699
      %v1797 = vpop.f32.mrf.mxu0
      %v1798 = vadd.f32 %v1095, %v1797
      %v1799 = vpop.f32.mrf.mxu0
      %v1800 = vadd.f32 %v1097, %v1799
      %v1801 = vpop.f32.mrf.mxu0
      %v1802 = vadd.f32 %v1099, %v1801
      %v1803 = vpop.f32.mrf.mxu0
      %v1804 = vadd.f32 %v1101, %v1803
      %1805 = vmatprep.mubr.bf16.mxu0 0
      %1806 = vmatmul.mubr.bf16.gmra.mxu0 %v702
      %v1807 = vpop.f32.mrf.mxu0
      %v1808 = vadd.f32 %v1105, %v1807
      %v1809 = vpop.f32.mrf.mxu0
      %v1810 = vadd.f32 %v1107, %v1809
      %v1811 = vpop.f32.mrf.mxu0
      %v1812 = vadd.f32 %v1109, %v1811
      %v1813 = vpop.f32.mrf.mxu0
      %v1814 = vadd.f32 %v1111, %v1813
      %1815 = vmatprep.mubr.bf16.mxu0 0
      %1816 = vmatmul.mubr.bf16.gmra.mxu0 %v705
      %v1817 = vpop.f32.mrf.mxu0
      %v1818 = vadd.f32 %v1115, %v1817
      %v1819 = vpop.f32.mrf.mxu0
      %v1820 = vadd.f32 %v1117, %v1819
      %v1821 = vpop.f32.mrf.mxu0
      %v1822 = vadd.f32 %v1119, %v1821
      %v1823 = vpop.f32.mrf.mxu0
      %v1824 = vadd.f32 %v1121, %v1823
      %1825 = vmatprep.mubr.bf16.mxu0 0
      %1826 = vmatmul.mubr.bf16.gmra.mxu0 %v708
      %v1827 = vpop.f32.mrf.mxu0
      %v1828 = vadd.f32 %v1125, %v1827
      %v1829 = vpop.f32.mrf.mxu0
      %v1830 = vadd.f32 %v1127, %v1829
      %v1831 = vpop.f32.mrf.mxu0
      %v1832 = vadd.f32 %v1129, %v1831
      %v1833 = vpop.f32.mrf.mxu0
      %v1834 = vadd.f32 %v1131, %v1833
      %1835 = vmatprep.mubr.bf16.mxu0 0
      %1836 = vmatmul.mubr.bf16.gmra.mxu0 %v711
      %v1837 = vpop.f32.mrf.mxu0
      %v1838 = vadd.f32 %v1135, %v1837
      %v1839 = vpop.f32.mrf.mxu0
      %v1840 = vadd.f32 %v1137, %v1839
      %v1841 = vpop.f32.mrf.mxu0
      %v1842 = vadd.f32 %v1139, %v1841
      %v1843 = vpop.f32.mrf.mxu0
      %v1844 = vadd.f32 %v1141, %v1843
      %1845 = vmatprep.mubr.bf16.mxu0 0
      %1846 = vmatmul.mubr.bf16.gmra.mxu0 %v714
      %v1847 = vpop.f32.mrf.mxu0
      %v1848 = vadd.f32 %v1145, %v1847
      %v1849 = vpop.f32.mrf.mxu0
      %v1850 = vadd.f32 %v1147, %v1849
      %v1851 = vpop.f32.mrf.mxu0
      %v1852 = vadd.f32 %v1149, %v1851
      %v1853 = vpop.f32.mrf.mxu0
      %v1854 = vadd.f32 %v1151, %v1853
      %1855 = vmatprep.mubr.bf16.mxu0 0
      %1856 = vmatmul.mubr.bf16.gmra.mxu0 %v717
      %v1857 = vpop.f32.mrf.mxu0
      %v1858 = vadd.f32 %v1155, %v1857
      %v1859 = vpop.f32.mrf.mxu0
      %v1860 = vadd.f32 %v1157, %v1859
      %v1861 = vpop.f32.mrf.mxu0
      %v1862 = vadd.f32 %v1159, %v1861
      %v1863 = vpop.f32.mrf.mxu0
      %v1864 = vadd.f32 %v1161, %v1863
      %1865 = vmatprep.mubr.bf16.mxu0 0
      %1866 = vmatmul.mubr.bf16.gmra.mxu0 %v720
      %v1867 = vpop.f32.mrf.mxu0
      %v1868 = vadd.f32 %v1165, %v1867
      %v1869 = vpop.f32.mrf.mxu0
      %v1870 = vadd.f32 %v1167, %v1869
      %v1871 = vpop.f32.mrf.mxu0
      %v1872 = vadd.f32 %v1169, %v1871
      %v1873 = vpop.f32.mrf.mxu0
      %v1874 = vadd.f32 %v1171, %v1873
      %1875 = vmatprep.mubr.bf16.mxu0 0
      %1876 = vmatmul.mubr.bf16.gmra.mxu0 %v723
      %v1877 = vpop.f32.mrf.mxu0
      %v1878 = vadd.f32 %v1175, %v1877
      %v1879 = vpop.f32.mrf.mxu0
      %v1880 = vadd.f32 %v1177, %v1879
      %v1881 = vpop.f32.mrf.mxu0
      %v1882 = vadd.f32 %v1179, %v1881
      %v1883 = vpop.f32.mrf.mxu0
      %v1884 = vadd.f32 %v1181, %v1883
      %1885 = vmatprep.mubr.bf16.mxu0 0
      %1886 = vmatmul.mubr.bf16.gmra.mxu0 %v726
      %v1887 = vpop.f32.mrf.mxu0
      %v1888 = vadd.f32 %v1185, %v1887
      %v1889 = vpop.f32.mrf.mxu0
      %v1890 = vadd.f32 %v1187, %v1889
      %v1891 = vpop.f32.mrf.mxu0
      %v1892 = vadd.f32 %v1189, %v1891
      %v1893 = vpop.f32.mrf.mxu0
      %v1894 = vadd.f32 %v1191, %v1893
      %1895 = vmatprep.mubr.bf16.mxu0 0
      %1896 = vmatmul.mubr.bf16.gmra.mxu0 %v729
      %v1897 = vpop.f32.mrf.mxu0
      %v1898 = vadd.f32 %v1195, %v1897
      %v1899 = vpop.f32.mrf.mxu0
      %v1900 = vadd.f32 %v1197, %v1899
      %v1901 = vpop.f32.mrf.mxu0
      %v1902 = vadd.f32 %v1199, %v1901
      %v1903 = vpop.f32.mrf.mxu0
      %v1904 = vadd.f32 %v1201, %v1903
      %1905 = vmatprep.mubr.bf16.mxu0 0
      %1906 = vmatmul.mubr.bf16.gmra.mxu0 %v732
      %v1907 = vpop.f32.mrf.mxu0
      %v1908 = vadd.f32 %v1205, %v1907
      %v1909 = vpop.f32.mrf.mxu0
      %v1910 = vadd.f32 %v1207, %v1909
      %v1911 = vpop.f32.mrf.mxu0
      %v1912 = vadd.f32 %v1209, %v1911
      %v1913 = vpop.f32.mrf.mxu0
      %v1914 = vadd.f32 %v1211, %v1913
      %1915 = vmatprep.mubr.bf16.mxu0 0
      %1916 = vmatmul.mubr.bf16.gmra.mxu0 %v735
      %v1917 = vpop.f32.mrf.mxu0
      %v1918 = vadd.f32 %v1215, %v1917
      %v1919 = vpop.f32.mrf.mxu0
      %v1920 = vadd.f32 %v1217, %v1919
      %v1921 = vpop.f32.mrf.mxu0
      %v1922 = vadd.f32 %v1219, %v1921
      %v1923 = vpop.f32.mrf.mxu0
      %v1924 = vadd.f32 %v1221, %v1923
      %1925 = vmatprep.mubr.bf16.mxu0 0
      %1926 = vmatmul.mubr.bf16.gmra.mxu0 %v738
      %v1927 = vpop.f32.mrf.mxu0
      %v1928 = vadd.f32 %v1225, %v1927
      %v1929 = vpop.f32.mrf.mxu0
      %v1930 = vadd.f32 %v1227, %v1929
      %v1931 = vpop.f32.mrf.mxu0
      %v1932 = vadd.f32 %v1229, %v1931
      %v1933 = vpop.f32.mrf.mxu0
      %v1934 = vadd.f32 %v1231, %v1933
      %1935 = vmatprep.mubr.bf16.mxu0 0
      %1936 = vmatmul.mubr.bf16.gmra.mxu0 %v741
      %v1937 = vpop.f32.mrf.mxu0
      %v1938 = vadd.f32 %v1235, %v1937
      %v1939 = vpop.f32.mrf.mxu0
      %v1940 = vadd.f32 %v1237, %v1939
      %v1941 = vpop.f32.mrf.mxu0
      %v1942 = vadd.f32 %v1239, %v1941
      %v1943 = vpop.f32.mrf.mxu0
      %v1944 = vadd.f32 %v1241, %v1943
      %1945 = vmatprep.mubr.bf16.mxu0 0
      %1946 = vmatmul.mubr.bf16.gmra.mxu0 %v744
      %v1947 = vpop.f32.mrf.mxu0
      %v1948 = vadd.f32 %v1245, %v1947
      %v1949 = vpop.f32.mrf.mxu0
      %v1950 = vadd.f32 %v1247, %v1949
      %v1951 = vpop.f32.mrf.mxu0
      %v1952 = vadd.f32 %v1249, %v1951
      %v1953 = vpop.f32.mrf.mxu0
      %v1954 = vadd.f32 %v1251, %v1953
      %1955 = vmatprep.mubr.bf16.mxu0 0
      %1956 = vmatmul.mubr.bf16.gmra.mxu0 %v747
      %v1957 = vpop.f32.mrf.mxu0
      %v1958 = vadd.f32 %v1255, %v1957
      %v1959 = vpop.f32.mrf.mxu0
      %v1960 = vadd.f32 %v1257, %v1959
      %v1961 = vpop.f32.mrf.mxu0
      %v1962 = vadd.f32 %v1259, %v1961
      %v1963 = vpop.f32.mrf.mxu0
      %v1964 = vadd.f32 %v1261, %v1963
      %1965 = vmatprep.mubr.bf16.mxu0 0
      %1966 = vmatmul.mubr.bf16.gmra.mxu0 %v750
      %v1967 = vpop.f32.mrf.mxu0
      %v1968 = vadd.f32 %v1265, %v1967
      %v1969 = vpop.f32.mrf.mxu0
      %v1970 = vadd.f32 %v1267, %v1969
      %v1971 = vpop.f32.mrf.mxu0
      %v1972 = vadd.f32 %v1269, %v1971
      %v1973 = vpop.f32.mrf.mxu0
      %v1974 = vadd.f32 %v1271, %v1973
      %1975 = vmatprep.mubr.bf16.mxu0 0
      %1976 = vmatmul.mubr.bf16.gmra.mxu0 %v753
      %v1977 = vpop.f32.mrf.mxu0
      %v1978 = vadd.f32 %v1275, %v1977
      %v1979 = vpop.f32.mrf.mxu0
      %v1980 = vadd.f32 %v1277, %v1979
      %v1981 = vpop.f32.mrf.mxu0
      %v1982 = vadd.f32 %v1279, %v1981
      %v1983 = vpop.f32.mrf.mxu0
      %v1984 = vadd.f32 %v1281, %v1983
      %1985 = vmatprep.mubr.bf16.mxu0 0
      %1986 = vmatmul.mubr.bf16.gmra.mxu0 %v756
      %v1987 = vpop.f32.mrf.mxu0
      %v1988 = vadd.f32 %v1285, %v1987
      %v1989 = vpop.f32.mrf.mxu0
      %v1990 = vadd.f32 %v1287, %v1989
      %v1991 = vpop.f32.mrf.mxu0
      %v1992 = vadd.f32 %v1289, %v1991
      %v1993 = vpop.f32.mrf.mxu0
      %v1994 = vadd.f32 %v1291, %v1993
      %1995 = vmatprep.mubr.bf16.mxu0 0
      %1996 = vmatmul.mubr.bf16.gmra.mxu0 %v759
      %v1997 = vpop.f32.mrf.mxu0
      %v1998 = vadd.f32 %v1295, %v1997
      %v1999 = vpop.f32.mrf.mxu0
      %v2000 = vadd.f32 %v1297, %v1999
      %v2001 = vpop.f32.mrf.mxu0
      %v2002 = vadd.f32 %v1299, %v2001
      %v2003 = vpop.f32.mrf.mxu0
      %v2004 = vadd.f32 %v1301, %v2003
      %2005 = vmatprep.mubr.bf16.mxu0 0
      %2006 = vmatmul.mubr.bf16.gmra.mxu0 %v762
      %v2007 = vpop.f32.mrf.mxu0
      %v2008 = vadd.f32 %v1305, %v2007
      %v2009 = vpop.f32.mrf.mxu0
      %v2010 = vadd.f32 %v1307, %v2009
      %v2011 = vpop.f32.mrf.mxu0
      %v2012 = vadd.f32 %v1309, %v2011
      %v2013 = vpop.f32.mrf.mxu0
      %v2014 = vadd.f32 %v1311, %v2013
      %2015 = vmatprep.mubr.bf16.mxu0 0
      %2016 = vmatmul.mubr.bf16.gmra.mxu0 %v765
      %v2017 = vpop.f32.mrf.mxu0
      %v2018 = vadd.f32 %v1315, %v2017
      %v2019 = vpop.f32.mrf.mxu0
      %v2020 = vadd.f32 %v1317, %v2019
      %v2021 = vpop.f32.mrf.mxu0
      %v2022 = vadd.f32 %v1319, %v2021
      %v2023 = vpop.f32.mrf.mxu0
      %v2024 = vadd.f32 %v1321, %v2023
      %2025 = vmatprep.mubr.bf16.mxu0 0
      %2026 = vmatmul.mubr.bf16.gmra.mxu0 %v768
      %v2027 = vpop.f32.mrf.mxu0
      %v2028 = vadd.f32 %v1325, %v2027
      %v2029 = vpop.f32.mrf.mxu0
      %v2030 = vadd.f32 %v1327, %v2029
      %v2031 = vpop.f32.mrf.mxu0
      %v2032 = vadd.f32 %v1329, %v2031
      %v2033 = vpop.f32.mrf.mxu0
      %v2034 = vadd.f32 %v1331, %v2033
      %2035 = vmatprep.mubr.bf16.mxu0 0
      %2036 = vmatmul.mubr.bf16.gmra.mxu0 %v771
      %v2037 = vpop.f32.mrf.mxu0
      %v2038 = vadd.f32 %v1335, %v2037
      %v2039 = vpop.f32.mrf.mxu0
      %v2040 = vadd.f32 %v1337, %v2039
      %v2041 = vpop.f32.mrf.mxu0
      %v2042 = vadd.f32 %v1339, %v2041
      %v2043 = vpop.f32.mrf.mxu0
      %v2044 = vadd.f32 %v1341, %v2043
      %2045 = vmatprep.mubr.bf16.mxu0 0
      %2046 = vmatmul.mubr.bf16.gmra.mxu0 %v774
      %v2047 = vpop.f32.mrf.mxu0
      %v2048 = vadd.f32 %v1345, %v2047
      %v2049 = vpop.f32.mrf.mxu0
      %v2050 = vadd.f32 %v1347, %v2049
      %v2051 = vpop.f32.mrf.mxu0
      %v2052 = vadd.f32 %v1349, %v2051
      %v2053 = vpop.f32.mrf.mxu0
      %v2054 = vadd.f32 %v1351, %v2053
      %2055 = vmatprep.mubr.bf16.mxu0 0
      %2056 = vmatmul.mubr.bf16.gmra.mxu0 %v777
      %v2057 = vpop.f32.mrf.mxu0
      %v2058 = vadd.f32 %v1355, %v2057
      %v2059 = vpop.f32.mrf.mxu0
      %v2060 = vadd.f32 %v1357, %v2059
      %v2061 = vpop.f32.mrf.mxu0
      %v2062 = vadd.f32 %v1359, %v2061
      %v2063 = vpop.f32.mrf.mxu0
      %v2064 = vadd.f32 %v1361, %v2063
      %2065 = vmatprep.mubr.bf16.mxu0 0
      %2066 = vmatmul.mubr.bf16.gmra.mxu0 %v780
      %v2067 = vpop.f32.mrf.mxu0
      %v2068 = vadd.f32 %v1365, %v2067
      %v2069 = vpop.f32.mrf.mxu0
      %v2070 = vadd.f32 %v1367, %v2069
      %v2071 = vpop.f32.mrf.mxu0
      %v2072 = vadd.f32 %v1369, %v2071
      %v2073 = vpop.f32.mrf.mxu0
      %v2074 = vadd.f32 %v1371, %v2073
      %2075 = vmatprep.mubr.bf16.mxu0 0
      %2076 = vmatmul.mubr.bf16.gmra.mxu0 %v783
      %v2077 = vpop.f32.mrf.mxu0
      %v2078 = vadd.f32 %v1375, %v2077
      %v2079 = vpop.f32.mrf.mxu0
      %v2080 = vadd.f32 %v1377, %v2079
      %v2081 = vpop.f32.mrf.mxu0
      %v2082 = vadd.f32 %v1379, %v2081
      %v2083 = vpop.f32.mrf.mxu0
      %v2084 = vadd.f32 %v1381, %v2083
      %2085 = vmatprep.mubr.bf16.mxu0 0
      %2086 = vmatmul.mubr.bf16.gmra.mxu0 %v786
      %v2087 = vpop.f32.mrf.mxu0
      %v2088 = vadd.f32 %v1385, %v2087
      %v2089 = vpop.f32.mrf.mxu0
      %v2090 = vadd.f32 %v1387, %v2089
      %v2091 = vpop.f32.mrf.mxu0
      %v2092 = vadd.f32 %v1389, %v2091
      %v2093 = vpop.f32.mrf.mxu0
      %v2094 = vadd.f32 %v1391, %v2093
      %2095 = vmatprep.mubr.bf16.mxu0 0
      %2096 = vmatmul.mubr.bf16.gmra.mxu0 %v789
      %v2097 = vpop.f32.mrf.mxu0
      %v2098 = vadd.f32 %v1395, %v2097
      %v2099 = vpop.f32.mrf.mxu0
      %v2100 = vadd.f32 %v1397, %v2099
      %v2101 = vpop.f32.mrf.mxu0
      %v2102 = vadd.f32 %v1399, %v2101
      %v2103 = vpop.f32.mrf.mxu0
      %v2104 = vadd.f32 %v1401, %v2103
      %2105 = vmatprep.mubr.bf16.mxu0 0
      %2106 = vmatmul.mubr.bf16.gmra.mxu0 %v792
      %v2107 = vpop.f32.mrf.mxu0
      %v2108 = vadd.f32 %v1405, %v2107
      %v2109 = vpop.f32.mrf.mxu0
      %v2110 = vadd.f32 %v1407, %v2109
      %v2111 = vpop.f32.mrf.mxu0
      %v2112 = vadd.f32 %v1409, %v2111
      %v2113 = vpop.f32.mrf.mxu0
      %v2114 = vadd.f32 %v1411, %v2113
      %2115 = vmatprep.mubr.bf16.mxu0 0
      %2116 = vmatmul.mubr.bf16.gmra.mxu0 %v795
      %v2117 = vpop.f32.mrf.mxu0
      %v2118 = vadd.f32 %v1415, %v2117
      %v2119 = vpop.f32.mrf.mxu0
      %v2120 = vadd.f32 %v1417, %v2119
      %v2121 = vpop.f32.mrf.mxu0
      %v2122 = vadd.f32 %v1419, %v2121
      %v2123 = vpop.f32.mrf.mxu0
      %v2124 = vadd.f32 %v1421, %v2123
      %2125 = vmatprep.mubr.bf16.mxu0 0
      %2126 = vmatmul.mubr.bf16.gmra.mxu0 %v798
      %v2127 = vpop.f32.mrf.mxu0
      %v2128 = vadd.f32 %v1425, %v2127
      %v2129 = vpop.f32.mrf.mxu0
      %v2130 = vadd.f32 %v1427, %v2129
      %v2131 = vpop.f32.mrf.mxu0
      %v2132 = vadd.f32 %v1429, %v2131
      %v2133 = vpop.f32.mrf.mxu0
      %v2134 = vadd.f32 %v1431, %v2133
      %2135 = vmatprep.mubr.bf16.mxu0 0
      %2136 = vmatmul.mubr.bf16.gmra.mxu0 %v801
      %v2137 = vpop.f32.mrf.mxu0
      %v2138 = vadd.f32 %v1435, %v2137
      %v2139 = vpop.f32.mrf.mxu0
      %v2140 = vadd.f32 %v1437, %v2139
      %v2141 = vpop.f32.mrf.mxu0
      %v2142 = vadd.f32 %v1439, %v2141
      %v2143 = vpop.f32.mrf.mxu0
      %v2144 = vadd.f32 %v1441, %v2143
      %2145 = vmatprep.mubr.bf16.mxu0 0
      %2146 = vmatmul.mubr.bf16.gmra.mxu0 %v804
      %v2147 = vpop.f32.mrf.mxu0
      %v2148 = vadd.f32 %v1445, %v2147
      %v2149 = vpop.f32.mrf.mxu0
      %v2150 = vadd.f32 %v1447, %v2149
      %v2151 = vpop.f32.mrf.mxu0
      %v2152 = vadd.f32 %v1449, %v2151
      %v2153 = vpop.f32.mrf.mxu0
      %v2154 = vadd.f32 %v1451, %v2153
      %2155 = vmatprep.mubr.bf16.mxu0 0
      %2156 = vmatmul.mubr.bf16.gmra.mxu0 %v807
      %v2157 = vpop.f32.mrf.mxu0
      %v2158 = vadd.f32 %v1455, %v2157
      %v2159 = vpop.f32.mrf.mxu0
      %v2160 = vadd.f32 %v1457, %v2159
      %v2161 = vpop.f32.mrf.mxu0
      %v2162 = vadd.f32 %v1459, %v2161
      %v2163 = vpop.f32.mrf.mxu0
      %v2164 = vadd.f32 %v1461, %v2163
      %2165 = vmatprep.mubr.bf16.mxu0 0
      %2166 = vmatmul.mubr.bf16.gmra.mxu0 %v810
      %v2167 = vpop.f32.mrf.mxu0
      %v2168 = vadd.f32 %v1465, %v2167
      %v2169 = vpop.f32.mrf.mxu0
      %v2170 = vadd.f32 %v1467, %v2169
      %v2171 = vpop.f32.mrf.mxu0
      %v2172 = vadd.f32 %v1469, %v2171
      %v2173 = vpop.f32.mrf.mxu0
      %v2174 = vadd.f32 %v1471, %v2173
      %2175 = vmatprep.mubr.bf16.mxu0 0
      %2176 = vmatmul.mubr.bf16.gmra.mxu0 %v813
      %v2177 = vpop.f32.mrf.mxu0
      %v2178 = vadd.f32 %v1475, %v2177
      %v2179 = vpop.f32.mrf.mxu0
      %v2180 = vadd.f32 %v1477, %v2179
      %v2181 = vpop.f32.mrf.mxu0
      %v2182 = vadd.f32 %v1479, %v2181
      %v2183 = vpop.f32.mrf.mxu0
      %v2184 = vadd.f32 %v1481, %v2183
      %2185 = vmatprep.mubr.bf16.mxu0 0
      %2186 = vmatmul.mubr.bf16.gmra.mxu0 %v816
      %v2187 = vpop.f32.mrf.mxu0
      %v2188 = vadd.f32 %v1485, %v2187
      %v2189 = vpop.f32.mrf.mxu0
      %v2190 = vadd.f32 %v1487, %v2189
      %v2191 = vpop.f32.mrf.mxu0
      %v2192 = vadd.f32 %v1489, %v2191
      %v2193 = vpop.f32.mrf.mxu0
      %v2194 = vadd.f32 %v1491, %v2193
      %2195 = vmatprep.mubr.bf16.mxu0 0
      %2196 = vmatmul.mubr.bf16.gmra.mxu0 %v819
      %v2197 = vpop.f32.mrf.mxu0
      %v2198 = vadd.f32 %v1495, %v2197
      %v2199 = vpop.f32.mrf.mxu0
      %v2200 = vadd.f32 %v1497, %v2199
      %v2201 = vpop.f32.mrf.mxu0
      %v2202 = vadd.f32 %v1499, %v2201
      %v2203 = vpop.f32.mrf.mxu0
      %v2204 = vadd.f32 %v1501, %v2203
      %2205 = vmatprep.mubr.bf16.mxu0 0
      %2206 = vmatmul.mubr.bf16.gmra.mxu0 %v822
      %v2207 = vpop.f32.mrf.mxu0
      %v2208 = vadd.f32 %v1505, %v2207
      %v2209 = vpop.f32.mrf.mxu0
      %v2210 = vadd.f32 %v1507, %v2209
      %v2211 = vpop.f32.mrf.mxu0
      %v2212 = vadd.f32 %v1509, %v2211
      %v2213 = vpop.f32.mrf.mxu0
      %v2214 = vadd.f32 %v1511, %v2213
      %2215 = vdwg.mxu0
      %v2216 = vld [vmem:[%s165 + $0x20] sm:$0xf]
      %v2217 = vld [vmem:[%s165 + $0x24] sm:$0xf]
      %v2218 = vld [vmem:[%s165 + $0x28] sm:$0xf]
      %v2219 = vld [vmem:[%s165 + $0x2c] sm:$0xf]
      %v2220 = vld [vmem:[%s165 + $0x30] sm:$0xf]
      %v2221 = vld [vmem:[%s165 + $0x34] sm:$0xf]
      %v2222 = vld [vmem:[%s165 + $0x38] sm:$0xf]
      %v2223 = vld [vmem:[%s165 + $0x3c] sm:$0xf]
      %v2224 = vld [vmem:[%s165 + $0x40] sm:$0xf]
      %v2225 = vld [vmem:[%s165 + $0x44] sm:$0xf]
      %v2226 = vld [vmem:[%s165 + $0x48] sm:$0xf]
      %v2227 = vld [vmem:[%s165 + $0x4c] sm:$0xf]
      %v2228 = vld [vmem:[%s165 + $0x50] sm:$0xf]
      %v2229 = vld [vmem:[%s165 + $0x54] sm:$0xf]
      %v2230 = vld [vmem:[%s165 + $0x58] sm:$0xf]
      %v2231 = vld [vmem:[%s165 + $0x5c] sm:$0xf]
      %v2232 = vld [vmem:[%s165 + $0x60] sm:$0xf]
      %v2233 = vld [vmem:[%s165 + $0x64] sm:$0xf]
      %v2234 = vld [vmem:[%s165 + $0x68] sm:$0xf]
      %v2235 = vld [vmem:[%s165 + $0x6c] sm:$0xf]
      %v2236 = vld [vmem:[%s165 + $0x70] sm:$0xf]
      %v2237 = vld [vmem:[%s165 + $0x74] sm:$0xf]
      %v2238 = vld [vmem:[%s165 + $0x78] sm:$0xf]
      %v2239 = vld [vmem:[%s165 + $0x7c] sm:$0xf]
      %v2240 = vld [vmem:[%s165 + $0x80] sm:$0xf]
      %v2241 = vld [vmem:[%s165 + $0x84] sm:$0xf]
      %v2242 = vld [vmem:[%s165 + $0x88] sm:$0xf]
      %v2243 = vld [vmem:[%s165 + $0x8c] sm:$0xf]
      %v2244 = vld [vmem:[%s165 + $0x90] sm:$0xf]
      %v2245 = vld [vmem:[%s165 + $0x94] sm:$0xf]
      %v2246 = vld [vmem:[%s165 + $0x98] sm:$0xf]
      %v2247 = vld [vmem:[%s165 + $0x9c] sm:$0xf]
      %v2248 = vld [vmem:[%s165 + $0xa0] sm:$0xf]
      %v2249 = vld [vmem:[%s165 + $0xa4] sm:$0xf]
      %v2250 = vld [vmem:[%s165 + $0xa8] sm:$0xf]
      %v2251 = vld [vmem:[%s165 + $0xac] sm:$0xf]
      %v2252 = vld [vmem:[%s165 + $0xb0] sm:$0xf]
      %v2253 = vld [vmem:[%s165 + $0xb4] sm:$0xf]
      %v2254 = vld [vmem:[%s165 + $0xb8] sm:$0xf]
      %v2255 = vld [vmem:[%s165 + $0xbc] sm:$0xf]
      %v2256 = vld [vmem:[%s165 + $0xc0] sm:$0xf]
      %v2257 = vld [vmem:[%s165 + $0xc4] sm:$0xf]
      %v2258 = vld [vmem:[%s165 + $0xc8] sm:$0xf]
      %v2259 = vld [vmem:[%s165 + $0xcc] sm:$0xf]
      %v2260 = vld [vmem:[%s165 + $0xd0] sm:$0xf]
      %v2261 = vld [vmem:[%s165 + $0xd4] sm:$0xf]
      %v2262 = vld [vmem:[%s165 + $0xd8] sm:$0xf]
      %v2263 = vld [vmem:[%s165 + $0xdc] sm:$0xf]
      %v2264 = vld [vmem:[%s165 + $0xe0] sm:$0xf]
      %v2265 = vld [vmem:[%s165 + $0xe4] sm:$0xf]
      %v2266 = vld [vmem:[%s165 + $0xe8] sm:$0xf]
      %v2267 = vld [vmem:[%s165 + $0xec] sm:$0xf]
      %v2268 = vld [vmem:[%s165 + $0xf0] sm:$0xf]
      %v2269 = vld [vmem:[%s165 + $0xf4] sm:$0xf]
      %v2270 = vld [vmem:[%s165 + $0xf8] sm:$0xf]
      %v2271 = vld [vmem:[%s165 + $0xfc] sm:$0xf]
      %v2272 = vld [vmem:[%s165 + $0x100] sm:$0xf]
      %v2273 = vld [vmem:[%s165 + $0x104] sm:$0xf]
      %v2274 = vld [vmem:[%s165 + $0x108] sm:$0xf]
      %v2275 = vld [vmem:[%s165 + $0x10c] sm:$0xf]
      %v2276 = vld [vmem:[%s165 + $0x110] sm:$0xf]
      %v2277 = vld [vmem:[%s165 + $0x114] sm:$0xf]
      %v2278 = vld [vmem:[%s165 + $0x118] sm:$0xf]
      %v2279 = vld [vmem:[%s165 + $0x11c] sm:$0xf]
      %v2280 = vld [vmem:[%s165 + $0x120] sm:$0xf]
      %v2281 = vld [vmem:[%s165 + $0x124] sm:$0xf]
      %v2282 = vld [vmem:[%s165 + $0x128] sm:$0xf]
      %v2283 = vld [vmem:[%s165 + $0x12c] sm:$0xf]
      %v2284 = vld [vmem:[%s165 + $0x130] sm:$0xf]
      %v2285 = vld [vmem:[%s165 + $0x134] sm:$0xf]
      %v2286 = vld [vmem:[%s165 + $0x138] sm:$0xf]
      %v2287 = vld [vmem:[%s165 + $0x13c] sm:$0xf]
      %v2288 = vld [vmem:[%s165 + $0x140] sm:$0xf]
      %v2289 = vld [vmem:[%s165 + $0x144] sm:$0xf]
      %v2290 = vld [vmem:[%s165 + $0x148] sm:$0xf]
      %v2291 = vld [vmem:[%s165 + $0x14c] sm:$0xf]
      %v2292 = vld [vmem:[%s165 + $0x150] sm:$0xf]
      %v2293 = vld [vmem:[%s165 + $0x154] sm:$0xf]
      %v2294 = vld [vmem:[%s165 + $0x158] sm:$0xf]
      %v2295 = vld [vmem:[%s165 + $0x15c] sm:$0xf]
      %v2296 = vld [vmem:[%s165 + $0x160] sm:$0xf]
      %v2297 = vld [vmem:[%s165 + $0x164] sm:$0xf]
      %v2298 = vld [vmem:[%s165 + $0x168] sm:$0xf]
      %v2299 = vld [vmem:[%s165 + $0x16c] sm:$0xf]
      %v2300 = vld [vmem:[%s165 + $0x170] sm:$0xf]
      %v2301 = vld [vmem:[%s165 + $0x174] sm:$0xf]
      %v2302 = vld [vmem:[%s165 + $0x178] sm:$0xf]
      %v2303 = vld [vmem:[%s165 + $0x17c] sm:$0xf]
      %v2304 = vld [vmem:[%s165 + $0x180] sm:$0xf]
      %v2305 = vld [vmem:[%s165 + $0x184] sm:$0xf]
      %v2306 = vld [vmem:[%s165 + $0x188] sm:$0xf]
      %v2307 = vld [vmem:[%s165 + $0x18c] sm:$0xf]
      %v2308 = vld [vmem:[%s165 + $0x190] sm:$0xf]
      %v2309 = vld [vmem:[%s165 + $0x194] sm:$0xf]
      %v2310 = vld [vmem:[%s165 + $0x198] sm:$0xf]
      %v2311 = vld [vmem:[%s165 + $0x19c] sm:$0xf]
      %v2312 = vld [vmem:[%s165 + $0x1a0] sm:$0xf]
      %v2313 = vld [vmem:[%s165 + $0x1a4] sm:$0xf]
      %v2314 = vld [vmem:[%s165 + $0x1a8] sm:$0xf]
      %v2315 = vld [vmem:[%s165 + $0x1ac] sm:$0xf]
      %v2316 = vld [vmem:[%s165 + $0x1b0] sm:$0xf]
      %v2317 = vld [vmem:[%s165 + $0x1b4] sm:$0xf]
      %v2318 = vld [vmem:[%s165 + $0x1b8] sm:$0xf]
      %v2319 = vld [vmem:[%s165 + $0x1bc] sm:$0xf]
      %v2320 = vld [vmem:[%s165 + $0x1c0] sm:$0xf]
      %v2321 = vld [vmem:[%s165 + $0x1c4] sm:$0xf]
      %v2322 = vld [vmem:[%s165 + $0x1c8] sm:$0xf]
      %v2323 = vld [vmem:[%s165 + $0x1cc] sm:$0xf]
      %v2324 = vld [vmem:[%s165 + $0x1d0] sm:$0xf]
      %v2325 = vld [vmem:[%s165 + $0x1d4] sm:$0xf]
      %v2326 = vld [vmem:[%s165 + $0x1d8] sm:$0xf]
      %v2327 = vld [vmem:[%s165 + $0x1dc] sm:$0xf]
      %v2328 = vld [vmem:[%s165 + $0x1e0] sm:$0xf]
      %v2329 = vld [vmem:[%s165 + $0x1e4] sm:$0xf]
      %v2330 = vld [vmem:[%s165 + $0x1e8] sm:$0xf]
      %v2331 = vld [vmem:[%s165 + $0x1ec] sm:$0xf]
      %v2332 = vld [vmem:[%s165 + $0x1f0] sm:$0xf]
      %v2333 = vld [vmem:[%s165 + $0x1f4] sm:$0xf]
      %v2334 = vld [vmem:[%s165 + $0x1f8] sm:$0xf]
      %v2335 = vld [vmem:[%s165 + $0x1fc] sm:$0xf]
      %v2336 = vld [vmem:[%s165 + $0x200] sm:$0xf]
      %v2337 = vld [vmem:[%s165 + $0x204] sm:$0xf]
      %v2338 = vld [vmem:[%s165 + $0x208] sm:$0xf]
      %v2339 = vld [vmem:[%s165 + $0x20c] sm:$0xf]
      %v2340 = vld [vmem:[%s165 + $0x210] sm:$0xf]
      %v2341 = vld [vmem:[%s165 + $0x214] sm:$0xf]
      %v2342 = vld [vmem:[%s165 + $0x218] sm:$0xf]
      %v2343 = vld [vmem:[%s165 + $0x21c] sm:$0xf]
      %s2344 = scalar_lea.vmem %s1, 32
      %v2345 = vld [vmem:[%s2344] sm:$0xff]
      %v2346 = vld [vmem:[%s2344 + $0x8] sm:$0x11]
      %v2475 = vunpack.c.l.b16 %v2216
      %v2476 = vunpack.c.l.b16 %v2217
      %v2477 = vunpack.c.l.b16 %v2218
      %v2478 = vunpack.c.l.b16 %v2219
      %v2479 = vunpack.c.l.b16 %v2220
      %v2480 = vunpack.c.l.b16 %v2221
      %v2481 = vunpack.c.l.b16 %v2222
      %v2482 = vunpack.c.l.b16 %v2223
      %v2483 = vunpack.c.l.b16 %v2224
      %v2484 = vunpack.c.l.b16 %v2225
      %v2485 = vunpack.c.l.b16 %v2226
      %v2486 = vunpack.c.l.b16 %v2227
      %v2487 = vunpack.c.l.b16 %v2228
      %v2488 = vunpack.c.l.b16 %v2229
      %v2489 = vunpack.c.l.b16 %v2230
      %v2490 = vunpack.c.l.b16 %v2231
      %v2491 = vunpack.c.l.b16 %v2232
      %v2492 = vunpack.c.l.b16 %v2233
      %v2493 = vunpack.c.l.b16 %v2234
      %v2494 = vunpack.c.l.b16 %v2235
      %v2495 = vunpack.c.l.b16 %v2236
      %v2496 = vunpack.c.l.b16 %v2237
      %v2497 = vunpack.c.l.b16 %v2238
      %v2498 = vunpack.c.l.b16 %v2239
      %v2499 = vunpack.c.l.b16 %v2240
      %v2500 = vunpack.c.l.b16 %v2241
      %v2501 = vunpack.c.l.b16 %v2242
      %v2502 = vunpack.c.l.b16 %v2243
      %v2503 = vunpack.c.l.b16 %v2244
      %v2504 = vunpack.c.l.b16 %v2245
      %v2505 = vunpack.c.l.b16 %v2246
      %v2506 = vunpack.c.l.b16 %v2247
      %v2507 = vunpack.c.l.b16 %v2248
      %v2508 = vunpack.c.l.b16 %v2249
      %v2509 = vunpack.c.l.b16 %v2250
      %v2510 = vunpack.c.l.b16 %v2251
      %v2511 = vunpack.c.l.b16 %v2252
      %v2512 = vunpack.c.l.b16 %v2253
      %v2513 = vunpack.c.l.b16 %v2254
      %v2514 = vunpack.c.l.b16 %v2255
      %v2515 = vunpack.c.l.b16 %v2256
      %v2516 = vunpack.c.l.b16 %v2257
      %v2517 = vunpack.c.l.b16 %v2258
      %v2518 = vunpack.c.l.b16 %v2259
      %v2519 = vunpack.c.l.b16 %v2260
      %v2520 = vunpack.c.l.b16 %v2261
      %v2521 = vunpack.c.l.b16 %v2262
      %v2522 = vunpack.c.l.b16 %v2263
      %v2523 = vunpack.c.l.b16 %v2264
      %v2524 = vunpack.c.l.b16 %v2265
      %v2525 = vunpack.c.l.b16 %v2266
      %v2526 = vunpack.c.l.b16 %v2267
      %v2527 = vunpack.c.l.b16 %v2268
      %v2528 = vunpack.c.l.b16 %v2269
      %v2529 = vunpack.c.l.b16 %v2270
      %v2530 = vunpack.c.l.b16 %v2271
      %v2531 = vunpack.c.l.b16 %v2272
      %v2532 = vunpack.c.l.b16 %v2273
      %v2533 = vunpack.c.l.b16 %v2274
      %v2534 = vunpack.c.l.b16 %v2275
      %v2535 = vunpack.c.l.b16 %v2276
      %v2536 = vunpack.c.l.b16 %v2277
      %v2537 = vunpack.c.l.b16 %v2278
      %v2538 = vunpack.c.l.b16 %v2279
      %v2539 = vunpack.c.l.b16 %v2280
      %v2540 = vunpack.c.l.b16 %v2281
      %v2541 = vunpack.c.l.b16 %v2282
      %v2542 = vunpack.c.l.b16 %v2283
      %v2543 = vunpack.c.l.b16 %v2284
      %v2544 = vunpack.c.l.b16 %v2285
      %v2545 = vunpack.c.l.b16 %v2286
      %v2546 = vunpack.c.l.b16 %v2287
      %v2547 = vunpack.c.l.b16 %v2288
      %v2548 = vunpack.c.l.b16 %v2289
      %v2549 = vunpack.c.l.b16 %v2290
      %v2550 = vunpack.c.l.b16 %v2291
      %v2551 = vunpack.c.l.b16 %v2292
      %v2552 = vunpack.c.l.b16 %v2293
      %v2553 = vunpack.c.l.b16 %v2294
      %v2554 = vunpack.c.l.b16 %v2295
      %v2555 = vunpack.c.l.b16 %v2296
      %v2556 = vunpack.c.l.b16 %v2297
      %v2557 = vunpack.c.l.b16 %v2298
      %v2558 = vunpack.c.l.b16 %v2299
      %v2559 = vunpack.c.l.b16 %v2300
      %v2560 = vunpack.c.l.b16 %v2301
      %v2561 = vunpack.c.l.b16 %v2302
      %v2562 = vunpack.c.l.b16 %v2303
      %v2563 = vunpack.c.l.b16 %v2304
      %v2564 = vunpack.c.l.b16 %v2305
      %v2565 = vunpack.c.l.b16 %v2306
      %v2566 = vunpack.c.l.b16 %v2307
      %v2567 = vunpack.c.l.b16 %v2308
      %v2568 = vunpack.c.l.b16 %v2309
      %v2569 = vunpack.c.l.b16 %v2310
      %v2570 = vunpack.c.l.b16 %v2311
      %v2571 = vunpack.c.l.b16 %v2312
      %v2572 = vunpack.c.l.b16 %v2313
      %v2573 = vunpack.c.l.b16 %v2314
      %v2574 = vunpack.c.l.b16 %v2315
      %v2575 = vunpack.c.l.b16 %v2316
      %v2576 = vunpack.c.l.b16 %v2317
      %v2577 = vunpack.c.l.b16 %v2318
      %v2578 = vunpack.c.l.b16 %v2319
      %v2579 = vunpack.c.l.b16 %v2320
      %v2580 = vunpack.c.l.b16 %v2321
      %v2581 = vunpack.c.l.b16 %v2322
      %v2582 = vunpack.c.l.b16 %v2323
      %v2583 = vunpack.c.l.b16 %v2324
      %v2584 = vunpack.c.l.b16 %v2325
      %v2585 = vunpack.c.l.b16 %v2326
      %v2586 = vunpack.c.l.b16 %v2327
      %v2587 = vunpack.c.l.b16 %v2328
      %v2588 = vunpack.c.l.b16 %v2329
      %v2589 = vunpack.c.l.b16 %v2330
      %v2590 = vunpack.c.l.b16 %v2331
      %v2591 = vunpack.c.l.b16 %v2332
      %v2592 = vunpack.c.l.b16 %v2333
      %v2593 = vunpack.c.l.b16 %v2334
      %v2594 = vunpack.c.l.b16 %v2335
      %v2595 = vunpack.c.l.b16 %v2336
      %v2596 = vunpack.c.l.b16 %v2337
      %v2597 = vunpack.c.l.b16 %v2338
      %v2598 = vunpack.c.l.b16 %v2339
      %v2599 = vunpack.c.l.b16 %v2340
      %v2600 = vunpack.c.l.b16 %v2341
      %v2601 = vunpack.c.l.b16 %v2342
      %v2602 = vunpack.c.l.b16 %v2343
      %v2603 = vpack.c.b16 %v2476, %v2475
      %v2604 = vpack.c.b16 %v2478, %v2477
      %v2605 = vpack.c.b16 %v2480, %v2479
      %v2606 = vpack.c.b16 %v2482, %v2481
      %v2607 = vpack.c.b16 %v2484, %v2483
      %v2608 = vpack.c.b16 %v2486, %v2485
      %v2609 = vpack.c.b16 %v2488, %v2487
      %v2610 = vpack.c.b16 %v2490, %v2489
      %v2611 = vpack.c.b16 %v2492, %v2491
      %v2612 = vpack.c.b16 %v2494, %v2493
      %v2613 = vpack.c.b16 %v2496, %v2495
      %v2614 = vpack.c.b16 %v2498, %v2497
      %v2615 = vpack.c.b16 %v2500, %v2499
      %v2616 = vpack.c.b16 %v2502, %v2501
      %v2617 = vpack.c.b16 %v2504, %v2503
      %v2618 = vpack.c.b16 %v2506, %v2505
      %v2619 = vpack.c.b16 %v2508, %v2507
      %v2620 = vpack.c.b16 %v2510, %v2509
      %v2621 = vpack.c.b16 %v2512, %v2511
      %v2622 = vpack.c.b16 %v2514, %v2513
      %v2623 = vpack.c.b16 %v2516, %v2515
      %v2624 = vpack.c.b16 %v2518, %v2517
      %v2625 = vpack.c.b16 %v2520, %v2519
      %v2626 = vpack.c.b16 %v2522, %v2521
      %v2627 = vpack.c.b16 %v2524, %v2523
      %v2628 = vpack.c.b16 %v2526, %v2525
      %v2629 = vpack.c.b16 %v2528, %v2527
      %v2630 = vpack.c.b16 %v2530, %v2529
      %v2631 = vpack.c.b16 %v2532, %v2531
      %v2632 = vpack.c.b16 %v2534, %v2533
      %v2633 = vpack.c.b16 %v2536, %v2535
      %v2634 = vpack.c.b16 %v2538, %v2537
      %v2635 = vpack.c.b16 %v2540, %v2539
      %v2636 = vpack.c.b16 %v2542, %v2541
      %v2637 = vpack.c.b16 %v2544, %v2543
      %v2638 = vpack.c.b16 %v2546, %v2545
      %v2639 = vpack.c.b16 %v2548, %v2547
      %v2640 = vpack.c.b16 %v2550, %v2549
      %v2641 = vpack.c.b16 %v2552, %v2551
      %v2642 = vpack.c.b16 %v2554, %v2553
      %v2643 = vpack.c.b16 %v2556, %v2555
      %v2644 = vpack.c.b16 %v2558, %v2557
      %v2645 = vpack.c.b16 %v2560, %v2559
      %v2646 = vpack.c.b16 %v2562, %v2561
      %v2647 = vpack.c.b16 %v2564, %v2563
      %v2648 = vpack.c.b16 %v2566, %v2565
      %v2649 = vpack.c.b16 %v2568, %v2567
      %v2650 = vpack.c.b16 %v2570, %v2569
      %v2651 = vpack.c.b16 %v2572, %v2571
      %v2652 = vpack.c.b16 %v2574, %v2573
      %v2653 = vpack.c.b16 %v2576, %v2575
      %v2654 = vpack.c.b16 %v2578, %v2577
      %v2655 = vpack.c.b16 %v2580, %v2579
      %v2656 = vpack.c.b16 %v2582, %v2581
      %v2657 = vpack.c.b16 %v2584, %v2583
      %v2658 = vpack.c.b16 %v2586, %v2585
      %v2659 = vpack.c.b16 %v2588, %v2587
      %v2660 = vpack.c.b16 %v2590, %v2589
      %v2661 = vpack.c.b16 %v2592, %v2591
      %v2662 = vpack.c.b16 %v2594, %v2593
      %v2663 = vpack.c.b16 %v2596, %v2595
      %v2664 = vpack.c.b16 %v2598, %v2597
      %v2665 = vpack.c.b16 %v2600, %v2599
      %v2666 = vpack.c.b16 %v2602, %v2601
      %v2669 = vunpack.c.l.b16 %v2345
      %v2670 = vunpack.c.h.b16 %v2345
      %v2671 = vunpack.c.l.b16 %v2346
      %v2672 = vunpack.c.h.b16 %v2346
      %v2673 = vpack.c.b16 %v2671, %v2669
      %v2674 = vpack.c.b16 %v2672, %v2670
      %v2676 = vsel %vm637, %v2603, 0
      %v2679 = vsel %vm637, %v2604, 0
      %v2682 = vsel %vm637, %v2605, 0
      %v2685 = vsel %vm637, %v2606, 0
      %v2688 = vsel %vm637, %v2607, 0
      %v2691 = vsel %vm637, %v2608, 0
      %v2694 = vsel %vm637, %v2609, 0
      %v2697 = vsel %vm637, %v2610, 0
      %v2700 = vsel %vm637, %v2611, 0
      %v2703 = vsel %vm637, %v2612, 0
      %v2706 = vsel %vm637, %v2613, 0
      %v2709 = vsel %vm637, %v2614, 0
      %v2712 = vsel %vm637, %v2615, 0
      %v2715 = vsel %vm637, %v2616, 0
      %v2718 = vsel %vm637, %v2617, 0
      %v2721 = vsel %vm637, %v2618, 0
      %v2724 = vsel %vm637, %v2619, 0
      %v2727 = vsel %vm637, %v2620, 0
      %v2730 = vsel %vm637, %v2621, 0
      %v2733 = vsel %vm637, %v2622, 0
      %v2736 = vsel %vm637, %v2623, 0
      %v2739 = vsel %vm637, %v2624, 0
      %v2742 = vsel %vm637, %v2625, 0
      %v2745 = vsel %vm637, %v2626, 0
      %v2748 = vsel %vm637, %v2627, 0
      %v2751 = vsel %vm637, %v2628, 0
      %v2754 = vsel %vm637, %v2629, 0
      %v2757 = vsel %vm637, %v2630, 0
      %v2760 = vsel %vm637, %v2631, 0
      %v2763 = vsel %vm637, %v2632, 0
      %v2766 = vsel %vm637, %v2633, 0
      %v2769 = vsel %vm637, %v2634, 0
      %v2772 = vsel %vm637, %v2635, 0
      %v2775 = vsel %vm637, %v2636, 0
      %v2778 = vsel %vm637, %v2637, 0
      %v2781 = vsel %vm637, %v2638, 0
      %v2784 = vsel %vm637, %v2639, 0
      %v2787 = vsel %vm637, %v2640, 0
      %v2790 = vsel %vm637, %v2641, 0
      %v2793 = vsel %vm637, %v2642, 0
      %v2796 = vsel %vm637, %v2643, 0
      %v2799 = vsel %vm637, %v2644, 0
      %v2802 = vsel %vm637, %v2645, 0
      %v2805 = vsel %vm637, %v2646, 0
      %v2808 = vsel %vm637, %v2647, 0
      %v2811 = vsel %vm637, %v2648, 0
      %v2814 = vsel %vm637, %v2649, 0
      %v2817 = vsel %vm637, %v2650, 0
      %v2820 = vsel %vm637, %v2651, 0
      %v2823 = vsel %vm637, %v2652, 0
      %v2826 = vsel %vm637, %v2653, 0
      %v2829 = vsel %vm637, %v2654, 0
      %v2832 = vsel %vm637, %v2655, 0
      %v2835 = vsel %vm637, %v2656, 0
      %v2838 = vsel %vm637, %v2657, 0
      %v2841 = vsel %vm637, %v2658, 0
      %v2844 = vsel %vm637, %v2659, 0
      %v2847 = vsel %vm637, %v2660, 0
      %v2850 = vsel %vm637, %v2661, 0
      %v2853 = vsel %vm637, %v2662, 0
      %v2856 = vsel %vm637, %v2663, 0
      %v2859 = vsel %vm637, %v2664, 0
      %v2862 = vsel %vm637, %v2665, 0
      %v2865 = vsel %vm637, %v2666, 0
      %v2868 = vand.u32 %v2673, %v833
      %v2871 = vand.u32 %v2674, %v833
      %2873 = vmatprep.subr.bf16.mxu0 0
      %2874 = vmatpush1.bf16.msra.mxu0 0
      %2875 = vmatprep.subr.bf16.mxu0 0
      %2876 = vmatpush1.bf16.msra.mxu0 0
      %2877 = vmatprep.subr.bf16.mxu0 0
      %2878 = vmatpush1.bf16.msra.mxu0 0
      %2879 = vmatprep.subr.bf16.mxu0 0
      %2880 = vmatpush1.bf16.msra.mxu0 0
      %2881 = vmatprep.subr.bf16.mxu0 0
      %2882 = vmatpush1.bf16.msra.mxu0 0
      %2883 = vmatprep.subr.bf16.mxu0 0
      %2884 = vmatpush1.bf16.msra.mxu0 0
      %2885 = vmatprep.subr.bf16.mxu0 0
      %2886 = vmatpush1.bf16.msra.mxu0 0
      %2887 = vmatprep.subr.bf16.mxu0 %v2871
      %2888 = vmatpush1.bf16.msra.mxu0 %v2868
      %2889 = vmatprep.subr.bf16.mxu0 0
      %2890 = vmatpush2.bf16.msra.mxu0 0
      %2891 = vmatprep.subr.bf16.mxu0 0
      %2892 = vmatpush2.bf16.msra.mxu0 0
      %2893 = vmatprep.subr.bf16.mxu0 0
      %2894 = vmatpush2.bf16.msra.mxu0 0
      %2895 = vmatprep.subr.bf16.mxu0 0
      %2896 = vmatpush2.bf16.msra.mxu0 0
      %2897 = vmatprep.subr.bf16.mxu0 0
      %2898 = vmatpush2.bf16.msra.mxu0 0
      %2899 = vmatprep.subr.bf16.mxu0 0
      %2900 = vmatpush2.bf16.msra.mxu0 0
      %2901 = vmatprep.subr.bf16.mxu0 0
      %2902 = vmatpush2.bf16.msra.mxu0 0
      %2903 = vmatprep.subr.bf16.mxu0 0
      %2904 = vmatpush2.bf16.msra.mxu0 0
      %2905 = vmatprep.mubr.bf16.mxu0 0
      %2906 = vmatmul.mubr.bf16.gmra.mxu0 %v2676
      %v2907 = vpop.f32.mrf.mxu0
      %v2908 = vadd.f32 0.0, %v2907
      %v2909 = vpop.f32.mrf.mxu0
      %v2910 = vadd.f32 0.0, %v2909
      %v2911 = vpop.f32.mrf.mxu0
      %v2912 = vadd.f32 0.0, %v2911
      %v2913 = vpop.f32.mrf.mxu0
      %v2914 = vadd.f32 0.0, %v2913
      %2915 = vmatprep.mubr.bf16.mxu0 0
      %2916 = vmatmul.mubr.bf16.gmra.mxu0 %v2679
      %v2917 = vpop.f32.mrf.mxu0
      %v2918 = vadd.f32 0.0, %v2917
      %v2919 = vpop.f32.mrf.mxu0
      %v2920 = vadd.f32 0.0, %v2919
      %v2921 = vpop.f32.mrf.mxu0
      %v2922 = vadd.f32 0.0, %v2921
      %v2923 = vpop.f32.mrf.mxu0
      %v2924 = vadd.f32 0.0, %v2923
      %2925 = vmatprep.mubr.bf16.mxu0 0
      %2926 = vmatmul.mubr.bf16.gmra.mxu0 %v2682
      %v2927 = vpop.f32.mrf.mxu0
      %v2928 = vadd.f32 0.0, %v2927
      %v2929 = vpop.f32.mrf.mxu0
      %v2930 = vadd.f32 0.0, %v2929
      %v2931 = vpop.f32.mrf.mxu0
      %v2932 = vadd.f32 0.0, %v2931
      %v2933 = vpop.f32.mrf.mxu0
      %v2934 = vadd.f32 0.0, %v2933
      %2935 = vmatprep.mubr.bf16.mxu0 0
      %2936 = vmatmul.mubr.bf16.gmra.mxu0 %v2685
      %v2937 = vpop.f32.mrf.mxu0
      %v2938 = vadd.f32 0.0, %v2937
      %v2939 = vpop.f32.mrf.mxu0
      %v2940 = vadd.f32 0.0, %v2939
      %v2941 = vpop.f32.mrf.mxu0
      %v2942 = vadd.f32 0.0, %v2941
      %v2943 = vpop.f32.mrf.mxu0
      %v2944 = vadd.f32 0.0, %v2943
      %2945 = vmatprep.mubr.bf16.mxu0 0
      %2946 = vmatmul.mubr.bf16.gmra.mxu0 %v2688
      %v2947 = vpop.f32.mrf.mxu0
      %v2948 = vadd.f32 0.0, %v2947
      %v2949 = vpop.f32.mrf.mxu0
      %v2950 = vadd.f32 0.0, %v2949
      %v2951 = vpop.f32.mrf.mxu0
      %v2952 = vadd.f32 0.0, %v2951
      %v2953 = vpop.f32.mrf.mxu0
      %v2954 = vadd.f32 0.0, %v2953
      %2955 = vmatprep.mubr.bf16.mxu0 0
      %2956 = vmatmul.mubr.bf16.gmra.mxu0 %v2691
      %v2957 = vpop.f32.mrf.mxu0
      %v2958 = vadd.f32 0.0, %v2957
      %v2959 = vpop.f32.mrf.mxu0
      %v2960 = vadd.f32 0.0, %v2959
      %v2961 = vpop.f32.mrf.mxu0
      %v2962 = vadd.f32 0.0, %v2961
      %v2963 = vpop.f32.mrf.mxu0
      %v2964 = vadd.f32 0.0, %v2963
      %2965 = vmatprep.mubr.bf16.mxu0 0
      %2966 = vmatmul.mubr.bf16.gmra.mxu0 %v2694
      %v2967 = vpop.f32.mrf.mxu0
      %v2968 = vadd.f32 0.0, %v2967
      %v2969 = vpop.f32.mrf.mxu0
      %v2970 = vadd.f32 0.0, %v2969
      %v2971 = vpop.f32.mrf.mxu0
      %v2972 = vadd.f32 0.0, %v2971
      %v2973 = vpop.f32.mrf.mxu0
      %v2974 = vadd.f32 0.0, %v2973
      %2975 = vmatprep.mubr.bf16.mxu0 0
      %2976 = vmatmul.mubr.bf16.gmra.mxu0 %v2697
      %v2977 = vpop.f32.mrf.mxu0
      %v2978 = vadd.f32 0.0, %v2977
      %v2979 = vpop.f32.mrf.mxu0
      %v2980 = vadd.f32 0.0, %v2979
      %v2981 = vpop.f32.mrf.mxu0
      %v2982 = vadd.f32 0.0, %v2981
      %v2983 = vpop.f32.mrf.mxu0
      %v2984 = vadd.f32 0.0, %v2983
      %2985 = vmatprep.mubr.bf16.mxu0 0
      %2986 = vmatmul.mubr.bf16.gmra.mxu0 %v2700
      %v2987 = vpop.f32.mrf.mxu0
      %v2988 = vadd.f32 0.0, %v2987
      %v2989 = vpop.f32.mrf.mxu0
      %v2990 = vadd.f32 0.0, %v2989
      %v2991 = vpop.f32.mrf.mxu0
      %v2992 = vadd.f32 0.0, %v2991
      %v2993 = vpop.f32.mrf.mxu0
      %v2994 = vadd.f32 0.0, %v2993
      %2995 = vmatprep.mubr.bf16.mxu0 0
      %2996 = vmatmul.mubr.bf16.gmra.mxu0 %v2703
      %v2997 = vpop.f32.mrf.mxu0
      %v2998 = vadd.f32 0.0, %v2997
      %v2999 = vpop.f32.mrf.mxu0
      %v3000 = vadd.f32 0.0, %v2999
      %v3001 = vpop.f32.mrf.mxu0
      %v3002 = vadd.f32 0.0, %v3001
      %v3003 = vpop.f32.mrf.mxu0
      %v3004 = vadd.f32 0.0, %v3003
      %3005 = vmatprep.mubr.bf16.mxu0 0
      %3006 = vmatmul.mubr.bf16.gmra.mxu0 %v2706
      %v3007 = vpop.f32.mrf.mxu0
      %v3008 = vadd.f32 0.0, %v3007
      %v3009 = vpop.f32.mrf.mxu0
      %v3010 = vadd.f32 0.0, %v3009
      %v3011 = vpop.f32.mrf.mxu0
      %v3012 = vadd.f32 0.0, %v3011
      %v3013 = vpop.f32.mrf.mxu0
      %v3014 = vadd.f32 0.0, %v3013
      %3015 = vmatprep.mubr.bf16.mxu0 0
      %3016 = vmatmul.mubr.bf16.gmra.mxu0 %v2709
      %v3017 = vpop.f32.mrf.mxu0
      %v3018 = vadd.f32 0.0, %v3017
      %v3019 = vpop.f32.mrf.mxu0
      %v3020 = vadd.f32 0.0, %v3019
      %v3021 = vpop.f32.mrf.mxu0
      %v3022 = vadd.f32 0.0, %v3021
      %v3023 = vpop.f32.mrf.mxu0
      %v3024 = vadd.f32 0.0, %v3023
      %3025 = vmatprep.mubr.bf16.mxu0 0
      %3026 = vmatmul.mubr.bf16.gmra.mxu0 %v2712
      %v3027 = vpop.f32.mrf.mxu0
      %v3028 = vadd.f32 0.0, %v3027
      %v3029 = vpop.f32.mrf.mxu0
      %v3030 = vadd.f32 0.0, %v3029
      %v3031 = vpop.f32.mrf.mxu0
      %v3032 = vadd.f32 0.0, %v3031
      %v3033 = vpop.f32.mrf.mxu0
      %v3034 = vadd.f32 0.0, %v3033
      %3035 = vmatprep.mubr.bf16.mxu0 0
      %3036 = vmatmul.mubr.bf16.gmra.mxu0 %v2715
      %v3037 = vpop.f32.mrf.mxu0
      %v3038 = vadd.f32 0.0, %v3037
      %v3039 = vpop.f32.mrf.mxu0
      %v3040 = vadd.f32 0.0, %v3039
      %v3041 = vpop.f32.mrf.mxu0
      %v3042 = vadd.f32 0.0, %v3041
      %v3043 = vpop.f32.mrf.mxu0
      %v3044 = vadd.f32 0.0, %v3043
      %3045 = vmatprep.mubr.bf16.mxu0 0
      %3046 = vmatmul.mubr.bf16.gmra.mxu0 %v2718
      %v3047 = vpop.f32.mrf.mxu0
      %v3048 = vadd.f32 0.0, %v3047
      %v3049 = vpop.f32.mrf.mxu0
      %v3050 = vadd.f32 0.0, %v3049
      %v3051 = vpop.f32.mrf.mxu0
      %v3052 = vadd.f32 0.0, %v3051
      %v3053 = vpop.f32.mrf.mxu0
      %v3054 = vadd.f32 0.0, %v3053
      %3055 = vmatprep.mubr.bf16.mxu0 0
      %3056 = vmatmul.mubr.bf16.gmra.mxu0 %v2721
      %v3057 = vpop.f32.mrf.mxu0
      %v3058 = vadd.f32 0.0, %v3057
      %v3059 = vpop.f32.mrf.mxu0
      %v3060 = vadd.f32 0.0, %v3059
      %v3061 = vpop.f32.mrf.mxu0
      %v3062 = vadd.f32 0.0, %v3061
      %v3063 = vpop.f32.mrf.mxu0
      %v3064 = vadd.f32 0.0, %v3063
      %3065 = vmatprep.mubr.bf16.mxu0 0
      %3066 = vmatmul.mubr.bf16.gmra.mxu0 %v2724
      %v3067 = vpop.f32.mrf.mxu0
      %v3068 = vadd.f32 0.0, %v3067
      %v3069 = vpop.f32.mrf.mxu0
      %v3070 = vadd.f32 0.0, %v3069
      %v3071 = vpop.f32.mrf.mxu0
      %v3072 = vadd.f32 0.0, %v3071
      %v3073 = vpop.f32.mrf.mxu0
      %v3074 = vadd.f32 0.0, %v3073
      %3075 = vmatprep.mubr.bf16.mxu0 0
      %3076 = vmatmul.mubr.bf16.gmra.mxu0 %v2727
      %v3077 = vpop.f32.mrf.mxu0
      %v3078 = vadd.f32 0.0, %v3077
      %v3079 = vpop.f32.mrf.mxu0
      %v3080 = vadd.f32 0.0, %v3079
      %v3081 = vpop.f32.mrf.mxu0
      %v3082 = vadd.f32 0.0, %v3081
      %v3083 = vpop.f32.mrf.mxu0
      %v3084 = vadd.f32 0.0, %v3083
      %3085 = vmatprep.mubr.bf16.mxu0 0
      %3086 = vmatmul.mubr.bf16.gmra.mxu0 %v2730
      %v3087 = vpop.f32.mrf.mxu0
      %v3088 = vadd.f32 0.0, %v3087
      %v3089 = vpop.f32.mrf.mxu0
      %v3090 = vadd.f32 0.0, %v3089
      %v3091 = vpop.f32.mrf.mxu0
      %v3092 = vadd.f32 0.0, %v3091
      %v3093 = vpop.f32.mrf.mxu0
      %v3094 = vadd.f32 0.0, %v3093
      %3095 = vmatprep.mubr.bf16.mxu0 0
      %3096 = vmatmul.mubr.bf16.gmra.mxu0 %v2733
      %v3097 = vpop.f32.mrf.mxu0
      %v3098 = vadd.f32 0.0, %v3097
      %v3099 = vpop.f32.mrf.mxu0
      %v3100 = vadd.f32 0.0, %v3099
      %v3101 = vpop.f32.mrf.mxu0
      %v3102 = vadd.f32 0.0, %v3101
      %v3103 = vpop.f32.mrf.mxu0
      %v3104 = vadd.f32 0.0, %v3103
      %3105 = vmatprep.mubr.bf16.mxu0 0
      %3106 = vmatmul.mubr.bf16.gmra.mxu0 %v2736
      %v3107 = vpop.f32.mrf.mxu0
      %v3108 = vadd.f32 0.0, %v3107
      %v3109 = vpop.f32.mrf.mxu0
      %v3110 = vadd.f32 0.0, %v3109
      %v3111 = vpop.f32.mrf.mxu0
      %v3112 = vadd.f32 0.0, %v3111
      %v3113 = vpop.f32.mrf.mxu0
      %v3114 = vadd.f32 0.0, %v3113
      %3115 = vmatprep.mubr.bf16.mxu0 0
      %3116 = vmatmul.mubr.bf16.gmra.mxu0 %v2739
      %v3117 = vpop.f32.mrf.mxu0
      %v3118 = vadd.f32 0.0, %v3117
      %v3119 = vpop.f32.mrf.mxu0
      %v3120 = vadd.f32 0.0, %v3119
      %v3121 = vpop.f32.mrf.mxu0
      %v3122 = vadd.f32 0.0, %v3121
      %v3123 = vpop.f32.mrf.mxu0
      %v3124 = vadd.f32 0.0, %v3123
      %3125 = vmatprep.mubr.bf16.mxu0 0
      %3126 = vmatmul.mubr.bf16.gmra.mxu0 %v2742
      %v3127 = vpop.f32.mrf.mxu0
      %v3128 = vadd.f32 0.0, %v3127
      %v3129 = vpop.f32.mrf.mxu0
      %v3130 = vadd.f32 0.0, %v3129
      %v3131 = vpop.f32.mrf.mxu0
      %v3132 = vadd.f32 0.0, %v3131
      %v3133 = vpop.f32.mrf.mxu0
      %v3134 = vadd.f32 0.0, %v3133
      %3135 = vmatprep.mubr.bf16.mxu0 0
      %3136 = vmatmul.mubr.bf16.gmra.mxu0 %v2745
      %v3137 = vpop.f32.mrf.mxu0
      %v3138 = vadd.f32 0.0, %v3137
      %v3139 = vpop.f32.mrf.mxu0
      %v3140 = vadd.f32 0.0, %v3139
      %v3141 = vpop.f32.mrf.mxu0
      %v3142 = vadd.f32 0.0, %v3141
      %v3143 = vpop.f32.mrf.mxu0
      %v3144 = vadd.f32 0.0, %v3143
      %3145 = vmatprep.mubr.bf16.mxu0 0
      %3146 = vmatmul.mubr.bf16.gmra.mxu0 %v2748
      %v3147 = vpop.f32.mrf.mxu0
      %v3148 = vadd.f32 0.0, %v3147
      %v3149 = vpop.f32.mrf.mxu0
      %v3150 = vadd.f32 0.0, %v3149
      %v3151 = vpop.f32.mrf.mxu0
      %v3152 = vadd.f32 0.0, %v3151
      %v3153 = vpop.f32.mrf.mxu0
      %v3154 = vadd.f32 0.0, %v3153
      %3155 = vmatprep.mubr.bf16.mxu0 0
      %3156 = vmatmul.mubr.bf16.gmra.mxu0 %v2751
      %v3157 = vpop.f32.mrf.mxu0
      %v3158 = vadd.f32 0.0, %v3157
      %v3159 = vpop.f32.mrf.mxu0
      %v3160 = vadd.f32 0.0, %v3159
      %v3161 = vpop.f32.mrf.mxu0
      %v3162 = vadd.f32 0.0, %v3161
      %v3163 = vpop.f32.mrf.mxu0
      %v3164 = vadd.f32 0.0, %v3163
      %3165 = vmatprep.mubr.bf16.mxu0 0
      %3166 = vmatmul.mubr.bf16.gmra.mxu0 %v2754
      %v3167 = vpop.f32.mrf.mxu0
      %v3168 = vadd.f32 0.0, %v3167
      %v3169 = vpop.f32.mrf.mxu0
      %v3170 = vadd.f32 0.0, %v3169
      %v3171 = vpop.f32.mrf.mxu0
      %v3172 = vadd.f32 0.0, %v3171
      %v3173 = vpop.f32.mrf.mxu0
      %v3174 = vadd.f32 0.0, %v3173
      %3175 = vmatprep.mubr.bf16.mxu0 0
      %3176 = vmatmul.mubr.bf16.gmra.mxu0 %v2757
      %v3177 = vpop.f32.mrf.mxu0
      %v3178 = vadd.f32 0.0, %v3177
      %v3179 = vpop.f32.mrf.mxu0
      %v3180 = vadd.f32 0.0, %v3179
      %v3181 = vpop.f32.mrf.mxu0
      %v3182 = vadd.f32 0.0, %v3181
      %v3183 = vpop.f32.mrf.mxu0
      %v3184 = vadd.f32 0.0, %v3183
      %3185 = vmatprep.mubr.bf16.mxu0 0
      %3186 = vmatmul.mubr.bf16.gmra.mxu0 %v2760
      %v3187 = vpop.f32.mrf.mxu0
      %v3188 = vadd.f32 0.0, %v3187
      %v3189 = vpop.f32.mrf.mxu0
      %v3190 = vadd.f32 0.0, %v3189
      %v3191 = vpop.f32.mrf.mxu0
      %v3192 = vadd.f32 0.0, %v3191
      %v3193 = vpop.f32.mrf.mxu0
      %v3194 = vadd.f32 0.0, %v3193
      %3195 = vmatprep.mubr.bf16.mxu0 0
      %3196 = vmatmul.mubr.bf16.gmra.mxu0 %v2763
      %v3197 = vpop.f32.mrf.mxu0
      %v3198 = vadd.f32 0.0, %v3197
      %v3199 = vpop.f32.mrf.mxu0
      %v3200 = vadd.f32 0.0, %v3199
      %v3201 = vpop.f32.mrf.mxu0
      %v3202 = vadd.f32 0.0, %v3201
      %v3203 = vpop.f32.mrf.mxu0
      %v3204 = vadd.f32 0.0, %v3203
      %3205 = vmatprep.mubr.bf16.mxu0 0
      %3206 = vmatmul.mubr.bf16.gmra.mxu0 %v2766
      %v3207 = vpop.f32.mrf.mxu0
      %v3208 = vadd.f32 0.0, %v3207
      %v3209 = vpop.f32.mrf.mxu0
      %v3210 = vadd.f32 0.0, %v3209
      %v3211 = vpop.f32.mrf.mxu0
      %v3212 = vadd.f32 0.0, %v3211
      %v3213 = vpop.f32.mrf.mxu0
      %v3214 = vadd.f32 0.0, %v3213
      %3215 = vmatprep.mubr.bf16.mxu0 0
      %3216 = vmatmul.mubr.bf16.gmra.mxu0 %v2769
      %v3217 = vpop.f32.mrf.mxu0
      %v3218 = vadd.f32 0.0, %v3217
      %v3219 = vpop.f32.mrf.mxu0
      %v3220 = vadd.f32 0.0, %v3219
      %v3221 = vpop.f32.mrf.mxu0
      %v3222 = vadd.f32 0.0, %v3221
      %v3223 = vpop.f32.mrf.mxu0
      %v3224 = vadd.f32 0.0, %v3223
      %3225 = vmatprep.mubr.bf16.mxu0 0
      %3226 = vmatmul.mubr.bf16.gmra.mxu0 %v2772
      %v3227 = vpop.f32.mrf.mxu0
      %v3228 = vadd.f32 0.0, %v3227
      %v3229 = vpop.f32.mrf.mxu0
      %v3230 = vadd.f32 0.0, %v3229
      %v3231 = vpop.f32.mrf.mxu0
      %v3232 = vadd.f32 0.0, %v3231
      %v3233 = vpop.f32.mrf.mxu0
      %v3234 = vadd.f32 0.0, %v3233
      %3235 = vmatprep.mubr.bf16.mxu0 0
      %3236 = vmatmul.mubr.bf16.gmra.mxu0 %v2775
      %v3237 = vpop.f32.mrf.mxu0
      %v3238 = vadd.f32 0.0, %v3237
      %v3239 = vpop.f32.mrf.mxu0
      %v3240 = vadd.f32 0.0, %v3239
      %v3241 = vpop.f32.mrf.mxu0
      %v3242 = vadd.f32 0.0, %v3241
      %v3243 = vpop.f32.mrf.mxu0
      %v3244 = vadd.f32 0.0, %v3243
      %3245 = vmatprep.mubr.bf16.mxu0 0
      %3246 = vmatmul.mubr.bf16.gmra.mxu0 %v2778
      %v3247 = vpop.f32.mrf.mxu0
      %v3248 = vadd.f32 0.0, %v3247
      %v3249 = vpop.f32.mrf.mxu0
      %v3250 = vadd.f32 0.0, %v3249
      %v3251 = vpop.f32.mrf.mxu0
      %v3252 = vadd.f32 0.0, %v3251
      %v3253 = vpop.f32.mrf.mxu0
      %v3254 = vadd.f32 0.0, %v3253
      %3255 = vmatprep.mubr.bf16.mxu0 0
      %3256 = vmatmul.mubr.bf16.gmra.mxu0 %v2781
      %v3257 = vpop.f32.mrf.mxu0
      %v3258 = vadd.f32 0.0, %v3257
      %v3259 = vpop.f32.mrf.mxu0
      %v3260 = vadd.f32 0.0, %v3259
      %v3261 = vpop.f32.mrf.mxu0
      %v3262 = vadd.f32 0.0, %v3261
      %v3263 = vpop.f32.mrf.mxu0
      %v3264 = vadd.f32 0.0, %v3263
      %3265 = vmatprep.mubr.bf16.mxu0 0
      %3266 = vmatmul.mubr.bf16.gmra.mxu0 %v2784
      %v3267 = vpop.f32.mrf.mxu0
      %v3268 = vadd.f32 0.0, %v3267
      %v3269 = vpop.f32.mrf.mxu0
      %v3270 = vadd.f32 0.0, %v3269
      %v3271 = vpop.f32.mrf.mxu0
      %v3272 = vadd.f32 0.0, %v3271
      %v3273 = vpop.f32.mrf.mxu0
      %v3274 = vadd.f32 0.0, %v3273
      %3275 = vmatprep.mubr.bf16.mxu0 0
      %3276 = vmatmul.mubr.bf16.gmra.mxu0 %v2787
      %v3277 = vpop.f32.mrf.mxu0
      %v3278 = vadd.f32 0.0, %v3277
      %v3279 = vpop.f32.mrf.mxu0
      %v3280 = vadd.f32 0.0, %v3279
      %v3281 = vpop.f32.mrf.mxu0
      %v3282 = vadd.f32 0.0, %v3281
      %v3283 = vpop.f32.mrf.mxu0
      %v3284 = vadd.f32 0.0, %v3283
      %3285 = vmatprep.mubr.bf16.mxu0 0
      %3286 = vmatmul.mubr.bf16.gmra.mxu0 %v2790
      %v3287 = vpop.f32.mrf.mxu0
      %v3288 = vadd.f32 0.0, %v3287
      %v3289 = vpop.f32.mrf.mxu0
      %v3290 = vadd.f32 0.0, %v3289
      %v3291 = vpop.f32.mrf.mxu0
      %v3292 = vadd.f32 0.0, %v3291
      %v3293 = vpop.f32.mrf.mxu0
      %v3294 = vadd.f32 0.0, %v3293
      %3295 = vmatprep.mubr.bf16.mxu0 0
      %3296 = vmatmul.mubr.bf16.gmra.mxu0 %v2793
      %v3297 = vpop.f32.mrf.mxu0
      %v3298 = vadd.f32 0.0, %v3297
      %v3299 = vpop.f32.mrf.mxu0
      %v3300 = vadd.f32 0.0, %v3299
      %v3301 = vpop.f32.mrf.mxu0
      %v3302 = vadd.f32 0.0, %v3301
      %v3303 = vpop.f32.mrf.mxu0
      %v3304 = vadd.f32 0.0, %v3303
      %3305 = vmatprep.mubr.bf16.mxu0 0
      %3306 = vmatmul.mubr.bf16.gmra.mxu0 %v2796
      %v3307 = vpop.f32.mrf.mxu0
      %v3308 = vadd.f32 0.0, %v3307
      %v3309 = vpop.f32.mrf.mxu0
      %v3310 = vadd.f32 0.0, %v3309
      %v3311 = vpop.f32.mrf.mxu0
      %v3312 = vadd.f32 0.0, %v3311
      %v3313 = vpop.f32.mrf.mxu0
      %v3314 = vadd.f32 0.0, %v3313
      %3315 = vmatprep.mubr.bf16.mxu0 0
      %3316 = vmatmul.mubr.bf16.gmra.mxu0 %v2799
      %v3317 = vpop.f32.mrf.mxu0
      %v3318 = vadd.f32 0.0, %v3317
      %v3319 = vpop.f32.mrf.mxu0
      %v3320 = vadd.f32 0.0, %v3319
      %v3321 = vpop.f32.mrf.mxu0
      %v3322 = vadd.f32 0.0, %v3321
      %v3323 = vpop.f32.mrf.mxu0
      %v3324 = vadd.f32 0.0, %v3323
      %3325 = vmatprep.mubr.bf16.mxu0 0
      %3326 = vmatmul.mubr.bf16.gmra.mxu0 %v2802
      %v3327 = vpop.f32.mrf.mxu0
      %v3328 = vadd.f32 0.0, %v3327
      %v3329 = vpop.f32.mrf.mxu0
      %v3330 = vadd.f32 0.0, %v3329
      %v3331 = vpop.f32.mrf.mxu0
      %v3332 = vadd.f32 0.0, %v3331
      %v3333 = vpop.f32.mrf.mxu0
      %v3334 = vadd.f32 0.0, %v3333
      %3335 = vmatprep.mubr.bf16.mxu0 0
      %3336 = vmatmul.mubr.bf16.gmra.mxu0 %v2805
      %v3337 = vpop.f32.mrf.mxu0
      %v3338 = vadd.f32 0.0, %v3337
      %v3339 = vpop.f32.mrf.mxu0
      %v3340 = vadd.f32 0.0, %v3339
      %v3341 = vpop.f32.mrf.mxu0
      %v3342 = vadd.f32 0.0, %v3341
      %v3343 = vpop.f32.mrf.mxu0
      %v3344 = vadd.f32 0.0, %v3343
      %3345 = vmatprep.mubr.bf16.mxu0 0
      %3346 = vmatmul.mubr.bf16.gmra.mxu0 %v2808
      %v3347 = vpop.f32.mrf.mxu0
      %v3348 = vadd.f32 0.0, %v3347
      %v3349 = vpop.f32.mrf.mxu0
      %v3350 = vadd.f32 0.0, %v3349
      %v3351 = vpop.f32.mrf.mxu0
      %v3352 = vadd.f32 0.0, %v3351
      %v3353 = vpop.f32.mrf.mxu0
      %v3354 = vadd.f32 0.0, %v3353
      %3355 = vmatprep.mubr.bf16.mxu0 0
      %3356 = vmatmul.mubr.bf16.gmra.mxu0 %v2811
      %v3357 = vpop.f32.mrf.mxu0
      %v3358 = vadd.f32 0.0, %v3357
      %v3359 = vpop.f32.mrf.mxu0
      %v3360 = vadd.f32 0.0, %v3359
      %v3361 = vpop.f32.mrf.mxu0
      %v3362 = vadd.f32 0.0, %v3361
      %v3363 = vpop.f32.mrf.mxu0
      %v3364 = vadd.f32 0.0, %v3363
      %3365 = vmatprep.mubr.bf16.mxu0 0
      %3366 = vmatmul.mubr.bf16.gmra.mxu0 %v2814
      %v3367 = vpop.f32.mrf.mxu0
      %v3368 = vadd.f32 0.0, %v3367
      %v3369 = vpop.f32.mrf.mxu0
      %v3370 = vadd.f32 0.0, %v3369
      %v3371 = vpop.f32.mrf.mxu0
      %v3372 = vadd.f32 0.0, %v3371
      %v3373 = vpop.f32.mrf.mxu0
      %v3374 = vadd.f32 0.0, %v3373
      %3375 = vmatprep.mubr.bf16.mxu0 0
      %3376 = vmatmul.mubr.bf16.gmra.mxu0 %v2817
      %v3377 = vpop.f32.mrf.mxu0
      %v3378 = vadd.f32 0.0, %v3377
      %v3379 = vpop.f32.mrf.mxu0
      %v3380 = vadd.f32 0.0, %v3379
      %v3381 = vpop.f32.mrf.mxu0
      %v3382 = vadd.f32 0.0, %v3381
      %v3383 = vpop.f32.mrf.mxu0
      %v3384 = vadd.f32 0.0, %v3383
      %3385 = vmatprep.mubr.bf16.mxu0 0
      %3386 = vmatmul.mubr.bf16.gmra.mxu0 %v2820
      %v3387 = vpop.f32.mrf.mxu0
      %v3388 = vadd.f32 0.0, %v3387
      %v3389 = vpop.f32.mrf.mxu0
      %v3390 = vadd.f32 0.0, %v3389
      %v3391 = vpop.f32.mrf.mxu0
      %v3392 = vadd.f32 0.0, %v3391
      %v3393 = vpop.f32.mrf.mxu0
      %v3394 = vadd.f32 0.0, %v3393
      %3395 = vmatprep.mubr.bf16.mxu0 0
      %3396 = vmatmul.mubr.bf16.gmra.mxu0 %v2823
      %v3397 = vpop.f32.mrf.mxu0
      %v3398 = vadd.f32 0.0, %v3397
      %v3399 = vpop.f32.mrf.mxu0
      %v3400 = vadd.f32 0.0, %v3399
      %v3401 = vpop.f32.mrf.mxu0
      %v3402 = vadd.f32 0.0, %v3401
      %v3403 = vpop.f32.mrf.mxu0
      %v3404 = vadd.f32 0.0, %v3403
      %3405 = vmatprep.mubr.bf16.mxu0 0
      %3406 = vmatmul.mubr.bf16.gmra.mxu0 %v2826
      %v3407 = vpop.f32.mrf.mxu0
      %v3408 = vadd.f32 0.0, %v3407
      %v3409 = vpop.f32.mrf.mxu0
      %v3410 = vadd.f32 0.0, %v3409
      %v3411 = vpop.f32.mrf.mxu0
      %v3412 = vadd.f32 0.0, %v3411
      %v3413 = vpop.f32.mrf.mxu0
      %v3414 = vadd.f32 0.0, %v3413
      %3415 = vmatprep.mubr.bf16.mxu0 0
      %3416 = vmatmul.mubr.bf16.gmra.mxu0 %v2829
      %v3417 = vpop.f32.mrf.mxu0
      %v3418 = vadd.f32 0.0, %v3417
      %v3419 = vpop.f32.mrf.mxu0
      %v3420 = vadd.f32 0.0, %v3419
      %v3421 = vpop.f32.mrf.mxu0
      %v3422 = vadd.f32 0.0, %v3421
      %v3423 = vpop.f32.mrf.mxu0
      %v3424 = vadd.f32 0.0, %v3423
      %3425 = vmatprep.mubr.bf16.mxu0 0
      %3426 = vmatmul.mubr.bf16.gmra.mxu0 %v2832
      %v3427 = vpop.f32.mrf.mxu0
      %v3428 = vadd.f32 0.0, %v3427
      %v3429 = vpop.f32.mrf.mxu0
      %v3430 = vadd.f32 0.0, %v3429
      %v3431 = vpop.f32.mrf.mxu0
      %v3432 = vadd.f32 0.0, %v3431
      %v3433 = vpop.f32.mrf.mxu0
      %v3434 = vadd.f32 0.0, %v3433
      %3435 = vmatprep.mubr.bf16.mxu0 0
      %3436 = vmatmul.mubr.bf16.gmra.mxu0 %v2835
      %v3437 = vpop.f32.mrf.mxu0
      %v3438 = vadd.f32 0.0, %v3437
      %v3439 = vpop.f32.mrf.mxu0
      %v3440 = vadd.f32 0.0, %v3439
      %v3441 = vpop.f32.mrf.mxu0
      %v3442 = vadd.f32 0.0, %v3441
      %v3443 = vpop.f32.mrf.mxu0
      %v3444 = vadd.f32 0.0, %v3443
      %3445 = vmatprep.mubr.bf16.mxu0 0
      %3446 = vmatmul.mubr.bf16.gmra.mxu0 %v2838
      %v3447 = vpop.f32.mrf.mxu0
      %v3448 = vadd.f32 0.0, %v3447
      %v3449 = vpop.f32.mrf.mxu0
      %v3450 = vadd.f32 0.0, %v3449
      %v3451 = vpop.f32.mrf.mxu0
      %v3452 = vadd.f32 0.0, %v3451
      %v3453 = vpop.f32.mrf.mxu0
      %v3454 = vadd.f32 0.0, %v3453
      %3455 = vmatprep.mubr.bf16.mxu0 0
      %3456 = vmatmul.mubr.bf16.gmra.mxu0 %v2841
      %v3457 = vpop.f32.mrf.mxu0
      %v3458 = vadd.f32 0.0, %v3457
      %v3459 = vpop.f32.mrf.mxu0
      %v3460 = vadd.f32 0.0, %v3459
      %v3461 = vpop.f32.mrf.mxu0
      %v3462 = vadd.f32 0.0, %v3461
      %v3463 = vpop.f32.mrf.mxu0
      %v3464 = vadd.f32 0.0, %v3463
      %3465 = vmatprep.mubr.bf16.mxu0 0
      %3466 = vmatmul.mubr.bf16.gmra.mxu0 %v2844
      %v3467 = vpop.f32.mrf.mxu0
      %v3468 = vadd.f32 0.0, %v3467
      %v3469 = vpop.f32.mrf.mxu0
      %v3470 = vadd.f32 0.0, %v3469
      %v3471 = vpop.f32.mrf.mxu0
      %v3472 = vadd.f32 0.0, %v3471
      %v3473 = vpop.f32.mrf.mxu0
      %v3474 = vadd.f32 0.0, %v3473
      %3475 = vmatprep.mubr.bf16.mxu0 0
      %3476 = vmatmul.mubr.bf16.gmra.mxu0 %v2847
      %v3477 = vpop.f32.mrf.mxu0
      %v3478 = vadd.f32 0.0, %v3477
      %v3479 = vpop.f32.mrf.mxu0
      %v3480 = vadd.f32 0.0, %v3479
      %v3481 = vpop.f32.mrf.mxu0
      %v3482 = vadd.f32 0.0, %v3481
      %v3483 = vpop.f32.mrf.mxu0
      %v3484 = vadd.f32 0.0, %v3483
      %3485 = vmatprep.mubr.bf16.mxu0 0
      %3486 = vmatmul.mubr.bf16.gmra.mxu0 %v2850
      %v3487 = vpop.f32.mrf.mxu0
      %v3488 = vadd.f32 0.0, %v3487
      %v3489 = vpop.f32.mrf.mxu0
      %v3490 = vadd.f32 0.0, %v3489
      %v3491 = vpop.f32.mrf.mxu0
      %v3492 = vadd.f32 0.0, %v3491
      %v3493 = vpop.f32.mrf.mxu0
      %v3494 = vadd.f32 0.0, %v3493
      %3495 = vmatprep.mubr.bf16.mxu0 0
      %3496 = vmatmul.mubr.bf16.gmra.mxu0 %v2853
      %v3497 = vpop.f32.mrf.mxu0
      %v3498 = vadd.f32 0.0, %v3497
      %v3499 = vpop.f32.mrf.mxu0
      %v3500 = vadd.f32 0.0, %v3499
      %v3501 = vpop.f32.mrf.mxu0
      %v3502 = vadd.f32 0.0, %v3501
      %v3503 = vpop.f32.mrf.mxu0
      %v3504 = vadd.f32 0.0, %v3503
      %3505 = vmatprep.mubr.bf16.mxu0 0
      %3506 = vmatmul.mubr.bf16.gmra.mxu0 %v2856
      %v3507 = vpop.f32.mrf.mxu0
      %v3508 = vadd.f32 0.0, %v3507
      %v3509 = vpop.f32.mrf.mxu0
      %v3510 = vadd.f32 0.0, %v3509
      %v3511 = vpop.f32.mrf.mxu0
      %v3512 = vadd.f32 0.0, %v3511
      %v3513 = vpop.f32.mrf.mxu0
      %v3514 = vadd.f32 0.0, %v3513
      %3515 = vmatprep.mubr.bf16.mxu0 0
      %3516 = vmatmul.mubr.bf16.gmra.mxu0 %v2859
      %v3517 = vpop.f32.mrf.mxu0
      %v3518 = vadd.f32 0.0, %v3517
      %v3519 = vpop.f32.mrf.mxu0
      %v3520 = vadd.f32 0.0, %v3519
      %v3521 = vpop.f32.mrf.mxu0
      %v3522 = vadd.f32 0.0, %v3521
      %v3523 = vpop.f32.mrf.mxu0
      %v3524 = vadd.f32 0.0, %v3523
      %3525 = vmatprep.mubr.bf16.mxu0 0
      %3526 = vmatmul.mubr.bf16.gmra.mxu0 %v2862
      %v3527 = vpop.f32.mrf.mxu0
      %v3528 = vadd.f32 0.0, %v3527
      %v3529 = vpop.f32.mrf.mxu0
      %v3530 = vadd.f32 0.0, %v3529
      %v3531 = vpop.f32.mrf.mxu0
      %v3532 = vadd.f32 0.0, %v3531
      %v3533 = vpop.f32.mrf.mxu0
      %v3534 = vadd.f32 0.0, %v3533
      %3535 = vmatprep.mubr.bf16.mxu0 0
      %3536 = vmatmul.mubr.bf16.gmra.mxu0 %v2865
      %v3537 = vpop.f32.mrf.mxu0
      %v3538 = vadd.f32 0.0, %v3537
      %v3539 = vpop.f32.mrf.mxu0
      %v3540 = vadd.f32 0.0, %v3539
      %v3541 = vpop.f32.mrf.mxu0
      %v3542 = vadd.f32 0.0, %v3541
      %v3543 = vpop.f32.mrf.mxu0
      %v3544 = vadd.f32 0.0, %v3543
      %3545 = vdwg.mxu0
      %v3546 = vadd.f32 %v1578, %v2908
      %v3547 = vadd.f32 %v1580, %v2910
      %v3548 = vadd.f32 %v1582, %v2912
      %v3549 = vadd.f32 %v1584, %v2914
      %v3550 = vadd.f32 %v1588, %v2918
      %v3551 = vadd.f32 %v1590, %v2920
      %v3552 = vadd.f32 %v1592, %v2922
      %v3553 = vadd.f32 %v1594, %v2924
      %v3554 = vadd.f32 %v1598, %v2928
      %v3555 = vadd.f32 %v1600, %v2930
      %v3556 = vadd.f32 %v1602, %v2932
      %v3557 = vadd.f32 %v1604, %v2934
      %v3558 = vadd.f32 %v1608, %v2938
      %v3559 = vadd.f32 %v1610, %v2940
      %v3560 = vadd.f32 %v1612, %v2942
      %v3561 = vadd.f32 %v1614, %v2944
      %v3562 = vadd.f32 %v1618, %v2948
      %v3563 = vadd.f32 %v1620, %v2950
      %v3564 = vadd.f32 %v1622, %v2952
      %v3565 = vadd.f32 %v1624, %v2954
      %v3566 = vadd.f32 %v1628, %v2958
      %v3567 = vadd.f32 %v1630, %v2960
      %v3568 = vadd.f32 %v1632, %v2962
      %v3569 = vadd.f32 %v1634, %v2964
      %v3570 = vadd.f32 %v1638, %v2968
      %v3571 = vadd.f32 %v1640, %v2970
      %v3572 = vadd.f32 %v1642, %v2972
      %v3573 = vadd.f32 %v1644, %v2974
      %v3574 = vadd.f32 %v1648, %v2978
      %v3575 = vadd.f32 %v1650, %v2980
      %v3576 = vadd.f32 %v1652, %v2982
      %v3577 = vadd.f32 %v1654, %v2984
      %v3578 = vadd.f32 %v1658, %v2988
      %v3579 = vadd.f32 %v1660, %v2990
      %v3580 = vadd.f32 %v1662, %v2992
      %v3581 = vadd.f32 %v1664, %v2994
      %v3582 = vadd.f32 %v1668, %v2998
      %v3583 = vadd.f32 %v1670, %v3000
      %v3584 = vadd.f32 %v1672, %v3002
      %v3585 = vadd.f32 %v1674, %v3004
      %v3586 = vadd.f32 %v1678, %v3008
      %v3587 = vadd.f32 %v1680, %v3010
      %v3588 = vadd.f32 %v1682, %v3012
      %v3589 = vadd.f32 %v1684, %v3014
      %v3590 = vadd.f32 %v1688, %v3018
      %v3591 = vadd.f32 %v1690, %v3020
      %v3592 = vadd.f32 %v1692, %v3022
      %v3593 = vadd.f32 %v1694, %v3024
      %v3594 = vadd.f32 %v1698, %v3028
      %v3595 = vadd.f32 %v1700, %v3030
      %v3596 = vadd.f32 %v1702, %v3032
      %v3597 = vadd.f32 %v1704, %v3034
      %v3598 = vadd.f32 %v1708, %v3038
      %v3599 = vadd.f32 %v1710, %v3040
      %v3600 = vadd.f32 %v1712, %v3042
      %v3601 = vadd.f32 %v1714, %v3044
      %v3602 = vadd.f32 %v1718, %v3048
      %v3603 = vadd.f32 %v1720, %v3050
      %v3604 = vadd.f32 %v1722, %v3052
      %v3605 = vadd.f32 %v1724, %v3054
      %v3606 = vadd.f32 %v1728, %v3058
      %v3607 = vadd.f32 %v1730, %v3060
      %v3608 = vadd.f32 %v1732, %v3062
      %v3609 = vadd.f32 %v1734, %v3064
      %v3610 = vadd.f32 %v1738, %v3068
      %v3611 = vadd.f32 %v1740, %v3070
      %v3612 = vadd.f32 %v1742, %v3072
      %v3613 = vadd.f32 %v1744, %v3074
      %v3614 = vadd.f32 %v1748, %v3078
      %v3615 = vadd.f32 %v1750, %v3080
      %v3616 = vadd.f32 %v1752, %v3082
      %v3617 = vadd.f32 %v1754, %v3084
      %v3618 = vadd.f32 %v1758, %v3088
      %v3619 = vadd.f32 %v1760, %v3090
      %v3620 = vadd.f32 %v1762, %v3092
      %v3621 = vadd.f32 %v1764, %v3094
      %v3622 = vadd.f32 %v1768, %v3098
      %v3623 = vadd.f32 %v1770, %v3100
      %v3624 = vadd.f32 %v1772, %v3102
      %v3625 = vadd.f32 %v1774, %v3104
      %v3626 = vadd.f32 %v1778, %v3108
      %v3627 = vadd.f32 %v1780, %v3110
      %v3628 = vadd.f32 %v1782, %v3112
      %v3629 = vadd.f32 %v1784, %v3114
      %v3630 = vadd.f32 %v1788, %v3118
      %v3631 = vadd.f32 %v1790, %v3120
      %v3632 = vadd.f32 %v1792, %v3122
      %v3633 = vadd.f32 %v1794, %v3124
      %v3634 = vadd.f32 %v1798, %v3128
      %v3635 = vadd.f32 %v1800, %v3130
      %v3636 = vadd.f32 %v1802, %v3132
      %v3637 = vadd.f32 %v1804, %v3134
      %v3638 = vadd.f32 %v1808, %v3138
      %v3639 = vadd.f32 %v1810, %v3140
      %v3640 = vadd.f32 %v1812, %v3142
      %v3641 = vadd.f32 %v1814, %v3144
      %v3642 = vadd.f32 %v1818, %v3148
      %v3643 = vadd.f32 %v1820, %v3150
      %v3644 = vadd.f32 %v1822, %v3152
      %v3645 = vadd.f32 %v1824, %v3154
      %v3646 = vadd.f32 %v1828, %v3158
      %v3647 = vadd.f32 %v1830, %v3160
      %v3648 = vadd.f32 %v1832, %v3162
      %v3649 = vadd.f32 %v1834, %v3164
      %v3650 = vadd.f32 %v1838, %v3168
      %v3651 = vadd.f32 %v1840, %v3170
      %v3652 = vadd.f32 %v1842, %v3172
      %v3653 = vadd.f32 %v1844, %v3174
      %v3654 = vadd.f32 %v1848, %v3178
      %v3655 = vadd.f32 %v1850, %v3180
      %v3656 = vadd.f32 %v1852, %v3182
      %v3657 = vadd.f32 %v1854, %v3184
      %v3658 = vadd.f32 %v1858, %v3188
      %v3659 = vadd.f32 %v1860, %v3190
      %v3660 = vadd.f32 %v1862, %v3192
      %v3661 = vadd.f32 %v1864, %v3194
      %v3662 = vadd.f32 %v1868, %v3198
      %v3663 = vadd.f32 %v1870, %v3200
      %v3664 = vadd.f32 %v1872, %v3202
      %v3665 = vadd.f32 %v1874, %v3204
      %v3666 = vadd.f32 %v1878, %v3208
      %v3667 = vadd.f32 %v1880, %v3210
      %v3668 = vadd.f32 %v1882, %v3212
      %v3669 = vadd.f32 %v1884, %v3214
      %v3670 = vadd.f32 %v1888, %v3218
      %v3671 = vadd.f32 %v1890, %v3220
      %v3672 = vadd.f32 %v1892, %v3222
      %v3673 = vadd.f32 %v1894, %v3224
      %v3674 = vadd.f32 %v1898, %v3228
      %v3675 = vadd.f32 %v1900, %v3230
      %v3676 = vadd.f32 %v1902, %v3232
      %v3677 = vadd.f32 %v1904, %v3234
      %v3678 = vadd.f32 %v1908, %v3238
      %v3679 = vadd.f32 %v1910, %v3240
      %v3680 = vadd.f32 %v1912, %v3242
      %v3681 = vadd.f32 %v1914, %v3244
      %v3682 = vadd.f32 %v1918, %v3248
      %v3683 = vadd.f32 %v1920, %v3250
      %v3684 = vadd.f32 %v1922, %v3252
      %v3685 = vadd.f32 %v1924, %v3254
      %v3686 = vadd.f32 %v1928, %v3258
      %v3687 = vadd.f32 %v1930, %v3260
      %v3688 = vadd.f32 %v1932, %v3262
      %v3689 = vadd.f32 %v1934, %v3264
      %v3690 = vadd.f32 %v1938, %v3268
      %v3691 = vadd.f32 %v1940, %v3270
      %v3692 = vadd.f32 %v1942, %v3272
      %v3693 = vadd.f32 %v1944, %v3274
      %v3694 = vadd.f32 %v1948, %v3278
      %v3695 = vadd.f32 %v1950, %v3280
      %v3696 = vadd.f32 %v1952, %v3282
      %v3697 = vadd.f32 %v1954, %v3284
      %v3698 = vadd.f32 %v1958, %v3288
      %v3699 = vadd.f32 %v1960, %v3290
      %v3700 = vadd.f32 %v1962, %v3292
      %v3701 = vadd.f32 %v1964, %v3294
      %v3702 = vadd.f32 %v1968, %v3298
      %v3703 = vadd.f32 %v1970, %v3300
      %v3704 = vadd.f32 %v1972, %v3302
      %v3705 = vadd.f32 %v1974, %v3304
      %v3706 = vadd.f32 %v1978, %v3308
      %v3707 = vadd.f32 %v1980, %v3310
      %v3708 = vadd.f32 %v1982, %v3312
      %v3709 = vadd.f32 %v1984, %v3314
      %v3710 = vadd.f32 %v1988, %v3318
      %v3711 = vadd.f32 %v1990, %v3320
      %v3712 = vadd.f32 %v1992, %v3322
      %v3713 = vadd.f32 %v1994, %v3324
      %v3714 = vadd.f32 %v1998, %v3328
      %v3715 = vadd.f32 %v2000, %v3330
      %v3716 = vadd.f32 %v2002, %v3332
      %v3717 = vadd.f32 %v2004, %v3334
      %v3718 = vadd.f32 %v2008, %v3338
      %v3719 = vadd.f32 %v2010, %v3340
      %v3720 = vadd.f32 %v2012, %v3342
      %v3721 = vadd.f32 %v2014, %v3344
      %v3722 = vadd.f32 %v2018, %v3348
      %v3723 = vadd.f32 %v2020, %v3350
      %v3724 = vadd.f32 %v2022, %v3352
      %v3725 = vadd.f32 %v2024, %v3354
      %v3726 = vadd.f32 %v2028, %v3358
      %v3727 = vadd.f32 %v2030, %v3360
      %v3728 = vadd.f32 %v2032, %v3362
      %v3729 = vadd.f32 %v2034, %v3364
      %v3730 = vadd.f32 %v2038, %v3368
      %v3731 = vadd.f32 %v2040, %v3370
      %v3732 = vadd.f32 %v2042, %v3372
      %v3733 = vadd.f32 %v2044, %v3374
      %v3734 = vadd.f32 %v2048, %v3378
      %v3735 = vadd.f32 %v2050, %v3380
      %v3736 = vadd.f32 %v2052, %v3382
      %v3737 = vadd.f32 %v2054, %v3384
      %v3738 = vadd.f32 %v2058, %v3388
      %v3739 = vadd.f32 %v2060, %v3390
      %v3740 = vadd.f32 %v2062, %v3392
      %v3741 = vadd.f32 %v2064, %v3394
      %v3742 = vadd.f32 %v2068, %v3398
      %v3743 = vadd.f32 %v2070, %v3400
      %v3744 = vadd.f32 %v2072, %v3402
      %v3745 = vadd.f32 %v2074, %v3404
      %v3746 = vadd.f32 %v2078, %v3408
      %v3747 = vadd.f32 %v2080, %v3410
      %v3748 = vadd.f32 %v2082, %v3412
      %v3749 = vadd.f32 %v2084, %v3414
      %v3750 = vadd.f32 %v2088, %v3418
      %v3751 = vadd.f32 %v2090, %v3420
      %v3752 = vadd.f32 %v2092, %v3422
      %v3753 = vadd.f32 %v2094, %v3424
      %v3754 = vadd.f32 %v2098, %v3428
      %v3755 = vadd.f32 %v2100, %v3430
      %v3756 = vadd.f32 %v2102, %v3432
      %v3757 = vadd.f32 %v2104, %v3434
      %v3758 = vadd.f32 %v2108, %v3438
      %v3759 = vadd.f32 %v2110, %v3440
      %v3760 = vadd.f32 %v2112, %v3442
      %v3761 = vadd.f32 %v2114, %v3444
      %v3762 = vadd.f32 %v2118, %v3448
      %v3763 = vadd.f32 %v2120, %v3450
      %v3764 = vadd.f32 %v2122, %v3452
      %v3765 = vadd.f32 %v2124, %v3454
      %v3766 = vadd.f32 %v2128, %v3458
      %v3767 = vadd.f32 %v2130, %v3460
      %v3768 = vadd.f32 %v2132, %v3462
      %v3769 = vadd.f32 %v2134, %v3464
      %v3770 = vadd.f32 %v2138, %v3468
      %v3771 = vadd.f32 %v2140, %v3470
      %v3772 = vadd.f32 %v2142, %v3472
      %v3773 = vadd.f32 %v2144, %v3474
      %v3774 = vadd.f32 %v2148, %v3478
      %v3775 = vadd.f32 %v2150, %v3480
      %v3776 = vadd.f32 %v2152, %v3482
      %v3777 = vadd.f32 %v2154, %v3484
      %v3778 = vadd.f32 %v2158, %v3488
      %v3779 = vadd.f32 %v2160, %v3490
      %v3780 = vadd.f32 %v2162, %v3492
      %v3781 = vadd.f32 %v2164, %v3494
      %v3782 = vadd.f32 %v2168, %v3498
      %v3783 = vadd.f32 %v2170, %v3500
      %v3784 = vadd.f32 %v2172, %v3502
      %v3785 = vadd.f32 %v2174, %v3504
      %v3786 = vadd.f32 %v2178, %v3508
      %v3787 = vadd.f32 %v2180, %v3510
      %v3788 = vadd.f32 %v2182, %v3512
      %v3789 = vadd.f32 %v2184, %v3514
      %v3790 = vadd.f32 %v2188, %v3518
      %v3791 = vadd.f32 %v2190, %v3520
      %v3792 = vadd.f32 %v2192, %v3522
      %v3793 = vadd.f32 %v2194, %v3524
      %v3794 = vadd.f32 %v2198, %v3528
      %v3795 = vadd.f32 %v2200, %v3530
      %v3796 = vadd.f32 %v2202, %v3532
      %v3797 = vadd.f32 %v2204, %v3534
      %v3798 = vadd.f32 %v2208, %v3538
      %v3799 = vadd.f32 %v2210, %v3540
      %v3800 = vadd.f32 %v2212, %v3542
      %v3801 = vadd.f32 %v2214, %v3544
      %v3802 = vld [vmem:[%s2] sm:$0x3]
      %v3804 = vlaneseq
      %v3805 = vshrl.u32 %v3804, 7
      %v3806 = vsub.s32 0, %v3805
      %v3807 = vrot.slane %v3802, %v3806
      %v3808 = vlaneseq
      %v3809 = vshrl.u32 %v3808, 7
      %v3810 = vsub.s32 1, %v3809
      %v3811 = vrot.slane %v3802, %v3810
      %v3814 = vadd.f32 %v3546, %v3807
      %v3815 = vadd.f32 %v3547, %v3811
      %v3816 = vadd.f32 %v3548, %v3807
      %v3817 = vadd.f32 %v3549, %v3811
      %v3818 = vadd.f32 %v3550, %v3807
      %v3819 = vadd.f32 %v3551, %v3811
      %v3820 = vadd.f32 %v3552, %v3807
      %v3821 = vadd.f32 %v3553, %v3811
      %v3822 = vadd.f32 %v3554, %v3807
      %v3823 = vadd.f32 %v3555, %v3811
      %v3824 = vadd.f32 %v3556, %v3807
      %v3825 = vadd.f32 %v3557, %v3811
      %v3826 = vadd.f32 %v3558, %v3807
      %v3827 = vadd.f32 %v3559, %v3811
      %v3828 = vadd.f32 %v3560, %v3807
      %v3829 = vadd.f32 %v3561, %v3811
      %v3830 = vadd.f32 %v3562, %v3807
      %v3831 = vadd.f32 %v3563, %v3811
      %v3832 = vadd.f32 %v3564, %v3807
      %v3833 = vadd.f32 %v3565, %v3811
      %v3834 = vadd.f32 %v3566, %v3807
      %v3835 = vadd.f32 %v3567, %v3811
      %v3836 = vadd.f32 %v3568, %v3807
      %v3837 = vadd.f32 %v3569, %v3811
      %v3838 = vadd.f32 %v3570, %v3807
      %v3839 = vadd.f32 %v3571, %v3811
      %v3840 = vadd.f32 %v3572, %v3807
      %v3841 = vadd.f32 %v3573, %v3811
      %v3842 = vadd.f32 %v3574, %v3807
      %v3843 = vadd.f32 %v3575, %v3811
      %v3844 = vadd.f32 %v3576, %v3807
      %v3845 = vadd.f32 %v3577, %v3811
      %v3846 = vadd.f32 %v3578, %v3807
      %v3847 = vadd.f32 %v3579, %v3811
      %v3848 = vadd.f32 %v3580, %v3807
      %v3849 = vadd.f32 %v3581, %v3811
      %v3850 = vadd.f32 %v3582, %v3807
      %v3851 = vadd.f32 %v3583, %v3811
      %v3852 = vadd.f32 %v3584, %v3807
      %v3853 = vadd.f32 %v3585, %v3811
      %v3854 = vadd.f32 %v3586, %v3807
      %v3855 = vadd.f32 %v3587, %v3811
      %v3856 = vadd.f32 %v3588, %v3807
      %v3857 = vadd.f32 %v3589, %v3811
      %v3858 = vadd.f32 %v3590, %v3807
      %v3859 = vadd.f32 %v3591, %v3811
      %v3860 = vadd.f32 %v3592, %v3807
      %v3861 = vadd.f32 %v3593, %v3811
      %v3862 = vadd.f32 %v3594, %v3807
      %v3863 = vadd.f32 %v3595, %v3811
      %v3864 = vadd.f32 %v3596, %v3807
      %v3865 = vadd.f32 %v3597, %v3811
      %v3866 = vadd.f32 %v3598, %v3807
      %v3867 = vadd.f32 %v3599, %v3811
      %v3868 = vadd.f32 %v3600, %v3807
      %v3869 = vadd.f32 %v3601, %v3811
      %v3870 = vadd.f32 %v3602, %v3807
      %v3871 = vadd.f32 %v3603, %v3811
      %v3872 = vadd.f32 %v3604, %v3807
      %v3873 = vadd.f32 %v3605, %v3811
      %v3874 = vadd.f32 %v3606, %v3807
      %v3875 = vadd.f32 %v3607, %v3811
      %v3876 = vadd.f32 %v3608, %v3807
      %v3877 = vadd.f32 %v3609, %v3811
      %v3878 = vadd.f32 %v3610, %v3807
      %v3879 = vadd.f32 %v3611, %v3811
      %v3880 = vadd.f32 %v3612, %v3807
      %v3881 = vadd.f32 %v3613, %v3811
      %v3882 = vadd.f32 %v3614, %v3807
      %v3883 = vadd.f32 %v3615, %v3811
      %v3884 = vadd.f32 %v3616, %v3807
      %v3885 = vadd.f32 %v3617, %v3811
      %v3886 = vadd.f32 %v3618, %v3807
      %v3887 = vadd.f32 %v3619, %v3811
      %v3888 = vadd.f32 %v3620, %v3807
      %v3889 = vadd.f32 %v3621, %v3811
      %v3890 = vadd.f32 %v3622, %v3807
      %v3891 = vadd.f32 %v3623, %v3811
      %v3892 = vadd.f32 %v3624, %v3807
      %v3893 = vadd.f32 %v3625, %v3811
      %v3894 = vadd.f32 %v3626, %v3807
      %v3895 = vadd.f32 %v3627, %v3811
      %v3896 = vadd.f32 %v3628, %v3807
      %v3897 = vadd.f32 %v3629, %v3811
      %v3898 = vadd.f32 %v3630, %v3807
      %v3899 = vadd.f32 %v3631, %v3811
      %v3900 = vadd.f32 %v3632, %v3807
      %v3901 = vadd.f32 %v3633, %v3811
      %v3902 = vadd.f32 %v3634, %v3807
      %v3903 = vadd.f32 %v3635, %v3811
      %v3904 = vadd.f32 %v3636, %v3807
      %v3905 = vadd.f32 %v3637, %v3811
      %v3906 = vadd.f32 %v3638, %v3807
      %v3907 = vadd.f32 %v3639, %v3811
      %v3908 = vadd.f32 %v3640, %v3807
      %v3909 = vadd.f32 %v3641, %v3811
      %v3910 = vadd.f32 %v3642, %v3807
      %v3911 = vadd.f32 %v3643, %v3811
      %v3912 = vadd.f32 %v3644, %v3807
      %v3913 = vadd.f32 %v3645, %v3811
      %v3914 = vadd.f32 %v3646, %v3807
      %v3915 = vadd.f32 %v3647, %v3811
      %v3916 = vadd.f32 %v3648, %v3807
      %v3917 = vadd.f32 %v3649, %v3811
      %v3918 = vadd.f32 %v3650, %v3807
      %v3919 = vadd.f32 %v3651, %v3811
      %v3920 = vadd.f32 %v3652, %v3807
      %v3921 = vadd.f32 %v3653, %v3811
      %v3922 = vadd.f32 %v3654, %v3807
      %v3923 = vadd.f32 %v3655, %v3811
      %v3924 = vadd.f32 %v3656, %v3807
      %v3925 = vadd.f32 %v3657, %v3811
      %v3926 = vadd.f32 %v3658, %v3807
      %v3927 = vadd.f32 %v3659, %v3811
      %v3928 = vadd.f32 %v3660, %v3807
      %v3929 = vadd.f32 %v3661, %v3811
      %v3930 = vadd.f32 %v3662, %v3807
      %v3931 = vadd.f32 %v3663, %v3811
      %v3932 = vadd.f32 %v3664, %v3807
      %v3933 = vadd.f32 %v3665, %v3811
      %v3934 = vadd.f32 %v3666, %v3807
      %v3935 = vadd.f32 %v3667, %v3811
      %v3936 = vadd.f32 %v3668, %v3807
      %v3937 = vadd.f32 %v3669, %v3811
      %v3938 = vadd.f32 %v3670, %v3807
      %v3939 = vadd.f32 %v3671, %v3811
      %v3940 = vadd.f32 %v3672, %v3807
      %v3941 = vadd.f32 %v3673, %v3811
      %v3942 = vadd.f32 %v3674, %v3807
      %v3943 = vadd.f32 %v3675, %v3811
      %v3944 = vadd.f32 %v3676, %v3807
      %v3945 = vadd.f32 %v3677, %v3811
      %v3946 = vadd.f32 %v3678, %v3807
      %v3947 = vadd.f32 %v3679, %v3811
      %v3948 = vadd.f32 %v3680, %v3807
      %v3949 = vadd.f32 %v3681, %v3811
      %v3950 = vadd.f32 %v3682, %v3807
      %v3951 = vadd.f32 %v3683, %v3811
      %v3952 = vadd.f32 %v3684, %v3807
      %v3953 = vadd.f32 %v3685, %v3811
      %v3954 = vadd.f32 %v3686, %v3807
      %v3955 = vadd.f32 %v3687, %v3811
      %v3956 = vadd.f32 %v3688, %v3807
      %v3957 = vadd.f32 %v3689, %v3811
      %v3958 = vadd.f32 %v3690, %v3807
      %v3959 = vadd.f32 %v3691, %v3811
      %v3960 = vadd.f32 %v3692, %v3807
      %v3961 = vadd.f32 %v3693, %v3811
      %v3962 = vadd.f32 %v3694, %v3807
      %v3963 = vadd.f32 %v3695, %v3811
      %v3964 = vadd.f32 %v3696, %v3807
      %v3965 = vadd.f32 %v3697, %v3811
      %v3966 = vadd.f32 %v3698, %v3807
      %v3967 = vadd.f32 %v3699, %v3811
      %v3968 = vadd.f32 %v3700, %v3807
      %v3969 = vadd.f32 %v3701, %v3811
      %v3970 = vadd.f32 %v3702, %v3807
      %v3971 = vadd.f32 %v3703, %v3811
      %v3972 = vadd.f32 %v3704, %v3807
      %v3973 = vadd.f32 %v3705, %v3811
      %v3974 = vadd.f32 %v3706, %v3807
      %v3975 = vadd.f32 %v3707, %v3811
      %v3976 = vadd.f32 %v3708, %v3807
      %v3977 = vadd.f32 %v3709, %v3811
      %v3978 = vadd.f32 %v3710, %v3807
      %v3979 = vadd.f32 %v3711, %v3811
      %v3980 = vadd.f32 %v3712, %v3807
      %v3981 = vadd.f32 %v3713, %v3811
      %v3982 = vadd.f32 %v3714, %v3807
      %v3983 = vadd.f32 %v3715, %v3811
      %v3984 = vadd.f32 %v3716, %v3807
      %v3985 = vadd.f32 %v3717, %v3811
      %v3986 = vadd.f32 %v3718, %v3807
      %v3987 = vadd.f32 %v3719, %v3811
      %v3988 = vadd.f32 %v3720, %v3807
      %v3989 = vadd.f32 %v3721, %v3811
      %v3990 = vadd.f32 %v3722, %v3807
      %v3991 = vadd.f32 %v3723, %v3811
      %v3992 = vadd.f32 %v3724, %v3807
      %v3993 = vadd.f32 %v3725, %v3811
      %v3994 = vadd.f32 %v3726, %v3807
      %v3995 = vadd.f32 %v3727, %v3811
      %v3996 = vadd.f32 %v3728, %v3807
      %v3997 = vadd.f32 %v3729, %v3811
      %v3998 = vadd.f32 %v3730, %v3807
      %v3999 = vadd.f32 %v3731, %v3811
      %v4000 = vadd.f32 %v3732, %v3807
      %v4001 = vadd.f32 %v3733, %v3811
      %v4002 = vadd.f32 %v3734, %v3807
      %v4003 = vadd.f32 %v3735, %v3811
      %v4004 = vadd.f32 %v3736, %v3807
      %v4005 = vadd.f32 %v3737, %v3811
      %v4006 = vadd.f32 %v3738, %v3807
      %v4007 = vadd.f32 %v3739, %v3811
      %v4008 = vadd.f32 %v3740, %v3807
      %v4009 = vadd.f32 %v3741, %v3811
      %v4010 = vadd.f32 %v3742, %v3807
      %v4011 = vadd.f32 %v3743, %v3811
      %v4012 = vadd.f32 %v3744, %v3807
      %v4013 = vadd.f32 %v3745, %v3811
      %v4014 = vadd.f32 %v3746, %v3807
      %v4015 = vadd.f32 %v3747, %v3811
      %v4016 = vadd.f32 %v3748, %v3807
      %v4017 = vadd.f32 %v3749, %v3811
      %v4018 = vadd.f32 %v3750, %v3807
      %v4019 = vadd.f32 %v3751, %v3811
      %v4020 = vadd.f32 %v3752, %v3807
      %v4021 = vadd.f32 %v3753, %v3811
      %v4022 = vadd.f32 %v3754, %v3807
      %v4023 = vadd.f32 %v3755, %v3811
      %v4024 = vadd.f32 %v3756, %v3807
      %v4025 = vadd.f32 %v3757, %v3811
      %v4026 = vadd.f32 %v3758, %v3807
      %v4027 = vadd.f32 %v3759, %v3811
      %v4028 = vadd.f32 %v3760, %v3807
      %v4029 = vadd.f32 %v3761, %v3811
      %v4030 = vadd.f32 %v3762, %v3807
      %v4031 = vadd.f32 %v3763, %v3811
      %v4032 = vadd.f32 %v3764, %v3807
      %v4033 = vadd.f32 %v3765, %v3811
      %v4034 = vadd.f32 %v3766, %v3807
      %v4035 = vadd.f32 %v3767, %v3811
      %v4036 = vadd.f32 %v3768, %v3807
      %v4037 = vadd.f32 %v3769, %v3811
      %v4038 = vadd.f32 %v3770, %v3807
      %v4039 = vadd.f32 %v3771, %v3811
      %v4040 = vadd.f32 %v3772, %v3807
      %v4041 = vadd.f32 %v3773, %v3811
      %v4042 = vadd.f32 %v3774, %v3807
      %v4043 = vadd.f32 %v3775, %v3811
      %v4044 = vadd.f32 %v3776, %v3807
      %v4045 = vadd.f32 %v3777, %v3811
      %v4046 = vadd.f32 %v3778, %v3807
      %v4047 = vadd.f32 %v3779, %v3811
      %v4048 = vadd.f32 %v3780, %v3807
      %v4049 = vadd.f32 %v3781, %v3811
      %v4050 = vadd.f32 %v3782, %v3807
      %v4051 = vadd.f32 %v3783, %v3811
      %v4052 = vadd.f32 %v3784, %v3807
      %v4053 = vadd.f32 %v3785, %v3811
      %v4054 = vadd.f32 %v3786, %v3807
      %v4055 = vadd.f32 %v3787, %v3811
      %v4056 = vadd.f32 %v3788, %v3807
      %v4057 = vadd.f32 %v3789, %v3811
      %v4058 = vadd.f32 %v3790, %v3807
      %v4059 = vadd.f32 %v3791, %v3811
      %v4060 = vadd.f32 %v3792, %v3807
      %v4061 = vadd.f32 %v3793, %v3811
      %v4062 = vadd.f32 %v3794, %v3807
      %v4063 = vadd.f32 %v3795, %v3811
      %v4064 = vadd.f32 %v3796, %v3807
      %v4065 = vadd.f32 %v3797, %v3811
      %v4066 = vadd.f32 %v3798, %v3807
      %v4067 = vadd.f32 %v3799, %v3811
      %v4068 = vadd.f32 %v3800, %v3807
      %v4069 = vadd.f32 %v3801, %v3811
      %v4070 = vmax.f32 %v3814, 0.0
      %v4071 = vmax.f32 %v3815, 0.0
      %v4072 = vmax.f32 %v3816, 0.0
      %v4073 = vmax.f32 %v3817, 0.0
      %v4074 = vmax.f32 %v3818, 0.0
      %v4075 = vmax.f32 %v3819, 0.0
      %v4076 = vmax.f32 %v3820, 0.0
      %v4077 = vmax.f32 %v3821, 0.0
      %v4078 = vmax.f32 %v3822, 0.0
      %v4079 = vmax.f32 %v3823, 0.0
      %v4080 = vmax.f32 %v3824, 0.0
      %v4081 = vmax.f32 %v3825, 0.0
      %v4082 = vmax.f32 %v3826, 0.0
      %v4083 = vmax.f32 %v3827, 0.0
      %v4084 = vmax.f32 %v3828, 0.0
      %v4085 = vmax.f32 %v3829, 0.0
      %v4086 = vmax.f32 %v3830, 0.0
      %v4087 = vmax.f32 %v3831, 0.0
      %v4088 = vmax.f32 %v3832, 0.0
      %v4089 = vmax.f32 %v3833, 0.0
      %v4090 = vmax.f32 %v3834, 0.0
      %v4091 = vmax.f32 %v3835, 0.0
      %v4092 = vmax.f32 %v3836, 0.0
      %v4093 = vmax.f32 %v3837, 0.0
      %v4094 = vmax.f32 %v3838, 0.0
      %v4095 = vmax.f32 %v3839, 0.0
      %v4096 = vmax.f32 %v3840, 0.0
      %v4097 = vmax.f32 %v3841, 0.0
      %v4098 = vmax.f32 %v3842, 0.0
      %v4099 = vmax.f32 %v3843, 0.0
      %v4100 = vmax.f32 %v3844, 0.0
      %v4101 = vmax.f32 %v3845, 0.0
      %v4102 = vmax.f32 %v3846, 0.0
      %v4103 = vmax.f32 %v3847, 0.0
      %v4104 = vmax.f32 %v3848, 0.0
      %v4105 = vmax.f32 %v3849, 0.0
      %v4106 = vmax.f32 %v3850, 0.0
      %v4107 = vmax.f32 %v3851, 0.0
      %v4108 = vmax.f32 %v3852, 0.0
      %v4109 = vmax.f32 %v3853, 0.0
      %v4110 = vmax.f32 %v3854, 0.0
      %v4111 = vmax.f32 %v3855, 0.0
      %v4112 = vmax.f32 %v3856, 0.0
      %v4113 = vmax.f32 %v3857, 0.0
      %v4114 = vmax.f32 %v3858, 0.0
      %v4115 = vmax.f32 %v3859, 0.0
      %v4116 = vmax.f32 %v3860, 0.0
      %v4117 = vmax.f32 %v3861, 0.0
      %v4118 = vmax.f32 %v3862, 0.0
      %v4119 = vmax.f32 %v3863, 0.0
      %v4120 = vmax.f32 %v3864, 0.0
      %v4121 = vmax.f32 %v3865, 0.0
      %v4122 = vmax.f32 %v3866, 0.0
      %v4123 = vmax.f32 %v3867, 0.0
      %v4124 = vmax.f32 %v3868, 0.0
      %v4125 = vmax.f32 %v3869, 0.0
      %v4126 = vmax.f32 %v3870, 0.0
      %v4127 = vmax.f32 %v3871, 0.0
      %v4128 = vmax.f32 %v3872, 0.0
      %v4129 = vmax.f32 %v3873, 0.0
      %v4130 = vmax.f32 %v3874, 0.0
      %v4131 = vmax.f32 %v3875, 0.0
      %v4132 = vmax.f32 %v3876, 0.0
      %v4133 = vmax.f32 %v3877, 0.0
      %v4134 = vmax.f32 %v3878, 0.0
      %v4135 = vmax.f32 %v3879, 0.0
      %v4136 = vmax.f32 %v3880, 0.0
      %v4137 = vmax.f32 %v3881, 0.0
      %v4138 = vmax.f32 %v3882, 0.0
      %v4139 = vmax.f32 %v3883, 0.0
      %v4140 = vmax.f32 %v3884, 0.0
      %v4141 = vmax.f32 %v3885, 0.0
      %v4142 = vmax.f32 %v3886, 0.0
      %v4143 = vmax.f32 %v3887, 0.0
      %v4144 = vmax.f32 %v3888, 0.0
      %v4145 = vmax.f32 %v3889, 0.0
      %v4146 = vmax.f32 %v3890, 0.0
      %v4147 = vmax.f32 %v3891, 0.0
      %v4148 = vmax.f32 %v3892, 0.0
      %v4149 = vmax.f32 %v3893, 0.0
      %v4150 = vmax.f32 %v3894, 0.0
      %v4151 = vmax.f32 %v3895, 0.0
      %v4152 = vmax.f32 %v3896, 0.0
      %v4153 = vmax.f32 %v3897, 0.0
      %v4154 = vmax.f32 %v3898, 0.0
      %v4155 = vmax.f32 %v3899, 0.0
      %v4156 = vmax.f32 %v3900, 0.0
      %v4157 = vmax.f32 %v3901, 0.0
      %v4158 = vmax.f32 %v3902, 0.0
      %v4159 = vmax.f32 %v3903, 0.0
      %v4160 = vmax.f32 %v3904, 0.0
      %v4161 = vmax.f32 %v3905, 0.0
      %v4162 = vmax.f32 %v3906, 0.0
      %v4163 = vmax.f32 %v3907, 0.0
      %v4164 = vmax.f32 %v3908, 0.0
      %v4165 = vmax.f32 %v3909, 0.0
      %v4166 = vmax.f32 %v3910, 0.0
      %v4167 = vmax.f32 %v3911, 0.0
      %v4168 = vmax.f32 %v3912, 0.0
      %v4169 = vmax.f32 %v3913, 0.0
      %v4170 = vmax.f32 %v3914, 0.0
      %v4171 = vmax.f32 %v3915, 0.0
      %v4172 = vmax.f32 %v3916, 0.0
      %v4173 = vmax.f32 %v3917, 0.0
      %v4174 = vmax.f32 %v3918, 0.0
      %v4175 = vmax.f32 %v3919, 0.0
      %v4176 = vmax.f32 %v3920, 0.0
      %v4177 = vmax.f32 %v3921, 0.0
      %v4178 = vmax.f32 %v3922, 0.0
      %v4179 = vmax.f32 %v3923, 0.0
      %v4180 = vmax.f32 %v3924, 0.0
      %v4181 = vmax.f32 %v3925, 0.0
      %v4182 = vmax.f32 %v3926, 0.0
      %v4183 = vmax.f32 %v3927, 0.0
      %v4184 = vmax.f32 %v3928, 0.0
      %v4185 = vmax.f32 %v3929, 0.0
      %v4186 = vmax.f32 %v3930, 0.0
      %v4187 = vmax.f32 %v3931, 0.0
      %v4188 = vmax.f32 %v3932, 0.0
      %v4189 = vmax.f32 %v3933, 0.0
      %v4190 = vmax.f32 %v3934, 0.0
      %v4191 = vmax.f32 %v3935, 0.0
      %v4192 = vmax.f32 %v3936, 0.0
      %v4193 = vmax.f32 %v3937, 0.0
      %v4194 = vmax.f32 %v3938, 0.0
      %v4195 = vmax.f32 %v3939, 0.0
      %v4196 = vmax.f32 %v3940, 0.0
      %v4197 = vmax.f32 %v3941, 0.0
      %v4198 = vmax.f32 %v3942, 0.0
      %v4199 = vmax.f32 %v3943, 0.0
      %v4200 = vmax.f32 %v3944, 0.0
      %v4201 = vmax.f32 %v3945, 0.0
      %v4202 = vmax.f32 %v3946, 0.0
      %v4203 = vmax.f32 %v3947, 0.0
      %v4204 = vmax.f32 %v3948, 0.0
      %v4205 = vmax.f32 %v3949, 0.0
      %v4206 = vmax.f32 %v3950, 0.0
      %v4207 = vmax.f32 %v3951, 0.0
      %v4208 = vmax.f32 %v3952, 0.0
      %v4209 = vmax.f32 %v3953, 0.0
      %v4210 = vmax.f32 %v3954, 0.0
      %v4211 = vmax.f32 %v3955, 0.0
      %v4212 = vmax.f32 %v3956, 0.0
      %v4213 = vmax.f32 %v3957, 0.0
      %v4214 = vmax.f32 %v3958, 0.0
      %v4215 = vmax.f32 %v3959, 0.0
      %v4216 = vmax.f32 %v3960, 0.0
      %v4217 = vmax.f32 %v3961, 0.0
      %v4218 = vmax.f32 %v3962, 0.0
      %v4219 = vmax.f32 %v3963, 0.0
      %v4220 = vmax.f32 %v3964, 0.0
      %v4221 = vmax.f32 %v3965, 0.0
      %v4222 = vmax.f32 %v3966, 0.0
      %v4223 = vmax.f32 %v3967, 0.0
      %v4224 = vmax.f32 %v3968, 0.0
      %v4225 = vmax.f32 %v3969, 0.0
      %v4226 = vmax.f32 %v3970, 0.0
      %v4227 = vmax.f32 %v3971, 0.0
      %v4228 = vmax.f32 %v3972, 0.0
      %v4229 = vmax.f32 %v3973, 0.0
      %v4230 = vmax.f32 %v3974, 0.0
      %v4231 = vmax.f32 %v3975, 0.0
      %v4232 = vmax.f32 %v3976, 0.0
      %v4233 = vmax.f32 %v3977, 0.0
      %v4234 = vmax.f32 %v3978, 0.0
      %v4235 = vmax.f32 %v3979, 0.0
      %v4236 = vmax.f32 %v3980, 0.0
      %v4237 = vmax.f32 %v3981, 0.0
      %v4238 = vmax.f32 %v3982, 0.0
      %v4239 = vmax.f32 %v3983, 0.0
      %v4240 = vmax.f32 %v3984, 0.0
      %v4241 = vmax.f32 %v3985, 0.0
      %v4242 = vmax.f32 %v3986, 0.0
      %v4243 = vmax.f32 %v3987, 0.0
      %v4244 = vmax.f32 %v3988, 0.0
      %v4245 = vmax.f32 %v3989, 0.0
      %v4246 = vmax.f32 %v3990, 0.0
      %v4247 = vmax.f32 %v3991, 0.0
      %v4248 = vmax.f32 %v3992, 0.0
      %v4249 = vmax.f32 %v3993, 0.0
      %v4250 = vmax.f32 %v3994, 0.0
      %v4251 = vmax.f32 %v3995, 0.0
      %v4252 = vmax.f32 %v3996, 0.0
      %v4253 = vmax.f32 %v3997, 0.0
      %v4254 = vmax.f32 %v3998, 0.0
      %v4255 = vmax.f32 %v3999, 0.0
      %v4256 = vmax.f32 %v4000, 0.0
      %v4257 = vmax.f32 %v4001, 0.0
      %v4258 = vmax.f32 %v4002, 0.0
      %v4259 = vmax.f32 %v4003, 0.0
      %v4260 = vmax.f32 %v4004, 0.0
      %v4261 = vmax.f32 %v4005, 0.0
      %v4262 = vmax.f32 %v4006, 0.0
      %v4263 = vmax.f32 %v4007, 0.0
      %v4264 = vmax.f32 %v4008, 0.0
      %v4265 = vmax.f32 %v4009, 0.0
      %v4266 = vmax.f32 %v4010, 0.0
      %v4267 = vmax.f32 %v4011, 0.0
      %v4268 = vmax.f32 %v4012, 0.0
      %v4269 = vmax.f32 %v4013, 0.0
      %v4270 = vmax.f32 %v4014, 0.0
      %v4271 = vmax.f32 %v4015, 0.0
      %v4272 = vmax.f32 %v4016, 0.0
      %v4273 = vmax.f32 %v4017, 0.0
      %v4274 = vmax.f32 %v4018, 0.0
      %v4275 = vmax.f32 %v4019, 0.0
      %v4276 = vmax.f32 %v4020, 0.0
      %v4277 = vmax.f32 %v4021, 0.0
      %v4278 = vmax.f32 %v4022, 0.0
      %v4279 = vmax.f32 %v4023, 0.0
      %v4280 = vmax.f32 %v4024, 0.0
      %v4281 = vmax.f32 %v4025, 0.0
      %v4282 = vmax.f32 %v4026, 0.0
      %v4283 = vmax.f32 %v4027, 0.0
      %v4284 = vmax.f32 %v4028, 0.0
      %v4285 = vmax.f32 %v4029, 0.0
      %v4286 = vmax.f32 %v4030, 0.0
      %v4287 = vmax.f32 %v4031, 0.0
      %v4288 = vmax.f32 %v4032, 0.0
      %v4289 = vmax.f32 %v4033, 0.0
      %v4290 = vmax.f32 %v4034, 0.0
      %v4291 = vmax.f32 %v4035, 0.0
      %v4292 = vmax.f32 %v4036, 0.0
      %v4293 = vmax.f32 %v4037, 0.0
      %v4294 = vmax.f32 %v4038, 0.0
      %v4295 = vmax.f32 %v4039, 0.0
      %v4296 = vmax.f32 %v4040, 0.0
      %v4297 = vmax.f32 %v4041, 0.0
      %v4298 = vmax.f32 %v4042, 0.0
      %v4299 = vmax.f32 %v4043, 0.0
      %v4300 = vmax.f32 %v4044, 0.0
      %v4301 = vmax.f32 %v4045, 0.0
      %v4302 = vmax.f32 %v4046, 0.0
      %v4303 = vmax.f32 %v4047, 0.0
      %v4304 = vmax.f32 %v4048, 0.0
      %v4305 = vmax.f32 %v4049, 0.0
      %v4306 = vmax.f32 %v4050, 0.0
      %v4307 = vmax.f32 %v4051, 0.0
      %v4308 = vmax.f32 %v4052, 0.0
      %v4309 = vmax.f32 %v4053, 0.0
      %v4310 = vmax.f32 %v4054, 0.0
      %v4311 = vmax.f32 %v4055, 0.0
      %v4312 = vmax.f32 %v4056, 0.0
      %v4313 = vmax.f32 %v4057, 0.0
      %v4314 = vmax.f32 %v4058, 0.0
      %v4315 = vmax.f32 %v4059, 0.0
      %v4316 = vmax.f32 %v4060, 0.0
      %v4317 = vmax.f32 %v4061, 0.0
      %v4318 = vmax.f32 %v4062, 0.0
      %v4319 = vmax.f32 %v4063, 0.0
      %v4320 = vmax.f32 %v4064, 0.0
      %v4321 = vmax.f32 %v4065, 0.0
      %v4322 = vmax.f32 %v4066, 0.0
      %v4323 = vmax.f32 %v4067, 0.0
      %v4324 = vmax.f32 %v4068, 0.0
      %v4325 = vmax.f32 %v4069, 0.0
      %v4326 = vmax.f32 %v4070, %v4078
      %v4327 = vmax.f32 %v4071, %v4079
      %v4328 = vmax.f32 %v4072, %v4080
      %v4329 = vmax.f32 %v4073, %v4081
      %v4330 = vmax.f32 %v4074, %v4082
      %v4331 = vmax.f32 %v4075, %v4083
      %v4332 = vmax.f32 %v4076, %v4084
      %v4333 = vmax.f32 %v4077, %v4085
      %v4334 = vmax.f32 %v4086, %v4094
      %v4335 = vmax.f32 %v4087, %v4095
      %v4336 = vmax.f32 %v4088, %v4096
      %v4337 = vmax.f32 %v4089, %v4097
      %v4338 = vmax.f32 %v4090, %v4098
      %v4339 = vmax.f32 %v4091, %v4099
      %v4340 = vmax.f32 %v4092, %v4100
      %v4341 = vmax.f32 %v4093, %v4101
      %v4342 = vmax.f32 %v4102, %v4110
      %v4343 = vmax.f32 %v4103, %v4111
      %v4344 = vmax.f32 %v4104, %v4112
      %v4345 = vmax.f32 %v4105, %v4113
      %v4346 = vmax.f32 %v4106, %v4114
      %v4347 = vmax.f32 %v4107, %v4115
      %v4348 = vmax.f32 %v4108, %v4116
      %v4349 = vmax.f32 %v4109, %v4117
      %v4350 = vmax.f32 %v4118, %v4126
      %v4351 = vmax.f32 %v4119, %v4127
      %v4352 = vmax.f32 %v4120, %v4128
      %v4353 = vmax.f32 %v4121, %v4129
      %v4354 = vmax.f32 %v4122, %v4130
      %v4355 = vmax.f32 %v4123, %v4131
      %v4356 = vmax.f32 %v4124, %v4132
      %v4357 = vmax.f32 %v4125, %v4133
      %v4358 = vmax.f32 %v4134, %v4142
      %v4359 = vmax.f32 %v4135, %v4143
      %v4360 = vmax.f32 %v4136, %v4144
      %v4361 = vmax.f32 %v4137, %v4145
      %v4362 = vmax.f32 %v4138, %v4146
      %v4363 = vmax.f32 %v4139, %v4147
      %v4364 = vmax.f32 %v4140, %v4148
      %v4365 = vmax.f32 %v4141, %v4149
      %v4366 = vmax.f32 %v4150, %v4158
      %v4367 = vmax.f32 %v4151, %v4159
      %v4368 = vmax.f32 %v4152, %v4160
      %v4369 = vmax.f32 %v4153, %v4161
      %v4370 = vmax.f32 %v4154, %v4162
      %v4371 = vmax.f32 %v4155, %v4163
      %v4372 = vmax.f32 %v4156, %v4164
      %v4373 = vmax.f32 %v4157, %v4165
      %v4374 = vmax.f32 %v4166, %v4174
      %v4375 = vmax.f32 %v4167, %v4175
      %v4376 = vmax.f32 %v4168, %v4176
      %v4377 = vmax.f32 %v4169, %v4177
      %v4378 = vmax.f32 %v4170, %v4178
      %v4379 = vmax.f32 %v4171, %v4179
      %v4380 = vmax.f32 %v4172, %v4180
      %v4381 = vmax.f32 %v4173, %v4181
      %v4382 = vmax.f32 %v4182, %v4190
      %v4383 = vmax.f32 %v4183, %v4191
      %v4384 = vmax.f32 %v4184, %v4192
      %v4385 = vmax.f32 %v4185, %v4193
      %v4386 = vmax.f32 %v4186, %v4194
      %v4387 = vmax.f32 %v4187, %v4195
      %v4388 = vmax.f32 %v4188, %v4196
      %v4389 = vmax.f32 %v4189, %v4197
      %v4390 = vmax.f32 %v4198, %v4206
      %v4391 = vmax.f32 %v4199, %v4207
      %v4392 = vmax.f32 %v4200, %v4208
      %v4393 = vmax.f32 %v4201, %v4209
      %v4394 = vmax.f32 %v4202, %v4210
      %v4395 = vmax.f32 %v4203, %v4211
      %v4396 = vmax.f32 %v4204, %v4212
      %v4397 = vmax.f32 %v4205, %v4213
      %v4398 = vmax.f32 %v4214, %v4222
      %v4399 = vmax.f32 %v4215, %v4223
      %v4400 = vmax.f32 %v4216, %v4224
      %v4401 = vmax.f32 %v4217, %v4225
      %v4402 = vmax.f32 %v4218, %v4226
      %v4403 = vmax.f32 %v4219, %v4227
      %v4404 = vmax.f32 %v4220, %v4228
      %v4405 = vmax.f32 %v4221, %v4229
      %v4406 = vmax.f32 %v4230, %v4238
      %v4407 = vmax.f32 %v4231, %v4239
      %v4408 = vmax.f32 %v4232, %v4240
      %v4409 = vmax.f32 %v4233, %v4241
      %v4410 = vmax.f32 %v4234, %v4242
      %v4411 = vmax.f32 %v4235, %v4243
      %v4412 = vmax.f32 %v4236, %v4244
      %v4413 = vmax.f32 %v4237, %v4245
      %v4414 = vmax.f32 %v4246, %v4254
      %v4415 = vmax.f32 %v4247, %v4255
      %v4416 = vmax.f32 %v4248, %v4256
      %v4417 = vmax.f32 %v4249, %v4257
      %v4418 = vmax.f32 %v4250, %v4258
      %v4419 = vmax.f32 %v4251, %v4259
      %v4420 = vmax.f32 %v4252, %v4260
      %v4421 = vmax.f32 %v4253, %v4261
      %v4422 = vmax.f32 %v4262, %v4270
      %v4423 = vmax.f32 %v4263, %v4271
      %v4424 = vmax.f32 %v4264, %v4272
      %v4425 = vmax.f32 %v4265, %v4273
      %v4426 = vmax.f32 %v4266, %v4274
      %v4427 = vmax.f32 %v4267, %v4275
      %v4428 = vmax.f32 %v4268, %v4276
      %v4429 = vmax.f32 %v4269, %v4277
      %v4430 = vmax.f32 %v4278, %v4286
      %v4431 = vmax.f32 %v4279, %v4287
      %v4432 = vmax.f32 %v4280, %v4288
      %v4433 = vmax.f32 %v4281, %v4289
      %v4434 = vmax.f32 %v4282, %v4290
      %v4435 = vmax.f32 %v4283, %v4291
      %v4436 = vmax.f32 %v4284, %v4292
      %v4437 = vmax.f32 %v4285, %v4293
      %v4438 = vmax.f32 %v4294, %v4302
      %v4439 = vmax.f32 %v4295, %v4303
      %v4440 = vmax.f32 %v4296, %v4304
      %v4441 = vmax.f32 %v4297, %v4305
      %v4442 = vmax.f32 %v4298, %v4306
      %v4443 = vmax.f32 %v4299, %v4307
      %v4444 = vmax.f32 %v4300, %v4308
      %v4445 = vmax.f32 %v4301, %v4309
      %v4446 = vmax.f32 %v4310, %v4318
      %v4447 = vmax.f32 %v4311, %v4319
      %v4448 = vmax.f32 %v4312, %v4320
      %v4449 = vmax.f32 %v4313, %v4321
      %v4450 = vmax.f32 %v4314, %v4322
      %v4451 = vmax.f32 %v4315, %v4323
      %v4452 = vmax.f32 %v4316, %v4324
      %v4453 = vmax.f32 %v4317, %v4325
      %v4454 = vmax.f32 %v4326, %v4330
      %v4455 = vmax.f32 %v4327, %v4331
      %v4456 = vmax.f32 %v4328, %v4332
      %v4457 = vmax.f32 %v4329, %v4333
      %v4458 = vmax.f32 %v4334, %v4338
      %v4459 = vmax.f32 %v4335, %v4339
      %v4460 = vmax.f32 %v4336, %v4340
      %v4461 = vmax.f32 %v4337, %v4341
      %v4462 = vmax.f32 %v4342, %v4346
      %v4463 = vmax.f32 %v4343, %v4347
      %v4464 = vmax.f32 %v4344, %v4348
      %v4465 = vmax.f32 %v4345, %v4349
      %v4466 = vmax.f32 %v4350, %v4354
      %v4467 = vmax.f32 %v4351, %v4355
      %v4468 = vmax.f32 %v4352, %v4356
      %v4469 = vmax.f32 %v4353, %v4357
      %v4470 = vmax.f32 %v4358, %v4362
      %v4471 = vmax.f32 %v4359, %v4363
      %v4472 = vmax.f32 %v4360, %v4364
      %v4473 = vmax.f32 %v4361, %v4365
      %v4474 = vmax.f32 %v4366, %v4370
      %v4475 = vmax.f32 %v4367, %v4371
      %v4476 = vmax.f32 %v4368, %v4372
      %v4477 = vmax.f32 %v4369, %v4373
      %v4478 = vmax.f32 %v4374, %v4378
      %v4479 = vmax.f32 %v4375, %v4379
      %v4480 = vmax.f32 %v4376, %v4380
      %v4481 = vmax.f32 %v4377, %v4381
      %v4482 = vmax.f32 %v4382, %v4386
      %v4483 = vmax.f32 %v4383, %v4387
      %v4484 = vmax.f32 %v4384, %v4388
      %v4485 = vmax.f32 %v4385, %v4389
      %v4486 = vmax.f32 %v4390, %v4394
      %v4487 = vmax.f32 %v4391, %v4395
      %v4488 = vmax.f32 %v4392, %v4396
      %v4489 = vmax.f32 %v4393, %v4397
      %v4490 = vmax.f32 %v4398, %v4402
      %v4491 = vmax.f32 %v4399, %v4403
      %v4492 = vmax.f32 %v4400, %v4404
      %v4493 = vmax.f32 %v4401, %v4405
      %v4494 = vmax.f32 %v4406, %v4410
      %v4495 = vmax.f32 %v4407, %v4411
      %v4496 = vmax.f32 %v4408, %v4412
      %v4497 = vmax.f32 %v4409, %v4413
      %v4498 = vmax.f32 %v4414, %v4418
      %v4499 = vmax.f32 %v4415, %v4419
      %v4500 = vmax.f32 %v4416, %v4420
      %v4501 = vmax.f32 %v4417, %v4421
      %v4502 = vmax.f32 %v4422, %v4426
      %v4503 = vmax.f32 %v4423, %v4427
      %v4504 = vmax.f32 %v4424, %v4428
      %v4505 = vmax.f32 %v4425, %v4429
      %v4506 = vmax.f32 %v4430, %v4434
      %v4507 = vmax.f32 %v4431, %v4435
      %v4508 = vmax.f32 %v4432, %v4436
      %v4509 = vmax.f32 %v4433, %v4437
      %v4510 = vmax.f32 %v4438, %v4442
      %v4511 = vmax.f32 %v4439, %v4443
      %v4512 = vmax.f32 %v4440, %v4444
      %v4513 = vmax.f32 %v4441, %v4445
      %v4514 = vmax.f32 %v4446, %v4450
      %v4515 = vmax.f32 %v4447, %v4451
      %v4516 = vmax.f32 %v4448, %v4452
      %v4517 = vmax.f32 %v4449, %v4453
      %v4518 = vpack.c.bf16 %v4456, %v4454
      %v4519 = vpack.c.bf16 %v4457, %v4455
      %v4520 = vpack.c.bf16 %v4460, %v4458
      %v4521 = vpack.c.bf16 %v4461, %v4459
      %v4522 = vpack.c.bf16 %v4464, %v4462
      %v4523 = vpack.c.bf16 %v4465, %v4463
      %v4524 = vpack.c.bf16 %v4468, %v4466
      %v4525 = vpack.c.bf16 %v4469, %v4467
      %v4526 = vpack.c.bf16 %v4472, %v4470
      %v4527 = vpack.c.bf16 %v4473, %v4471
      %v4528 = vpack.c.bf16 %v4476, %v4474
      %v4529 = vpack.c.bf16 %v4477, %v4475
      %v4530 = vpack.c.bf16 %v4480, %v4478
      %v4531 = vpack.c.bf16 %v4481, %v4479
      %v4532 = vpack.c.bf16 %v4484, %v4482
      %v4533 = vpack.c.bf16 %v4485, %v4483
      %v4534 = vpack.c.bf16 %v4488, %v4486
      %v4535 = vpack.c.bf16 %v4489, %v4487
      %v4536 = vpack.c.bf16 %v4492, %v4490
      %v4537 = vpack.c.bf16 %v4493, %v4491
      %v4538 = vpack.c.bf16 %v4496, %v4494
      %v4539 = vpack.c.bf16 %v4497, %v4495
      %v4540 = vpack.c.bf16 %v4500, %v4498
      %v4541 = vpack.c.bf16 %v4501, %v4499
      %v4542 = vpack.c.bf16 %v4504, %v4502
      %v4543 = vpack.c.bf16 %v4505, %v4503
      %v4544 = vpack.c.bf16 %v4508, %v4506
      %v4545 = vpack.c.bf16 %v4509, %v4507
      %v4546 = vpack.c.bf16 %v4512, %v4510
      %v4547 = vpack.c.bf16 %v4513, %v4511
      %v4548 = vpack.c.bf16 %v4516, %v4514
      %v4549 = vpack.c.bf16 %v4517, %v4515
      %v4582 = vunpack.c.l.b16 %v4518
      %v4583 = vunpack.c.l.b16 %v4519
      %v4584 = vunpack.c.h.b16 %v4518
      %v4585 = vunpack.c.h.b16 %v4519
      %v4586 = vunpack.c.l.b16 %v4520
      %v4587 = vunpack.c.l.b16 %v4521
      %v4588 = vunpack.c.h.b16 %v4520
      %v4589 = vunpack.c.h.b16 %v4521
      %v4590 = vunpack.c.l.b16 %v4522
      %v4591 = vunpack.c.l.b16 %v4523
      %v4592 = vunpack.c.h.b16 %v4522
      %v4593 = vunpack.c.h.b16 %v4523
      %v4594 = vunpack.c.l.b16 %v4524
      %v4595 = vunpack.c.l.b16 %v4525
      %v4596 = vunpack.c.h.b16 %v4524
      %v4597 = vunpack.c.h.b16 %v4525
      %v4598 = vunpack.c.l.b16 %v4526
      %v4599 = vunpack.c.l.b16 %v4527
      %v4600 = vunpack.c.h.b16 %v4526
      %v4601 = vunpack.c.h.b16 %v4527
      %v4602 = vunpack.c.l.b16 %v4528
      %v4603 = vunpack.c.l.b16 %v4529
      %v4604 = vunpack.c.h.b16 %v4528
      %v4605 = vunpack.c.h.b16 %v4529
      %v4606 = vunpack.c.l.b16 %v4530
      %v4607 = vunpack.c.l.b16 %v4531
      %v4608 = vunpack.c.h.b16 %v4530
      %v4609 = vunpack.c.h.b16 %v4531
      %v4610 = vunpack.c.l.b16 %v4532
      %v4611 = vunpack.c.l.b16 %v4533
      %v4612 = vunpack.c.h.b16 %v4532
      %v4613 = vunpack.c.h.b16 %v4533
      %v4614 = vunpack.c.l.b16 %v4534
      %v4615 = vunpack.c.l.b16 %v4535
      %v4616 = vunpack.c.h.b16 %v4534
      %v4617 = vunpack.c.h.b16 %v4535
      %v4618 = vunpack.c.l.b16 %v4536
      %v4619 = vunpack.c.l.b16 %v4537
      %v4620 = vunpack.c.h.b16 %v4536
      %v4621 = vunpack.c.h.b16 %v4537
      %v4622 = vunpack.c.l.b16 %v4538
      %v4623 = vunpack.c.l.b16 %v4539
      %v4624 = vunpack.c.h.b16 %v4538
      %v4625 = vunpack.c.h.b16 %v4539
      %v4626 = vunpack.c.l.b16 %v4540
      %v4627 = vunpack.c.l.b16 %v4541
      %v4628 = vunpack.c.h.b16 %v4540
      %v4629 = vunpack.c.h.b16 %v4541
      %v4630 = vunpack.c.l.b16 %v4542
      %v4631 = vunpack.c.l.b16 %v4543
      %v4632 = vunpack.c.h.b16 %v4542
      %v4633 = vunpack.c.h.b16 %v4543
      %v4634 = vunpack.c.l.b16 %v4544
      %v4635 = vunpack.c.l.b16 %v4545
      %v4636 = vunpack.c.h.b16 %v4544
      %v4637 = vunpack.c.h.b16 %v4545
      %v4638 = vunpack.c.l.b16 %v4546
      %v4639 = vunpack.c.l.b16 %v4547
      %v4640 = vunpack.c.h.b16 %v4546
      %v4641 = vunpack.c.h.b16 %v4547
      %v4642 = vunpack.c.l.b16 %v4548
      %v4643 = vunpack.c.l.b16 %v4549
      %v4644 = vunpack.c.h.b16 %v4548
      %v4645 = vunpack.c.h.b16 %v4549
      %v4646 = vpack.c.b16 %v4583, %v4582
      %v4647 = vpack.c.b16 %v4585, %v4584
      %v4648 = vpack.c.b16 %v4587, %v4586
      %v4649 = vpack.c.b16 %v4589, %v4588
      %v4650 = vpack.c.b16 %v4591, %v4590
      %v4651 = vpack.c.b16 %v4593, %v4592
      %v4652 = vpack.c.b16 %v4595, %v4594
      %v4653 = vpack.c.b16 %v4597, %v4596
      %v4654 = vpack.c.b16 %v4599, %v4598
      %v4655 = vpack.c.b16 %v4601, %v4600
      %v4656 = vpack.c.b16 %v4603, %v4602
      %v4657 = vpack.c.b16 %v4605, %v4604
      %v4658 = vpack.c.b16 %v4607, %v4606
      %v4659 = vpack.c.b16 %v4609, %v4608
      %v4660 = vpack.c.b16 %v4611, %v4610
      %v4661 = vpack.c.b16 %v4613, %v4612
      %v4662 = vpack.c.b16 %v4615, %v4614
      %v4663 = vpack.c.b16 %v4617, %v4616
      %v4664 = vpack.c.b16 %v4619, %v4618
      %v4665 = vpack.c.b16 %v4621, %v4620
      %v4666 = vpack.c.b16 %v4623, %v4622
      %v4667 = vpack.c.b16 %v4625, %v4624
      %v4668 = vpack.c.b16 %v4627, %v4626
      %v4669 = vpack.c.b16 %v4629, %v4628
      %v4670 = vpack.c.b16 %v4631, %v4630
      %v4671 = vpack.c.b16 %v4633, %v4632
      %v4672 = vpack.c.b16 %v4635, %v4634
      %v4673 = vpack.c.b16 %v4637, %v4636
      %v4674 = vpack.c.b16 %v4639, %v4638
      %v4675 = vpack.c.b16 %v4641, %v4640
      %v4676 = vpack.c.b16 %v4643, %v4642
      %v4677 = vpack.c.b16 %v4645, %v4644
      %4710 = vst [vmem:[%s170] sm:$0xff] %v4646
      %4711 = vst [vmem:[%s170 + $0x8] sm:$0xff] %v4647
      %4712 = vst [vmem:[%s170 + $0x10] sm:$0xff] %v4648
      %4713 = vst [vmem:[%s170 + $0x18] sm:$0xff] %v4649
      %4714 = vst [vmem:[%s170 + $0x20] sm:$0xff] %v4650
      %4715 = vst [vmem:[%s170 + $0x28] sm:$0xff] %v4651
      %4716 = vst [vmem:[%s170 + $0x30] sm:$0xff] %v4652
      %4717 = vst [vmem:[%s170 + $0x38] sm:$0xff] %v4653
      %4718 = vst [vmem:[%s170 + $0x40] sm:$0xff] %v4654
      %4719 = vst [vmem:[%s170 + $0x48] sm:$0xff] %v4655
      %4720 = vst [vmem:[%s170 + $0x50] sm:$0xff] %v4656
      %4721 = vst [vmem:[%s170 + $0x58] sm:$0xff] %v4657
      %4722 = vst [vmem:[%s170 + $0x60] sm:$0xff] %v4658
      %4723 = vst [vmem:[%s170 + $0x68] sm:$0xff] %v4659
      %4724 = vst [vmem:[%s170 + $0x70] sm:$0xff] %v4660
      %4725 = vst [vmem:[%s170 + $0x78] sm:$0xff] %v4661
      %4726 = vst [vmem:[%s170 + $0x80] sm:$0xff] %v4662
      %4727 = vst [vmem:[%s170 + $0x88] sm:$0xff] %v4663
      %4728 = vst [vmem:[%s170 + $0x90] sm:$0xff] %v4664
      %4729 = vst [vmem:[%s170 + $0x98] sm:$0xff] %v4665
      %4730 = vst [vmem:[%s170 + $0xa0] sm:$0xff] %v4666
      %4731 = vst [vmem:[%s170 + $0xa8] sm:$0xff] %v4667
      %4732 = vst [vmem:[%s170 + $0xb0] sm:$0xff] %v4668
      %4733 = vst [vmem:[%s170 + $0xb8] sm:$0xff] %v4669
      %4734 = vst [vmem:[%s170 + $0xc0] sm:$0xff] %v4670
      %4735 = vst [vmem:[%s170 + $0xc8] sm:$0xff] %v4671
      %4736 = vst [vmem:[%s170 + $0xd0] sm:$0xff] %v4672
      %4737 = vst [vmem:[%s170 + $0xd8] sm:$0xff] %v4673
      %4738 = vst [vmem:[%s170 + $0xe0] sm:$0xff] %v4674
      %4739 = vst [vmem:[%s170 + $0xe8] sm:$0xff] %v4675
      %4740 = vst [vmem:[%s170 + $0xf0] sm:$0xff] %v4676
      %4741 = vst [vmem:[%s170 + $0xf8] sm:$0xff] %v4677
      %p4742 = scmp.lt.s32.totalorder %s14, 1
      %s4743 = scalar_select %p4742, %s14, 1
      %s4744 = smul.addr %s4743, 64
      %s4745 = smul.addr %s4744, 4
      %s4746 = scalar_lea.vmem %s3, %s4745
      // Predicated region
      $region33: #{dbcnn_forward.3} parent=31 // pred_check
        %p4747 = pneg %p100
      $region34: #{dbcnn_forward.3} parent=31 // pred_check_branch
        %4749 = sbr.rel (%p4747) target = $region36
      $region35: #{dbcnn_forward.3} parent=31 // pred_region
        _
      $region36: #{dbcnn_forward.3} parent=31 // pred_fallthru
        _
    $region32: #{dbcnn_forward.3} parent=5 // pred_fallthru
      _
    %p4750 = scmp.le.s32.totalorder 2, %s9
    // Predicated region
    $region37: #{dbcnn_forward.3} parent=5 // pred_check
      %p4751 = pneg %p4750
    $region38: #{dbcnn_forward.3} parent=5 // pred_check_branch
      %4753 = sbr.rel (%p4751) target = $region40
    $region39: #{dbcnn_forward.3} parent=5 // pred_region
      %s4754 = ssub.s32 %s9, 2
      // Predicated region
      $region41: #{dbcnn_forward.3} parent=39 // pred_check
        %p4755 = pneg %p106
      $region42: #{dbcnn_forward.3} parent=39 // pred_check_branch
        %4757 = sbr.rel (%p4755) target = $region44
      $region43: #{dbcnn_forward.3} parent=39 // pred_region
        %p4758 = scmp.lt.s32.totalorder %s15, 1
        %s4759 = scalar_select %p4758, %s15, 1
        %s4760 = smul.addr %s4759, 64
        %s4761 = smul.addr %s4760, 4
        %s4762 = scalar_lea.vmem %s3, %s4761
      $region44: #{dbcnn_forward.3} parent=39 // pred_fallthru
        _
    $region40: #{dbcnn_forward.3} parent=5 // pred_fallthru
      _
  $region6: #{dbcnn_forward.3} parent=0 // loop_footer
    %s13 = sadd.s32 1, %s9
  $region7: #{dbcnn_forward.3} parent=0 // loop_footer_branch
    %8 = sbr.rel target = $region3
  $region8: #{dbcnn_forward.3} parent=0 // loop_exit
    _

// kernel: dbcnn_forward.5
$region0: #{dbcnn_forward.5}
  #allocation0 [shape = 'u32[]', space=smem, size = 0x4, offset = 0x4, fixed_abs, tag = 'smem constant byte address 0x4 - core index']
  #allocation1 [shape = 'u32[144,128]{1,0:T(1,128)}', space=vmem, size = 0x12000, scoped, tag = 'internal scratch']
  #allocation2 [shape = 'f32[128,128]{1,0:T(8,128)}', space=vmem, size = 0x10000, scoped, tag = 'scratch operand']
  #allocation3 [shape = 'f32[1,1]{1,0:T(1,128)S(1)}', space=vmem, size = 0x200, scoped, tag = 'scoped memory for dbcnn_forward.5']
  %s0 = inlined_call_operand.vmem [shape: bf16[2,256,128], index: 0, kind: input, shape index: {}]
  %s1 = inlined_call_operand.vmem [shape: bf16[2,256,128], index: 1, kind: input, shape index: {}]
  %s2 = inlined_call_operand.vmem [shape: f32[128,128], index: 2, kind: input, shape index: {}]
  %s3 = inlined_call_operand.<no memory space> [shape: f32[1,1], index: 3, kind: input, shape index: {}]
  %s4 = inlined_call_operand.vmem [shape: f32[2,8,128], index: 4, kind: output, shape index: {}]
  %s5 = sld [smem:[#allocation0]]
  $region57: #{dbcnn_forward.5} parent=0
    _
  %s7 = ssub.s32 1, %s5
  %s8 = scalar_select 0, %s7, %s5
  %v9 = vstv %s3
  %10 = vst [vmem:[#allocation3] sm:$0x1] %v9
  loop: start=0, step=1, limit=6
  $region2: #{dbcnn_forward.5} parent=0 // loop_pre_header
    _
  $region3: #{dbcnn_forward.5} parent=0 // loop_header
    %s12 = sphi 0, %s16
    %p13 = scmp.ge.s32.totalorder %s12, 6
    %s19 = sphi 0, %s31
    %s20 = sphi 0, %s27
    %s21 = sphi 0, %s19
    %s22 = sphi 0, %s20
    %s23 = sphi 0, %s21
    %s24 = sphi 0, %s22
    %s36 = sphi 0, %s38
    %s39 = sphi 0, %s36
    %s40 = sphi 0, %s39
    %s56 = sphi 0, %s40
    %s64 = sphi 0, %s66
    %s67 = sphi 0, %s64
    %s68 = sphi 0, %s67
    %s84 = sphi 0, %s68
    %s88 = sphi 0, %s88
    %s90 = sphi 0, %s88
    %s91 = sphi 0, %s90
    %s105 = sphi 0, %s91
    %s109 = sphi 0, %s109
    %s111 = sphi 0, %s109
    %s112 = sphi 0, %s111
    %s126 = sphi 0, %s112
    %s132 = sphi 0, %s134
    %s135 = sphi 0, %s132
    %s136 = sphi 0, %s135
    %s152 = sphi 0, %s136
  $region4: #{dbcnn_forward.5} parent=0 // loop_header_branch
    %15 = sbr.rel (%p13) target = $region8
  $region5: #{dbcnn_forward.5} parent=0 // loop_body
    %s17 = ssub.s32 %s12, 1
    %s18 = ssub.s32 %s12, 2
    %s25 = sadd.s32 1, %s20
    %p26 = scmp.ge.s32.totalorder %s25, 2
    %s27 = scalar_select %p26, 0, %s25
    %s28 = sadd.s32 1, %s19
    %s29 = scalar_select %p26, %s28, %s19
    %p30 = scmp.ge.s32.totalorder %s29, 2
    %s31 = scalar_select %p30, 0, %s29
    %s32 = ssub.s32 %s19, %s31
    %s33 = ssub.s32 %s20, %s27
    %s34 = sor.u32 %s32, %s33
    %p35 = scmp.eq.s32.totalorder %s34, 0
    %s37 = sadd.s32 %s36, 1
    %s38 = scalar_select %p35, %s36, %s37
    %p41 = pneg %p35
    %p42 = scmp.eq.s32.totalorder %s12, 3
    %p43 = por %p41, %p42
    %p44 = scmp.ne.s32.totalorder %s36, %s39
    %p45 = scmp.eq.s32.totalorder %s12, 0
    %p46 = por %p44, %p45
    %p47 = scmp.ne.s32.totalorder %s36, %s39
    %p48 = scmp.eq.s32.totalorder %s17, 3
    %p49 = por %p47, %p48
    %p50 = scmp.ne.s32.totalorder %s39, %s40
    %p51 = scmp.eq.s32.totalorder %s17, 0
    %p52 = por %p50, %p51
    %p53 = scmp.ne.s32.totalorder %s39, %s40
    %p54 = scmp.eq.s32.totalorder %s18, 3
    %p55 = por %p53, %p54
    %p57 = scmp.ne.s32.totalorder %s40, %s56
    %p58 = scmp.eq.s32.totalorder %s18, 0
    %p59 = por %p57, %p58
    %s60 = ssub.s32 %s19, %s31
    %s61 = ssub.s32 %s20, %s27
    %s62 = sor.u32 %s60, %s61
    %p63 = scmp.eq.s32.totalorder %s62, 0
    %s65 = sadd.s32 %s64, 1
    %s66 = scalar_select %p63, %s64, %s65
    %p69 = pneg %p63
    %p70 = scmp.eq.s32.totalorder %s12, 3
    %p71 = por %p69, %p70
    %p72 = scmp.ne.s32.totalorder %s64, %s67
    %p73 = scmp.eq.s32.totalorder %s12, 0
    %p74 = por %p72, %p73
    %p75 = scmp.ne.s32.totalorder %s64, %s67
    %p76 = scmp.eq.s32.totalorder %s17, 3
    %p77 = por %p75, %p76
    %p78 = scmp.ne.s32.totalorder %s67, %s68
    %p79 = scmp.eq.s32.totalorder %s17, 0
    %p80 = por %p78, %p79
    %p81 = scmp.ne.s32.totalorder %s67, %s68
    %p82 = scmp.eq.s32.totalorder %s18, 3
    %p83 = por %p81, %p82
    %p85 = scmp.ne.s32.totalorder %s68, %s84
    %p86 = scmp.eq.s32.totalorder %s18, 0
    %p87 = por %p85, %p86
    %s89 = sadd.s32 %s88, 1
    %p92 = scmp.eq.s32.totalorder %s12, 3
    %p93 = scmp.ne.s32.totalorder %s88, %s90
    %p94 = scmp.eq.s32.totalorder %s12, 0
    %p95 = por %p93, %p94
    %p96 = scmp.ne.s32.totalorder %s88, %s90
    %p97 = scmp.eq.s32.totalorder %s17, 3
    %p98 = por %p96, %p97
    %p99 = scmp.ne.s32.totalorder %s90, %s91
    %p100 = scmp.eq.s32.totalorder %s17, 0
    %p101 = por %p99, %p100
    %p102 = scmp.ne.s32.totalorder %s90, %s91
    %p103 = scmp.eq.s32.totalorder %s18, 3
    %p104 = por %p102, %p103
    %p106 = scmp.ne.s32.totalorder %s91, %s105
    %p107 = scmp.eq.s32.totalorder %s18, 0
    %p108 = por %p106, %p107
    %s110 = sadd.s32 %s109, 1
    %p113 = scmp.eq.s32.totalorder %s12, 3
    %p114 = scmp.ne.s32.totalorder %s109, %s111
    %p115 = scmp.eq.s32.totalorder %s12, 0
    %p116 = por %p114, %p115
    %p117 = scmp.ne.s32.totalorder %s109, %s111
    %p118 = scmp.eq.s32.totalorder %s17, 3
    %p119 = por %p117, %p118
    %p120 = scmp.ne.s32.totalorder %s111, %s112
    %p121 = scmp.eq.s32.totalorder %s17, 0
    %p122 = por %p120, %p121
    %p123 = scmp.ne.s32.totalorder %s111, %s112
    %p124 = scmp.eq.s32.totalorder %s18, 3
    %p125 = por %p123, %p124
    %p127 = scmp.ne.s32.totalorder %s112, %s126
    %p128 = scmp.eq.s32.totalorder %s18, 0
    %p129 = por %p127, %p128
    %s130 = ssub.s32 %s19, %s31
    %p131 = scmp.eq.s32.totalorder %s130, 0
    %s133 = sadd.s32 %s132, 1
    %s134 = scalar_select %p131, %s132, %s133
    %p137 = pneg %p131
    %p138 = scmp.eq.s32.totalorder %s12, 3
    %p139 = por %p137, %p138
    %p140 = scmp.ne.s32.totalorder %s132, %s135
    %p141 = scmp.eq.s32.totalorder %s12, 0
    %p142 = por %p140, %p141
    %p143 = scmp.ne.s32.totalorder %s132, %s135
    %p144 = scmp.eq.s32.totalorder %s17, 3
    %p145 = por %p143, %p144
    %p146 = scmp.ne.s32.totalorder %s135, %s136
    %p147 = scmp.eq.s32.totalorder %s17, 0
    %p148 = por %p146, %p147
    %p149 = scmp.ne.s32.totalorder %s135, %s136
    %p150 = scmp.eq.s32.totalorder %s18, 3
    %p151 = por %p149, %p150
    %p153 = scmp.ne.s32.totalorder %s136, %s152
    %p154 = scmp.eq.s32.totalorder %s18, 0
    %p155 = por %p153, %p154
    %p156 = scmp.le.s32.totalorder 1, %s12
    %p157 = scmp.lt.s32.totalorder %s12, 5
    %p158 = pnand %p156, %p157
    %p159 = pneg %p158
    // Predicated region
    $region9: #{dbcnn_forward.5} parent=5 // pred_check
      _
    $region10: #{dbcnn_forward.5} parent=5 // pred_check_branch
      %161 = sbr.rel (%p158) target = $region12
    $region11: #{dbcnn_forward.5} parent=5 // pred_region
      %s162 = ssub.s32 %s12, 1
      // Predicated region
      $region13: #{dbcnn_forward.5} parent=11 // pred_check
        %p163 = pneg %p101
      $region14: #{dbcnn_forward.5} parent=11 // pred_check_branch
        %165 = sbr.rel (%p163) target = $region16
      $region15: #{dbcnn_forward.5} parent=11 // pred_region
        _
      $region16: #{dbcnn_forward.5} parent=11 // pred_fallthru
        _
      // Predicated region
      $region17: #{dbcnn_forward.5} parent=11 // pred_check
        %p166 = pneg %p122
      $region18: #{dbcnn_forward.5} parent=11 // pred_check_branch
        %168 = sbr.rel (%p166) target = $region20
      $region19: #{dbcnn_forward.5} parent=11 // pred_region
        _
      $region20: #{dbcnn_forward.5} parent=11 // pred_fallthru
        _
    $region12: #{dbcnn_forward.5} parent=5 // pred_fallthru
      _
    %p169 = scmp.lt.s32.totalorder %s12, 4
    // Predicated region
    $region21: #{dbcnn_forward.5} parent=5 // pred_check
      %p170 = pneg %p169
    $region22: #{dbcnn_forward.5} parent=5 // pred_check_branch
      %172 = sbr.rel (%p170) target = $region24
    $region23: #{dbcnn_forward.5} parent=5 // pred_region
      // Predicated region
      $region25: #{dbcnn_forward.5} parent=23 // pred_check
        %p173 = pneg %p46
      $region26: #{dbcnn_forward.5} parent=23 // pred_check_branch
        %175 = sbr.rel (%p173) target = $region28
      $region27: #{dbcnn_forward.5} parent=23 // pred_region
        %s176 = smul.u32 16, %s20
        %p177 = scmp.lt.s32.totalorder %s19, 1
        %s178 = scalar_select %p177, %s19, 1
        %p179 = scmp.lt.s32.totalorder %s176, 31
        %s180 = scalar_select %p179, %s176, 31
        %s181 = smul.addr %s178, 32
        %s182 = sadd.s32 %s180, %s181
        %s183 = smul.addr %s182, 4
        %s184 = scalar_lea.vmem %s0, %s183
        %s185 = smul.u32 16, %s20
      $region28: #{dbcnn_forward.5} parent=23 // pred_fallthru
        _
      // Predicated region
      $region29: #{dbcnn_forward.5} parent=23 // pred_check
        %p186 = pneg %p74
      $region30: #{dbcnn_forward.5} parent=23 // pred_check_branch
        %188 = sbr.rel (%p186) target = $region32
      $region31: #{dbcnn_forward.5} parent=23 // pred_region
        %s189 = smul.u32 16, %s20
        %p190 = scmp.lt.s32.totalorder %s19, 1
        %s191 = scalar_select %p190, %s19, 1
        %p192 = scmp.lt.s32.totalorder %s189, 31
        %s193 = scalar_select %p192, %s189, 31
        %s194 = smul.addr %s191, 32
        %s195 = sadd.s32 %s193, %s194
        %s196 = smul.addr %s195, 4
        %s197 = scalar_lea.vmem %s1, %s196
        %s198 = smul.u32 16, %s20
      $region32: #{dbcnn_forward.5} parent=23 // pred_fallthru
        _
    $region24: #{dbcnn_forward.5} parent=5 // pred_fallthru
      _
    %p199 = scmp.le.s32.totalorder 1, %s12
    %p200 = scmp.lt.s32.totalorder %s12, 5
    %p201 = pnand %p199, %p200
    %p202 = pneg %p201
    // Predicated region
    $region33: #{dbcnn_forward.5} parent=5 // pred_check
      _
    $region34: #{dbcnn_forward.5} parent=5 // pred_check_branch
      %204 = sbr.rel (%p201) target = $region36
    $region35: #{dbcnn_forward.5} parent=5 // pred_region
      %s205 = ssub.s32 %s12, 1
      %s206 = smul.u32 16, %s22
      %p207 = scmp.lt.s32.totalorder %s21, 1
      %s208 = scalar_select %p207, %s21, 1
      %p209 = scmp.lt.s32.totalorder %s206, 31
      %s210 = scalar_select %p209, %s206, 31
      %s211 = smul.addr %s208, 32
      %s212 = sadd.s32 %s210, %s211
      %s213 = smul.addr %s212, 4
      %s214 = scalar_lea.vmem %s0, %s213
      %p215 = pneg %p52
      %p216 = pneg %p49
      %s217 = smul.u32 16, %s22
      %p218 = scmp.lt.s32.totalorder %s21, 1
      %s219 = scalar_select %p218, %s21, 1
      %p220 = scmp.lt.s32.totalorder %s217, 31
      %s221 = scalar_select %p220, %s217, 31
      %s222 = smul.addr %s219, 32
      %s223 = sadd.s32 %s221, %s222
      %s224 = smul.addr %s223, 4
      %s225 = scalar_lea.vmem %s1, %s224
      %p226 = pneg %p80
      %p227 = pneg %p77
      %p228 = pneg %p101
      %p229 = pneg %p98
      %p230 = pneg %p122
      %p231 = pneg %p119
      %p232 = pneg %p148
      %p233 = pneg %p145
      %p234 = scmp.lt.s32.totalorder %s21, 1
      %s235 = scalar_select %p234, %s21, 1
      %s236 = smul.addr %s235, 8
      %s237 = scalar_lea.vmem %s4, %s236
      %s238 = smul.u32 16, %s22
      %p239 = scmp.lt.s32.totalorder %s21, 1
      %s240 = scalar_select %p239, %s21, 1
      %p241 = scmp.lt.s32.totalorder %s238, 31
      %s242 = scalar_select %p241, %s238, 31
      %s243 = smul.addr %s240, 32
      %s244 = sadd.s32 %s242, %s243
      %s245 = smul.addr %s244, 4
      %s246 = scalar_lea.vmem %s0, %s245
      %s247 = smul.u32 16, %s22
      %s248 = smul.u32 16, %s22
      %p249 = scmp.lt.s32.totalorder %s21, 1
      %s250 = scalar_select %p249, %s21, 1
      %p251 = scmp.lt.s32.totalorder %s248, 31
      %s252 = scalar_select %p251, %s248, 31
      %s253 = smul.addr %s250, 32
      %s254 = sadd.s32 %s252, %s253
      %s255 = smul.addr %s254, 4
      %s256 = scalar_lea.vmem %s1, %s255
      %s257 = smul.u32 16, %s22
      %p258 = scmp.lt.s32.totalorder %s21, 1
      %s259 = scalar_select %p258, %s21, 1
      %s260 = smul.addr %s259, 8
      %s261 = scalar_lea.vmem %s4, %s260
      %p262 = scmp.eq.s32.totalorder %s22, 0
      // Predicated region
      $region37: #{dbcnn_forward.5} parent=35 // pred_check
        %p263 = pneg %p262
      $region38: #{dbcnn_forward.5} parent=35 // pred_check_branch
        %265 = sbr.rel (%p263) target = $region40
      $region39: #{dbcnn_forward.5} parent=35 // pred_region
        %266 = vst [vmem:[#allocation2] sm:$0xff] 0.0
        %267 = vst [vmem:[#allocation2 + $0x8] sm:$0xff] 0.0
        %268 = vst [vmem:[#allocation2 + $0x10] sm:$0xff] 0.0
        %269 = vst [vmem:[#allocation2 + $0x18] sm:$0xff] 0.0
        %270 = vst [vmem:[#allocation2 + $0x20] sm:$0xff] 0.0
        %271 = vst [vmem:[#allocation2 + $0x28] sm:$0xff] 0.0
        %272 = vst [vmem:[#allocation2 + $0x30] sm:$0xff] 0.0
        %273 = vst [vmem:[#allocation2 + $0x38] sm:$0xff] 0.0
        %274 = vst [vmem:[#allocation2 + $0x40] sm:$0xff] 0.0
        %275 = vst [vmem:[#allocation2 + $0x48] sm:$0xff] 0.0
        %276 = vst [vmem:[#allocation2 + $0x50] sm:$0xff] 0.0
        %277 = vst [vmem:[#allocation2 + $0x58] sm:$0xff] 0.0
        %278 = vst [vmem:[#allocation2 + $0x60] sm:$0xff] 0.0
        %279 = vst [vmem:[#allocation2 + $0x68] sm:$0xff] 0.0
        %280 = vst [vmem:[#allocation2 + $0x70] sm:$0xff] 0.0
        %281 = vst [vmem:[#allocation2 + $0x78] sm:$0xff] 0.0
      $region40: #{dbcnn_forward.5} parent=35 // pred_fallthru
        _
      %v282 = vld [vmem:[%s246] sm:$0xf]
      %v283 = vld [vmem:[%s246 + $0x4] sm:$0xf]
      %v284 = vld [vmem:[%s246 + $0x8] sm:$0xf]
      %v285 = vld [vmem:[%s246 + $0xc] sm:$0xf]
      %v286 = vld [vmem:[%s246 + $0x10] sm:$0xf]
      %v287 = vld [vmem:[%s246 + $0x14] sm:$0xf]
      %v288 = vld [vmem:[%s246 + $0x18] sm:$0xf]
      %v289 = vld [vmem:[%s246 + $0x1c] sm:$0xf]
      %v290 = vld [vmem:[%s246 + $0x20] sm:$0xf]
      %v291 = vld [vmem:[%s246 + $0x24] sm:$0xf]
      %v292 = vld [vmem:[%s246 + $0x28] sm:$0xf]
      %v293 = vld [vmem:[%s246 + $0x2c] sm:$0xf]
      %v294 = vld [vmem:[%s246 + $0x30] sm:$0xf]
      %v295 = vld [vmem:[%s246 + $0x34] sm:$0xf]
      %v296 = vld [vmem:[%s246 + $0x38] sm:$0xf]
      %v297 = vld [vmem:[%s246 + $0x3c] sm:$0xf]
      %v298 = vunpack.c.l.bf16 %v282
      %v299 = vunpack.c.l.bf16 %v283
      %v300 = vunpack.c.l.bf16 %v284
      %v301 = vunpack.c.l.bf16 %v285
      %v302 = vunpack.c.l.bf16 %v286
      %v303 = vunpack.c.l.bf16 %v287
      %v304 = vunpack.c.l.bf16 %v288
      %v305 = vunpack.c.l.bf16 %v289
      %v306 = vunpack.c.l.bf16 %v290
      %v307 = vunpack.c.l.bf16 %v291
      %v308 = vunpack.c.l.bf16 %v292
      %v309 = vunpack.c.l.bf16 %v293
      %v310 = vunpack.c.l.bf16 %v294
      %v311 = vunpack.c.l.bf16 %v295
      %v312 = vunpack.c.l.bf16 %v296
      %v313 = vunpack.c.l.bf16 %v297
      %314 = vxpose.xlu0.b32.start [1/16] %v298, 128
      %315 = vxpose.xlu0.b32.cont [2/16] %v299, 128
      %316 = vxpose.xlu0.b32.cont [3/16] %v300, 128
      %317 = vxpose.xlu0.b32.cont [4/16] %v301, 128
      %318 = vxpose.xlu0.b32.cont [5/16] %v302, 128
      %319 = vxpose.xlu0.b32.cont [6/16] %v303, 128
      %320 = vxpose.xlu0.b32.cont [7/16] %v304, 128
      %321 = vxpose.xlu0.b32.cont [8/16] %v305, 128
      %322 = vxpose.xlu0.b32.cont [9/16] %v306, 128
      %323 = vxpose.xlu0.b32.cont [10/16] %v307, 128
      %324 = vxpose.xlu0.b32.cont [11/16] %v308, 128
      %325 = vxpose.xlu0.b32.cont [12/16] %v309, 128
      %326 = vxpose.xlu0.b32.cont [13/16] %v310, 128
      %327 = vxpose.xlu0.b32.cont [14/16] %v311, 128
      %328 = vxpose.xlu0.b32.cont [15/16] %v312, 128
      %329 = vxpose.xlu0.b32.end [16/16] %v313, 128
      %v330 = vpop.trf.xlu0
      %v331 = vpop.trf.xlu0
      %v332 = vpop.trf.xlu0
      %v333 = vpop.trf.xlu0
      %v334 = vpop.trf.xlu0
      %v335 = vpop.trf.xlu0
      %v336 = vpop.trf.xlu0
      %v337 = vpop.trf.xlu0
      %v338 = vpop.trf.xlu0
      %v339 = vpop.trf.xlu0
      %v340 = vpop.trf.xlu0
      %v341 = vpop.trf.xlu0
      %v342 = vpop.trf.xlu0
      %v343 = vpop.trf.xlu0
      %v344 = vpop.trf.xlu0
      %v345 = vpop.trf.xlu0
      %v346 = vld [vmem:[%s256] sm:$0xf]
      %v347 = vld [vmem:[%s256 + $0x4] sm:$0xf]
      %v348 = vld [vmem:[%s256 + $0x8] sm:$0xf]
      %v349 = vld [vmem:[%s256 + $0xc] sm:$0xf]
      %v350 = vld [vmem:[%s256 + $0x10] sm:$0xf]
      %v351 = vld [vmem:[%s256 + $0x14] sm:$0xf]
      %v352 = vld [vmem:[%s256 + $0x18] sm:$0xf]
      %v353 = vld [vmem:[%s256 + $0x1c] sm:$0xf]
      %v354 = vld [vmem:[%s256 + $0x20] sm:$0xf]
      %v355 = vld [vmem:[%s256 + $0x24] sm:$0xf]
      %v356 = vld [vmem:[%s256 + $0x28] sm:$0xf]
      %v357 = vld [vmem:[%s256 + $0x2c] sm:$0xf]
      %v358 = vld [vmem:[%s256 + $0x30] sm:$0xf]
      %v359 = vld [vmem:[%s256 + $0x34] sm:$0xf]
      %v360 = vld [vmem:[%s256 + $0x38] sm:$0xf]
      %v361 = vld [vmem:[%s256 + $0x3c] sm:$0xf]
      %v362 = vunpack.c.l.bf16 %v346
      %v363 = vunpack.c.l.bf16 %v347
      %v364 = vunpack.c.l.bf16 %v348
      %v365 = vunpack.c.l.bf16 %v349
      %v366 = vunpack.c.l.bf16 %v350
      %v367 = vunpack.c.l.bf16 %v351
      %v368 = vunpack.c.l.bf16 %v352
      %v369 = vunpack.c.l.bf16 %v353
      %v370 = vunpack.c.l.bf16 %v354
      %v371 = vunpack.c.l.bf16 %v355
      %v372 = vunpack.c.l.bf16 %v356
      %v373 = vunpack.c.l.bf16 %v357
      %v374 = vunpack.c.l.bf16 %v358
      %v375 = vunpack.c.l.bf16 %v359
      %v376 = vunpack.c.l.bf16 %v360
      %v377 = vunpack.c.l.bf16 %v361
      %v378 = vld [vmem:[#allocation2] sm:$0xff]
      %v379 = vld [vmem:[#allocation2 + $0x8] sm:$0xff]
      %v380 = vld [vmem:[#allocation2 + $0x10] sm:$0xff]
      %v381 = vld [vmem:[#allocation2 + $0x18] sm:$0xff]
      %v382 = vld [vmem:[#allocation2 + $0x20] sm:$0xff]
      %v383 = vld [vmem:[#allocation2 + $0x28] sm:$0xff]
      %v384 = vld [vmem:[#allocation2 + $0x30] sm:$0xff]
      %v385 = vld [vmem:[#allocation2 + $0x38] sm:$0xff]
      %v386 = vld [vmem:[#allocation2 + $0x40] sm:$0xff]
      %v387 = vld [vmem:[#allocation2 + $0x48] sm:$0xff]
      %v388 = vld [vmem:[#allocation2 + $0x50] sm:$0xff]
      %v389 = vld [vmem:[#allocation2 + $0x58] sm:$0xff]
      %v390 = vld [vmem:[#allocation2 + $0x60] sm:$0xff]
      %v391 = vld [vmem:[#allocation2 + $0x68] sm:$0xff]
      %v392 = vld [vmem:[#allocation2 + $0x70] sm:$0xff]
      %v393 = vld [vmem:[#allocation2 + $0x78] sm:$0xff]
      %394 = vmatprep.subr.mxu0 0.0
      %395 = vmatpush1.msra.mxu0 %v377
      %396 = vmatprep.subr.mxu0 0.0
      %397 = vmatpush1.msra.mxu0 %v376
      %398 = vmatprep.subr.mxu0 0.0
      %399 = vmatpush1.msra.mxu0 %v375
      %400 = vmatprep.subr.mxu0 0.0
      %401 = vmatpush1.msra.mxu0 %v374
      %402 = vmatprep.subr.mxu0 0.0
      %403 = vmatpush1.msra.mxu0 %v373
      %404 = vmatprep.subr.mxu0 0.0
      %405 = vmatpush1.msra.mxu0 %v372
      %406 = vmatprep.subr.mxu0 0.0
      %407 = vmatpush1.msra.mxu0 %v371
      %408 = vmatprep.subr.mxu0 0.0
      %409 = vmatpush1.msra.mxu0 %v370
      %410 = vmatprep.subr.mxu0 0.0
      %411 = vmatpush1.msra.mxu0 %v369
      %412 = vmatprep.subr.mxu0 0.0
      %413 = vmatpush1.msra.mxu0 %v368
      %414 = vmatprep.subr.mxu0 0.0
      %415 = vmatpush1.msra.mxu0 %v367
      %416 = vmatprep.subr.mxu0 0.0
      %417 = vmatpush1.msra.mxu0 %v366
      %418 = vmatprep.subr.mxu0 0.0
      %419 = vmatpush1.msra.mxu0 %v365
      %420 = vmatprep.subr.mxu0 0.0
      %421 = vmatpush1.msra.mxu0 %v364
      %422 = vmatprep.subr.mxu0 0.0
      %423 = vmatpush1.msra.mxu0 %v363
      %424 = vmatprep.subr.mxu0 0.0
      %425 = vmatpush1.msra.mxu0 %v362
      %426 = vmatprep.subr.mxu0 0.0
      %427 = vmatpush2.msra.mxu0 0.0
      %428 = vmatprep.subr.mxu0 0.0
      %429 = vmatpush2.msra.mxu0 0.0
      %430 = vmatprep.subr.mxu0 0.0
      %431 = vmatpush2.msra.mxu0 0.0
      %432 = vmatprep.subr.mxu0 0.0
      %433 = vmatpush2.msra.mxu0 0.0
      %434 = vmatprep.subr.mxu0 0.0
      %435 = vmatpush2.msra.mxu0 0.0
      %436 = vmatprep.subr.mxu0 0.0
      %437 = vmatpush2.msra.mxu0 0.0
      %438 = vmatprep.subr.mxu0 0.0
      %439 = vmatpush2.msra.mxu0 0.0
      %440 = vmatprep.subr.mxu0 0.0
      %441 = vmatpush2.msra.mxu0 0.0
      %442 = vmatprep.subr.mxu0 0.0
      %443 = vmatpush2.msra.mxu0 0.0
      %444 = vmatprep.subr.mxu0 0.0
      %445 = vmatpush2.msra.mxu0 0.0
      %446 = vmatprep.subr.mxu0 0.0
      %447 = vmatpush2.msra.mxu0 0.0
      %448 = vmatprep.subr.mxu0 0.0
      %449 = vmatpush2.msra.mxu0 0.0
      %450 = vmatprep.subr.mxu0 0.0
      %451 = vmatpush2.msra.mxu0 0.0
      %452 = vmatprep.subr.mxu0 0.0
      %453 = vmatpush2.msra.mxu0 0.0
      %454 = vmatprep.subr.mxu0 0.0
      %455 = vmatpush2.msra.mxu0 0.0
      %456 = vmatprep.subr.mxu0 0.0
      %457 = vmatpush2.msra.mxu0 0.0
      %458 = vmatprep.mubr.f32.mxu0 0.0
      %459 = vmatmul.mubr.f32.gmra.mxu0 %v330
      %v460 = vpop.f32.mrf.mxu0
      %v461 = vadd.f32 0.0, %v460
      %v462 = vpop.f32.mrf.mxu0
      %463 = vmatprep.mubr.f32.mxu0 0.0
      %464 = vmatmul.mubr.f32.gmra.mxu0 %v331
      %v465 = vpop.f32.mrf.mxu0
      %v466 = vadd.f32 0.0, %v465
      %v467 = vpop.f32.mrf.mxu0
      %468 = vmatprep.mubr.f32.mxu0 0.0
      %469 = vmatmul.mubr.f32.gmra.mxu0 %v332
      %v470 = vpop.f32.mrf.mxu0
      %v471 = vadd.f32 0.0, %v470
      %v472 = vpop.f32.mrf.mxu0
      %473 = vmatprep.mubr.f32.mxu0 0.0
      %474 = vmatmul.mubr.f32.gmra.mxu0 %v333
      %v475 = vpop.f32.mrf.mxu0
      %v476 = vadd.f32 0.0, %v475
      %v477 = vpop.f32.mrf.mxu0
      %478 = vmatprep.mubr.f32.mxu0 0.0
      %479 = vmatmul.mubr.f32.gmra.mxu0 %v334
      %v480 = vpop.f32.mrf.mxu0
      %v481 = vadd.f32 0.0, %v480
      %v482 = vpop.f32.mrf.mxu0
      %483 = vmatprep.mubr.f32.mxu0 0.0
      %484 = vmatmul.mubr.f32.gmra.mxu0 %v335
      %v485 = vpop.f32.mrf.mxu0
      %v486 = vadd.f32 0.0, %v485
      %v487 = vpop.f32.mrf.mxu0
      %488 = vmatprep.mubr.f32.mxu0 0.0
      %489 = vmatmul.mubr.f32.gmra.mxu0 %v336
      %v490 = vpop.f32.mrf.mxu0
      %v491 = vadd.f32 0.0, %v490
      %v492 = vpop.f32.mrf.mxu0
      %493 = vmatprep.mubr.f32.mxu0 0.0
      %494 = vmatmul.mubr.f32.gmra.mxu0 %v337
      %v495 = vpop.f32.mrf.mxu0
      %v496 = vadd.f32 0.0, %v495
      %v497 = vpop.f32.mrf.mxu0
      %498 = vmatprep.mubr.f32.mxu0 0.0
      %499 = vmatmul.mubr.f32.gmra.mxu0 %v338
      %v500 = vpop.f32.mrf.mxu0
      %v501 = vadd.f32 0.0, %v500
      %v502 = vpop.f32.mrf.mxu0
      %503 = vmatprep.mubr.f32.mxu0 0.0
      %504 = vmatmul.mubr.f32.gmra.mxu0 %v339
      %v505 = vpop.f32.mrf.mxu0
      %v506 = vadd.f32 0.0, %v505
      %v507 = vpop.f32.mrf.mxu0
      %508 = vmatprep.mubr.f32.mxu0 0.0
      %509 = vmatmul.mubr.f32.gmra.mxu0 %v340
      %v510 = vpop.f32.mrf.mxu0
      %v511 = vadd.f32 0.0, %v510
      %v512 = vpop.f32.mrf.mxu0
      %513 = vmatprep.mubr.f32.mxu0 0.0
      %514 = vmatmul.mubr.f32.gmra.mxu0 %v341
      %v515 = vpop.f32.mrf.mxu0
      %v516 = vadd.f32 0.0, %v515
      %v517 = vpop.f32.mrf.mxu0
      %518 = vmatprep.mubr.f32.mxu0 0.0
      %519 = vmatmul.mubr.f32.gmra.mxu0 %v342
      %v520 = vpop.f32.mrf.mxu0
      %v521 = vadd.f32 0.0, %v520
      %v522 = vpop.f32.mrf.mxu0
      %523 = vmatprep.mubr.f32.mxu0 0.0
      %524 = vmatmul.mubr.f32.gmra.mxu0 %v343
      %v525 = vpop.f32.mrf.mxu0
      %v526 = vadd.f32 0.0, %v525
      %v527 = vpop.f32.mrf.mxu0
      %528 = vmatprep.mubr.f32.mxu0 0.0
      %529 = vmatmul.mubr.f32.gmra.mxu0 %v344
      %v530 = vpop.f32.mrf.mxu0
      %v531 = vadd.f32 0.0, %v530
      %v532 = vpop.f32.mrf.mxu0
      %533 = vmatprep.mubr.f32.mxu0 0.0
      %534 = vmatmul.mubr.f32.gmra.mxu0 %v345
      %v535 = vpop.f32.mrf.mxu0
      %v536 = vadd.f32 0.0, %v535
      %v537 = vpop.f32.mrf.mxu0
      %538 = vdwg.mxu0
      %v539 = vadd.f32 %v378, %v461
      %v540 = vadd.f32 %v379, %v466
      %v541 = vadd.f32 %v380, %v471
      %v542 = vadd.f32 %v381, %v476
      %v543 = vadd.f32 %v382, %v481
      %v544 = vadd.f32 %v383, %v486
      %v545 = vadd.f32 %v384, %v491
      %v546 = vadd.f32 %v385, %v496
      %v547 = vadd.f32 %v386, %v501
      %v548 = vadd.f32 %v387, %v506
      %v549 = vadd.f32 %v388, %v511
      %v550 = vadd.f32 %v389, %v516
      %v551 = vadd.f32 %v390, %v521
      %v552 = vadd.f32 %v391, %v526
      %v553 = vadd.f32 %v392, %v531
      %v554 = vadd.f32 %v393, %v536
      %555 = vst [vmem:[#allocation2] sm:$0xff] %v539
      %556 = vst [vmem:[#allocation2 + $0x8] sm:$0xff] %v540
      %557 = vst [vmem:[#allocation2 + $0x10] sm:$0xff] %v541
      %558 = vst [vmem:[#allocation2 + $0x18] sm:$0xff] %v542
      %559 = vst [vmem:[#allocation2 + $0x20] sm:$0xff] %v543
      %560 = vst [vmem:[#allocation2 + $0x28] sm:$0xff] %v544
      %561 = vst [vmem:[#allocation2 + $0x30] sm:$0xff] %v545
      %562 = vst [vmem:[#allocation2 + $0x38] sm:$0xff] %v546
      %563 = vst [vmem:[#allocation2 + $0x40] sm:$0xff] %v547
      %564 = vst [vmem:[#allocation2 + $0x48] sm:$0xff] %v548
      %565 = vst [vmem:[#allocation2 + $0x50] sm:$0xff] %v549
      %566 = vst [vmem:[#allocation2 + $0x58] sm:$0xff] %v550
      %567 = vst [vmem:[#allocation2 + $0x60] sm:$0xff] %v551
      %568 = vst [vmem:[#allocation2 + $0x68] sm:$0xff] %v552
      %569 = vst [vmem:[#allocation2 + $0x70] sm:$0xff] %v553
      %570 = vst [vmem:[#allocation2 + $0x78] sm:$0xff] %v554
      %p571 = scmp.eq.s32.totalorder %s22, 1
      // Predicated region
      $region41: #{dbcnn_forward.5} parent=35 // pred_check
        %p572 = pneg %p571
      $region42: #{dbcnn_forward.5} parent=35 // pred_check_branch
        %574 = sbr.rel (%p572) target = $region44
      $region43: #{dbcnn_forward.5} parent=35 // pred_region
        %v575 = vld [vmem:[#allocation2] sm:$0xff]
        %v576 = vld [vmem:[#allocation2 + $0x8] sm:$0xff]
        %v577 = vld [vmem:[#allocation2 + $0x10] sm:$0xff]
        %v578 = vld [vmem:[#allocation2 + $0x18] sm:$0xff]
        %v579 = vld [vmem:[#allocation2 + $0x20] sm:$0xff]
        %v580 = vld [vmem:[#allocation2 + $0x28] sm:$0xff]
        %v581 = vld [vmem:[#allocation2 + $0x30] sm:$0xff]
        %v582 = vld [vmem:[#allocation2 + $0x38] sm:$0xff]
        %v583 = vld [vmem:[#allocation2 + $0x40] sm:$0xff]
        %v584 = vld [vmem:[#allocation2 + $0x48] sm:$0xff]
        %v585 = vld [vmem:[#allocation2 + $0x50] sm:$0xff]
        %v586 = vld [vmem:[#allocation2 + $0x58] sm:$0xff]
        %v587 = vld [vmem:[#allocation2 + $0x60] sm:$0xff]
        %v588 = vld [vmem:[#allocation2 + $0x68] sm:$0xff]
        %v589 = vld [vmem:[#allocation2 + $0x70] sm:$0xff]
        %v590 = vld [vmem:[#allocation2 + $0x78] sm:$0xff]
        %591 = vadd.xlane.f32.xlu0 %v575
        %v592 = vpop.xlane.xlu0 %591
        %593 = vadd.xlane.f32.xlu0 %v576
        %v594 = vpop.xlane.xlu0 %593
        %595 = vadd.xlane.f32.xlu0 %v577
        %v596 = vpop.xlane.xlu0 %595
        %597 = vadd.xlane.f32.xlu0 %v578
        %v598 = vpop.xlane.xlu0 %597
        %599 = vadd.xlane.f32.xlu0 %v579
        %v600 = vpop.xlane.xlu0 %599
        %601 = vadd.xlane.f32.xlu0 %v580
        %v602 = vpop.xlane.xlu0 %601
        %603 = vadd.xlane.f32.xlu0 %v581
        %v604 = vpop.xlane.xlu0 %603
        %605 = vadd.xlane.f32.xlu0 %v582
        %v606 = vpop.xlane.xlu0 %605
        %607 = vadd.xlane.f32.xlu0 %v583
        %v608 = vpop.xlane.xlu0 %607
        %609 = vadd.xlane.f32.xlu0 %v584
        %v610 = vpop.xlane.xlu0 %609
        %611 = vadd.xlane.f32.xlu0 %v585
        %v612 = vpop.xlane.xlu0 %611
        %613 = vadd.xlane.f32.xlu0 %v586
        %v614 = vpop.xlane.xlu0 %613
        %615 = vadd.xlane.f32.xlu0 %v587
        %v616 = vpop.xlane.xlu0 %615
        %617 = vadd.xlane.f32.xlu0 %v588
        %v618 = vpop.xlane.xlu0 %617
        %619 = vadd.xlane.f32.xlu0 %v589
        %v620 = vpop.xlane.xlu0 %619
        %621 = vadd.xlane.f32.xlu0 %v590
        %v622 = vpop.xlane.xlu0 %621
        %v623 = vadd.f32 %v592, %v594
        %v624 = vadd.f32 %v623, %v596
        %v625 = vadd.f32 %v624, %v598
        %v626 = vadd.f32 %v625, %v600
        %v627 = vadd.f32 %v626, %v602
        %v628 = vadd.f32 %v627, %v604
        %v629 = vadd.f32 %v628, %v606
        %v630 = vadd.f32 %v629, %v608
        %v631 = vadd.f32 %v630, %v610
        %v632 = vadd.f32 %v631, %v612
        %v633 = vadd.f32 %v632, %v614
        %v634 = vadd.f32 %v633, %v616
        %v635 = vadd.f32 %v634, %v618
        %v636 = vadd.f32 %v635, %v620
        %v637 = vadd.f32 %v636, %v622
        %v638 = vrot.slane %v637, 4
        %v639 = vadd.f32 %v637, %v638
        %v640 = vrot.slane %v639, 2
        %v641 = vadd.f32 %v639, %v640
        %v642 = vrot.slane %v641, 1
        %v643 = vadd.f32 %v641, %v642
        %v644 = vmul.f32 %v643, 0.00390625
        %v645 = vadd.f32 %v644, 0.00016384
        %v646 = vmul.f32 %v575, 0.00390625
        %v647 = vmul.f32 %v576, 0.00390625
        %v648 = vmul.f32 %v577, 0.00390625
        %v649 = vmul.f32 %v578, 0.00390625
        %v650 = vmul.f32 %v579, 0.00390625
        %v651 = vmul.f32 %v580, 0.00390625
        %v652 = vmul.f32 %v581, 0.00390625
        %v653 = vmul.f32 %v582, 0.00390625
        %v654 = vmul.f32 %v583, 0.00390625
        %v655 = vmul.f32 %v584, 0.00390625
        %v656 = vmul.f32 %v585, 0.00390625
        %v657 = vmul.f32 %v586, 0.00390625
        %v658 = vmul.f32 %v587, 0.00390625
        %v659 = vmul.f32 %v588, 0.00390625
        %v660 = vmul.f32 %v589, 0.00390625
        %v661 = vmul.f32 %v590, 0.00390625
        %v662 = vadd.f32 %v646, 1e-08
        %v663 = vadd.f32 %v647, 1e-08
        %v664 = vadd.f32 %v648, 1e-08
        %v665 = vadd.f32 %v649, 1e-08
        %v666 = vadd.f32 %v650, 1e-08
        %v667 = vadd.f32 %v651, 1e-08
        %v668 = vadd.f32 %v652, 1e-08
        %v669 = vadd.f32 %v653, 1e-08
        %v670 = vadd.f32 %v654, 1e-08
        %v671 = vadd.f32 %v655, 1e-08
        %v672 = vadd.f32 %v656, 1e-08
        %v673 = vadd.f32 %v657, 1e-08
        %v674 = vadd.f32 %v658, 1e-08
        %v675 = vadd.f32 %v659, 1e-08
        %v676 = vadd.f32 %v660, 1e-08
        %v677 = vadd.f32 %v661, 1e-08
        %v678 = vrsqrt.pop %v662
        %v679 = vmul.f32 %v662, %v678
        %vm680 = vcmp.eq.f32.partialorder %v662, inf
        %v681 = vsel %vm680, %v662, %v679
        %vm682 = vcmp.eq.f32.partialorder %v662, 0.0
        %v683 = vand.u32 %v662, 2147483648
        %v684 = vsel %vm682, %v683, %v681
        %v685 = vrsqrt.pop %v663
        %v686 = vmul.f32 %v663, %v685
        %vm687 = vcmp.eq.f32.partialorder %v663, inf
        %v688 = vsel %vm687, %v663, %v686
        %vm689 = vcmp.eq.f32.partialorder %v663, 0.0
        %v690 = vand.u32 %v663, 2147483648
        %v691 = vsel %vm689, %v690, %v688
        %v692 = vrsqrt.pop %v664
        %v693 = vmul.f32 %v664, %v692
        %vm694 = vcmp.eq.f32.partialorder %v664, inf
        %v695 = vsel %vm694, %v664, %v693
        %vm696 = vcmp.eq.f32.partialorder %v664, 0.0
        %v697 = vand.u32 %v664, 2147483648
        %v698 = vsel %vm696, %v697, %v695
        %v699 = vrsqrt.pop %v665
        %v700 = vmul.f32 %v665, %v699
        %vm701 = vcmp.eq.f32.partialorder %v665, inf
        %v702 = vsel %vm701, %v665, %v700
        %vm703 = vcmp.eq.f32.partialorder %v665, 0.0
        %v704 = vand.u32 %v665, 2147483648
        %v705 = vsel %vm703, %v704, %v702
        %v706 = vrsqrt.pop %v666
        %v707 = vmul.f32 %v666, %v706
        %vm708 = vcmp.eq.f32.partialorder %v666, inf
        %v709 = vsel %vm708, %v666, %v707
        %vm710 = vcmp.eq.f32.partialorder %v666, 0.0
        %v711 = vand.u32 %v666, 2147483648
        %v712 = vsel %vm710, %v711, %v709
        %v713 = vrsqrt.pop %v667
        %v714 = vmul.f32 %v667, %v713
        %vm715 = vcmp.eq.f32.partialorder %v667, inf
        %v716 = vsel %vm715, %v667, %v714
        %vm717 = vcmp.eq.f32.partialorder %v667, 0.0
        %v718 = vand.u32 %v667, 2147483648
        %v719 = vsel %vm717, %v718, %v716
        %v720 = vrsqrt.pop %v668
        %v721 = vmul.f32 %v668, %v720
        %vm722 = vcmp.eq.f32.partialorder %v668, inf
        %v723 = vsel %vm722, %v668, %v721
        %vm724 = vcmp.eq.f32.partialorder %v668, 0.0
        %v725 = vand.u32 %v668, 2147483648
        %v726 = vsel %vm724, %v725, %v723
        %v727 = vrsqrt.pop %v669
        %v728 = vmul.f32 %v669, %v727
        %vm729 = vcmp.eq.f32.partialorder %v669, inf
        %v730 = vsel %vm729, %v669, %v728
        %vm731 = vcmp.eq.f32.partialorder %v669, 0.0
        %v732 = vand.u32 %v669, 2147483648
        %v733 = vsel %vm731, %v732, %v730
        %v734 = vrsqrt.pop %v670
        %v735 = vmul.f32 %v670, %v734
        %vm736 = vcmp.eq.f32.partialorder %v670, inf
        %v737 = vsel %vm736, %v670, %v735
        %vm738 = vcmp.eq.f32.partialorder %v670, 0.0
        %v739 = vand.u32 %v670, 2147483648
        %v740 = vsel %vm738, %v739, %v737
        %v741 = vrsqrt.pop %v671
        %v742 = vmul.f32 %v671, %v741
        %vm743 = vcmp.eq.f32.partialorder %v671, inf
        %v744 = vsel %vm743, %v671, %v742
        %vm745 = vcmp.eq.f32.partialorder %v671, 0.0
        %v746 = vand.u32 %v671, 2147483648
        %v747 = vsel %vm745, %v746, %v744
        %v748 = vrsqrt.pop %v672
        %v749 = vmul.f32 %v672, %v748
        %vm750 = vcmp.eq.f32.partialorder %v672, inf
        %v751 = vsel %vm750, %v672, %v749
        %vm752 = vcmp.eq.f32.partialorder %v672, 0.0
        %v753 = vand.u32 %v672, 2147483648
        %v754 = vsel %vm752, %v753, %v751
        %v755 = vrsqrt.pop %v673
        %v756 = vmul.f32 %v673, %v755
        %vm757 = vcmp.eq.f32.partialorder %v673, inf
        %v758 = vsel %vm757, %v673, %v756
        %vm759 = vcmp.eq.f32.partialorder %v673, 0.0
        %v760 = vand.u32 %v673, 2147483648
        %v761 = vsel %vm759, %v760, %v758
        %v762 = vrsqrt.pop %v674
        %v763 = vmul.f32 %v674, %v762
        %vm764 = vcmp.eq.f32.partialorder %v674, inf
        %v765 = vsel %vm764, %v674, %v763
        %vm766 = vcmp.eq.f32.partialorder %v674, 0.0
        %v767 = vand.u32 %v674, 2147483648
        %v768 = vsel %vm766, %v767, %v765
        %v769 = vrsqrt.pop %v675
        %v770 = vmul.f32 %v675, %v769
        %vm771 = vcmp.eq.f32.partialorder %v675, inf
        %v772 = vsel %vm771, %v675, %v770
        %vm773 = vcmp.eq.f32.partialorder %v675, 0.0
        %v774 = vand.u32 %v675, 2147483648
        %v775 = vsel %vm773, %v774, %v772
        %v776 = vrsqrt.pop %v676
        %v777 = vmul.f32 %v676, %v776
        %vm778 = vcmp.eq.f32.partialorder %v676, inf
        %v779 = vsel %vm778, %v676, %v777
        %vm780 = vcmp.eq.f32.partialorder %v676, 0.0
        %v781 = vand.u32 %v676, 2147483648
        %v782 = vsel %vm780, %v781, %v779
        %v783 = vrsqrt.pop %v677
        %v784 = vmul.f32 %v677, %v783
        %vm785 = vcmp.eq.f32.partialorder %v677, inf
        %v786 = vsel %vm785, %v677, %v784
        %vm787 = vcmp.eq.f32.partialorder %v677, 0.0
        %v788 = vand.u32 %v677, 2147483648
        %v789 = vsel %vm787, %v788, %v786
        %v790 = vld [vmem:[%s2] sm:$0xff]
        %v791 = vld [vmem:[%s2 + $0x8] sm:$0xff]
        %v792 = vld [vmem:[%s2 + $0x10] sm:$0xff]
        %v793 = vld [vmem:[%s2 + $0x18] sm:$0xff]
        %v794 = vld [vmem:[%s2 + $0x20] sm:$0xff]
        %v795 = vld [vmem:[%s2 + $0x28] sm:$0xff]
        %v796 = vld [vmem:[%s2 + $0x30] sm:$0xff]
        %v797 = vld [vmem:[%s2 + $0x38] sm:$0xff]
        %v798 = vld [vmem:[%s2 + $0x40] sm:$0xff]
        %v799 = vld [vmem:[%s2 + $0x48] sm:$0xff]
        %v800 = vld [vmem:[%s2 + $0x50] sm:$0xff]
        %v801 = vld [vmem:[%s2 + $0x58] sm:$0xff]
        %v802 = vld [vmem:[%s2 + $0x60] sm:$0xff]
        %v803 = vld [vmem:[%s2 + $0x68] sm:$0xff]
        %v804 = vld [vmem:[%s2 + $0x70] sm:$0xff]
        %v805 = vld [vmem:[%s2 + $0x78] sm:$0xff]
        %v806 = vmul.f32 %v684, %v790
        %v807 = vmul.f32 %v691, %v791
        %v808 = vmul.f32 %v698, %v792
        %v809 = vmul.f32 %v705, %v793
        %v810 = vmul.f32 %v712, %v794
        %v811 = vmul.f32 %v719, %v795
        %v812 = vmul.f32 %v726, %v796
        %v813 = vmul.f32 %v733, %v797
        %v814 = vmul.f32 %v740, %v798
        %v815 = vmul.f32 %v747, %v799
        %v816 = vmul.f32 %v754, %v800
        %v817 = vmul.f32 %v761, %v801
        %v818 = vmul.f32 %v768, %v802
        %v819 = vmul.f32 %v775, %v803
        %v820 = vmul.f32 %v782, %v804
        %v821 = vmul.f32 %v789, %v805
        %822 = vadd.xlane.f32.xlu0 %v806
        %v823 = vpop.xlane.xlu0 %822
        %824 = vadd.xlane.f32.xlu0 %v807
        %v825 = vpop.xlane.xlu0 %824
        %826 = vadd.xlane.f32.xlu0 %v808
        %v827 = vpop.xlane.xlu0 %826
        %828 = vadd.xlane.f32.xlu0 %v809
        %v829 = vpop.xlane.xlu0 %828
        %830 = vadd.xlane.f32.xlu0 %v810
        %v831 = vpop.xlane.xlu0 %830
        %832 = vadd.xlane.f32.xlu0 %v811
        %v833 = vpop.xlane.xlu0 %832
        %834 = vadd.xlane.f32.xlu0 %v812
        %v835 = vpop.xlane.xlu0 %834
        %836 = vadd.xlane.f32.xlu0 %v813
        %v837 = vpop.xlane.xlu0 %836
        %838 = vadd.xlane.f32.xlu0 %v814
        %v839 = vpop.xlane.xlu0 %838
        %840 = vadd.xlane.f32.xlu0 %v815
        %v841 = vpop.xlane.xlu0 %840
        %842 = vadd.xlane.f32.xlu0 %v816
        %v843 = vpop.xlane.xlu0 %842
        %844 = vadd.xlane.f32.xlu0 %v817
        %v845 = vpop.xlane.xlu0 %844
        %846 = vadd.xlane.f32.xlu0 %v818
        %v847 = vpop.xlane.xlu0 %846
        %848 = vadd.xlane.f32.xlu0 %v819
        %v849 = vpop.xlane.xlu0 %848
        %850 = vadd.xlane.f32.xlu0 %v820
        %v851 = vpop.xlane.xlu0 %850
        %852 = vadd.xlane.f32.xlu0 %v821
        %v853 = vpop.xlane.xlu0 %852
        %v854 = vadd.f32 %v823, %v825
        %v855 = vadd.f32 %v854, %v827
        %v856 = vadd.f32 %v855, %v829
        %v857 = vadd.f32 %v856, %v831
        %v858 = vadd.f32 %v857, %v833
        %v859 = vadd.f32 %v858, %v835
        %v860 = vadd.f32 %v859, %v837
        %v861 = vadd.f32 %v860, %v839
        %v862 = vadd.f32 %v861, %v841
        %v863 = vadd.f32 %v862, %v843
        %v864 = vadd.f32 %v863, %v845
        %v865 = vadd.f32 %v864, %v847
        %v866 = vadd.f32 %v865, %v849
        %v867 = vadd.f32 %v866, %v851
        %v868 = vadd.f32 %v867, %v853
        %v869 = vrot.slane %v868, 4
        %v870 = vadd.f32 %v868, %v869
        %v871 = vrot.slane %v870, 2
        %v872 = vadd.f32 %v870, %v871
        %v873 = vrot.slane %v872, 1
        %v874 = vadd.f32 %v872, %v873
        %v875 = vrsqrt.pop %v645
        %v876 = vmul.f32 %v874, %v875
        %v877 = vld [vmem:[#allocation3] sm:$0x1]
        %v878 = vadd.f32 %v876, %v877
        %v880 = vlaneseq
        %v881 = vshrl.u32 %v880, 7
        %v882 = vsub.s32 0, %v881
        %v883 = vrot.slane %v878, %v882
        %884 = vset.pattern.permute.xlu0 0
        %885 = vperm.xlu0 %884, %v883
        %v886 = vpop.permute.xlu0 %885
        %888 = vst [vmem:[%s261] sm:$0xff] %v886
      $region44: #{dbcnn_forward.5} parent=35 // pred_fallthru
        _
      %p889 = scmp.lt.s32.totalorder %s21, 1
      %s890 = scalar_select %p889, %s21, 1
      %s891 = smul.addr %s890, 8
      %s892 = scalar_lea.vmem %s4, %s891
      // Predicated region
      $region45: #{dbcnn_forward.5} parent=35 // pred_check
        %p893 = pneg %p145
      $region46: #{dbcnn_forward.5} parent=35 // pred_check_branch
        %895 = sbr.rel (%p893) target = $region48
      $region47: #{dbcnn_forward.5} parent=35 // pred_region
        _
      $region48: #{dbcnn_forward.5} parent=35 // pred_fallthru
        _
    $region36: #{dbcnn_forward.5} parent=5 // pred_fallthru
      _
    %p896 = scmp.le.s32.totalorder 2, %s12
    // Predicated region
    $region49: #{dbcnn_forward.5} parent=5 // pred_check
      %p897 = pneg %p896
    $region50: #{dbcnn_forward.5} parent=5 // pred_check_branch
      %899 = sbr.rel (%p897) target = $region52
    $region51: #{dbcnn_forward.5} parent=5 // pred_region
      %s900 = ssub.s32 %s12, 2
      // Predicated region
      $region53: #{dbcnn_forward.5} parent=51 // pred_check
        %p901 = pneg %p151
      $region54: #{dbcnn_forward.5} parent=51 // pred_check_branch
        %903 = sbr.rel (%p901) target = $region56
      $region55: #{dbcnn_forward.5} parent=51 // pred_region
        %p904 = scmp.lt.s32.totalorder %s23, 1
        %s905 = scalar_select %p904, %s23, 1
        %s906 = smul.addr %s905, 8
        %s907 = scalar_lea.vmem %s4, %s906
      $region56: #{dbcnn_forward.5} parent=51 // pred_fallthru
        _
    $region52: #{dbcnn_forward.5} parent=5 // pred_fallthru
      _
  $region6: #{dbcnn_forward.5} parent=0 // loop_footer
    %s16 = sadd.s32 1, %s12
  $region7: #{dbcnn_forward.5} parent=0 // loop_footer_branch
    %11 = sbr.rel target = $region3
  $region8: #{dbcnn_forward.5} parent=0 // loop_exit
    _

// kernel: dbcnn_forward.4
$region0: #{dbcnn_forward.4}
  #allocation0 [shape = 'u32[]', space=smem, size = 0x4, offset = 0x4, fixed_abs, tag = 'smem constant byte address 0x4 - core index']
  #allocation1 [shape = 'u32[144,128]{1,0:T(1,128)}', space=vmem, size = 0x12000, scoped, tag = 'internal scratch']
  %s0 = inlined_call_operand.vmem [shape: bf16[2,2,288,384], index: 0, kind: input, shape index: {}]
  %s1 = inlined_call_operand.vmem [shape: bf16[2,3,384,128], index: 1, kind: input, shape index: {}]
  %s2 = inlined_call_operand.vmem [shape: f32[2,1,128], index: 2, kind: input, shape index: {}]
  %s3 = inlined_call_operand.vmem [shape: bf16[2,2,256,128], index: 3, kind: output, shape index: {}]
  %s4 = sld [smem:[#allocation0]]
  $region45: #{dbcnn_forward.4} parent=0
    _
  %s6 = ssub.s32 1, %s4
  %s7 = scalar_select 0, %s6, %s4
  loop: start=0, step=1, limit=6
  $region2: #{dbcnn_forward.4} parent=0 // loop_pre_header
    _
  $region3: #{dbcnn_forward.4} parent=0 // loop_header
    %s9 = sphi 0, %s13
    %p10 = scmp.ge.s32.totalorder %s9, 6
    %s16 = sphi 0, %s28
    %s17 = sphi 0, %s24
    %s18 = sphi 0, %s16
    %s19 = sphi 0, %s17
    %s20 = sphi 0, %s18
    %s21 = sphi 0, %s19
    %s33 = sphi 0, %s35
    %s36 = sphi 0, %s33
    %s37 = sphi 0, %s36
    %s53 = sphi 0, %s37
    %s59 = sphi 0, %s61
    %s62 = sphi 0, %s59
    %s63 = sphi 0, %s62
    %s79 = sphi 0, %s63
    %s85 = sphi 0, %s87
    %s88 = sphi 0, %s85
    %s89 = sphi 0, %s88
    %s105 = sphi 0, %s89
    %s113 = sphi 0, %s115
    %s116 = sphi 0, %s113
    %s117 = sphi 0, %s116
    %s133 = sphi 0, %s117
  $region4: #{dbcnn_forward.4} parent=0 // loop_header_branch
    %12 = sbr.rel (%p10) target = $region8
  $region5: #{dbcnn_forward.4} parent=0 // loop_body
    %s14 = ssub.s32 %s9, 1
    %s15 = ssub.s32 %s9, 2
    %s22 = sadd.s32 1, %s17
    %p23 = scmp.ge.s32.totalorder %s22, 2
    %s24 = scalar_select %p23, 0, %s22
    %s25 = sadd.s32 1, %s16
    %s26 = scalar_select %p23, %s25, %s16
    %p27 = scmp.ge.s32.totalorder %s26, 2
    %s28 = scalar_select %p27, 0, %s26
    %s29 = ssub.s32 %s16, %s28
    %s30 = ssub.s32 %s17, %s24
    %s31 = sor.u32 %s29, %s30
    %p32 = scmp.eq.s32.totalorder %s31, 0
    %s34 = sadd.s32 %s33, 1
    %s35 = scalar_select %p32, %s33, %s34
    %p38 = pneg %p32
    %p39 = scmp.eq.s32.totalorder %s9, 3
    %p40 = por %p38, %p39
    %p41 = scmp.ne.s32.totalorder %s33, %s36
    %p42 = scmp.eq.s32.totalorder %s9, 0
    %p43 = por %p41, %p42
    %p44 = scmp.ne.s32.totalorder %s33, %s36
    %p45 = scmp.eq.s32.totalorder %s14, 3
    %p46 = por %p44, %p45
    %p47 = scmp.ne.s32.totalorder %s36, %s37
    %p48 = scmp.eq.s32.totalorder %s14, 0
    %p49 = por %p47, %p48
    %p50 = scmp.ne.s32.totalorder %s36, %s37
    %p51 = scmp.eq.s32.totalorder %s15, 3
    %p52 = por %p50, %p51
    %p54 = scmp.ne.s32.totalorder %s37, %s53
    %p55 = scmp.eq.s32.totalorder %s15, 0
    %p56 = por %p54, %p55
    %s57 = ssub.s32 %s16, %s28
    %p58 = scmp.eq.s32.totalorder %s57, 0
    %s60 = sadd.s32 %s59, 1
    %s61 = scalar_select %p58, %s59, %s60
    %p64 = pneg %p58
    %p65 = scmp.eq.s32.totalorder %s9, 3
    %p66 = por %p64, %p65
    %p67 = scmp.ne.s32.totalorder %s59, %s62
    %p68 = scmp.eq.s32.totalorder %s9, 0
    %p69 = por %p67, %p68
    %p70 = scmp.ne.s32.totalorder %s59, %s62
    %p71 = scmp.eq.s32.totalorder %s14, 3
    %p72 = por %p70, %p71
    %p73 = scmp.ne.s32.totalorder %s62, %s63
    %p74 = scmp.eq.s32.totalorder %s14, 0
    %p75 = por %p73, %p74
    %p76 = scmp.ne.s32.totalorder %s62, %s63
    %p77 = scmp.eq.s32.totalorder %s15, 3
    %p78 = por %p76, %p77
    %p80 = scmp.ne.s32.totalorder %s63, %s79
    %p81 = scmp.eq.s32.totalorder %s15, 0
    %p82 = por %p80, %p81
    %s83 = ssub.s32 %s16, %s28
    %p84 = scmp.eq.s32.totalorder %s83, 0
    %s86 = sadd.s32 %s85, 1
    %s87 = scalar_select %p84, %s85, %s86
    %p90 = pneg %p84
    %p91 = scmp.eq.s32.totalorder %s9, 3
    %p92 = por %p90, %p91
    %p93 = scmp.ne.s32.totalorder %s85, %s88
    %p94 = scmp.eq.s32.totalorder %s9, 0
    %p95 = por %p93, %p94
    %p96 = scmp.ne.s32.totalorder %s85, %s88
    %p97 = scmp.eq.s32.totalorder %s14, 3
    %p98 = por %p96, %p97
    %p99 = scmp.ne.s32.totalorder %s88, %s89
    %p100 = scmp.eq.s32.totalorder %s14, 0
    %p101 = por %p99, %p100
    %p102 = scmp.ne.s32.totalorder %s88, %s89
    %p103 = scmp.eq.s32.totalorder %s15, 3
    %p104 = por %p102, %p103
    %p106 = scmp.ne.s32.totalorder %s89, %s105
    %p107 = scmp.eq.s32.totalorder %s15, 0
    %p108 = por %p106, %p107
    %s109 = ssub.s32 %s16, %s28
    %s110 = ssub.s32 %s17, %s24
    %s111 = sor.u32 %s109, %s110
    %p112 = scmp.eq.s32.totalorder %s111, 0
    %s114 = sadd.s32 %s113, 1
    %s115 = scalar_select %p112, %s113, %s114
    %p118 = pneg %p112
    %p119 = scmp.eq.s32.totalorder %s9, 3
    %p120 = por %p118, %p119
    %p121 = scmp.ne.s32.totalorder %s113, %s116
    %p122 = scmp.eq.s32.totalorder %s9, 0
    %p123 = por %p121, %p122
    %p124 = scmp.ne.s32.totalorder %s113, %s116
    %p125 = scmp.eq.s32.totalorder %s14, 3
    %p126 = por %p124, %p125
    %p127 = scmp.ne.s32.totalorder %s116, %s117
    %p128 = scmp.eq.s32.totalorder %s14, 0
    %p129 = por %p127, %p128
    %p130 = scmp.ne.s32.totalorder %s116, %s117
    %p131 = scmp.eq.s32.totalorder %s15, 3
    %p132 = por %p130, %p131
    %p134 = scmp.ne.s32.totalorder %s117, %s133
    %p135 = scmp.eq.s32.totalorder %s15, 0
    %p136 = por %p134, %p135
    %p137 = scmp.le.s32.totalorder 1, %s9
    %p138 = scmp.lt.s32.totalorder %s9, 5
    %p139 = pnand %p137, %p138
    %p140 = pneg %p139
    // Predicated region
    $region9: #{dbcnn_forward.4} parent=5 // pred_check
      _
    $region10: #{dbcnn_forward.4} parent=5 // pred_check_branch
      %142 = sbr.rel (%p139) target = $region12
    $region11: #{dbcnn_forward.4} parent=5 // pred_region
      %s143 = ssub.s32 %s9, 1
    $region12: #{dbcnn_forward.4} parent=5 // pred_fallthru
      _
    %p144 = scmp.lt.s32.totalorder %s9, 4
    // Predicated region
    $region13: #{dbcnn_forward.4} parent=5 // pred_check
      %p145 = pneg %p144
    $region14: #{dbcnn_forward.4} parent=5 // pred_check_branch
      %147 = sbr.rel (%p145) target = $region16
    $region15: #{dbcnn_forward.4} parent=5 // pred_region
      // Predicated region
      $region17: #{dbcnn_forward.4} parent=15 // pred_check
        %p148 = pneg %p43
      $region18: #{dbcnn_forward.4} parent=15 // pred_check_branch
        %150 = sbr.rel (%p148) target = $region20
      $region19: #{dbcnn_forward.4} parent=15 // pred_region
        %p151 = scmp.lt.s32.totalorder %s16, 1
        %s152 = scalar_select %p151, %s16, 1
        %p153 = scmp.lt.s32.totalorder %s17, 1
        %s154 = scalar_select %p153, %s17, 1
        %s155 = smul.addr %s154, 108
        %s156 = smul.addr %s152, 216
        %s157 = sadd.s32 %s155, %s156
        %s158 = smul.addr %s157, 4
        %s159 = scalar_lea.vmem %s0, %s158
      $region20: #{dbcnn_forward.4} parent=15 // pred_fallthru
        _
      // Predicated region
      $region21: #{dbcnn_forward.4} parent=15 // pred_check
        %p160 = pneg %p69
      $region22: #{dbcnn_forward.4} parent=15 // pred_check_branch
        %162 = sbr.rel (%p160) target = $region24
      $region23: #{dbcnn_forward.4} parent=15 // pred_region
        %p163 = scmp.lt.s32.totalorder %s16, 1
        %s164 = scalar_select %p163, %s16, 1
        %s165 = smul.addr %s164, 144
        %s166 = smul.addr %s165, 4
        %s167 = scalar_lea.vmem %s1, %s166
      $region24: #{dbcnn_forward.4} parent=15 // pred_fallthru
        _
      // Predicated region
      $region25: #{dbcnn_forward.4} parent=15 // pred_check
        %p168 = pneg %p95
      $region26: #{dbcnn_forward.4} parent=15 // pred_check_branch
        %170 = sbr.rel (%p168) target = $region28
      $region27: #{dbcnn_forward.4} parent=15 // pred_region
        %p171 = scmp.lt.s32.totalorder %s16, 1
        %s172 = scalar_select %p171, %s16, 1
        %s173 = scalar_lea.vmem %s2, %s172
      $region28: #{dbcnn_forward.4} parent=15 // pred_fallthru
        _
    $region16: #{dbcnn_forward.4} parent=5 // pred_fallthru
      _
    %p174 = scmp.le.s32.totalorder 1, %s9
    %p175 = scmp.lt.s32.totalorder %s9, 5
    %p176 = pnand %p174, %p175
    %p177 = pneg %p176
    // Predicated region
    $region29: #{dbcnn_forward.4} parent=5 // pred_check
      _
    $region30: #{dbcnn_forward.4} parent=5 // pred_check_branch
      %179 = sbr.rel (%p176) target = $region32
    $region31: #{dbcnn_forward.4} parent=5 // pred_region
      %s180 = ssub.s32 %s9, 1
      %p181 = scmp.lt.s32.totalorder %s18, 1
      %s182 = scalar_select %p181, %s18, 1
      %p183 = scmp.lt.s32.totalorder %s19, 1
      %s184 = scalar_select %p183, %s19, 1
      %s185 = smul.addr %s184, 108
      %s186 = smul.addr %s182, 216
      %s187 = sadd.s32 %s185, %s186
      %s188 = smul.addr %s187, 4
      %s189 = scalar_lea.vmem %s0, %s188
      %p190 = pneg %p49
      %p191 = pneg %p46
      %p192 = scmp.lt.s32.totalorder %s18, 1
      %s193 = scalar_select %p192, %s18, 1
      %s194 = smul.addr %s193, 144
      %s195 = smul.addr %s194, 4
      %s196 = scalar_lea.vmem %s1, %s195
      %p197 = pneg %p75
      %p198 = pneg %p72
      %p199 = scmp.lt.s32.totalorder %s18, 1
      %s200 = scalar_select %p199, %s18, 1
      %s201 = scalar_lea.vmem %s2, %s200
      %p202 = pneg %p101
      %p203 = pneg %p98
      %p204 = pneg %p129
      %p205 = pneg %p126
      %p206 = scmp.lt.s32.totalorder %s18, 1
      %s207 = scalar_select %p206, %s18, 1
      %p208 = scmp.lt.s32.totalorder %s19, 1
      %s209 = scalar_select %p208, %s19, 1
      %s210 = smul.addr %s209, 32
      %s211 = smul.addr %s207, 64
      %s212 = sadd.s32 %s210, %s211
      %s213 = smul.addr %s212, 4
      %s214 = scalar_lea.vmem %s3, %s213
      %p215 = scmp.lt.s32.totalorder %s18, 1
      %s216 = scalar_select %p215, %s18, 1
      %p217 = scmp.lt.s32.totalorder %s19, 1
      %s218 = scalar_select %p217, %s19, 1
      %s219 = smul.addr %s218, 108
      %s220 = smul.addr %s216, 216
      %s221 = sadd.s32 %s219, %s220
      %s222 = smul.addr %s221, 4
      %s223 = scalar_lea.vmem %s0, %s222
      %p224 = scmp.lt.s32.totalorder %s18, 1
      %s225 = scalar_select %p224, %s18, 1
      %s226 = smul.addr %s225, 144
      %s227 = smul.addr %s226, 4
      %s228 = scalar_lea.vmem %s1, %s227
      %p229 = scmp.lt.s32.totalorder %s18, 1
      %s230 = scalar_select %p229, %s18, 1
      %s231 = scalar_lea.vmem %s2, %s230
      %p232 = scmp.lt.s32.totalorder %s18, 1
      %s233 = scalar_select %p232, %s18, 1
      %p234 = scmp.lt.s32.totalorder %s19, 1
      %s235 = scalar_select %p234, %s19, 1
      %s236 = smul.addr %s235, 32
      %s237 = smul.addr %s233, 64
      %s238 = sadd.s32 %s236, %s237
      %s239 = smul.addr %s238, 4
      %s240 = scalar_lea.vmem %s3, %s239
      %v242 = vld [vmem:[%s223] sm:$0xff]
      %v243 = vld [vmem:[%s223 + $0x8] sm:$0xf]
      %v244 = vld [vmem:[%s223 + $0xc] sm:$0xff]
      %v245 = vld [vmem:[%s223 + $0x14] sm:$0xf]
      %v246 = vld [vmem:[%s223 + $0x18] sm:$0xff]
      %v247 = vld [vmem:[%s223 + $0x20] sm:$0xf]
      %v248 = vld [vmem:[%s223 + $0x24] sm:$0xff]
      %v249 = vld [vmem:[%s223 + $0x2c] sm:$0xf]
      %v250 = vld [vmem:[%s223 + $0x30] sm:$0xff]
      %v251 = vld [vmem:[%s223 + $0x38] sm:$0xf]
      %v252 = vld [vmem:[%s223 + $0x3c] sm:$0xff]
      %v253 = vld [vmem:[%s223 + $0x44] sm:$0xf]
      %v254 = vld [vmem:[%s223 + $0x48] sm:$0xff]
      %v255 = vld [vmem:[%s223 + $0x50] sm:$0xf]
      %v256 = vld [vmem:[%s223 + $0x54] sm:$0xff]
      %v257 = vld [vmem:[%s223 + $0x5c] sm:$0xf]
      %v258 = vld [vmem:[%s223 + $0x60] sm:$0xff]
      %v259 = vld [vmem:[%s223 + $0x68] sm:$0xf]
      %v260 = vld [vmem:[%s223 + $0x6c] sm:$0xff]
      %v261 = vld [vmem:[%s223 + $0x74] sm:$0xf]
      %v262 = vld [vmem:[%s223 + $0x78] sm:$0xff]
      %v263 = vld [vmem:[%s223 + $0x80] sm:$0xf]
      %v264 = vld [vmem:[%s223 + $0x84] sm:$0xff]
      %v265 = vld [vmem:[%s223 + $0x8c] sm:$0xf]
      %v266 = vld [vmem:[%s223 + $0x90] sm:$0xff]
      %v267 = vld [vmem:[%s223 + $0x98] sm:$0xf]
      %v268 = vld [vmem:[%s223 + $0x9c] sm:$0xff]
      %v269 = vld [vmem:[%s223 + $0xa4] sm:$0xf]
      %v270 = vld [vmem:[%s223 + $0xa8] sm:$0xff]
      %v271 = vld [vmem:[%s223 + $0xb0] sm:$0xf]
      %v272 = vld [vmem:[%s223 + $0xb4] sm:$0xff]
      %v273 = vld [vmem:[%s223 + $0xbc] sm:$0xf]
      %v274 = vld [vmem:[%s223 + $0xc0] sm:$0xff]
      %v275 = vld [vmem:[%s223 + $0xc8] sm:$0xf]
      %v276 = vld [vmem:[%s223 + $0xcc] sm:$0xff]
      %v277 = vld [vmem:[%s223 + $0xd4] sm:$0xf]
      %v278 = vld [vmem:[%s223 + $0xd8] sm:$0xff]
      %v279 = vld [vmem:[%s223 + $0xe0] sm:$0xf]
      %v280 = vld [vmem:[%s223 + $0xe4] sm:$0xff]
      %v281 = vld [vmem:[%s223 + $0xec] sm:$0xf]
      %v282 = vld [vmem:[%s223 + $0xf0] sm:$0xff]
      %v283 = vld [vmem:[%s223 + $0xf8] sm:$0xf]
      %v284 = vld [vmem:[%s223 + $0xfc] sm:$0xff]
      %v285 = vld [vmem:[%s223 + $0x104] sm:$0xf]
      %v286 = vld [vmem:[%s223 + $0x108] sm:$0xff]
      %v287 = vld [vmem:[%s223 + $0x110] sm:$0xf]
      %v288 = vld [vmem:[%s223 + $0x114] sm:$0xff]
      %v289 = vld [vmem:[%s223 + $0x11c] sm:$0xf]
      %v290 = vld [vmem:[%s223 + $0x120] sm:$0xff]
      %v291 = vld [vmem:[%s223 + $0x128] sm:$0xf]
      %v292 = vld [vmem:[%s223 + $0x12c] sm:$0xff]
      %v293 = vld [vmem:[%s223 + $0x134] sm:$0xf]
      %v294 = vld [vmem:[%s223 + $0x138] sm:$0xff]
      %v295 = vld [vmem:[%s223 + $0x140] sm:$0xf]
      %v296 = vld [vmem:[%s223 + $0x144] sm:$0xff]
      %v297 = vld [vmem:[%s223 + $0x14c] sm:$0xf]
      %v298 = vld [vmem:[%s223 + $0x150] sm:$0xff]
      %v299 = vld [vmem:[%s223 + $0x158] sm:$0xf]
      %v300 = vld [vmem:[%s223 + $0x15c] sm:$0xff]
      %v301 = vld [vmem:[%s223 + $0x164] sm:$0xf]
      %v302 = vld [vmem:[%s223 + $0x168] sm:$0xff]
      %v303 = vld [vmem:[%s223 + $0x170] sm:$0xf]
      %v304 = vld [vmem:[%s223 + $0x174] sm:$0xff]
      %v305 = vld [vmem:[%s223 + $0x17c] sm:$0xf]
      %v306 = vld [vmem:[%s228] sm:$0xf]
      %v307 = vld [vmem:[%s228 + $0x4] sm:$0xf]
      %v308 = vld [vmem:[%s228 + $0x8] sm:$0xf]
      %v309 = vld [vmem:[%s228 + $0xc] sm:$0xf]
      %v310 = vld [vmem:[%s228 + $0x10] sm:$0xf]
      %v311 = vld [vmem:[%s228 + $0x14] sm:$0xf]
      %v312 = vld [vmem:[%s228 + $0x18] sm:$0xf]
      %v313 = vld [vmem:[%s228 + $0x1c] sm:$0xf]
      %v314 = vld [vmem:[%s228 + $0x20] sm:$0xf]
      %v315 = vld [vmem:[%s228 + $0x24] sm:$0xf]
      %v316 = vld [vmem:[%s228 + $0x28] sm:$0xf]
      %v317 = vld [vmem:[%s228 + $0x2c] sm:$0xf]
      %v318 = vld [vmem:[%s228 + $0x30] sm:$0xf]
      %v319 = vld [vmem:[%s228 + $0x34] sm:$0xf]
      %v320 = vld [vmem:[%s228 + $0x38] sm:$0xf]
      %v321 = vld [vmem:[%s228 + $0x3c] sm:$0xf]
      %v322 = vld [vmem:[%s228 + $0x40] sm:$0xf]
      %v323 = vld [vmem:[%s228 + $0x44] sm:$0xf]
      %v324 = vld [vmem:[%s228 + $0x48] sm:$0xf]
      %v325 = vld [vmem:[%s228 + $0x4c] sm:$0xf]
      %v326 = vld [vmem:[%s228 + $0x50] sm:$0xf]
      %v327 = vld [vmem:[%s228 + $0x54] sm:$0xf]
      %v328 = vld [vmem:[%s228 + $0x58] sm:$0xf]
      %v329 = vld [vmem:[%s228 + $0x5c] sm:$0xf]
      %v330 = vld [vmem:[%s228 + $0x60] sm:$0xf]
      %v331 = vld [vmem:[%s228 + $0x64] sm:$0xf]
      %v332 = vld [vmem:[%s228 + $0x68] sm:$0xf]
      %v333 = vld [vmem:[%s228 + $0x6c] sm:$0xf]
      %v334 = vld [vmem:[%s228 + $0x70] sm:$0xf]
      %v335 = vld [vmem:[%s228 + $0x74] sm:$0xf]
      %v336 = vld [vmem:[%s228 + $0x78] sm:$0xf]
      %v337 = vld [vmem:[%s228 + $0x7c] sm:$0xf]
      %v338 = vld [vmem:[%s228 + $0x80] sm:$0xf]
      %v339 = vld [vmem:[%s228 + $0x84] sm:$0xf]
      %v340 = vld [vmem:[%s228 + $0x88] sm:$0xf]
      %v341 = vld [vmem:[%s228 + $0x8c] sm:$0xf]
      %v342 = vld [vmem:[%s228 + $0x90] sm:$0xf]
      %v343 = vld [vmem:[%s228 + $0x94] sm:$0xf]
      %v344 = vld [vmem:[%s228 + $0x98] sm:$0xf]
      %v345 = vld [vmem:[%s228 + $0x9c] sm:$0xf]
      %v346 = vld [vmem:[%s228 + $0xa0] sm:$0xf]
      %v347 = vld [vmem:[%s228 + $0xa4] sm:$0xf]
      %v348 = vld [vmem:[%s228 + $0xa8] sm:$0xf]
      %v349 = vld [vmem:[%s228 + $0xac] sm:$0xf]
      %v350 = vld [vmem:[%s228 + $0xb0] sm:$0xf]
      %v351 = vld [vmem:[%s228 + $0xb4] sm:$0xf]
      %v352 = vld [vmem:[%s228 + $0xb8] sm:$0xf]
      %v353 = vld [vmem:[%s228 + $0xbc] sm:$0xf]
      %v354 = vld [vmem:[%s223 + $0x180] sm:$0xff]
      %v355 = vld [vmem:[%s223 + $0x188] sm:$0xf]
      %v356 = vld [vmem:[%s223 + $0x18c] sm:$0xff]
      %v357 = vld [vmem:[%s223 + $0x194] sm:$0xf]
      %s358 = scalar_lea.vmem %s228, 192
      %v359 = vld [vmem:[%s358] sm:$0xf]
      %v360 = vld [vmem:[%s358 + $0x4] sm:$0xf]
      %v361 = vld [vmem:[%s358 + $0x8] sm:$0xf]
      %v362 = vld [vmem:[%s358 + $0xc] sm:$0xf]
      %v363 = vld [vmem:[%s358 + $0x10] sm:$0xf]
      %v364 = vld [vmem:[%s358 + $0x14] sm:$0xf]
      %v365 = vld [vmem:[%s358 + $0x18] sm:$0xf]
      %v366 = vld [vmem:[%s358 + $0x1c] sm:$0xf]
      %v367 = vld [vmem:[%s358 + $0x20] sm:$0xf]
      %v368 = vld [vmem:[%s358 + $0x24] sm:$0xf]
      %v369 = vld [vmem:[%s358 + $0x28] sm:$0xf]
      %v370 = vld [vmem:[%s358 + $0x2c] sm:$0xf]
      %v371 = vld [vmem:[%s358 + $0x30] sm:$0xf]
      %v372 = vld [vmem:[%s358 + $0x34] sm:$0xf]
      %v373 = vld [vmem:[%s358 + $0x38] sm:$0xf]
      %v374 = vld [vmem:[%s358 + $0x3c] sm:$0xf]
      %v375 = vld [vmem:[%s358 + $0x40] sm:$0xf]
      %v376 = vld [vmem:[%s358 + $0x44] sm:$0xf]
      %v377 = vld [vmem:[%s358 + $0x48] sm:$0xf]
      %v378 = vld [vmem:[%s358 + $0x4c] sm:$0xf]
      %v379 = vld [vmem:[%s358 + $0x50] sm:$0xf]
      %v380 = vld [vmem:[%s358 + $0x54] sm:$0xf]
      %v381 = vld [vmem:[%s358 + $0x58] sm:$0xf]
      %v382 = vld [vmem:[%s358 + $0x5c] sm:$0xf]
      %v383 = vld [vmem:[%s358 + $0x60] sm:$0xf]
      %v384 = vld [vmem:[%s358 + $0x64] sm:$0xf]
      %v385 = vld [vmem:[%s358 + $0x68] sm:$0xf]
      %v386 = vld [vmem:[%s358 + $0x6c] sm:$0xf]
      %v387 = vld [vmem:[%s358 + $0x70] sm:$0xf]
      %v388 = vld [vmem:[%s358 + $0x74] sm:$0xf]
      %v389 = vld [vmem:[%s358 + $0x78] sm:$0xf]
      %v390 = vld [vmem:[%s358 + $0x7c] sm:$0xf]
      %v391 = vld [vmem:[%s358 + $0x80] sm:$0xf]
      %v392 = vld [vmem:[%s358 + $0x84] sm:$0xf]
      %v393 = vld [vmem:[%s358 + $0x88] sm:$0xf]
      %v394 = vld [vmem:[%s358 + $0x8c] sm:$0xf]
      %v395 = vld [vmem:[%s358 + $0x90] sm:$0xf]
      %v396 = vld [vmem:[%s358 + $0x94] sm:$0xf]
      %v397 = vld [vmem:[%s358 + $0x98] sm:$0xf]
      %v398 = vld [vmem:[%s358 + $0x9c] sm:$0xf]
      %v399 = vld [vmem:[%s358 + $0xa0] sm:$0xf]
      %v400 = vld [vmem:[%s358 + $0xa4] sm:$0xf]
      %v401 = vld [vmem:[%s358 + $0xa8] sm:$0xf]
      %v402 = vld [vmem:[%s358 + $0xac] sm:$0xf]
      %v403 = vld [vmem:[%s358 + $0xb0] sm:$0xf]
      %v404 = vld [vmem:[%s358 + $0xb4] sm:$0xf]
      %v405 = vld [vmem:[%s358 + $0xb8] sm:$0xf]
      %v406 = vld [vmem:[%s358 + $0xbc] sm:$0xf]
      %v471 = vunpack.c.l.b16 %v246
      %v472 = vunpack.c.h.b16 %v246
      %v473 = vunpack.c.l.b16 %v247
      %v474 = vunpack.c.l.b16 %v248
      %v475 = vunpack.c.h.b16 %v248
      %v476 = vunpack.c.l.b16 %v249
      %v477 = vunpack.c.l.b16 %v250
      %v478 = vunpack.c.h.b16 %v250
      %v479 = vunpack.c.l.b16 %v251
      %v480 = vunpack.c.l.b16 %v252
      %v481 = vunpack.c.h.b16 %v252
      %v482 = vunpack.c.l.b16 %v253
      %v483 = vunpack.c.l.b16 %v254
      %v484 = vunpack.c.h.b16 %v254
      %v485 = vunpack.c.l.b16 %v255
      %v486 = vunpack.c.l.b16 %v256
      %v487 = vunpack.c.h.b16 %v256
      %v488 = vunpack.c.l.b16 %v257
      %v489 = vunpack.c.l.b16 %v258
      %v490 = vunpack.c.h.b16 %v258
      %v491 = vunpack.c.l.b16 %v259
      %v492 = vunpack.c.l.b16 %v260
      %v493 = vunpack.c.h.b16 %v260
      %v494 = vunpack.c.l.b16 %v261
      %v495 = vunpack.c.l.b16 %v262
      %v496 = vunpack.c.h.b16 %v262
      %v497 = vunpack.c.l.b16 %v263
      %v498 = vunpack.c.l.b16 %v264
      %v499 = vunpack.c.h.b16 %v264
      %v500 = vunpack.c.l.b16 %v265
      %v501 = vunpack.c.l.b16 %v266
      %v502 = vunpack.c.h.b16 %v266
      %v503 = vunpack.c.l.b16 %v267
      %v504 = vunpack.c.l.b16 %v268
      %v505 = vunpack.c.h.b16 %v268
      %v506 = vunpack.c.l.b16 %v269
      %v507 = vunpack.c.l.b16 %v270
      %v508 = vunpack.c.h.b16 %v270
      %v509 = vunpack.c.l.b16 %v271
      %v510 = vunpack.c.l.b16 %v272
      %v511 = vunpack.c.h.b16 %v272
      %v512 = vunpack.c.l.b16 %v273
      %v513 = vunpack.c.l.b16 %v274
      %v514 = vunpack.c.h.b16 %v274
      %v515 = vunpack.c.l.b16 %v275
      %v516 = vunpack.c.l.b16 %v276
      %v517 = vunpack.c.h.b16 %v276
      %v518 = vunpack.c.l.b16 %v277
      %v519 = vunpack.c.l.b16 %v278
      %v520 = vunpack.c.h.b16 %v278
      %v521 = vunpack.c.l.b16 %v279
      %v522 = vunpack.c.l.b16 %v280
      %v523 = vunpack.c.h.b16 %v280
      %v524 = vunpack.c.l.b16 %v281
      %v525 = vunpack.c.l.b16 %v282
      %v526 = vunpack.c.h.b16 %v282
      %v527 = vunpack.c.l.b16 %v283
      %v528 = vunpack.c.l.b16 %v284
      %v529 = vunpack.c.h.b16 %v284
      %v530 = vunpack.c.l.b16 %v285
      %v531 = vunpack.c.l.b16 %v286
      %v532 = vunpack.c.h.b16 %v286
      %v533 = vunpack.c.l.b16 %v287
      %v534 = vunpack.c.l.b16 %v288
      %v535 = vunpack.c.h.b16 %v288
      %v536 = vunpack.c.l.b16 %v289
      %v537 = vunpack.c.l.b16 %v290
      %v538 = vunpack.c.h.b16 %v290
      %v539 = vunpack.c.l.b16 %v291
      %v540 = vunpack.c.l.b16 %v292
      %v541 = vunpack.c.h.b16 %v292
      %v542 = vunpack.c.l.b16 %v293
      %v543 = vunpack.c.l.b16 %v294
      %v544 = vunpack.c.h.b16 %v294
      %v545 = vunpack.c.l.b16 %v295
      %v546 = vunpack.c.l.b16 %v296
      %v547 = vunpack.c.h.b16 %v296
      %v548 = vunpack.c.l.b16 %v297
      %v549 = vunpack.c.l.b16 %v298
      %v550 = vunpack.c.h.b16 %v298
      %v551 = vunpack.c.l.b16 %v299
      %v552 = vunpack.c.l.b16 %v300
      %v553 = vunpack.c.h.b16 %v300
      %v554 = vunpack.c.l.b16 %v301
      %v555 = vunpack.c.l.b16 %v302
      %v556 = vunpack.c.h.b16 %v302
      %v557 = vunpack.c.l.b16 %v303
      %v558 = vunpack.c.l.b16 %v304
      %v559 = vunpack.c.h.b16 %v304
      %v560 = vunpack.c.l.b16 %v305
      %v561 = vunpack.c.l.b16 %v354
      %v562 = vunpack.c.h.b16 %v354
      %v563 = vunpack.c.l.b16 %v355
      %v564 = vunpack.c.l.b16 %v356
      %v565 = vunpack.c.h.b16 %v356
      %v566 = vunpack.c.l.b16 %v357
      %v567 = vpack.c.b16 %v474, %v471
      %v568 = vpack.c.b16 %v475, %v472
      %v569 = vpack.c.b16 %v476, %v473
      %v570 = vpack.c.b16 %v480, %v477
      %v571 = vpack.c.b16 %v481, %v478
      %v572 = vpack.c.b16 %v482, %v479
      %v573 = vpack.c.b16 %v486, %v483
      %v574 = vpack.c.b16 %v487, %v484
      %v575 = vpack.c.b16 %v488, %v485
      %v576 = vpack.c.b16 %v492, %v489
      %v577 = vpack.c.b16 %v493, %v490
      %v578 = vpack.c.b16 %v494, %v491
      %v579 = vpack.c.b16 %v498, %v495
      %v580 = vpack.c.b16 %v499, %v496
      %v581 = vpack.c.b16 %v500, %v497
      %v582 = vpack.c.b16 %v504, %v501
      %v583 = vpack.c.b16 %v505, %v502
      %v584 = vpack.c.b16 %v506, %v503
      %v585 = vpack.c.b16 %v510, %v507
      %v586 = vpack.c.b16 %v511, %v508
      %v587 = vpack.c.b16 %v512, %v509
      %v588 = vpack.c.b16 %v516, %v513
      %v589 = vpack.c.b16 %v517, %v514
      %v590 = vpack.c.b16 %v518, %v515
      %v591 = vpack.c.b16 %v522, %v519
      %v592 = vpack.c.b16 %v523, %v520
      %v593 = vpack.c.b16 %v524, %v521
      %v594 = vpack.c.b16 %v528, %v525
      %v595 = vpack.c.b16 %v529, %v526
      %v596 = vpack.c.b16 %v530, %v527
      %v597 = vpack.c.b16 %v534, %v531
      %v598 = vpack.c.b16 %v535, %v532
      %v599 = vpack.c.b16 %v536, %v533
      %v600 = vpack.c.b16 %v540, %v537
      %v601 = vpack.c.b16 %v541, %v538
      %v602 = vpack.c.b16 %v542, %v539
      %v603 = vpack.c.b16 %v546, %v543
      %v604 = vpack.c.b16 %v547, %v544
      %v605 = vpack.c.b16 %v548, %v545
      %v606 = vpack.c.b16 %v552, %v549
      %v607 = vpack.c.b16 %v553, %v550
      %v608 = vpack.c.b16 %v554, %v551
      %v609 = vpack.c.b16 %v558, %v555
      %v610 = vpack.c.b16 %v559, %v556
      %v611 = vpack.c.b16 %v560, %v557
      %v612 = vpack.c.b16 %v564, %v561
      %v613 = vpack.c.b16 %v565, %v562
      %v614 = vpack.c.b16 %v566, %v563
      %v711 = vunpack.c.l.b16 %v359
      %v712 = vunpack.c.l.b16 %v360
      %v713 = vunpack.c.l.b16 %v361
      %v714 = vunpack.c.l.b16 %v362
      %v715 = vunpack.c.l.b16 %v363
      %v716 = vunpack.c.l.b16 %v364
      %v717 = vunpack.c.l.b16 %v365
      %v718 = vunpack.c.l.b16 %v366
      %v719 = vunpack.c.l.b16 %v367
      %v720 = vunpack.c.l.b16 %v368
      %v721 = vunpack.c.l.b16 %v369
      %v722 = vunpack.c.l.b16 %v370
      %v723 = vunpack.c.l.b16 %v371
      %v724 = vunpack.c.l.b16 %v372
      %v725 = vunpack.c.l.b16 %v373
      %v726 = vunpack.c.l.b16 %v374
      %v727 = vunpack.c.l.b16 %v375
      %v728 = vunpack.c.l.b16 %v376
      %v729 = vunpack.c.l.b16 %v377
      %v730 = vunpack.c.l.b16 %v378
      %v731 = vunpack.c.l.b16 %v379
      %v732 = vunpack.c.l.b16 %v380
      %v733 = vunpack.c.l.b16 %v381
      %v734 = vunpack.c.l.b16 %v382
      %v735 = vunpack.c.l.b16 %v383
      %v736 = vunpack.c.l.b16 %v384
      %v737 = vunpack.c.l.b16 %v385
      %v738 = vunpack.c.l.b16 %v386
      %v739 = vunpack.c.l.b16 %v387
      %v740 = vunpack.c.l.b16 %v388
      %v741 = vunpack.c.l.b16 %v389
      %v742 = vunpack.c.l.b16 %v390
      %v743 = vunpack.c.l.b16 %v391
      %v744 = vunpack.c.l.b16 %v392
      %v745 = vunpack.c.l.b16 %v393
      %v746 = vunpack.c.l.b16 %v394
      %v747 = vunpack.c.l.b16 %v395
      %v748 = vunpack.c.l.b16 %v396
      %v749 = vunpack.c.l.b16 %v397
      %v750 = vunpack.c.l.b16 %v398
      %v751 = vunpack.c.l.b16 %v399
      %v752 = vunpack.c.l.b16 %v400
      %v753 = vunpack.c.l.b16 %v401
      %v754 = vunpack.c.l.b16 %v402
      %v755 = vunpack.c.l.b16 %v403
      %v756 = vunpack.c.l.b16 %v404
      %v757 = vunpack.c.l.b16 %v405
      %v758 = vunpack.c.l.b16 %v406
      %v759 = vpack.c.b16 %v712, %v711
      %v760 = vpack.c.b16 %v714, %v713
      %v761 = vpack.c.b16 %v716, %v715
      %v762 = vpack.c.b16 %v718, %v717
      %v763 = vpack.c.b16 %v720, %v719
      %v764 = vpack.c.b16 %v722, %v721
      %v765 = vpack.c.b16 %v724, %v723
      %v766 = vpack.c.b16 %v726, %v725
      %v767 = vpack.c.b16 %v728, %v727
      %v768 = vpack.c.b16 %v730, %v729
      %v769 = vpack.c.b16 %v732, %v731
      %v770 = vpack.c.b16 %v734, %v733
      %v771 = vpack.c.b16 %v736, %v735
      %v772 = vpack.c.b16 %v738, %v737
      %v773 = vpack.c.b16 %v740, %v739
      %v774 = vpack.c.b16 %v742, %v741
      %v775 = vpack.c.b16 %v744, %v743
      %v776 = vpack.c.b16 %v746, %v745
      %v777 = vpack.c.b16 %v748, %v747
      %v778 = vpack.c.b16 %v750, %v749
      %v779 = vpack.c.b16 %v752, %v751
      %v780 = vpack.c.b16 %v754, %v753
      %v781 = vpack.c.b16 %v756, %v755
      %v782 = vpack.c.b16 %v758, %v757
      %807 = vmatprep.subr.bf16.mxu0 0
      %808 = vmatpush1.bf16.msra.mxu0 %v766
      %809 = vmatprep.subr.bf16.mxu0 0
      %810 = vmatpush1.bf16.msra.mxu0 %v765
      %811 = vmatprep.subr.bf16.mxu0 0
      %812 = vmatpush1.bf16.msra.mxu0 %v764
      %813 = vmatprep.subr.bf16.mxu0 0
      %814 = vmatpush1.bf16.msra.mxu0 %v763
      %815 = vmatprep.subr.bf16.mxu0 0
      %816 = vmatpush1.bf16.msra.mxu0 %v762
      %817 = vmatprep.subr.bf16.mxu0 0
      %818 = vmatpush1.bf16.msra.mxu0 %v761
      %819 = vmatprep.subr.bf16.mxu0 0
      %820 = vmatpush1.bf16.msra.mxu0 %v760
      %821 = vmatprep.subr.bf16.mxu0 0
      %822 = vmatpush1.bf16.msra.mxu0 %v759
      %823 = vmatprep.subr.bf16.mxu0 0
      %824 = vmatpush2.bf16.msra.mxu0 %v774
      %825 = vmatprep.subr.bf16.mxu0 0
      %826 = vmatpush2.bf16.msra.mxu0 %v773
      %827 = vmatprep.subr.bf16.mxu0 0
      %828 = vmatpush2.bf16.msra.mxu0 %v772
      %829 = vmatprep.subr.bf16.mxu0 0
      %830 = vmatpush2.bf16.msra.mxu0 %v771
      %831 = vmatprep.subr.bf16.mxu0 0
      %832 = vmatpush2.bf16.msra.mxu0 %v770
      %833 = vmatprep.subr.bf16.mxu0 0
      %834 = vmatpush2.bf16.msra.mxu0 %v769
      %835 = vmatprep.subr.bf16.mxu0 0
      %836 = vmatpush2.bf16.msra.mxu0 %v768
      %837 = vmatprep.subr.bf16.mxu0 0
      %838 = vmatpush2.bf16.msra.mxu0 %v767
      %839 = vmatprep.mubr.bf16.mxu0 %v568
      %840 = vmatmul.mubr.bf16.gmra.mxu0 %v567
      %v841 = vpop.f32.mrf.mxu0
      %v842 = vadd.f32 0.0, %v841
      %v843 = vpop.f32.mrf.mxu0
      %v844 = vpop.f32.mrf.mxu0
      %v845 = vadd.f32 0.0, %v844
      %v846 = vpop.f32.mrf.mxu0
      %847 = vmatprep.mubr.bf16.mxu0 %v571
      %848 = vmatmul.mubr.bf16.gmra.mxu0 %v570
      %v849 = vpop.f32.mrf.mxu0
      %v850 = vadd.f32 0.0, %v849
      %v851 = vpop.f32.mrf.mxu0
      %v852 = vpop.f32.mrf.mxu0
      %v853 = vadd.f32 0.0, %v852
      %v854 = vpop.f32.mrf.mxu0
      %855 = vmatprep.mubr.bf16.mxu0 %v574
      %856 = vmatmul.mubr.bf16.gmra.mxu0 %v573
      %v857 = vpop.f32.mrf.mxu0
      %v858 = vadd.f32 0.0, %v857
      %v859 = vpop.f32.mrf.mxu0
      %v860 = vpop.f32.mrf.mxu0
      %v861 = vadd.f32 0.0, %v860
      %v862 = vpop.f32.mrf.mxu0
      %863 = vmatprep.mubr.bf16.mxu0 %v577
      %864 = vmatmul.mubr.bf16.gmra.mxu0 %v576
      %v865 = vpop.f32.mrf.mxu0
      %v866 = vadd.f32 0.0, %v865
      %v867 = vpop.f32.mrf.mxu0
      %v868 = vpop.f32.mrf.mxu0
      %v869 = vadd.f32 0.0, %v868
      %v870 = vpop.f32.mrf.mxu0
      %871 = vmatprep.mubr.bf16.mxu0 %v580
      %872 = vmatmul.mubr.bf16.gmra.mxu0 %v579
      %v873 = vpop.f32.mrf.mxu0
      %v874 = vadd.f32 0.0, %v873
      %v875 = vpop.f32.mrf.mxu0
      %v876 = vpop.f32.mrf.mxu0
      %v877 = vadd.f32 0.0, %v876
      %v878 = vpop.f32.mrf.mxu0
      %879 = vmatprep.mubr.bf16.mxu0 %v583
      %880 = vmatmul.mubr.bf16.gmra.mxu0 %v582
      %v881 = vpop.f32.mrf.mxu0
      %v882 = vadd.f32 0.0, %v881
      %v883 = vpop.f32.mrf.mxu0
      %v884 = vpop.f32.mrf.mxu0
      %v885 = vadd.f32 0.0, %v884
      %v886 = vpop.f32.mrf.mxu0
      %887 = vmatprep.mubr.bf16.mxu0 %v586
      %888 = vmatmul.mubr.bf16.gmra.mxu0 %v585
      %v889 = vpop.f32.mrf.mxu0
      %v890 = vadd.f32 0.0, %v889
      %v891 = vpop.f32.mrf.mxu0
      %v892 = vpop.f32.mrf.mxu0
      %v893 = vadd.f32 0.0, %v892
      %v894 = vpop.f32.mrf.mxu0
      %895 = vmatprep.mubr.bf16.mxu0 %v589
      %896 = vmatmul.mubr.bf16.gmra.mxu0 %v588
      %v897 = vpop.f32.mrf.mxu0
      %v898 = vadd.f32 0.0, %v897
      %v899 = vpop.f32.mrf.mxu0
      %v900 = vpop.f32.mrf.mxu0
      %v901 = vadd.f32 0.0, %v900
      %v902 = vpop.f32.mrf.mxu0
      %903 = vmatprep.mubr.bf16.mxu0 %v592
      %904 = vmatmul.mubr.bf16.gmra.mxu0 %v591
      %v905 = vpop.f32.mrf.mxu0
      %v906 = vadd.f32 0.0, %v905
      %v907 = vpop.f32.mrf.mxu0
      %v908 = vpop.f32.mrf.mxu0
      %v909 = vadd.f32 0.0, %v908
      %v910 = vpop.f32.mrf.mxu0
      %911 = vmatprep.mubr.bf16.mxu0 %v595
      %912 = vmatmul.mubr.bf16.gmra.mxu0 %v594
      %v913 = vpop.f32.mrf.mxu0
      %v914 = vadd.f32 0.0, %v913
      %v915 = vpop.f32.mrf.mxu0
      %v916 = vpop.f32.mrf.mxu0
      %v917 = vadd.f32 0.0, %v916
      %v918 = vpop.f32.mrf.mxu0
      %919 = vmatprep.mubr.bf16.mxu0 %v598
      %920 = vmatmul.mubr.bf16.gmra.mxu0 %v597
      %v921 = vpop.f32.mrf.mxu0
      %v922 = vadd.f32 0.0, %v921
      %v923 = vpop.f32.mrf.mxu0
      %v924 = vpop.f32.mrf.mxu0
      %v925 = vadd.f32 0.0, %v924
      %v926 = vpop.f32.mrf.mxu0
      %927 = vmatprep.mubr.bf16.mxu0 %v601
      %928 = vmatmul.mubr.bf16.gmra.mxu0 %v600
      %v929 = vpop.f32.mrf.mxu0
      %v930 = vadd.f32 0.0, %v929
      %v931 = vpop.f32.mrf.mxu0
      %v932 = vpop.f32.mrf.mxu0
      %v933 = vadd.f32 0.0, %v932
      %v934 = vpop.f32.mrf.mxu0
      %935 = vmatprep.mubr.bf16.mxu0 %v604
      %936 = vmatmul.mubr.bf16.gmra.mxu0 %v603
      %v937 = vpop.f32.mrf.mxu0
      %v938 = vadd.f32 0.0, %v937
      %v939 = vpop.f32.mrf.mxu0
      %v940 = vpop.f32.mrf.mxu0
      %v941 = vadd.f32 0.0, %v940
      %v942 = vpop.f32.mrf.mxu0
      %943 = vmatprep.mubr.bf16.mxu0 %v607
      %944 = vmatmul.mubr.bf16.gmra.mxu0 %v606
      %v945 = vpop.f32.mrf.mxu0
      %v946 = vadd.f32 0.0, %v945
      %v947 = vpop.f32.mrf.mxu0
      %v948 = vpop.f32.mrf.mxu0
      %v949 = vadd.f32 0.0, %v948
      %v950 = vpop.f32.mrf.mxu0
      %951 = vmatprep.mubr.bf16.mxu0 %v610
      %952 = vmatmul.mubr.bf16.gmra.mxu0 %v609
      %v953 = vpop.f32.mrf.mxu0
      %v954 = vadd.f32 0.0, %v953
      %v955 = vpop.f32.mrf.mxu0
      %v956 = vpop.f32.mrf.mxu0
      %v957 = vadd.f32 0.0, %v956
      %v958 = vpop.f32.mrf.mxu0
      %959 = vmatprep.mubr.bf16.mxu0 %v613
      %960 = vmatmul.mubr.bf16.gmra.mxu0 %v612
      %v961 = vpop.f32.mrf.mxu0
      %v962 = vadd.f32 0.0, %v961
      %v963 = vpop.f32.mrf.mxu0
      %v964 = vpop.f32.mrf.mxu0
      %v965 = vadd.f32 0.0, %v964
      %v966 = vpop.f32.mrf.mxu0
      %967 = vdwg.mxu0
      %968 = vmatprep.subr.bf16.mxu0 0
      %969 = vmatpush1.bf16.msra.mxu0 %v782
      %970 = vmatprep.subr.bf16.mxu0 0
      %971 = vmatpush1.bf16.msra.mxu0 %v781
      %972 = vmatprep.subr.bf16.mxu0 0
      %973 = vmatpush1.bf16.msra.mxu0 %v780
      %974 = vmatprep.subr.bf16.mxu0 0
      %975 = vmatpush1.bf16.msra.mxu0 %v779
      %976 = vmatprep.subr.bf16.mxu0 0
      %977 = vmatpush1.bf16.msra.mxu0 %v778
      %978 = vmatprep.subr.bf16.mxu0 0
      %979 = vmatpush1.bf16.msra.mxu0 %v777
      %980 = vmatprep.subr.bf16.mxu0 0
      %981 = vmatpush1.bf16.msra.mxu0 %v776
      %982 = vmatprep.subr.bf16.mxu0 0
      %983 = vmatpush1.bf16.msra.mxu0 %v775
      %984 = vmatprep.subr.bf16.mxu0 0
      %985 = vmatpush2.bf16.msra.mxu0 0
      %986 = vmatprep.subr.bf16.mxu0 0
      %987 = vmatpush2.bf16.msra.mxu0 0
      %988 = vmatprep.subr.bf16.mxu0 0
      %989 = vmatpush2.bf16.msra.mxu0 0
      %990 = vmatprep.subr.bf16.mxu0 0
      %991 = vmatpush2.bf16.msra.mxu0 0
      %992 = vmatprep.subr.bf16.mxu0 0
      %993 = vmatpush2.bf16.msra.mxu0 0
      %994 = vmatprep.subr.bf16.mxu0 0
      %995 = vmatpush2.bf16.msra.mxu0 0
      %996 = vmatprep.subr.bf16.mxu0 0
      %997 = vmatpush2.bf16.msra.mxu0 0
      %998 = vmatprep.subr.bf16.mxu0 0
      %999 = vmatpush2.bf16.msra.mxu0 0
      %1000 = vmatprep.mubr.bf16.mxu0 0
      %1001 = vmatmul.mubr.bf16.gmra.mxu0 %v569
      %v1002 = vpop.f32.mrf.mxu0
      %v1003 = vadd.f32 %v842, %v1002
      %v1004 = vpop.f32.mrf.mxu0
      %v1005 = vpop.f32.mrf.mxu0
      %v1006 = vadd.f32 %v845, %v1005
      %v1007 = vpop.f32.mrf.mxu0
      %1008 = vmatprep.mubr.bf16.mxu0 0
      %1009 = vmatmul.mubr.bf16.gmra.mxu0 %v572
      %v1010 = vpop.f32.mrf.mxu0
      %v1011 = vadd.f32 %v850, %v1010
      %v1012 = vpop.f32.mrf.mxu0
      %v1013 = vpop.f32.mrf.mxu0
      %v1014 = vadd.f32 %v853, %v1013
      %v1015 = vpop.f32.mrf.mxu0
      %1016 = vmatprep.mubr.bf16.mxu0 0
      %1017 = vmatmul.mubr.bf16.gmra.mxu0 %v575
      %v1018 = vpop.f32.mrf.mxu0
      %v1019 = vadd.f32 %v858, %v1018
      %v1020 = vpop.f32.mrf.mxu0
      %v1021 = vpop.f32.mrf.mxu0
      %v1022 = vadd.f32 %v861, %v1021
      %v1023 = vpop.f32.mrf.mxu0
      %1024 = vmatprep.mubr.bf16.mxu0 0
      %1025 = vmatmul.mubr.bf16.gmra.mxu0 %v578
      %v1026 = vpop.f32.mrf.mxu0
      %v1027 = vadd.f32 %v866, %v1026
      %v1028 = vpop.f32.mrf.mxu0
      %v1029 = vpop.f32.mrf.mxu0
      %v1030 = vadd.f32 %v869, %v1029
      %v1031 = vpop.f32.mrf.mxu0
      %1032 = vmatprep.mubr.bf16.mxu0 0
      %1033 = vmatmul.mubr.bf16.gmra.mxu0 %v581
      %v1034 = vpop.f32.mrf.mxu0
      %v1035 = vadd.f32 %v874, %v1034
      %v1036 = vpop.f32.mrf.mxu0
      %v1037 = vpop.f32.mrf.mxu0
      %v1038 = vadd.f32 %v877, %v1037
      %v1039 = vpop.f32.mrf.mxu0
      %1040 = vmatprep.mubr.bf16.mxu0 0
      %1041 = vmatmul.mubr.bf16.gmra.mxu0 %v584
      %v1042 = vpop.f32.mrf.mxu0
      %v1043 = vadd.f32 %v882, %v1042
      %v1044 = vpop.f32.mrf.mxu0
      %v1045 = vpop.f32.mrf.mxu0
      %v1046 = vadd.f32 %v885, %v1045
      %v1047 = vpop.f32.mrf.mxu0
      %1048 = vmatprep.mubr.bf16.mxu0 0
      %1049 = vmatmul.mubr.bf16.gmra.mxu0 %v587
      %v1050 = vpop.f32.mrf.mxu0
      %v1051 = vadd.f32 %v890, %v1050
      %v1052 = vpop.f32.mrf.mxu0
      %v1053 = vpop.f32.mrf.mxu0
      %v1054 = vadd.f32 %v893, %v1053
      %v1055 = vpop.f32.mrf.mxu0
      %1056 = vmatprep.mubr.bf16.mxu0 0
      %1057 = vmatmul.mubr.bf16.gmra.mxu0 %v590
      %v1058 = vpop.f32.mrf.mxu0
      %v1059 = vadd.f32 %v898, %v1058
      %v1060 = vpop.f32.mrf.mxu0
      %v1061 = vpop.f32.mrf.mxu0
      %v1062 = vadd.f32 %v901, %v1061
      %v1063 = vpop.f32.mrf.mxu0
      %1064 = vmatprep.mubr.bf16.mxu0 0
      %1065 = vmatmul.mubr.bf16.gmra.mxu0 %v593
      %v1066 = vpop.f32.mrf.mxu0
      %v1067 = vadd.f32 %v906, %v1066
      %v1068 = vpop.f32.mrf.mxu0
      %v1069 = vpop.f32.mrf.mxu0
      %v1070 = vadd.f32 %v909, %v1069
      %v1071 = vpop.f32.mrf.mxu0
      %1072 = vmatprep.mubr.bf16.mxu0 0
      %1073 = vmatmul.mubr.bf16.gmra.mxu0 %v596
      %v1074 = vpop.f32.mrf.mxu0
      %v1075 = vadd.f32 %v914, %v1074
      %v1076 = vpop.f32.mrf.mxu0
      %v1077 = vpop.f32.mrf.mxu0
      %v1078 = vadd.f32 %v917, %v1077
      %v1079 = vpop.f32.mrf.mxu0
      %1080 = vmatprep.mubr.bf16.mxu0 0
      %1081 = vmatmul.mubr.bf16.gmra.mxu0 %v599
      %v1082 = vpop.f32.mrf.mxu0
      %v1083 = vadd.f32 %v922, %v1082
      %v1084 = vpop.f32.mrf.mxu0
      %v1085 = vpop.f32.mrf.mxu0
      %v1086 = vadd.f32 %v925, %v1085
      %v1087 = vpop.f32.mrf.mxu0
      %1088 = vmatprep.mubr.bf16.mxu0 0
      %1089 = vmatmul.mubr.bf16.gmra.mxu0 %v602
      %v1090 = vpop.f32.mrf.mxu0
      %v1091 = vadd.f32 %v930, %v1090
      %v1092 = vpop.f32.mrf.mxu0
      %v1093 = vpop.f32.mrf.mxu0
      %v1094 = vadd.f32 %v933, %v1093
      %v1095 = vpop.f32.mrf.mxu0
      %1096 = vmatprep.mubr.bf16.mxu0 0
      %1097 = vmatmul.mubr.bf16.gmra.mxu0 %v605
      %v1098 = vpop.f32.mrf.mxu0
      %v1099 = vadd.f32 %v938, %v1098
      %v1100 = vpop.f32.mrf.mxu0
      %v1101 = vpop.f32.mrf.mxu0
      %v1102 = vadd.f32 %v941, %v1101
      %v1103 = vpop.f32.mrf.mxu0
      %1104 = vmatprep.mubr.bf16.mxu0 0
      %1105 = vmatmul.mubr.bf16.gmra.mxu0 %v608
      %v1106 = vpop.f32.mrf.mxu0
      %v1107 = vadd.f32 %v946, %v1106
      %v1108 = vpop.f32.mrf.mxu0
      %v1109 = vpop.f32.mrf.mxu0
      %v1110 = vadd.f32 %v949, %v1109
      %v1111 = vpop.f32.mrf.mxu0
      %1112 = vmatprep.mubr.bf16.mxu0 0
      %1113 = vmatmul.mubr.bf16.gmra.mxu0 %v611
      %v1114 = vpop.f32.mrf.mxu0
      %v1115 = vadd.f32 %v954, %v1114
      %v1116 = vpop.f32.mrf.mxu0
      %v1117 = vpop.f32.mrf.mxu0
      %v1118 = vadd.f32 %v957, %v1117
      %v1119 = vpop.f32.mrf.mxu0
      %1120 = vmatprep.mubr.bf16.mxu0 0
      %1121 = vmatmul.mubr.bf16.gmra.mxu0 %v614
      %v1122 = vpop.f32.mrf.mxu0
      %v1123 = vadd.f32 %v962, %v1122
      %v1124 = vpop.f32.mrf.mxu0
      %v1125 = vpop.f32.mrf.mxu0
      %v1126 = vadd.f32 %v965, %v1125
      %v1127 = vpop.f32.mrf.mxu0
      %1128 = vdwg.mxu0
      %v1133 = vunpack.c.l.b16 %v242
      %v1134 = vunpack.c.h.b16 %v242
      %v1135 = vunpack.c.l.b16 %v243
      %v1136 = vunpack.c.l.b16 %v244
      %v1137 = vunpack.c.h.b16 %v244
      %v1138 = vunpack.c.l.b16 %v245
      %v1139 = vpack.c.b16 %v1136, %v1133
      %v1140 = vpack.c.b16 %v1137, %v1134
      %v1141 = vpack.c.b16 %v1138, %v1135
      %v1193 = vunpack.c.l.b16 %v306
      %v1194 = vunpack.c.l.b16 %v307
      %v1195 = vunpack.c.l.b16 %v308
      %v1196 = vunpack.c.l.b16 %v309
      %v1197 = vunpack.c.l.b16 %v310
      %v1198 = vunpack.c.l.b16 %v311
      %v1199 = vunpack.c.l.b16 %v312
      %v1200 = vunpack.c.l.b16 %v313
      %v1201 = vunpack.c.l.b16 %v314
      %v1202 = vunpack.c.l.b16 %v315
      %v1203 = vunpack.c.l.b16 %v316
      %v1204 = vunpack.c.l.b16 %v317
      %v1205 = vunpack.c.l.b16 %v318
      %v1206 = vunpack.c.l.b16 %v319
      %v1207 = vunpack.c.l.b16 %v320
      %v1208 = vunpack.c.l.b16 %v321
      %v1209 = vunpack.c.l.b16 %v322
      %v1210 = vunpack.c.l.b16 %v323
      %v1211 = vunpack.c.l.b16 %v324
      %v1212 = vunpack.c.l.b16 %v325
      %v1213 = vunpack.c.l.b16 %v326
      %v1214 = vunpack.c.l.b16 %v327
      %v1215 = vunpack.c.l.b16 %v328
      %v1216 = vunpack.c.l.b16 %v329
      %v1217 = vunpack.c.l.b16 %v330
      %v1218 = vunpack.c.l.b16 %v331
      %v1219 = vunpack.c.l.b16 %v332
      %v1220 = vunpack.c.l.b16 %v333
      %v1221 = vunpack.c.l.b16 %v334
      %v1222 = vunpack.c.l.b16 %v335
      %v1223 = vunpack.c.l.b16 %v336
      %v1224 = vunpack.c.l.b16 %v337
      %v1225 = vunpack.c.l.b16 %v338
      %v1226 = vunpack.c.l.b16 %v339
      %v1227 = vunpack.c.l.b16 %v340
      %v1228 = vunpack.c.l.b16 %v341
      %v1229 = vunpack.c.l.b16 %v342
      %v1230 = vunpack.c.l.b16 %v343
      %v1231 = vunpack.c.l.b16 %v344
      %v1232 = vunpack.c.l.b16 %v345
      %v1233 = vunpack.c.l.b16 %v346
      %v1234 = vunpack.c.l.b16 %v347
      %v1235 = vunpack.c.l.b16 %v348
      %v1236 = vunpack.c.l.b16 %v349
      %v1237 = vunpack.c.l.b16 %v350
      %v1238 = vunpack.c.l.b16 %v351
      %v1239 = vunpack.c.l.b16 %v352
      %v1240 = vunpack.c.l.b16 %v353
      %v1241 = vpack.c.b16 %v1194, %v1193
      %v1242 = vpack.c.b16 %v1196, %v1195
      %v1243 = vpack.c.b16 %v1198, %v1197
      %v1244 = vpack.c.b16 %v1200, %v1199
      %v1245 = vpack.c.b16 %v1202, %v1201
      %v1246 = vpack.c.b16 %v1204, %v1203
      %v1247 = vpack.c.b16 %v1206, %v1205
      %v1248 = vpack.c.b16 %v1208, %v1207
      %v1249 = vpack.c.b16 %v1210, %v1209
      %v1250 = vpack.c.b16 %v1212, %v1211
      %v1251 = vpack.c.b16 %v1214, %v1213
      %v1252 = vpack.c.b16 %v1216, %v1215
      %v1253 = vpack.c.b16 %v1218, %v1217
      %v1254 = vpack.c.b16 %v1220, %v1219
      %v1255 = vpack.c.b16 %v1222, %v1221
      %v1256 = vpack.c.b16 %v1224, %v1223
      %v1257 = vpack.c.b16 %v1226, %v1225
      %v1258 = vpack.c.b16 %v1228, %v1227
      %v1259 = vpack.c.b16 %v1230, %v1229
      %v1260 = vpack.c.b16 %v1232, %v1231
      %v1261 = vpack.c.b16 %v1234, %v1233
      %v1262 = vpack.c.b16 %v1236, %v1235
      %v1263 = vpack.c.b16 %v1238, %v1237
      %v1264 = vpack.c.b16 %v1240, %v1239
      %1289 = vmatprep.subr.bf16.mxu0 0
      %1290 = vmatpush1.bf16.msra.mxu0 %v1248
      %1291 = vmatprep.subr.bf16.mxu0 0
      %1292 = vmatpush1.bf16.msra.mxu0 %v1247
      %1293 = vmatprep.subr.bf16.mxu0 0
      %1294 = vmatpush1.bf16.msra.mxu0 %v1246
      %1295 = vmatprep.subr.bf16.mxu0 0
      %1296 = vmatpush1.bf16.msra.mxu0 %v1245
      %1297 = vmatprep.subr.bf16.mxu0 0
      %1298 = vmatpush1.bf16.msra.mxu0 %v1244
      %1299 = vmatprep.subr.bf16.mxu0 0
      %1300 = vmatpush1.bf16.msra.mxu0 %v1243
      %1301 = vmatprep.subr.bf16.mxu0 0
      %1302 = vmatpush1.bf16.msra.mxu0 %v1242
      %1303 = vmatprep.subr.bf16.mxu0 0
      %1304 = vmatpush1.bf16.msra.mxu0 %v1241
      %1305 = vmatprep.subr.bf16.mxu0 0
      %1306 = vmatpush2.bf16.msra.mxu0 %v1256
      %1307 = vmatprep.subr.bf16.mxu0 0
      %1308 = vmatpush2.bf16.msra.mxu0 %v1255
      %1309 = vmatprep.subr.bf16.mxu0 0
      %1310 = vmatpush2.bf16.msra.mxu0 %v1254
      %1311 = vmatprep.subr.bf16.mxu0 0
      %1312 = vmatpush2.bf16.msra.mxu0 %v1253
      %1313 = vmatprep.subr.bf16.mxu0 0
      %1314 = vmatpush2.bf16.msra.mxu0 %v1252
      %1315 = vmatprep.subr.bf16.mxu0 0
      %1316 = vmatpush2.bf16.msra.mxu0 %v1251
      %1317 = vmatprep.subr.bf16.mxu0 0
      %1318 = vmatpush2.bf16.msra.mxu0 %v1250
      %1319 = vmatprep.subr.bf16.mxu0 0
      %1320 = vmatpush2.bf16.msra.mxu0 %v1249
      %1321 = vmatprep.mubr.bf16.mxu0 %v1140
      %1322 = vmatmul.mubr.bf16.gmra.mxu0 %v1139
      %v1323 = vpop.f32.mrf.mxu0
      %v1324 = vadd.f32 %v1003, %v1323
      %v1325 = vpop.f32.mrf.mxu0
      %v1326 = vpop.f32.mrf.mxu0
      %v1327 = vadd.f32 %v1006, %v1326
      %v1328 = vpop.f32.mrf.mxu0
      %1329 = vmatprep.mubr.bf16.mxu0 %v568
      %1330 = vmatmul.mubr.bf16.gmra.mxu0 %v567
      %v1331 = vpop.f32.mrf.mxu0
      %v1332 = vadd.f32 %v1011, %v1331
      %v1333 = vpop.f32.mrf.mxu0
      %v1334 = vpop.f32.mrf.mxu0
      %v1335 = vadd.f32 %v1014, %v1334
      %v1336 = vpop.f32.mrf.mxu0
      %1337 = vmatprep.mubr.bf16.mxu0 %v571
      %1338 = vmatmul.mubr.bf16.gmra.mxu0 %v570
      %v1339 = vpop.f32.mrf.mxu0
      %v1340 = vadd.f32 %v1019, %v1339
      %v1341 = vpop.f32.mrf.mxu0
      %v1342 = vpop.f32.mrf.mxu0
      %v1343 = vadd.f32 %v1022, %v1342
      %v1344 = vpop.f32.mrf.mxu0
      %1345 = vmatprep.mubr.bf16.mxu0 %v574
      %1346 = vmatmul.mubr.bf16.gmra.mxu0 %v573
      %v1347 = vpop.f32.mrf.mxu0
      %v1348 = vadd.f32 %v1027, %v1347
      %v1349 = vpop.f32.mrf.mxu0
      %v1350 = vpop.f32.mrf.mxu0
      %v1351 = vadd.f32 %v1030, %v1350
      %v1352 = vpop.f32.mrf.mxu0
      %1353 = vmatprep.mubr.bf16.mxu0 %v577
      %1354 = vmatmul.mubr.bf16.gmra.mxu0 %v576
      %v1355 = vpop.f32.mrf.mxu0
      %v1356 = vadd.f32 %v1035, %v1355
      %v1357 = vpop.f32.mrf.mxu0
      %v1358 = vpop.f32.mrf.mxu0
      %v1359 = vadd.f32 %v1038, %v1358
      %v1360 = vpop.f32.mrf.mxu0
      %1361 = vmatprep.mubr.bf16.mxu0 %v580
      %1362 = vmatmul.mubr.bf16.gmra.mxu0 %v579
      %v1363 = vpop.f32.mrf.mxu0
      %v1364 = vadd.f32 %v1043, %v1363
      %v1365 = vpop.f32.mrf.mxu0
      %v1366 = vpop.f32.mrf.mxu0
      %v1367 = vadd.f32 %v1046, %v1366
      %v1368 = vpop.f32.mrf.mxu0
      %1369 = vmatprep.mubr.bf16.mxu0 %v583
      %1370 = vmatmul.mubr.bf16.gmra.mxu0 %v582
      %v1371 = vpop.f32.mrf.mxu0
      %v1372 = vadd.f32 %v1051, %v1371
      %v1373 = vpop.f32.mrf.mxu0
      %v1374 = vpop.f32.mrf.mxu0
      %v1375 = vadd.f32 %v1054, %v1374
      %v1376 = vpop.f32.mrf.mxu0
      %1377 = vmatprep.mubr.bf16.mxu0 %v586
      %1378 = vmatmul.mubr.bf16.gmra.mxu0 %v585
      %v1379 = vpop.f32.mrf.mxu0
      %v1380 = vadd.f32 %v1059, %v1379
      %v1381 = vpop.f32.mrf.mxu0
      %v1382 = vpop.f32.mrf.mxu0
      %v1383 = vadd.f32 %v1062, %v1382
      %v1384 = vpop.f32.mrf.mxu0
      %1385 = vmatprep.mubr.bf16.mxu0 %v589
      %1386 = vmatmul.mubr.bf16.gmra.mxu0 %v588
      %v1387 = vpop.f32.mrf.mxu0
      %v1388 = vadd.f32 %v1067, %v1387
      %v1389 = vpop.f32.mrf.mxu0
      %v1390 = vpop.f32.mrf.mxu0
      %v1391 = vadd.f32 %v1070, %v1390
      %v1392 = vpop.f32.mrf.mxu0
      %1393 = vmatprep.mubr.bf16.mxu0 %v592
      %1394 = vmatmul.mubr.bf16.gmra.mxu0 %v591
      %v1395 = vpop.f32.mrf.mxu0
      %v1396 = vadd.f32 %v1075, %v1395
      %v1397 = vpop.f32.mrf.mxu0
      %v1398 = vpop.f32.mrf.mxu0
      %v1399 = vadd.f32 %v1078, %v1398
      %v1400 = vpop.f32.mrf.mxu0
      %1401 = vmatprep.mubr.bf16.mxu0 %v595
      %1402 = vmatmul.mubr.bf16.gmra.mxu0 %v594
      %v1403 = vpop.f32.mrf.mxu0
      %v1404 = vadd.f32 %v1083, %v1403
      %v1405 = vpop.f32.mrf.mxu0
      %v1406 = vpop.f32.mrf.mxu0
      %v1407 = vadd.f32 %v1086, %v1406
      %v1408 = vpop.f32.mrf.mxu0
      %1409 = vmatprep.mubr.bf16.mxu0 %v598
      %1410 = vmatmul.mubr.bf16.gmra.mxu0 %v597
      %v1411 = vpop.f32.mrf.mxu0
      %v1412 = vadd.f32 %v1091, %v1411
      %v1413 = vpop.f32.mrf.mxu0
      %v1414 = vpop.f32.mrf.mxu0
      %v1415 = vadd.f32 %v1094, %v1414
      %v1416 = vpop.f32.mrf.mxu0
      %1417 = vmatprep.mubr.bf16.mxu0 %v601
      %1418 = vmatmul.mubr.bf16.gmra.mxu0 %v600
      %v1419 = vpop.f32.mrf.mxu0
      %v1420 = vadd.f32 %v1099, %v1419
      %v1421 = vpop.f32.mrf.mxu0
      %v1422 = vpop.f32.mrf.mxu0
      %v1423 = vadd.f32 %v1102, %v1422
      %v1424 = vpop.f32.mrf.mxu0
      %1425 = vmatprep.mubr.bf16.mxu0 %v604
      %1426 = vmatmul.mubr.bf16.gmra.mxu0 %v603
      %v1427 = vpop.f32.mrf.mxu0
      %v1428 = vadd.f32 %v1107, %v1427
      %v1429 = vpop.f32.mrf.mxu0
      %v1430 = vpop.f32.mrf.mxu0
      %v1431 = vadd.f32 %v1110, %v1430
      %v1432 = vpop.f32.mrf.mxu0
      %1433 = vmatprep.mubr.bf16.mxu0 %v607
      %1434 = vmatmul.mubr.bf16.gmra.mxu0 %v606
      %v1435 = vpop.f32.mrf.mxu0
      %v1436 = vadd.f32 %v1115, %v1435
      %v1437 = vpop.f32.mrf.mxu0
      %v1438 = vpop.f32.mrf.mxu0
      %v1439 = vadd.f32 %v1118, %v1438
      %v1440 = vpop.f32.mrf.mxu0
      %1441 = vmatprep.mubr.bf16.mxu0 %v610
      %1442 = vmatmul.mubr.bf16.gmra.mxu0 %v609
      %v1443 = vpop.f32.mrf.mxu0
      %v1444 = vadd.f32 %v1123, %v1443
      %v1445 = vpop.f32.mrf.mxu0
      %v1446 = vpop.f32.mrf.mxu0
      %v1447 = vadd.f32 %v1126, %v1446
      %v1448 = vpop.f32.mrf.mxu0
      %1449 = vdwg.mxu0
      %1450 = vmatprep.subr.bf16.mxu0 0
      %1451 = vmatpush1.bf16.msra.mxu0 %v1264
      %1452 = vmatprep.subr.bf16.mxu0 0
      %1453 = vmatpush1.bf16.msra.mxu0 %v1263
      %1454 = vmatprep.subr.bf16.mxu0 0
      %1455 = vmatpush1.bf16.msra.mxu0 %v1262
      %1456 = vmatprep.subr.bf16.mxu0 0
      %1457 = vmatpush1.bf16.msra.mxu0 %v1261
      %1458 = vmatprep.subr.bf16.mxu0 0
      %1459 = vmatpush1.bf16.msra.mxu0 %v1260
      %1460 = vmatprep.subr.bf16.mxu0 0
      %1461 = vmatpush1.bf16.msra.mxu0 %v1259
      %1462 = vmatprep.subr.bf16.mxu0 0
      %1463 = vmatpush1.bf16.msra.mxu0 %v1258
      %1464 = vmatprep.subr.bf16.mxu0 0
      %1465 = vmatpush1.bf16.msra.mxu0 %v1257
      %1466 = vmatprep.subr.bf16.mxu0 0
      %1467 = vmatpush2.bf16.msra.mxu0 0
      %1468 = vmatprep.subr.bf16.mxu0 0
      %1469 = vmatpush2.bf16.msra.mxu0 0
      %1470 = vmatprep.subr.bf16.mxu0 0
      %1471 = vmatpush2.bf16.msra.mxu0 0
      %1472 = vmatprep.subr.bf16.mxu0 0
      %1473 = vmatpush2.bf16.msra.mxu0 0
      %1474 = vmatprep.subr.bf16.mxu0 0
      %1475 = vmatpush2.bf16.msra.mxu0 0
      %1476 = vmatprep.subr.bf16.mxu0 0
      %1477 = vmatpush2.bf16.msra.mxu0 0
      %1478 = vmatprep.subr.bf16.mxu0 0
      %1479 = vmatpush2.bf16.msra.mxu0 0
      %1480 = vmatprep.subr.bf16.mxu0 0
      %1481 = vmatpush2.bf16.msra.mxu0 0
      %1482 = vmatprep.mubr.bf16.mxu0 0
      %1483 = vmatmul.mubr.bf16.gmra.mxu0 %v1141
      %v1484 = vpop.f32.mrf.mxu0
      %v1485 = vadd.f32 %v1324, %v1484
      %v1486 = vpop.f32.mrf.mxu0
      %v1487 = vpop.f32.mrf.mxu0
      %v1488 = vadd.f32 %v1327, %v1487
      %v1489 = vpop.f32.mrf.mxu0
      %1490 = vmatprep.mubr.bf16.mxu0 0
      %1491 = vmatmul.mubr.bf16.gmra.mxu0 %v569
      %v1492 = vpop.f32.mrf.mxu0
      %v1493 = vadd.f32 %v1332, %v1492
      %v1494 = vpop.f32.mrf.mxu0
      %v1495 = vpop.f32.mrf.mxu0
      %v1496 = vadd.f32 %v1335, %v1495
      %v1497 = vpop.f32.mrf.mxu0
      %1498 = vmatprep.mubr.bf16.mxu0 0
      %1499 = vmatmul.mubr.bf16.gmra.mxu0 %v572
      %v1500 = vpop.f32.mrf.mxu0
      %v1501 = vadd.f32 %v1340, %v1500
      %v1502 = vpop.f32.mrf.mxu0
      %v1503 = vpop.f32.mrf.mxu0
      %v1504 = vadd.f32 %v1343, %v1503
      %v1505 = vpop.f32.mrf.mxu0
      %1506 = vmatprep.mubr.bf16.mxu0 0
      %1507 = vmatmul.mubr.bf16.gmra.mxu0 %v575
      %v1508 = vpop.f32.mrf.mxu0
      %v1509 = vadd.f32 %v1348, %v1508
      %v1510 = vpop.f32.mrf.mxu0
      %v1511 = vpop.f32.mrf.mxu0
      %v1512 = vadd.f32 %v1351, %v1511
      %v1513 = vpop.f32.mrf.mxu0
      %1514 = vmatprep.mubr.bf16.mxu0 0
      %1515 = vmatmul.mubr.bf16.gmra.mxu0 %v578
      %v1516 = vpop.f32.mrf.mxu0
      %v1517 = vadd.f32 %v1356, %v1516
      %v1518 = vpop.f32.mrf.mxu0
      %v1519 = vpop.f32.mrf.mxu0
      %v1520 = vadd.f32 %v1359, %v1519
      %v1521 = vpop.f32.mrf.mxu0
      %1522 = vmatprep.mubr.bf16.mxu0 0
      %1523 = vmatmul.mubr.bf16.gmra.mxu0 %v581
      %v1524 = vpop.f32.mrf.mxu0
      %v1525 = vadd.f32 %v1364, %v1524
      %v1526 = vpop.f32.mrf.mxu0
      %v1527 = vpop.f32.mrf.mxu0
      %v1528 = vadd.f32 %v1367, %v1527
      %v1529 = vpop.f32.mrf.mxu0
      %1530 = vmatprep.mubr.bf16.mxu0 0
      %1531 = vmatmul.mubr.bf16.gmra.mxu0 %v584
      %v1532 = vpop.f32.mrf.mxu0
      %v1533 = vadd.f32 %v1372, %v1532
      %v1534 = vpop.f32.mrf.mxu0
      %v1535 = vpop.f32.mrf.mxu0
      %v1536 = vadd.f32 %v1375, %v1535
      %v1537 = vpop.f32.mrf.mxu0
      %1538 = vmatprep.mubr.bf16.mxu0 0
      %1539 = vmatmul.mubr.bf16.gmra.mxu0 %v587
      %v1540 = vpop.f32.mrf.mxu0
      %v1541 = vadd.f32 %v1380, %v1540
      %v1542 = vpop.f32.mrf.mxu0
      %v1543 = vpop.f32.mrf.mxu0
      %v1544 = vadd.f32 %v1383, %v1543
      %v1545 = vpop.f32.mrf.mxu0
      %1546 = vmatprep.mubr.bf16.mxu0 0
      %1547 = vmatmul.mubr.bf16.gmra.mxu0 %v590
      %v1548 = vpop.f32.mrf.mxu0
      %v1549 = vadd.f32 %v1388, %v1548
      %v1550 = vpop.f32.mrf.mxu0
      %v1551 = vpop.f32.mrf.mxu0
      %v1552 = vadd.f32 %v1391, %v1551
      %v1553 = vpop.f32.mrf.mxu0
      %1554 = vmatprep.mubr.bf16.mxu0 0
      %1555 = vmatmul.mubr.bf16.gmra.mxu0 %v593
      %v1556 = vpop.f32.mrf.mxu0
      %v1557 = vadd.f32 %v1396, %v1556
      %v1558 = vpop.f32.mrf.mxu0
      %v1559 = vpop.f32.mrf.mxu0
      %v1560 = vadd.f32 %v1399, %v1559
      %v1561 = vpop.f32.mrf.mxu0
      %1562 = vmatprep.mubr.bf16.mxu0 0
      %1563 = vmatmul.mubr.bf16.gmra.mxu0 %v596
      %v1564 = vpop.f32.mrf.mxu0
      %v1565 = vadd.f32 %v1404, %v1564
      %v1566 = vpop.f32.mrf.mxu0
      %v1567 = vpop.f32.mrf.mxu0
      %v1568 = vadd.f32 %v1407, %v1567
      %v1569 = vpop.f32.mrf.mxu0
      %1570 = vmatprep.mubr.bf16.mxu0 0
      %1571 = vmatmul.mubr.bf16.gmra.mxu0 %v599
      %v1572 = vpop.f32.mrf.mxu0
      %v1573 = vadd.f32 %v1412, %v1572
      %v1574 = vpop.f32.mrf.mxu0
      %v1575 = vpop.f32.mrf.mxu0
      %v1576 = vadd.f32 %v1415, %v1575
      %v1577 = vpop.f32.mrf.mxu0
      %1578 = vmatprep.mubr.bf16.mxu0 0
      %1579 = vmatmul.mubr.bf16.gmra.mxu0 %v602
      %v1580 = vpop.f32.mrf.mxu0
      %v1581 = vadd.f32 %v1420, %v1580
      %v1582 = vpop.f32.mrf.mxu0
      %v1583 = vpop.f32.mrf.mxu0
      %v1584 = vadd.f32 %v1423, %v1583
      %v1585 = vpop.f32.mrf.mxu0
      %1586 = vmatprep.mubr.bf16.mxu0 0
      %1587 = vmatmul.mubr.bf16.gmra.mxu0 %v605
      %v1588 = vpop.f32.mrf.mxu0
      %v1589 = vadd.f32 %v1428, %v1588
      %v1590 = vpop.f32.mrf.mxu0
      %v1591 = vpop.f32.mrf.mxu0
      %v1592 = vadd.f32 %v1431, %v1591
      %v1593 = vpop.f32.mrf.mxu0
      %1594 = vmatprep.mubr.bf16.mxu0 0
      %1595 = vmatmul.mubr.bf16.gmra.mxu0 %v608
      %v1596 = vpop.f32.mrf.mxu0
      %v1597 = vadd.f32 %v1436, %v1596
      %v1598 = vpop.f32.mrf.mxu0
      %v1599 = vpop.f32.mrf.mxu0
      %v1600 = vadd.f32 %v1439, %v1599
      %v1601 = vpop.f32.mrf.mxu0
      %1602 = vmatprep.mubr.bf16.mxu0 0
      %1603 = vmatmul.mubr.bf16.gmra.mxu0 %v611
      %v1604 = vpop.f32.mrf.mxu0
      %v1605 = vadd.f32 %v1444, %v1604
      %v1606 = vpop.f32.mrf.mxu0
      %v1607 = vpop.f32.mrf.mxu0
      %v1608 = vadd.f32 %v1447, %v1607
      %v1609 = vpop.f32.mrf.mxu0
      %1610 = vdwg.mxu0
      %v1611 = vld [vmem:[%s223 + $0x30] sm:$0xff]
      %v1612 = vld [vmem:[%s223 + $0x38] sm:$0xf]
      %v1613 = vld [vmem:[%s223 + $0x3c] sm:$0xff]
      %v1614 = vld [vmem:[%s223 + $0x44] sm:$0xf]
      %v1615 = vld [vmem:[%s223 + $0x48] sm:$0xff]
      %v1616 = vld [vmem:[%s223 + $0x50] sm:$0xf]
      %v1617 = vld [vmem:[%s223 + $0x54] sm:$0xff]
      %v1618 = vld [vmem:[%s223 + $0x5c] sm:$0xf]
      %v1619 = vld [vmem:[%s223 + $0x60] sm:$0xff]
      %v1620 = vld [vmem:[%s223 + $0x68] sm:$0xf]
      %v1621 = vld [vmem:[%s223 + $0x6c] sm:$0xff]
      %v1622 = vld [vmem:[%s223 + $0x74] sm:$0xf]
      %v1623 = vld [vmem:[%s223 + $0x78] sm:$0xff]
      %v1624 = vld [vmem:[%s223 + $0x80] sm:$0xf]
      %v1625 = vld [vmem:[%s223 + $0x84] sm:$0xff]
      %v1626 = vld [vmem:[%s223 + $0x8c] sm:$0xf]
      %v1627 = vld [vmem:[%s223 + $0x90] sm:$0xff]
      %v1628 = vld [vmem:[%s223 + $0x98] sm:$0xf]
      %v1629 = vld [vmem:[%s223 + $0x9c] sm:$0xff]
      %v1630 = vld [vmem:[%s223 + $0xa4] sm:$0xf]
      %v1631 = vld [vmem:[%s223 + $0xa8] sm:$0xff]
      %v1632 = vld [vmem:[%s223 + $0xb0] sm:$0xf]
      %v1633 = vld [vmem:[%s223 + $0xb4] sm:$0xff]
      %v1634 = vld [vmem:[%s223 + $0xbc] sm:$0xf]
      %v1635 = vld [vmem:[%s223 + $0xc0] sm:$0xff]
      %v1636 = vld [vmem:[%s223 + $0xc8] sm:$0xf]
      %v1637 = vld [vmem:[%s223 + $0xcc] sm:$0xff]
      %v1638 = vld [vmem:[%s223 + $0xd4] sm:$0xf]
      %v1639 = vld [vmem:[%s223 + $0xd8] sm:$0xff]
      %v1640 = vld [vmem:[%s223 + $0xe0] sm:$0xf]
      %v1641 = vld [vmem:[%s223 + $0xe4] sm:$0xff]
      %v1642 = vld [vmem:[%s223 + $0xec] sm:$0xf]
      %v1643 = vld [vmem:[%s223 + $0xf0] sm:$0xff]
      %v1644 = vld [vmem:[%s223 + $0xf8] sm:$0xf]
      %v1645 = vld [vmem:[%s223 + $0xfc] sm:$0xff]
      %v1646 = vld [vmem:[%s223 + $0x104] sm:$0xf]
      %v1647 = vld [vmem:[%s223 + $0x108] sm:$0xff]
      %v1648 = vld [vmem:[%s223 + $0x110] sm:$0xf]
      %v1649 = vld [vmem:[%s223 + $0x114] sm:$0xff]
      %v1650 = vld [vmem:[%s223 + $0x11c] sm:$0xf]
      %v1651 = vld [vmem:[%s223 + $0x120] sm:$0xff]
      %v1652 = vld [vmem:[%s223 + $0x128] sm:$0xf]
      %v1653 = vld [vmem:[%s223 + $0x12c] sm:$0xff]
      %v1654 = vld [vmem:[%s223 + $0x134] sm:$0xf]
      %v1655 = vld [vmem:[%s223 + $0x138] sm:$0xff]
      %v1656 = vld [vmem:[%s223 + $0x140] sm:$0xf]
      %v1657 = vld [vmem:[%s223 + $0x144] sm:$0xff]
      %v1658 = vld [vmem:[%s223 + $0x14c] sm:$0xf]
      %v1659 = vld [vmem:[%s223 + $0x150] sm:$0xff]
      %v1660 = vld [vmem:[%s223 + $0x158] sm:$0xf]
      %v1661 = vld [vmem:[%s223 + $0x15c] sm:$0xff]
      %v1662 = vld [vmem:[%s223 + $0x164] sm:$0xf]
      %v1663 = vld [vmem:[%s223 + $0x168] sm:$0xff]
      %v1664 = vld [vmem:[%s223 + $0x170] sm:$0xf]
      %v1665 = vld [vmem:[%s223 + $0x174] sm:$0xff]
      %v1666 = vld [vmem:[%s223 + $0x17c] sm:$0xf]
      %v1667 = vld [vmem:[%s223 + $0x180] sm:$0xff]
      %v1668 = vld [vmem:[%s223 + $0x188] sm:$0xf]
      %v1669 = vld [vmem:[%s223 + $0x18c] sm:$0xff]
      %v1670 = vld [vmem:[%s223 + $0x194] sm:$0xf]
      %v1671 = vld [vmem:[%s223 + $0x198] sm:$0xff]
      %v1672 = vld [vmem:[%s223 + $0x1a0] sm:$0xf]
      %v1673 = vld [vmem:[%s223 + $0x1a4] sm:$0xff]
      %v1674 = vld [vmem:[%s223 + $0x1ac] sm:$0xf]
      %s1675 = scalar_lea.vmem %s228, 384
      %v1676 = vld [vmem:[%s1675] sm:$0xf]
      %v1677 = vld [vmem:[%s1675 + $0x4] sm:$0xf]
      %v1678 = vld [vmem:[%s1675 + $0x8] sm:$0xf]
      %v1679 = vld [vmem:[%s1675 + $0xc] sm:$0xf]
      %v1680 = vld [vmem:[%s1675 + $0x10] sm:$0xf]
      %v1681 = vld [vmem:[%s1675 + $0x14] sm:$0xf]
      %v1682 = vld [vmem:[%s1675 + $0x18] sm:$0xf]
      %v1683 = vld [vmem:[%s1675 + $0x1c] sm:$0xf]
      %v1684 = vld [vmem:[%s1675 + $0x20] sm:$0xf]
      %v1685 = vld [vmem:[%s1675 + $0x24] sm:$0xf]
      %v1686 = vld [vmem:[%s1675 + $0x28] sm:$0xf]
      %v1687 = vld [vmem:[%s1675 + $0x2c] sm:$0xf]
      %v1688 = vld [vmem:[%s1675 + $0x30] sm:$0xf]
      %v1689 = vld [vmem:[%s1675 + $0x34] sm:$0xf]
      %v1690 = vld [vmem:[%s1675 + $0x38] sm:$0xf]
      %v1691 = vld [vmem:[%s1675 + $0x3c] sm:$0xf]
      %v1692 = vld [vmem:[%s1675 + $0x40] sm:$0xf]
      %v1693 = vld [vmem:[%s1675 + $0x44] sm:$0xf]
      %v1694 = vld [vmem:[%s1675 + $0x48] sm:$0xf]
      %v1695 = vld [vmem:[%s1675 + $0x4c] sm:$0xf]
      %v1696 = vld [vmem:[%s1675 + $0x50] sm:$0xf]
      %v1697 = vld [vmem:[%s1675 + $0x54] sm:$0xf]
      %v1698 = vld [vmem:[%s1675 + $0x58] sm:$0xf]
      %v1699 = vld [vmem:[%s1675 + $0x5c] sm:$0xf]
      %v1700 = vld [vmem:[%s1675 + $0x60] sm:$0xf]
      %v1701 = vld [vmem:[%s1675 + $0x64] sm:$0xf]
      %v1702 = vld [vmem:[%s1675 + $0x68] sm:$0xf]
      %v1703 = vld [vmem:[%s1675 + $0x6c] sm:$0xf]
      %v1704 = vld [vmem:[%s1675 + $0x70] sm:$0xf]
      %v1705 = vld [vmem:[%s1675 + $0x74] sm:$0xf]
      %v1706 = vld [vmem:[%s1675 + $0x78] sm:$0xf]
      %v1707 = vld [vmem:[%s1675 + $0x7c] sm:$0xf]
      %v1708 = vld [vmem:[%s1675 + $0x80] sm:$0xf]
      %v1709 = vld [vmem:[%s1675 + $0x84] sm:$0xf]
      %v1710 = vld [vmem:[%s1675 + $0x88] sm:$0xf]
      %v1711 = vld [vmem:[%s1675 + $0x8c] sm:$0xf]
      %v1712 = vld [vmem:[%s1675 + $0x90] sm:$0xf]
      %v1713 = vld [vmem:[%s1675 + $0x94] sm:$0xf]
      %v1714 = vld [vmem:[%s1675 + $0x98] sm:$0xf]
      %v1715 = vld [vmem:[%s1675 + $0x9c] sm:$0xf]
      %v1716 = vld [vmem:[%s1675 + $0xa0] sm:$0xf]
      %v1717 = vld [vmem:[%s1675 + $0xa4] sm:$0xf]
      %v1718 = vld [vmem:[%s1675 + $0xa8] sm:$0xf]
      %v1719 = vld [vmem:[%s1675 + $0xac] sm:$0xf]
      %v1720 = vld [vmem:[%s1675 + $0xb0] sm:$0xf]
      %v1721 = vld [vmem:[%s1675 + $0xb4] sm:$0xf]
      %v1722 = vld [vmem:[%s1675 + $0xb8] sm:$0xf]
      %v1723 = vld [vmem:[%s1675 + $0xbc] sm:$0xf]
      %v1788 = vunpack.c.l.b16 %v1611
      %v1789 = vunpack.c.h.b16 %v1611
      %v1790 = vunpack.c.l.b16 %v1612
      %v1791 = vunpack.c.l.b16 %v1613
      %v1792 = vunpack.c.h.b16 %v1613
      %v1793 = vunpack.c.l.b16 %v1614
      %v1794 = vunpack.c.l.b16 %v1615
      %v1795 = vunpack.c.h.b16 %v1615
      %v1796 = vunpack.c.l.b16 %v1616
      %v1797 = vunpack.c.l.b16 %v1617
      %v1798 = vunpack.c.h.b16 %v1617
      %v1799 = vunpack.c.l.b16 %v1618
      %v1800 = vunpack.c.l.b16 %v1619
      %v1801 = vunpack.c.h.b16 %v1619
      %v1802 = vunpack.c.l.b16 %v1620
      %v1803 = vunpack.c.l.b16 %v1621
      %v1804 = vunpack.c.h.b16 %v1621
      %v1805 = vunpack.c.l.b16 %v1622
      %v1806 = vunpack.c.l.b16 %v1623
      %v1807 = vunpack.c.h.b16 %v1623
      %v1808 = vunpack.c.l.b16 %v1624
      %v1809 = vunpack.c.l.b16 %v1625
      %v1810 = vunpack.c.h.b16 %v1625
      %v1811 = vunpack.c.l.b16 %v1626
      %v1812 = vunpack.c.l.b16 %v1627
      %v1813 = vunpack.c.h.b16 %v1627
      %v1814 = vunpack.c.l.b16 %v1628
      %v1815 = vunpack.c.l.b16 %v1629
      %v1816 = vunpack.c.h.b16 %v1629
      %v1817 = vunpack.c.l.b16 %v1630
      %v1818 = vunpack.c.l.b16 %v1631
      %v1819 = vunpack.c.h.b16 %v1631
      %v1820 = vunpack.c.l.b16 %v1632
      %v1821 = vunpack.c.l.b16 %v1633
      %v1822 = vunpack.c.h.b16 %v1633
      %v1823 = vunpack.c.l.b16 %v1634
      %v1824 = vunpack.c.l.b16 %v1635
      %v1825 = vunpack.c.h.b16 %v1635
      %v1826 = vunpack.c.l.b16 %v1636
      %v1827 = vunpack.c.l.b16 %v1637
      %v1828 = vunpack.c.h.b16 %v1637
      %v1829 = vunpack.c.l.b16 %v1638
      %v1830 = vunpack.c.l.b16 %v1639
      %v1831 = vunpack.c.h.b16 %v1639
      %v1832 = vunpack.c.l.b16 %v1640
      %v1833 = vunpack.c.l.b16 %v1641
      %v1834 = vunpack.c.h.b16 %v1641
      %v1835 = vunpack.c.l.b16 %v1642
      %v1836 = vunpack.c.l.b16 %v1643
      %v1837 = vunpack.c.h.b16 %v1643
      %v1838 = vunpack.c.l.b16 %v1644
      %v1839 = vunpack.c.l.b16 %v1645
      %v1840 = vunpack.c.h.b16 %v1645
      %v1841 = vunpack.c.l.b16 %v1646
      %v1842 = vunpack.c.l.b16 %v1647
      %v1843 = vunpack.c.h.b16 %v1647
      %v1844 = vunpack.c.l.b16 %v1648
      %v1845 = vunpack.c.l.b16 %v1649
      %v1846 = vunpack.c.h.b16 %v1649
      %v1847 = vunpack.c.l.b16 %v1650
      %v1848 = vunpack.c.l.b16 %v1651
      %v1849 = vunpack.c.h.b16 %v1651
      %v1850 = vunpack.c.l.b16 %v1652
      %v1851 = vunpack.c.l.b16 %v1653
      %v1852 = vunpack.c.h.b16 %v1653
      %v1853 = vunpack.c.l.b16 %v1654
      %v1854 = vunpack.c.l.b16 %v1655
      %v1855 = vunpack.c.h.b16 %v1655
      %v1856 = vunpack.c.l.b16 %v1656
      %v1857 = vunpack.c.l.b16 %v1657
      %v1858 = vunpack.c.h.b16 %v1657
      %v1859 = vunpack.c.l.b16 %v1658
      %v1860 = vunpack.c.l.b16 %v1659
      %v1861 = vunpack.c.h.b16 %v1659
      %v1862 = vunpack.c.l.b16 %v1660
      %v1863 = vunpack.c.l.b16 %v1661
      %v1864 = vunpack.c.h.b16 %v1661
      %v1865 = vunpack.c.l.b16 %v1662
      %v1866 = vunpack.c.l.b16 %v1663
      %v1867 = vunpack.c.h.b16 %v1663
      %v1868 = vunpack.c.l.b16 %v1664
      %v1869 = vunpack.c.l.b16 %v1665
      %v1870 = vunpack.c.h.b16 %v1665
      %v1871 = vunpack.c.l.b16 %v1666
      %v1872 = vunpack.c.l.b16 %v1667
      %v1873 = vunpack.c.h.b16 %v1667
      %v1874 = vunpack.c.l.b16 %v1668
      %v1875 = vunpack.c.l.b16 %v1669
      %v1876 = vunpack.c.h.b16 %v1669
      %v1877 = vunpack.c.l.b16 %v1670
      %v1878 = vunpack.c.l.b16 %v1671
      %v1879 = vunpack.c.h.b16 %v1671
      %v1880 = vunpack.c.l.b16 %v1672
      %v1881 = vunpack.c.l.b16 %v1673
      %v1882 = vunpack.c.h.b16 %v1673
      %v1883 = vunpack.c.l.b16 %v1674
      %v1884 = vpack.c.b16 %v1791, %v1788
      %v1885 = vpack.c.b16 %v1792, %v1789
      %v1886 = vpack.c.b16 %v1793, %v1790
      %v1887 = vpack.c.b16 %v1797, %v1794
      %v1888 = vpack.c.b16 %v1798, %v1795
      %v1889 = vpack.c.b16 %v1799, %v1796
      %v1890 = vpack.c.b16 %v1803, %v1800
      %v1891 = vpack.c.b16 %v1804, %v1801
      %v1892 = vpack.c.b16 %v1805, %v1802
      %v1893 = vpack.c.b16 %v1809, %v1806
      %v1894 = vpack.c.b16 %v1810, %v1807
      %v1895 = vpack.c.b16 %v1811, %v1808
      %v1896 = vpack.c.b16 %v1815, %v1812
      %v1897 = vpack.c.b16 %v1816, %v1813
      %v1898 = vpack.c.b16 %v1817, %v1814
      %v1899 = vpack.c.b16 %v1821, %v1818
      %v1900 = vpack.c.b16 %v1822, %v1819
      %v1901 = vpack.c.b16 %v1823, %v1820
      %v1902 = vpack.c.b16 %v1827, %v1824
      %v1903 = vpack.c.b16 %v1828, %v1825
      %v1904 = vpack.c.b16 %v1829, %v1826
      %v1905 = vpack.c.b16 %v1833, %v1830
      %v1906 = vpack.c.b16 %v1834, %v1831
      %v1907 = vpack.c.b16 %v1835, %v1832
      %v1908 = vpack.c.b16 %v1839, %v1836
      %v1909 = vpack.c.b16 %v1840, %v1837
      %v1910 = vpack.c.b16 %v1841, %v1838
      %v1911 = vpack.c.b16 %v1845, %v1842
      %v1912 = vpack.c.b16 %v1846, %v1843
      %v1913 = vpack.c.b16 %v1847, %v1844
      %v1914 = vpack.c.b16 %v1851, %v1848
      %v1915 = vpack.c.b16 %v1852, %v1849
      %v1916 = vpack.c.b16 %v1853, %v1850
      %v1917 = vpack.c.b16 %v1857, %v1854
      %v1918 = vpack.c.b16 %v1858, %v1855
      %v1919 = vpack.c.b16 %v1859, %v1856
      %v1920 = vpack.c.b16 %v1863, %v1860
      %v1921 = vpack.c.b16 %v1864, %v1861
      %v1922 = vpack.c.b16 %v1865, %v1862
      %v1923 = vpack.c.b16 %v1869, %v1866
      %v1924 = vpack.c.b16 %v1870, %v1867
      %v1925 = vpack.c.b16 %v1871, %v1868
      %v1926 = vpack.c.b16 %v1875, %v1872
      %v1927 = vpack.c.b16 %v1876, %v1873
      %v1928 = vpack.c.b16 %v1877, %v1874
      %v1929 = vpack.c.b16 %v1881, %v1878
      %v1930 = vpack.c.b16 %v1882, %v1879
      %v1931 = vpack.c.b16 %v1883, %v1880
      %v2028 = vunpack.c.l.b16 %v1676
      %v2029 = vunpack.c.l.b16 %v1677
      %v2030 = vunpack.c.l.b16 %v1678
      %v2031 = vunpack.c.l.b16 %v1679
      %v2032 = vunpack.c.l.b16 %v1680
      %v2033 = vunpack.c.l.b16 %v1681
      %v2034 = vunpack.c.l.b16 %v1682
      %v2035 = vunpack.c.l.b16 %v1683
      %v2036 = vunpack.c.l.b16 %v1684
      %v2037 = vunpack.c.l.b16 %v1685
      %v2038 = vunpack.c.l.b16 %v1686
      %v2039 = vunpack.c.l.b16 %v1687
      %v2040 = vunpack.c.l.b16 %v1688
      %v2041 = vunpack.c.l.b16 %v1689
      %v2042 = vunpack.c.l.b16 %v1690
      %v2043 = vunpack.c.l.b16 %v1691
      %v2044 = vunpack.c.l.b16 %v1692
      %v2045 = vunpack.c.l.b16 %v1693
      %v2046 = vunpack.c.l.b16 %v1694
      %v2047 = vunpack.c.l.b16 %v1695
      %v2048 = vunpack.c.l.b16 %v1696
      %v2049 = vunpack.c.l.b16 %v1697
      %v2050 = vunpack.c.l.b16 %v1698
      %v2051 = vunpack.c.l.b16 %v1699
      %v2052 = vunpack.c.l.b16 %v1700
      %v2053 = vunpack.c.l.b16 %v1701
      %v2054 = vunpack.c.l.b16 %v1702
      %v2055 = vunpack.c.l.b16 %v1703
      %v2056 = vunpack.c.l.b16 %v1704
      %v2057 = vunpack.c.l.b16 %v1705
      %v2058 = vunpack.c.l.b16 %v1706
      %v2059 = vunpack.c.l.b16 %v1707
      %v2060 = vunpack.c.l.b16 %v1708
      %v2061 = vunpack.c.l.b16 %v1709
      %v2062 = vunpack.c.l.b16 %v1710
      %v2063 = vunpack.c.l.b16 %v1711
      %v2064 = vunpack.c.l.b16 %v1712
      %v2065 = vunpack.c.l.b16 %v1713
      %v2066 = vunpack.c.l.b16 %v1714
      %v2067 = vunpack.c.l.b16 %v1715
      %v2068 = vunpack.c.l.b16 %v1716
      %v2069 = vunpack.c.l.b16 %v1717
      %v2070 = vunpack.c.l.b16 %v1718
      %v2071 = vunpack.c.l.b16 %v1719
      %v2072 = vunpack.c.l.b16 %v1720
      %v2073 = vunpack.c.l.b16 %v1721
      %v2074 = vunpack.c.l.b16 %v1722
      %v2075 = vunpack.c.l.b16 %v1723
      %v2076 = vpack.c.b16 %v2029, %v2028
      %v2077 = vpack.c.b16 %v2031, %v2030
      %v2078 = vpack.c.b16 %v2033, %v2032
      %v2079 = vpack.c.b16 %v2035, %v2034
      %v2080 = vpack.c.b16 %v2037, %v2036
      %v2081 = vpack.c.b16 %v2039, %v2038
      %v2082 = vpack.c.b16 %v2041, %v2040
      %v2083 = vpack.c.b16 %v2043, %v2042
      %v2084 = vpack.c.b16 %v2045, %v2044
      %v2085 = vpack.c.b16 %v2047, %v2046
      %v2086 = vpack.c.b16 %v2049, %v2048
      %v2087 = vpack.c.b16 %v2051, %v2050
      %v2088 = vpack.c.b16 %v2053, %v2052
      %v2089 = vpack.c.b16 %v2055, %v2054
      %v2090 = vpack.c.b16 %v2057, %v2056
      %v2091 = vpack.c.b16 %v2059, %v2058
      %v2092 = vpack.c.b16 %v2061, %v2060
      %v2093 = vpack.c.b16 %v2063, %v2062
      %v2094 = vpack.c.b16 %v2065, %v2064
      %v2095 = vpack.c.b16 %v2067, %v2066
      %v2096 = vpack.c.b16 %v2069, %v2068
      %v2097 = vpack.c.b16 %v2071, %v2070
      %v2098 = vpack.c.b16 %v2073, %v2072
      %v2099 = vpack.c.b16 %v2075, %v2074
      %2124 = vmatprep.subr.bf16.mxu0 0
      %2125 = vmatpush1.bf16.msra.mxu0 %v2083
      %2126 = vmatprep.subr.bf16.mxu0 0
      %2127 = vmatpush1.bf16.msra.mxu0 %v2082
      %2128 = vmatprep.subr.bf16.mxu0 0
      %2129 = vmatpush1.bf16.msra.mxu0 %v2081
      %2130 = vmatprep.subr.bf16.mxu0 0
      %2131 = vmatpush1.bf16.msra.mxu0 %v2080
      %2132 = vmatprep.subr.bf16.mxu0 0
      %2133 = vmatpush1.bf16.msra.mxu0 %v2079
      %2134 = vmatprep.subr.bf16.mxu0 0
      %2135 = vmatpush1.bf16.msra.mxu0 %v2078
      %2136 = vmatprep.subr.bf16.mxu0 0
      %2137 = vmatpush1.bf16.msra.mxu0 %v2077
      %2138 = vmatprep.subr.bf16.mxu0 0
      %2139 = vmatpush1.bf16.msra.mxu0 %v2076
      %2140 = vmatprep.subr.bf16.mxu0 0
      %2141 = vmatpush2.bf16.msra.mxu0 %v2091
      %2142 = vmatprep.subr.bf16.mxu0 0
      %2143 = vmatpush2.bf16.msra.mxu0 %v2090
      %2144 = vmatprep.subr.bf16.mxu0 0
      %2145 = vmatpush2.bf16.msra.mxu0 %v2089
      %2146 = vmatprep.subr.bf16.mxu0 0
      %2147 = vmatpush2.bf16.msra.mxu0 %v2088
      %2148 = vmatprep.subr.bf16.mxu0 0
      %2149 = vmatpush2.bf16.msra.mxu0 %v2087
      %2150 = vmatprep.subr.bf16.mxu0 0
      %2151 = vmatpush2.bf16.msra.mxu0 %v2086
      %2152 = vmatprep.subr.bf16.mxu0 0
      %2153 = vmatpush2.bf16.msra.mxu0 %v2085
      %2154 = vmatprep.subr.bf16.mxu0 0
      %2155 = vmatpush2.bf16.msra.mxu0 %v2084
      %2156 = vmatprep.mubr.bf16.mxu0 %v1885
      %2157 = vmatmul.mubr.bf16.gmra.mxu0 %v1884
      %v2158 = vpop.f32.mrf.mxu0
      %v2159 = vadd.f32 0.0, %v2158
      %v2160 = vpop.f32.mrf.mxu0
      %v2161 = vpop.f32.mrf.mxu0
      %v2162 = vadd.f32 0.0, %v2161
      %v2163 = vpop.f32.mrf.mxu0
      %2164 = vmatprep.mubr.bf16.mxu0 %v1888
      %2165 = vmatmul.mubr.bf16.gmra.mxu0 %v1887
      %v2166 = vpop.f32.mrf.mxu0
      %v2167 = vadd.f32 0.0, %v2166
      %v2168 = vpop.f32.mrf.mxu0
      %v2169 = vpop.f32.mrf.mxu0
      %v2170 = vadd.f32 0.0, %v2169
      %v2171 = vpop.f32.mrf.mxu0
      %2172 = vmatprep.mubr.bf16.mxu0 %v1891
      %2173 = vmatmul.mubr.bf16.gmra.mxu0 %v1890
      %v2174 = vpop.f32.mrf.mxu0
      %v2175 = vadd.f32 0.0, %v2174
      %v2176 = vpop.f32.mrf.mxu0
      %v2177 = vpop.f32.mrf.mxu0
      %v2178 = vadd.f32 0.0, %v2177
      %v2179 = vpop.f32.mrf.mxu0
      %2180 = vmatprep.mubr.bf16.mxu0 %v1894
      %2181 = vmatmul.mubr.bf16.gmra.mxu0 %v1893
      %v2182 = vpop.f32.mrf.mxu0
      %v2183 = vadd.f32 0.0, %v2182
      %v2184 = vpop.f32.mrf.mxu0
      %v2185 = vpop.f32.mrf.mxu0
      %v2186 = vadd.f32 0.0, %v2185
      %v2187 = vpop.f32.mrf.mxu0
      %2188 = vmatprep.mubr.bf16.mxu0 %v1897
      %2189 = vmatmul.mubr.bf16.gmra.mxu0 %v1896
      %v2190 = vpop.f32.mrf.mxu0
      %v2191 = vadd.f32 0.0, %v2190
      %v2192 = vpop.f32.mrf.mxu0
      %v2193 = vpop.f32.mrf.mxu0
      %v2194 = vadd.f32 0.0, %v2193
      %v2195 = vpop.f32.mrf.mxu0
      %2196 = vmatprep.mubr.bf16.mxu0 %v1900
      %2197 = vmatmul.mubr.bf16.gmra.mxu0 %v1899
      %v2198 = vpop.f32.mrf.mxu0
      %v2199 = vadd.f32 0.0, %v2198
      %v2200 = vpop.f32.mrf.mxu0
      %v2201 = vpop.f32.mrf.mxu0
      %v2202 = vadd.f32 0.0, %v2201
      %v2203 = vpop.f32.mrf.mxu0
      %2204 = vmatprep.mubr.bf16.mxu0 %v1903
      %2205 = vmatmul.mubr.bf16.gmra.mxu0 %v1902
      %v2206 = vpop.f32.mrf.mxu0
      %v2207 = vadd.f32 0.0, %v2206
      %v2208 = vpop.f32.mrf.mxu0
      %v2209 = vpop.f32.mrf.mxu0
      %v2210 = vadd.f32 0.0, %v2209
      %v2211 = vpop.f32.mrf.mxu0
      %2212 = vmatprep.mubr.bf16.mxu0 %v1906
      %2213 = vmatmul.mubr.bf16.gmra.mxu0 %v1905
      %v2214 = vpop.f32.mrf.mxu0
      %v2215 = vadd.f32 0.0, %v2214
      %v2216 = vpop.f32.mrf.mxu0
      %v2217 = vpop.f32.mrf.mxu0
      %v2218 = vadd.f32 0.0, %v2217
      %v2219 = vpop.f32.mrf.mxu0
      %2220 = vmatprep.mubr.bf16.mxu0 %v1909
      %2221 = vmatmul.mubr.bf16.gmra.mxu0 %v1908
      %v2222 = vpop.f32.mrf.mxu0
      %v2223 = vadd.f32 0.0, %v2222
      %v2224 = vpop.f32.mrf.mxu0
      %v2225 = vpop.f32.mrf.mxu0
      %v2226 = vadd.f32 0.0, %v2225
      %v2227 = vpop.f32.mrf.mxu0
      %2228 = vmatprep.mubr.bf16.mxu0 %v1912
      %2229 = vmatmul.mubr.bf16.gmra.mxu0 %v1911
      %v2230 = vpop.f32.mrf.mxu0
      %v2231 = vadd.f32 0.0, %v2230
      %v2232 = vpop.f32.mrf.mxu0
      %v2233 = vpop.f32.mrf.mxu0
      %v2234 = vadd.f32 0.0, %v2233
      %v2235 = vpop.f32.mrf.mxu0
      %2236 = vmatprep.mubr.bf16.mxu0 %v1915
      %2237 = vmatmul.mubr.bf16.gmra.mxu0 %v1914
      %v2238 = vpop.f32.mrf.mxu0
      %v2239 = vadd.f32 0.0, %v2238
      %v2240 = vpop.f32.mrf.mxu0
      %v2241 = vpop.f32.mrf.mxu0
      %v2242 = vadd.f32 0.0, %v2241
      %v2243 = vpop.f32.mrf.mxu0
      %2244 = vmatprep.mubr.bf16.mxu0 %v1918
      %2245 = vmatmul.mubr.bf16.gmra.mxu0 %v1917
      %v2246 = vpop.f32.mrf.mxu0
      %v2247 = vadd.f32 0.0, %v2246
      %v2248 = vpop.f32.mrf.mxu0
      %v2249 = vpop.f32.mrf.mxu0
      %v2250 = vadd.f32 0.0, %v2249
      %v2251 = vpop.f32.mrf.mxu0
      %2252 = vmatprep.mubr.bf16.mxu0 %v1921
      %2253 = vmatmul.mubr.bf16.gmra.mxu0 %v1920
      %v2254 = vpop.f32.mrf.mxu0
      %v2255 = vadd.f32 0.0, %v2254
      %v2256 = vpop.f32.mrf.mxu0
      %v2257 = vpop.f32.mrf.mxu0
      %v2258 = vadd.f32 0.0, %v2257
      %v2259 = vpop.f32.mrf.mxu0
      %2260 = vmatprep.mubr.bf16.mxu0 %v1924
      %2261 = vmatmul.mubr.bf16.gmra.mxu0 %v1923
      %v2262 = vpop.f32.mrf.mxu0
      %v2263 = vadd.f32 0.0, %v2262
      %v2264 = vpop.f32.mrf.mxu0
      %v2265 = vpop.f32.mrf.mxu0
      %v2266 = vadd.f32 0.0, %v2265
      %v2267 = vpop.f32.mrf.mxu0
      %2268 = vmatprep.mubr.bf16.mxu0 %v1927
      %2269 = vmatmul.mubr.bf16.gmra.mxu0 %v1926
      %v2270 = vpop.f32.mrf.mxu0
      %v2271 = vadd.f32 0.0, %v2270
      %v2272 = vpop.f32.mrf.mxu0
      %v2273 = vpop.f32.mrf.mxu0
      %v2274 = vadd.f32 0.0, %v2273
      %v2275 = vpop.f32.mrf.mxu0
      %2276 = vmatprep.mubr.bf16.mxu0 %v1930
      %2277 = vmatmul.mubr.bf16.gmra.mxu0 %v1929
      %v2278 = vpop.f32.mrf.mxu0
      %v2279 = vadd.f32 0.0, %v2278
      %v2280 = vpop.f32.mrf.mxu0
      %v2281 = vpop.f32.mrf.mxu0
      %v2282 = vadd.f32 0.0, %v2281
      %v2283 = vpop.f32.mrf.mxu0
      %2284 = vdwg.mxu0
      %2285 = vmatprep.subr.bf16.mxu0 0
      %2286 = vmatpush1.bf16.msra.mxu0 %v2099
      %2287 = vmatprep.subr.bf16.mxu0 0
      %2288 = vmatpush1.bf16.msra.mxu0 %v2098
      %2289 = vmatprep.subr.bf16.mxu0 0
      %2290 = vmatpush1.bf16.msra.mxu0 %v2097
      %2291 = vmatprep.subr.bf16.mxu0 0
      %2292 = vmatpush1.bf16.msra.mxu0 %v2096
      %2293 = vmatprep.subr.bf16.mxu0 0
      %2294 = vmatpush1.bf16.msra.mxu0 %v2095
      %2295 = vmatprep.subr.bf16.mxu0 0
      %2296 = vmatpush1.bf16.msra.mxu0 %v2094
      %2297 = vmatprep.subr.bf16.mxu0 0
      %2298 = vmatpush1.bf16.msra.mxu0 %v2093
      %2299 = vmatprep.subr.bf16.mxu0 0
      %2300 = vmatpush1.bf16.msra.mxu0 %v2092
      %2301 = vmatprep.subr.bf16.mxu0 0
      %2302 = vmatpush2.bf16.msra.mxu0 0
      %2303 = vmatprep.subr.bf16.mxu0 0
      %2304 = vmatpush2.bf16.msra.mxu0 0
      %2305 = vmatprep.subr.bf16.mxu0 0
      %2306 = vmatpush2.bf16.msra.mxu0 0
      %2307 = vmatprep.subr.bf16.mxu0 0
      %2308 = vmatpush2.bf16.msra.mxu0 0
      %2309 = vmatprep.subr.bf16.mxu0 0
      %2310 = vmatpush2.bf16.msra.mxu0 0
      %2311 = vmatprep.subr.bf16.mxu0 0
      %2312 = vmatpush2.bf16.msra.mxu0 0
      %2313 = vmatprep.subr.bf16.mxu0 0
      %2314 = vmatpush2.bf16.msra.mxu0 0
      %2315 = vmatprep.subr.bf16.mxu0 0
      %2316 = vmatpush2.bf16.msra.mxu0 0
      %2317 = vmatprep.mubr.bf16.mxu0 0
      %2318 = vmatmul.mubr.bf16.gmra.mxu0 %v1886
      %v2319 = vpop.f32.mrf.mxu0
      %v2320 = vadd.f32 %v2159, %v2319
      %v2321 = vpop.f32.mrf.mxu0
      %v2322 = vpop.f32.mrf.mxu0
      %v2323 = vadd.f32 %v2162, %v2322
      %v2324 = vpop.f32.mrf.mxu0
      %2325 = vmatprep.mubr.bf16.mxu0 0
      %2326 = vmatmul.mubr.bf16.gmra.mxu0 %v1889
      %v2327 = vpop.f32.mrf.mxu0
      %v2328 = vadd.f32 %v2167, %v2327
      %v2329 = vpop.f32.mrf.mxu0
      %v2330 = vpop.f32.mrf.mxu0
      %v2331 = vadd.f32 %v2170, %v2330
      %v2332 = vpop.f32.mrf.mxu0
      %2333 = vmatprep.mubr.bf16.mxu0 0
      %2334 = vmatmul.mubr.bf16.gmra.mxu0 %v1892
      %v2335 = vpop.f32.mrf.mxu0
      %v2336 = vadd.f32 %v2175, %v2335
      %v2337 = vpop.f32.mrf.mxu0
      %v2338 = vpop.f32.mrf.mxu0
      %v2339 = vadd.f32 %v2178, %v2338
      %v2340 = vpop.f32.mrf.mxu0
      %2341 = vmatprep.mubr.bf16.mxu0 0
      %2342 = vmatmul.mubr.bf16.gmra.mxu0 %v1895
      %v2343 = vpop.f32.mrf.mxu0
      %v2344 = vadd.f32 %v2183, %v2343
      %v2345 = vpop.f32.mrf.mxu0
      %v2346 = vpop.f32.mrf.mxu0
      %v2347 = vadd.f32 %v2186, %v2346
      %v2348 = vpop.f32.mrf.mxu0
      %2349 = vmatprep.mubr.bf16.mxu0 0
      %2350 = vmatmul.mubr.bf16.gmra.mxu0 %v1898
      %v2351 = vpop.f32.mrf.mxu0
      %v2352 = vadd.f32 %v2191, %v2351
      %v2353 = vpop.f32.mrf.mxu0
      %v2354 = vpop.f32.mrf.mxu0
      %v2355 = vadd.f32 %v2194, %v2354
      %v2356 = vpop.f32.mrf.mxu0
      %2357 = vmatprep.mubr.bf16.mxu0 0
      %2358 = vmatmul.mubr.bf16.gmra.mxu0 %v1901
      %v2359 = vpop.f32.mrf.mxu0
      %v2360 = vadd.f32 %v2199, %v2359
      %v2361 = vpop.f32.mrf.mxu0
      %v2362 = vpop.f32.mrf.mxu0
      %v2363 = vadd.f32 %v2202, %v2362
      %v2364 = vpop.f32.mrf.mxu0
      %2365 = vmatprep.mubr.bf16.mxu0 0
      %2366 = vmatmul.mubr.bf16.gmra.mxu0 %v1904
      %v2367 = vpop.f32.mrf.mxu0
      %v2368 = vadd.f32 %v2207, %v2367
      %v2369 = vpop.f32.mrf.mxu0
      %v2370 = vpop.f32.mrf.mxu0
      %v2371 = vadd.f32 %v2210, %v2370
      %v2372 = vpop.f32.mrf.mxu0
      %2373 = vmatprep.mubr.bf16.mxu0 0
      %2374 = vmatmul.mubr.bf16.gmra.mxu0 %v1907
      %v2375 = vpop.f32.mrf.mxu0
      %v2376 = vadd.f32 %v2215, %v2375
      %v2377 = vpop.f32.mrf.mxu0
      %v2378 = vpop.f32.mrf.mxu0
      %v2379 = vadd.f32 %v2218, %v2378
      %v2380 = vpop.f32.mrf.mxu0
      %2381 = vmatprep.mubr.bf16.mxu0 0
      %2382 = vmatmul.mubr.bf16.gmra.mxu0 %v1910
      %v2383 = vpop.f32.mrf.mxu0
      %v2384 = vadd.f32 %v2223, %v2383
      %v2385 = vpop.f32.mrf.mxu0
      %v2386 = vpop.f32.mrf.mxu0
      %v2387 = vadd.f32 %v2226, %v2386
      %v2388 = vpop.f32.mrf.mxu0
      %2389 = vmatprep.mubr.bf16.mxu0 0
      %2390 = vmatmul.mubr.bf16.gmra.mxu0 %v1913
      %v2391 = vpop.f32.mrf.mxu0
      %v2392 = vadd.f32 %v2231, %v2391
      %v2393 = vpop.f32.mrf.mxu0
      %v2394 = vpop.f32.mrf.mxu0
      %v2395 = vadd.f32 %v2234, %v2394
      %v2396 = vpop.f32.mrf.mxu0
      %2397 = vmatprep.mubr.bf16.mxu0 0
      %2398 = vmatmul.mubr.bf16.gmra.mxu0 %v1916
      %v2399 = vpop.f32.mrf.mxu0
      %v2400 = vadd.f32 %v2239, %v2399
      %v2401 = vpop.f32.mrf.mxu0
      %v2402 = vpop.f32.mrf.mxu0
      %v2403 = vadd.f32 %v2242, %v2402
      %v2404 = vpop.f32.mrf.mxu0
      %2405 = vmatprep.mubr.bf16.mxu0 0
      %2406 = vmatmul.mubr.bf16.gmra.mxu0 %v1919
      %v2407 = vpop.f32.mrf.mxu0
      %v2408 = vadd.f32 %v2247, %v2407
      %v2409 = vpop.f32.mrf.mxu0
      %v2410 = vpop.f32.mrf.mxu0
      %v2411 = vadd.f32 %v2250, %v2410
      %v2412 = vpop.f32.mrf.mxu0
      %2413 = vmatprep.mubr.bf16.mxu0 0
      %2414 = vmatmul.mubr.bf16.gmra.mxu0 %v1922
      %v2415 = vpop.f32.mrf.mxu0
      %v2416 = vadd.f32 %v2255, %v2415
      %v2417 = vpop.f32.mrf.mxu0
      %v2418 = vpop.f32.mrf.mxu0
      %v2419 = vadd.f32 %v2258, %v2418
      %v2420 = vpop.f32.mrf.mxu0
      %2421 = vmatprep.mubr.bf16.mxu0 0
      %2422 = vmatmul.mubr.bf16.gmra.mxu0 %v1925
      %v2423 = vpop.f32.mrf.mxu0
      %v2424 = vadd.f32 %v2263, %v2423
      %v2425 = vpop.f32.mrf.mxu0
      %v2426 = vpop.f32.mrf.mxu0
      %v2427 = vadd.f32 %v2266, %v2426
      %v2428 = vpop.f32.mrf.mxu0
      %2429 = vmatprep.mubr.bf16.mxu0 0
      %2430 = vmatmul.mubr.bf16.gmra.mxu0 %v1928
      %v2431 = vpop.f32.mrf.mxu0
      %v2432 = vadd.f32 %v2271, %v2431
      %v2433 = vpop.f32.mrf.mxu0
      %v2434 = vpop.f32.mrf.mxu0
      %v2435 = vadd.f32 %v2274, %v2434
      %v2436 = vpop.f32.mrf.mxu0
      %2437 = vmatprep.mubr.bf16.mxu0 0
      %2438 = vmatmul.mubr.bf16.gmra.mxu0 %v1931
      %v2439 = vpop.f32.mrf.mxu0
      %v2440 = vadd.f32 %v2279, %v2439
      %v2441 = vpop.f32.mrf.mxu0
      %v2442 = vpop.f32.mrf.mxu0
      %v2443 = vadd.f32 %v2282, %v2442
      %v2444 = vpop.f32.mrf.mxu0
      %2445 = vdwg.mxu0
      %v2446 = vadd.f32 %v1485, %v2320
      %v2447 = vadd.f32 %v1488, %v2323
      %v2448 = vadd.f32 %v1493, %v2328
      %v2449 = vadd.f32 %v1496, %v2331
      %v2450 = vadd.f32 %v1501, %v2336
      %v2451 = vadd.f32 %v1504, %v2339
      %v2452 = vadd.f32 %v1509, %v2344
      %v2453 = vadd.f32 %v1512, %v2347
      %v2454 = vadd.f32 %v1517, %v2352
      %v2455 = vadd.f32 %v1520, %v2355
      %v2456 = vadd.f32 %v1525, %v2360
      %v2457 = vadd.f32 %v1528, %v2363
      %v2458 = vadd.f32 %v1533, %v2368
      %v2459 = vadd.f32 %v1536, %v2371
      %v2460 = vadd.f32 %v1541, %v2376
      %v2461 = vadd.f32 %v1544, %v2379
      %v2462 = vadd.f32 %v1549, %v2384
      %v2463 = vadd.f32 %v1552, %v2387
      %v2464 = vadd.f32 %v1557, %v2392
      %v2465 = vadd.f32 %v1560, %v2395
      %v2466 = vadd.f32 %v1565, %v2400
      %v2467 = vadd.f32 %v1568, %v2403
      %v2468 = vadd.f32 %v1573, %v2408
      %v2469 = vadd.f32 %v1576, %v2411
      %v2470 = vadd.f32 %v1581, %v2416
      %v2471 = vadd.f32 %v1584, %v2419
      %v2472 = vadd.f32 %v1589, %v2424
      %v2473 = vadd.f32 %v1592, %v2427
      %v2474 = vadd.f32 %v1597, %v2432
      %v2475 = vadd.f32 %v1600, %v2435
      %v2476 = vadd.f32 %v1605, %v2440
      %v2477 = vadd.f32 %v1608, %v2443
      %v2478 = vld [vmem:[%s231] sm:$0x1]
      %v2480 = vlaneseq
      %v2481 = vshrl.u32 %v2480, 7
      %v2482 = vsub.s32 0, %v2481
      %v2483 = vrot.slane %v2478, %v2482
      %v2485 = vadd.f32 %v2446, %v2483
      %v2486 = vadd.f32 %v2447, %v2483
      %v2487 = vadd.f32 %v2448, %v2483
      %v2488 = vadd.f32 %v2449, %v2483
      %v2489 = vadd.f32 %v2450, %v2483
      %v2490 = vadd.f32 %v2451, %v2483
      %v2491 = vadd.f32 %v2452, %v2483
      %v2492 = vadd.f32 %v2453, %v2483
      %v2493 = vadd.f32 %v2454, %v2483
      %v2494 = vadd.f32 %v2455, %v2483
      %v2495 = vadd.f32 %v2456, %v2483
      %v2496 = vadd.f32 %v2457, %v2483
      %v2497 = vadd.f32 %v2458, %v2483
      %v2498 = vadd.f32 %v2459, %v2483
      %v2499 = vadd.f32 %v2460, %v2483
      %v2500 = vadd.f32 %v2461, %v2483
      %v2501 = vadd.f32 %v2462, %v2483
      %v2502 = vadd.f32 %v2463, %v2483
      %v2503 = vadd.f32 %v2464, %v2483
      %v2504 = vadd.f32 %v2465, %v2483
      %v2505 = vadd.f32 %v2466, %v2483
      %v2506 = vadd.f32 %v2467, %v2483
      %v2507 = vadd.f32 %v2468, %v2483
      %v2508 = vadd.f32 %v2469, %v2483
      %v2509 = vadd.f32 %v2470, %v2483
      %v2510 = vadd.f32 %v2471, %v2483
      %v2511 = vadd.f32 %v2472, %v2483
      %v2512 = vadd.f32 %v2473, %v2483
      %v2513 = vadd.f32 %v2474, %v2483
      %v2514 = vadd.f32 %v2475, %v2483
      %v2515 = vadd.f32 %v2476, %v2483
      %v2516 = vadd.f32 %v2477, %v2483
      %v2517 = vmax.f32 %v2485, 0.0
      %v2518 = vmax.f32 %v2486, 0.0
      %v2519 = vmax.f32 %v2487, 0.0
      %v2520 = vmax.f32 %v2488, 0.0
      %v2521 = vmax.f32 %v2489, 0.0
      %v2522 = vmax.f32 %v2490, 0.0
      %v2523 = vmax.f32 %v2491, 0.0
      %v2524 = vmax.f32 %v2492, 0.0
      %v2525 = vmax.f32 %v2493, 0.0
      %v2526 = vmax.f32 %v2494, 0.0
      %v2527 = vmax.f32 %v2495, 0.0
      %v2528 = vmax.f32 %v2496, 0.0
      %v2529 = vmax.f32 %v2497, 0.0
      %v2530 = vmax.f32 %v2498, 0.0
      %v2531 = vmax.f32 %v2499, 0.0
      %v2532 = vmax.f32 %v2500, 0.0
      %v2533 = vmax.f32 %v2501, 0.0
      %v2534 = vmax.f32 %v2502, 0.0
      %v2535 = vmax.f32 %v2503, 0.0
      %v2536 = vmax.f32 %v2504, 0.0
      %v2537 = vmax.f32 %v2505, 0.0
      %v2538 = vmax.f32 %v2506, 0.0
      %v2539 = vmax.f32 %v2507, 0.0
      %v2540 = vmax.f32 %v2508, 0.0
      %v2541 = vmax.f32 %v2509, 0.0
      %v2542 = vmax.f32 %v2510, 0.0
      %v2543 = vmax.f32 %v2511, 0.0
      %v2544 = vmax.f32 %v2512, 0.0
      %v2545 = vmax.f32 %v2513, 0.0
      %v2546 = vmax.f32 %v2514, 0.0
      %v2547 = vmax.f32 %v2515, 0.0
      %v2548 = vmax.f32 %v2516, 0.0
      %v2549 = vpack.c.bf16 %v2518, %v2517
      %v2550 = vpack.c.bf16 %v2520, %v2519
      %v2551 = vpack.c.bf16 %v2522, %v2521
      %v2552 = vpack.c.bf16 %v2524, %v2523
      %v2553 = vpack.c.bf16 %v2526, %v2525
      %v2554 = vpack.c.bf16 %v2528, %v2527
      %v2555 = vpack.c.bf16 %v2530, %v2529
      %v2556 = vpack.c.bf16 %v2532, %v2531
      %v2557 = vpack.c.bf16 %v2534, %v2533
      %v2558 = vpack.c.bf16 %v2536, %v2535
      %v2559 = vpack.c.bf16 %v2538, %v2537
      %v2560 = vpack.c.bf16 %v2540, %v2539
      %v2561 = vpack.c.bf16 %v2542, %v2541
      %v2562 = vpack.c.bf16 %v2544, %v2543
      %v2563 = vpack.c.bf16 %v2546, %v2545
      %v2564 = vpack.c.bf16 %v2548, %v2547
      %v2581 = vunpack.c.l.b16 %v2549
      %v2582 = vunpack.c.h.b16 %v2549
      %v2583 = vunpack.c.l.b16 %v2550
      %v2584 = vunpack.c.h.b16 %v2550
      %v2585 = vunpack.c.l.b16 %v2551
      %v2586 = vunpack.c.h.b16 %v2551
      %v2587 = vunpack.c.l.b16 %v2552
      %v2588 = vunpack.c.h.b16 %v2552
      %v2589 = vunpack.c.l.b16 %v2553
      %v2590 = vunpack.c.h.b16 %v2553
      %v2591 = vunpack.c.l.b16 %v2554
      %v2592 = vunpack.c.h.b16 %v2554
      %v2593 = vunpack.c.l.b16 %v2555
      %v2594 = vunpack.c.h.b16 %v2555
      %v2595 = vunpack.c.l.b16 %v2556
      %v2596 = vunpack.c.h.b16 %v2556
      %v2597 = vunpack.c.l.b16 %v2557
      %v2598 = vunpack.c.h.b16 %v2557
      %v2599 = vunpack.c.l.b16 %v2558
      %v2600 = vunpack.c.h.b16 %v2558
      %v2601 = vunpack.c.l.b16 %v2559
      %v2602 = vunpack.c.h.b16 %v2559
      %v2603 = vunpack.c.l.b16 %v2560
      %v2604 = vunpack.c.h.b16 %v2560
      %v2605 = vunpack.c.l.b16 %v2561
      %v2606 = vunpack.c.h.b16 %v2561
      %v2607 = vunpack.c.l.b16 %v2562
      %v2608 = vunpack.c.h.b16 %v2562
      %v2609 = vunpack.c.l.b16 %v2563
      %v2610 = vunpack.c.h.b16 %v2563
      %v2611 = vunpack.c.l.b16 %v2564
      %v2612 = vunpack.c.h.b16 %v2564
      %v2613 = vpack.c.b16 %v2581, %v2581
      %v2614 = vpack.c.b16 %v2582, %v2582
      %v2615 = vpack.c.b16 %v2583, %v2583
      %v2616 = vpack.c.b16 %v2584, %v2584
      %v2617 = vpack.c.b16 %v2585, %v2585
      %v2618 = vpack.c.b16 %v2586, %v2586
      %v2619 = vpack.c.b16 %v2587, %v2587
      %v2620 = vpack.c.b16 %v2588, %v2588
      %v2621 = vpack.c.b16 %v2589, %v2589
      %v2622 = vpack.c.b16 %v2590, %v2590
      %v2623 = vpack.c.b16 %v2591, %v2591
      %v2624 = vpack.c.b16 %v2592, %v2592
      %v2625 = vpack.c.b16 %v2593, %v2593
      %v2626 = vpack.c.b16 %v2594, %v2594
      %v2627 = vpack.c.b16 %v2595, %v2595
      %v2628 = vpack.c.b16 %v2596, %v2596
      %v2629 = vpack.c.b16 %v2597, %v2597
      %v2630 = vpack.c.b16 %v2598, %v2598
      %v2631 = vpack.c.b16 %v2599, %v2599
      %v2632 = vpack.c.b16 %v2600, %v2600
      %v2633 = vpack.c.b16 %v2601, %v2601
      %v2634 = vpack.c.b16 %v2602, %v2602
      %v2635 = vpack.c.b16 %v2603, %v2603
      %v2636 = vpack.c.b16 %v2604, %v2604
      %v2637 = vpack.c.b16 %v2605, %v2605
      %v2638 = vpack.c.b16 %v2606, %v2606
      %v2639 = vpack.c.b16 %v2607, %v2607
      %v2640 = vpack.c.b16 %v2608, %v2608
      %v2641 = vpack.c.b16 %v2609, %v2609
      %v2642 = vpack.c.b16 %v2610, %v2610
      %v2643 = vpack.c.b16 %v2611, %v2611
      %v2644 = vpack.c.b16 %v2612, %v2612
      %2677 = vst [vmem:[%s240] sm:$0xf] %v2613
      %2678 = vst [vmem:[%s240 + $0x4] sm:$0xf] %v2614
      %2679 = vst [vmem:[%s240 + $0x8] sm:$0xf] %v2615
      %2680 = vst [vmem:[%s240 + $0xc] sm:$0xf] %v2616
      %2681 = vst [vmem:[%s240 + $0x10] sm:$0xf] %v2617
      %2682 = vst [vmem:[%s240 + $0x14] sm:$0xf] %v2618
      %2683 = vst [vmem:[%s240 + $0x18] sm:$0xf] %v2619
      %2684 = vst [vmem:[%s240 + $0x1c] sm:$0xf] %v2620
      %2685 = vst [vmem:[%s240 + $0x20] sm:$0xf] %v2621
      %2686 = vst [vmem:[%s240 + $0x24] sm:$0xf] %v2622
      %2687 = vst [vmem:[%s240 + $0x28] sm:$0xf] %v2623
      %2688 = vst [vmem:[%s240 + $0x2c] sm:$0xf] %v2624
      %2689 = vst [vmem:[%s240 + $0x30] sm:$0xf] %v2625
      %2690 = vst [vmem:[%s240 + $0x34] sm:$0xf] %v2626
      %2691 = vst [vmem:[%s240 + $0x38] sm:$0xf] %v2627
      %2692 = vst [vmem:[%s240 + $0x3c] sm:$0xf] %v2628
      %2693 = vst [vmem:[%s240 + $0x40] sm:$0xf] %v2629
      %2694 = vst [vmem:[%s240 + $0x44] sm:$0xf] %v2630
      %2695 = vst [vmem:[%s240 + $0x48] sm:$0xf] %v2631
      %2696 = vst [vmem:[%s240 + $0x4c] sm:$0xf] %v2632
      %2697 = vst [vmem:[%s240 + $0x50] sm:$0xf] %v2633
      %2698 = vst [vmem:[%s240 + $0x54] sm:$0xf] %v2634
      %2699 = vst [vmem:[%s240 + $0x58] sm:$0xf] %v2635
      %2700 = vst [vmem:[%s240 + $0x5c] sm:$0xf] %v2636
      %2701 = vst [vmem:[%s240 + $0x60] sm:$0xf] %v2637
      %2702 = vst [vmem:[%s240 + $0x64] sm:$0xf] %v2638
      %2703 = vst [vmem:[%s240 + $0x68] sm:$0xf] %v2639
      %2704 = vst [vmem:[%s240 + $0x6c] sm:$0xf] %v2640
      %2705 = vst [vmem:[%s240 + $0x70] sm:$0xf] %v2641
      %2706 = vst [vmem:[%s240 + $0x74] sm:$0xf] %v2642
      %2707 = vst [vmem:[%s240 + $0x78] sm:$0xf] %v2643
      %2708 = vst [vmem:[%s240 + $0x7c] sm:$0xf] %v2644
      %p2709 = scmp.lt.s32.totalorder %s18, 1
      %s2710 = scalar_select %p2709, %s18, 1
      %p2711 = scmp.lt.s32.totalorder %s19, 1
      %s2712 = scalar_select %p2711, %s19, 1
      %s2713 = smul.addr %s2712, 32
      %s2714 = smul.addr %s2710, 64
      %s2715 = sadd.s32 %s2713, %s2714
      %s2716 = smul.addr %s2715, 4
      %s2717 = scalar_lea.vmem %s3, %s2716
      // Predicated region
      $region33: #{dbcnn_forward.4} parent=31 // pred_check
        %p2718 = pneg %p126
      $region34: #{dbcnn_forward.4} parent=31 // pred_check_branch
        %2720 = sbr.rel (%p2718) target = $region36
      $region35: #{dbcnn_forward.4} parent=31 // pred_region
        _
      $region36: #{dbcnn_forward.4} parent=31 // pred_fallthru
        _
    $region32: #{dbcnn_forward.4} parent=5 // pred_fallthru
      _
    %p2721 = scmp.le.s32.totalorder 2, %s9
    // Predicated region
    $region37: #{dbcnn_forward.4} parent=5 // pred_check
      %p2722 = pneg %p2721
    $region38: #{dbcnn_forward.4} parent=5 // pred_check_branch
      %2724 = sbr.rel (%p2722) target = $region40
    $region39: #{dbcnn_forward.4} parent=5 // pred_region
      %s2725 = ssub.s32 %s9, 2
      // Predicated region
      $region41: #{dbcnn_forward.4} parent=39 // pred_check
        %p2726 = pneg %p132
      $region42: #{dbcnn_forward.4} parent=39 // pred_check_branch
        %2728 = sbr.rel (%p2726) target = $region44
      $region43: #{dbcnn_forward.4} parent=39 // pred_region
        %p2729 = scmp.lt.s32.totalorder %s20, 1
        %s2730 = scalar_select %p2729, %s20, 1
        %p2731 = scmp.lt.s32.totalorder %s21, 1
        %s2732 = scalar_select %p2731, %s21, 1
        %s2733 = smul.addr %s2732, 32
        %s2734 = smul.addr %s2730, 64
        %s2735 = sadd.s32 %s2733, %s2734
        %s2736 = smul.addr %s2735, 4
        %s2737 = scalar_lea.vmem %s3, %s2736
      $region44: #{dbcnn_forward.4} parent=39 // pred_fallthru
        _
    $region40: #{dbcnn_forward.4} parent=5 // pred_fallthru
      _
  $region6: #{dbcnn_forward.4} parent=0 // loop_footer
    %s13 = sadd.s32 1, %s9
  $region7: #{dbcnn_forward.4} parent=0 // loop_footer_branch
    %8 = sbr.rel target = $region3
  $region8: #{dbcnn_forward.4} parent=0 // loop_exit
    _

</llo_original>
